<compile_context>
chip_gen: v7x
topology: tpu7x:2x2x1
jax: 0.10.0
libtpu: 0.0.40
codegen_flags: <defaults>
</compile_context>

<pallas_src>
import math

import jax
import jax.numpy as jnp
from jax.experimental import pallas as pl
from jax.experimental.pallas import tpu as pltpu

# Module-consistent sizes: input dim 5, output dim 2, lane-aligned hidden width.
LAYERS = (5, 128, 128, 128, 128, 128, 2)
BATCH = 1024          # collocation points per kernel call
MAX_BATCH_TILE = 1024  # rows per grid step; activations + weights << VMEM budget


def _mlp_kernel(*refs):
    """refs = (x, w0, b0, ..., wL, bL, out).  Normalization already folded in w0/b0."""
    x_ref = refs[0]
    out_ref = refs[-1]
    wb_refs = refs[1:-1]
    n_layers = len(wb_refs) // 2

    a = x_ref[...]                                   # (tb, in_pad) f32, raw x

    for i in range(n_layers):
        w = wb_refs[2 * i][...]                      # (in, out) bf16, VMEM-resident
        b = wb_refs[2 * i + 1][...]                  # (1, out)  f32
        z = jnp.dot(a.astype(jnp.bfloat16), w,
                    preferred_element_type=jnp.float32) + b
        if i < n_layers - 1:
            # nn.Softmax() on a 2D tensor -> softmax over dim=1 (feature axis).
            # Kept in f32 (v5e VPU/EUP have no bf16 path).
            z = z - jnp.max(z, axis=-1, keepdims=True)
            e = jnp.exp(z)
            s = jnp.sum(e, axis=-1, keepdims=True)
            a = e * pl.reciprocal(s, approx=True)    # EUP slot, not VALU divide
        else:
            a = z                                    # padded cols are exact zeros
    out_ref[...] = a.astype(out_ref.dtype)           # lane-dense (tb, 128) store


def mlp_forward(x, lb, ub, weights, biases, *, max_batch_tile=MAX_BATCH_TILE):
    """x: (B, in_dim) f32; lb/ub: (1, in_dim) f32; weights[i]: (in_i, out_i) f32."""
    batch, in_dim = x.shape
    out_dim = weights[-1].shape[1]

    # --- fold input normalization into layer 0 (exact linear identity) -------
    inv_range = 1.0 / (ub - lb)                                   # (1, in_dim)
    w0 = weights[0] * inv_range.reshape(-1, 1)                    # row-scale
    b0 = biases[0].reshape(1, -1) - (lb * inv_range) @ weights[0]

    # --- pad in_dim to a multiple of 8 (sublane-aligned first matmul) --------
    in_pad = ((in_dim + 7) // 8) * 8
    if in_pad != in_dim:
        x = jnp.pad(x, ((0, 0), (0, in_pad - in_dim)))
        w0 = jnp.pad(w0, ((0, in_pad - in_dim), (0, 0)))

    # --- pad the last layer to a lane-dense 128-wide output ------------------
    out_pad = ((out_dim + 127) // 128) * 128
    w_last = jnp.pad(weights[-1], ((0, 0), (0, out_pad - out_dim)))
    b_last = jnp.pad(biases[-1].reshape(1, -1), ((0, 0), (0, out_pad - out_dim)))

    w_list = [w0] + list(weights[1:-1]) + [w_last]
    b_list = [b0] + [b.reshape(1, -1) for b in biases[1:-1]] + [b_last]
    w_bf16 = [w.astype(jnp.bfloat16) for w in w_list]
    b_f32 = [b.astype(jnp.float32) for b in b_list]

    # --- minimal grid: 1 block per TensorCore (1 on v5e/v6e, 2 on v7x) -------
    kind = getattr(jax.devices()[0], "device_kind", "").lower()
    num_tc = 2 if "v7" in kind else 1
    tb = pl.cdiv(batch, num_tc)
    tb = min(max_batch_tile, max(128, ((tb + 127) // 128) * 128))
    padded_batch = pl.cdiv(batch, tb) * tb
    if padded_batch != batch:
        x = jnp.pad(x, ((0, padded_batch - batch), (0, 0)))
    n_blocks = padded_batch // tb

    wb_flat, wb_specs = [], []
    for w, b in zip(w_bf16, b_f32):
        wb_flat.extend([w, b])
        # Full-extent, constant index_map -> stays resident in VMEM across grid.
        wb_specs.append(pl.BlockSpec(w.shape, lambda i: (0, 0)))
        wb_specs.append(pl.BlockSpec(b.shape, lambda i: (0, 0)))

    in_specs = [pl.BlockSpec((tb, in_pad), lambda i: (i, 0))] + wb_specs
    out_spec = pl.BlockSpec((tb, out_pad), lambda i: (i, 0))

    flops = 2 * padded_batch * sum(w.shape[0] * w.shape[1] for w in w_bf16)
    transcendentals = padded_batch * sum(w.shape[1] for w in w_bf16[:-1])  # exps
    bytes_accessed = (
        x.size * 4 + padded_batch * out_pad * 4
        + sum(w.size * 2 for w in w_bf16)
        + sum(b.size * 4 for b in b_f32)
    )

    out = pl.pallas_call(
        _mlp_kernel,
        out_shape=jax.ShapeDtypeStruct((padded_batch, out_pad), jnp.float32),
        grid_spec=pltpu.PrefetchScalarGridSpec(
            num_scalar_prefetch=0,
            grid=(n_blocks,),
            in_specs=in_specs,
            out_specs=out_spec,
        ),
        compiler_params=pltpu.CompilerParams(
            dimension_semantics=("parallel",),      # shards batch across TCs on v7x
        ),
        cost_estimate=pl.CostEstimate(
            flops=flops,
            transcendentals=transcendentals,
            bytes_accessed=bytes_accessed,
        ),
    )(x, *wb_flat)

    # Strip batch padding and the zero output columns.
    return out[:batch, :out_dim]


def init_params(key, layers):
    """Xavier-normal weights (gain=2), zero biases, weights stored (in, out)."""
    weights, biases = [], []
    for i in range(len(layers) - 1):
        fan_in, fan_out = layers[i], layers[i + 1]
        key, sub = jax.random.split(key)
        std = 2.0 * math.sqrt(2.0 / (fan_in + fan_out))
        w = std * jax.random.normal(sub, (fan_in, fan_out), dtype=jnp.float32)
        weights.append(w)
        biases.append(jnp.zeros((fan_out,), dtype=jnp.float32))
    return weights, biases


def reference_forward(x, lb, ub, weights, biases):
    """Pure-JAX f32 reference matching the PyTorch module semantics."""
    a = (x - lb) / (ub - lb)
    n = len(weights)
    for i in range(n - 1):
        a = jax.nn.softmax(a @ weights[i] + biases[i], axis=-1)
    return a @ weights[-1] + biases[-1]


if __name__ == "__main__":
    key = jax.random.PRNGKey(0)
    key, kx = jax.random.split(key)

    in_dim = LAYERS[0]
    x = jax.random.uniform(kx, (BATCH, in_dim), dtype=jnp.float32,
                           minval=-1.0, maxval=3.0)
    # Deterministic per-feature domain bounds (stand-ins for lb / ub of the
    # original script's xy_stack).
    lb = jnp.linspace(-1.0, 0.0, in_dim, dtype=jnp.float32)[None, :]
    ub = jnp.linspace(3.0, 4.0, in_dim, dtype=jnp.float32)[None, :]

    weights, biases = init_params(key, LAYERS)

    out = mlp_forward(x, lb, ub, weights, biases)
    out = jax.block_until_ready(out)

    ref = reference_forward(x, lb, ub, weights, biases)
    assert out.shape == (BATCH, LAYERS[-1])
    # Loose tolerance: kernel uses bf16 matmul inputs + approx reciprocal.
    assert jnp.allclose(out, ref, atol=2e-2, rtol=2e-2), "mismatch vs reference"

    print("KERNEL_OK")
</pallas_src>

<mosaic_0001>
module attributes {stable_mosaic.version = 11 : i64} {
  func.func @_mlp_kernel(%arg0: i32, %arg1: memref<1024x8xf32, #tpu.memory_space<vmem>>, %arg2: memref<8x128xbf16, #tpu.memory_space<vmem>>, %arg3: memref<1x128xf32, #tpu.memory_space<vmem>>, %arg4: memref<128x128xbf16, #tpu.memory_space<vmem>>, %arg5: memref<1x128xf32, #tpu.memory_space<vmem>>, %arg6: memref<128x128xbf16, #tpu.memory_space<vmem>>, %arg7: memref<1x128xf32, #tpu.memory_space<vmem>>, %arg8: memref<128x128xbf16, #tpu.memory_space<vmem>>, %arg9: memref<1x128xf32, #tpu.memory_space<vmem>>, %arg10: memref<128x128xbf16, #tpu.memory_space<vmem>>, %arg11: memref<1x128xf32, #tpu.memory_space<vmem>>, %arg12: memref<128x128xbf16, #tpu.memory_space<vmem>>, %arg13: memref<1x128xf32, #tpu.memory_space<vmem>>, %arg14: memref<1024x128xf32, #tpu.memory_space<vmem>>) attributes {dimension_semantics = [#tpu.dimension_semantics<parallel>], iteration_bounds = array<i64: 1>, scalar_prefetch = 0 : i64, scratch_operands = 0 : i64, tpu.core_type = #tpu.core_type<tc>, window_params = [{transform_indices = @transform_0, window_bounds = array<i64: 1024, 8>}, {pipeline_mode = #tpu.pipeline_mode<synchronous>, transform_indices = @transform_1, window_bounds = array<i64: 8, 128>}, {pipeline_mode = #tpu.pipeline_mode<synchronous>, transform_indices = @transform_2, window_bounds = array<i64: 1, 128>}, {pipeline_mode = #tpu.pipeline_mode<synchronous>, transform_indices = @transform_3, window_bounds = array<i64: 128, 128>}, {pipeline_mode = #tpu.pipeline_mode<synchronous>, transform_indices = @transform_4, window_bounds = array<i64: 1, 128>}, {pipeline_mode = #tpu.pipeline_mode<synchronous>, transform_indices = @transform_5, window_bounds = array<i64: 128, 128>}, {pipeline_mode = #tpu.pipeline_mode<synchronous>, transform_indices = @transform_6, window_bounds = array<i64: 1, 128>}, {pipeline_mode = #tpu.pipeline_mode<synchronous>, transform_indices = @transform_7, window_bounds = array<i64: 128, 128>}, {pipeline_mode = #tpu.pipeline_mode<synchronous>, transform_indices = @transform_8, window_bounds = array<i64: 1, 128>}, {pipeline_mode = #tpu.pipeline_mode<synchronous>, transform_indices = @transform_9, window_bounds = array<i64: 128, 128>}, {pipeline_mode = #tpu.pipeline_mode<synchronous>, transform_indices = @transform_10, window_bounds = array<i64: 1, 128>}, {pipeline_mode = #tpu.pipeline_mode<synchronous>, transform_indices = @transform_11, window_bounds = array<i64: 128, 128>}, {pipeline_mode = #tpu.pipeline_mode<synchronous>, transform_indices = @transform_12, window_bounds = array<i64: 1, 128>}, {transform_indices = @transform_13, window_bounds = array<i64: 1024, 128>}]} {
    %c0 = arith.constant 0 : index
    %c0_0 = arith.constant 0 : index
    %0 = vector.load %arg1[%c0, %c0_0] : memref<1024x8xf32, #tpu.memory_space<vmem>>, vector<1024x8xf32>
    %c0_1 = arith.constant 0 : index
    %c0_2 = arith.constant 0 : index
    %1 = vector.load %arg2[%c0_1, %c0_2] : memref<8x128xbf16, #tpu.memory_space<vmem>>, vector<8x128xbf16>
    %c0_3 = arith.constant 0 : index
    %c0_4 = arith.constant 0 : index
    %2 = vector.load %arg3[%c0_3, %c0_4] : memref<1x128xf32, #tpu.memory_space<vmem>>, vector<1x128xf32>
    %3 = arith.truncf %0 : vector<1024x8xf32> to vector<1024x8xbf16>
    %cst = arith.constant dense<0.000000e+00> : vector<1024x128xf32>
    %4 = tpu.matmul %3, %1, %cst {dimension_numbers = #tpu.dot_dimension_numbers<[1], [0], [0], [1], [0, 0, 1, 1], [], []>} : vector<1024x8xbf16>, vector<8x128xbf16>, vector<1024x128xf32> -> vector<1024x128xf32>
    %5 = vector.broadcast %2 : vector<1x128xf32> to vector<1024x128xf32>
    %6 = arith.addf %4, %5 : vector<1024x128xf32>
    %cst_5 = arith.constant dense<0xFF800000> : vector<1024xf32>
    %7 = vector.multi_reduction <maximumf>, %6, %cst_5 [1] : vector<1024x128xf32> to vector<1024xf32>
    %8 = vector.shape_cast %7 : vector<1024xf32> to vector<1024x1xf32>
    %9 = vector.broadcast %8 : vector<1024x1xf32> to vector<1024x128xf32>
    %10 = arith.subf %6, %9 : vector<1024x128xf32>
    %11 = math.exp %10 : vector<1024x128xf32>
    %cst_6 = arith.constant dense<0.000000e+00> : vector<1024xf32>
    %12 = vector.multi_reduction <add>, %11, %cst_6 [1] : vector<1024x128xf32> to vector<1024xf32>
    %13 = vector.shape_cast %12 : vector<1024xf32> to vector<1024x1xf32>
    %14 = tpu.reciprocal %13 {approx = true} : vector<1024x1xf32> -> vector<1024x1xf32>
    %15 = vector.broadcast %14 : vector<1024x1xf32> to vector<1024x128xf32>
    %16 = arith.mulf %11, %15 : vector<1024x128xf32>
    %c0_7 = arith.constant 0 : index
    %c0_8 = arith.constant 0 : index
    %17 = vector.load %arg4[%c0_7, %c0_8] : memref<128x128xbf16, #tpu.memory_space<vmem>>, vector<128x128xbf16>
    %c0_9 = arith.constant 0 : index
    %c0_10 = arith.constant 0 : index
    %18 = vector.load %arg5[%c0_9, %c0_10] : memref<1x128xf32, #tpu.memory_space<vmem>>, vector<1x128xf32>
    %19 = arith.truncf %16 : vector<1024x128xf32> to vector<1024x128xbf16>
    %cst_11 = arith.constant dense<0.000000e+00> : vector<1024x128xf32>
    %20 = tpu.matmul %19, %17, %cst_11 {dimension_numbers = #tpu.dot_dimension_numbers<[1], [0], [0], [1], [0, 0, 1, 1], [], []>} : vector<1024x128xbf16>, vector<128x128xbf16>, vector<1024x128xf32> -> vector<1024x128xf32>
    %21 = vector.broadcast %18 : vector<1x128xf32> to vector<1024x128xf32>
    %22 = arith.addf %20, %21 : vector<1024x128xf32>
    %cst_12 = arith.constant dense<0xFF800000> : vector<1024xf32>
    %23 = vector.multi_reduction <maximumf>, %22, %cst_12 [1] : vector<1024x128xf32> to vector<1024xf32>
    %24 = vector.shape_cast %23 : vector<1024xf32> to vector<1024x1xf32>
    %25 = vector.broadcast %24 : vector<1024x1xf32> to vector<1024x128xf32>
    %26 = arith.subf %22, %25 : vector<1024x128xf32>
    %27 = math.exp %26 : vector<1024x128xf32>
    %cst_13 = arith.constant dense<0.000000e+00> : vector<1024xf32>
    %28 = vector.multi_reduction <add>, %27, %cst_13 [1] : vector<1024x128xf32> to vector<1024xf32>
    %29 = vector.shape_cast %28 : vector<1024xf32> to vector<1024x1xf32>
    %30 = tpu.reciprocal %29 {approx = true} : vector<1024x1xf32> -> vector<1024x1xf32>
    %31 = vector.broadcast %30 : vector<1024x1xf32> to vector<1024x128xf32>
    %32 = arith.mulf %27, %31 : vector<1024x128xf32>
    %c0_14 = arith.constant 0 : index
    %c0_15 = arith.constant 0 : index
    %33 = vector.load %arg6[%c0_14, %c0_15] : memref<128x128xbf16, #tpu.memory_space<vmem>>, vector<128x128xbf16>
    %c0_16 = arith.constant 0 : index
    %c0_17 = arith.constant 0 : index
    %34 = vector.load %arg7[%c0_16, %c0_17] : memref<1x128xf32, #tpu.memory_space<vmem>>, vector<1x128xf32>
    %35 = arith.truncf %32 : vector<1024x128xf32> to vector<1024x128xbf16>
    %cst_18 = arith.constant dense<0.000000e+00> : vector<1024x128xf32>
    %36 = tpu.matmul %35, %33, %cst_18 {dimension_numbers = #tpu.dot_dimension_numbers<[1], [0], [0], [1], [0, 0, 1, 1], [], []>} : vector<1024x128xbf16>, vector<128x128xbf16>, vector<1024x128xf32> -> vector<1024x128xf32>
    %37 = vector.broadcast %34 : vector<1x128xf32> to vector<1024x128xf32>
    %38 = arith.addf %36, %37 : vector<1024x128xf32>
    %cst_19 = arith.constant dense<0xFF800000> : vector<1024xf32>
    %39 = vector.multi_reduction <maximumf>, %38, %cst_19 [1] : vector<1024x128xf32> to vector<1024xf32>
    %40 = vector.shape_cast %39 : vector<1024xf32> to vector<1024x1xf32>
    %41 = vector.broadcast %40 : vector<1024x1xf32> to vector<1024x128xf32>
    %42 = arith.subf %38, %41 : vector<1024x128xf32>
    %43 = math.exp %42 : vector<1024x128xf32>
    %cst_20 = arith.constant dense<0.000000e+00> : vector<1024xf32>
    %44 = vector.multi_reduction <add>, %43, %cst_20 [1] : vector<1024x128xf32> to vector<1024xf32>
    %45 = vector.shape_cast %44 : vector<1024xf32> to vector<1024x1xf32>
    %46 = tpu.reciprocal %45 {approx = true} : vector<1024x1xf32> -> vector<1024x1xf32>
    %47 = vector.broadcast %46 : vector<1024x1xf32> to vector<1024x128xf32>
    %48 = arith.mulf %43, %47 : vector<1024x128xf32>
    %c0_21 = arith.constant 0 : index
    %c0_22 = arith.constant 0 : index
    %49 = vector.load %arg8[%c0_21, %c0_22] : memref<128x128xbf16, #tpu.memory_space<vmem>>, vector<128x128xbf16>
    %c0_23 = arith.constant 0 : index
    %c0_24 = arith.constant 0 : index
    %50 = vector.load %arg9[%c0_23, %c0_24] : memref<1x128xf32, #tpu.memory_space<vmem>>, vector<1x128xf32>
    %51 = arith.truncf %48 : vector<1024x128xf32> to vector<1024x128xbf16>
    %cst_25 = arith.constant dense<0.000000e+00> : vector<1024x128xf32>
    %52 = tpu.matmul %51, %49, %cst_25 {dimension_numbers = #tpu.dot_dimension_numbers<[1], [0], [0], [1], [0, 0, 1, 1], [], []>} : vector<1024x128xbf16>, vector<128x128xbf16>, vector<1024x128xf32> -> vector<1024x128xf32>
    %53 = vector.broadcast %50 : vector<1x128xf32> to vector<1024x128xf32>
    %54 = arith.addf %52, %53 : vector<1024x128xf32>
    %cst_26 = arith.constant dense<0xFF800000> : vector<1024xf32>
    %55 = vector.multi_reduction <maximumf>, %54, %cst_26 [1] : vector<1024x128xf32> to vector<1024xf32>
    %56 = vector.shape_cast %55 : vector<1024xf32> to vector<1024x1xf32>
    %57 = vector.broadcast %56 : vector<1024x1xf32> to vector<1024x128xf32>
    %58 = arith.subf %54, %57 : vector<1024x128xf32>
    %59 = math.exp %58 : vector<1024x128xf32>
    %cst_27 = arith.constant dense<0.000000e+00> : vector<1024xf32>
    %60 = vector.multi_reduction <add>, %59, %cst_27 [1] : vector<1024x128xf32> to vector<1024xf32>
    %61 = vector.shape_cast %60 : vector<1024xf32> to vector<1024x1xf32>
    %62 = tpu.reciprocal %61 {approx = true} : vector<1024x1xf32> -> vector<1024x1xf32>
    %63 = vector.broadcast %62 : vector<1024x1xf32> to vector<1024x128xf32>
    %64 = arith.mulf %59, %63 : vector<1024x128xf32>
    %c0_28 = arith.constant 0 : index
    %c0_29 = arith.constant 0 : index
    %65 = vector.load %arg10[%c0_28, %c0_29] : memref<128x128xbf16, #tpu.memory_space<vmem>>, vector<128x128xbf16>
    %c0_30 = arith.constant 0 : index
    %c0_31 = arith.constant 0 : index
    %66 = vector.load %arg11[%c0_30, %c0_31] : memref<1x128xf32, #tpu.memory_space<vmem>>, vector<1x128xf32>
    %67 = arith.truncf %64 : vector<1024x128xf32> to vector<1024x128xbf16>
    %cst_32 = arith.constant dense<0.000000e+00> : vector<1024x128xf32>
    %68 = tpu.matmul %67, %65, %cst_32 {dimension_numbers = #tpu.dot_dimension_numbers<[1], [0], [0], [1], [0, 0, 1, 1], [], []>} : vector<1024x128xbf16>, vector<128x128xbf16>, vector<1024x128xf32> -> vector<1024x128xf32>
    %69 = vector.broadcast %66 : vector<1x128xf32> to vector<1024x128xf32>
    %70 = arith.addf %68, %69 : vector<1024x128xf32>
    %cst_33 = arith.constant dense<0xFF800000> : vector<1024xf32>
    %71 = vector.multi_reduction <maximumf>, %70, %cst_33 [1] : vector<1024x128xf32> to vector<1024xf32>
    %72 = vector.shape_cast %71 : vector<1024xf32> to vector<1024x1xf32>
    %73 = vector.broadcast %72 : vector<1024x1xf32> to vector<1024x128xf32>
    %74 = arith.subf %70, %73 : vector<1024x128xf32>
    %75 = math.exp %74 : vector<1024x128xf32>
    %cst_34 = arith.constant dense<0.000000e+00> : vector<1024xf32>
    %76 = vector.multi_reduction <add>, %75, %cst_34 [1] : vector<1024x128xf32> to vector<1024xf32>
    %77 = vector.shape_cast %76 : vector<1024xf32> to vector<1024x1xf32>
    %78 = tpu.reciprocal %77 {approx = true} : vector<1024x1xf32> -> vector<1024x1xf32>
    %79 = vector.broadcast %78 : vector<1024x1xf32> to vector<1024x128xf32>
    %80 = arith.mulf %75, %79 : vector<1024x128xf32>
    %c0_35 = arith.constant 0 : index
    %c0_36 = arith.constant 0 : index
    %81 = vector.load %arg12[%c0_35, %c0_36] : memref<128x128xbf16, #tpu.memory_space<vmem>>, vector<128x128xbf16>
    %c0_37 = arith.constant 0 : index
    %c0_38 = arith.constant 0 : index
    %82 = vector.load %arg13[%c0_37, %c0_38] : memref<1x128xf32, #tpu.memory_space<vmem>>, vector<1x128xf32>
    %83 = arith.truncf %80 : vector<1024x128xf32> to vector<1024x128xbf16>
    %cst_39 = arith.constant dense<0.000000e+00> : vector<1024x128xf32>
    %84 = tpu.matmul %83, %81, %cst_39 {dimension_numbers = #tpu.dot_dimension_numbers<[1], [0], [0], [1], [0, 0, 1, 1], [], []>} : vector<1024x128xbf16>, vector<128x128xbf16>, vector<1024x128xf32> -> vector<1024x128xf32>
    %85 = vector.broadcast %82 : vector<1x128xf32> to vector<1024x128xf32>
    %86 = arith.addf %84, %85 : vector<1024x128xf32>
    %c0_40 = arith.constant 0 : index
    %c0_41 = arith.constant 0 : index
    %87 = vector.load %arg14[%c0_40, %c0_41] : memref<1024x128xf32, #tpu.memory_space<vmem>>, vector<1024x128xf32>
    tpu.vector_store %arg14[%c0_40, %c0_41], %86 {strides = array<i32>} : memref<1024x128xf32, #tpu.memory_space<vmem>>, vector<1024x128xf32>,
    return
  }
  func.func @transform_0(%arg0: i32) -> (i32, i32) {
    %c0_i32 = arith.constant 0 : i32
    %c0_i32_0 = arith.constant 0 : i32
    return %arg0, %c0_i32 : i32, i32
  }
  func.func @transform_1(%arg0: i32) -> (i32, i32) {
    %c0_i32 = arith.constant 0 : i32
    %c0_i32_0 = arith.constant 0 : i32
    %c0_i32_1 = arith.constant 0 : i32
    return %c0_i32, %c0_i32_0 : i32, i32
  }
  func.func @transform_2(%arg0: i32) -> (i32, i32) {
    %c0_i32 = arith.constant 0 : i32
    %c0_i32_0 = arith.constant 0 : i32
    %c0_i32_1 = arith.constant 0 : i32
    return %c0_i32, %c0_i32_0 : i32, i32
  }
  func.func @transform_3(%arg0: i32) -> (i32, i32) {
    %c0_i32 = arith.constant 0 : i32
    %c0_i32_0 = arith.constant 0 : i32
    %c0_i32_1 = arith.constant 0 : i32
    return %c0_i32, %c0_i32_0 : i32, i32
  }
  func.func @transform_4(%arg0: i32) -> (i32, i32) {
    %c0_i32 = arith.constant 0 : i32
    %c0_i32_0 = arith.constant 0 : i32
    %c0_i32_1 = arith.constant 0 : i32
    return %c0_i32, %c0_i32_0 : i32, i32
  }
  func.func @transform_5(%arg0: i32) -> (i32, i32) {
    %c0_i32 = arith.constant 0 : i32
    %c0_i32_0 = arith.constant 0 : i32
    %c0_i32_1 = arith.constant 0 : i32
    return %c0_i32, %c0_i32_0 : i32, i32
  }
  func.func @transform_6(%arg0: i32) -> (i32, i32) {
    %c0_i32 = arith.constant 0 : i32
    %c0_i32_0 = arith.constant 0 : i32
    %c0_i32_1 = arith.constant 0 : i32
    return %c0_i32, %c0_i32_0 : i32, i32
  }
  func.func @transform_7(%arg0: i32) -> (i32, i32) {
    %c0_i32 = arith.constant 0 : i32
    %c0_i32_0 = arith.constant 0 : i32
    %c0_i32_1 = arith.constant 0 : i32
    return %c0_i32, %c0_i32_0 : i32, i32
  }
  func.func @transform_8(%arg0: i32) -> (i32, i32) {
    %c0_i32 = arith.constant 0 : i32
    %c0_i32_0 = arith.constant 0 : i32
    %c0_i32_1 = arith.constant 0 : i32
    return %c0_i32, %c0_i32_0 : i32, i32
  }
  func.func @transform_9(%arg0: i32) -> (i32, i32) {
    %c0_i32 = arith.constant 0 : i32
    %c0_i32_0 = arith.constant 0 : i32
    %c0_i32_1 = arith.constant 0 : i32
    return %c0_i32, %c0_i32_0 : i32, i32
  }
  func.func @transform_10(%arg0: i32) -> (i32, i32) {
    %c0_i32 = arith.constant 0 : i32
    %c0_i32_0 = arith.constant 0 : i32
    %c0_i32_1 = arith.constant 0 : i32
    return %c0_i32, %c0_i32_0 : i32, i32
  }
  func.func @transform_11(%arg0: i32) -> (i32, i32) {
    %c0_i32 = arith.constant 0 : i32
    %c0_i32_0 = arith.constant 0 : i32
    %c0_i32_1 = arith.constant 0 : i32
    return %c0_i32, %c0_i32_0 : i32, i32
  }
  func.func @transform_12(%arg0: i32) -> (i32, i32) {
    %c0_i32 = arith.constant 0 : i32
    %c0_i32_0 = arith.constant 0 : i32
    %c0_i32_1 = arith.constant 0 : i32
    return %c0_i32, %c0_i32_0 : i32, i32
  }
  func.func @transform_13(%arg0: i32) -> (i32, i32) {
    %c0_i32 = arith.constant 0 : i32
    %c0_i32_0 = arith.constant 0 : i32
    return %arg0, %c0_i32 : i32, i32
  }
}

</mosaic_0001>

<llo_original>
// kernel: tpu_custom_call.1
$region0: #{tpu_custom_call.1}
  #allocation0 [shape = 'u32[]', space=smem, size = 0x4, offset = 0x4, fixed_abs, tag = 'smem constant byte address 0x4 - core index']
  #allocation1 [shape = 'u32[144,128]{1,0:T(1,128)}', space=vmem, size = 0x12000, scoped, tag = 'internal scratch']
  %s0 = inlined_call_operand.vmem [shape: f32[1024,8], index: 0, kind: input, shape index: {}]
  %s1 = inlined_call_operand.vmem [shape: bf16[8,128], index: 1, kind: input, shape index: {}]
  %s2 = inlined_call_operand.vmem [shape: f32[1,128], index: 2, kind: input, shape index: {}]
  %s3 = inlined_call_operand.vmem [shape: bf16[128,128], index: 3, kind: input, shape index: {}]
  %s4 = inlined_call_operand.vmem [shape: f32[1,128], index: 4, kind: input, shape index: {}]
  %s5 = inlined_call_operand.vmem [shape: bf16[128,128], index: 5, kind: input, shape index: {}]
  %s6 = inlined_call_operand.vmem [shape: f32[1,128], index: 6, kind: input, shape index: {}]
  %s7 = inlined_call_operand.vmem [shape: bf16[128,128], index: 7, kind: input, shape index: {}]
  %s8 = inlined_call_operand.vmem [shape: f32[1,128], index: 8, kind: input, shape index: {}]
  %s9 = inlined_call_operand.vmem [shape: bf16[128,128], index: 9, kind: input, shape index: {}]
  %s10 = inlined_call_operand.vmem [shape: f32[1,128], index: 10, kind: input, shape index: {}]
  %s11 = inlined_call_operand.vmem [shape: bf16[128,128], index: 11, kind: input, shape index: {}]
  %s12 = inlined_call_operand.vmem [shape: f32[1,128], index: 12, kind: input, shape index: {}]
  %s13 = inlined_call_operand.hbm [shape: f32[1024,128], index: 13, kind: output, shape index: {}]
  %s14 = sld [smem:[#allocation0]]
  $region62: #{tpu_custom_call.1} parent=0
    _
  %s16 = ssub.s32 1, %s14
  %s17 = scalar_select 0, %s16, %s14
  $region1: #{tpu_custom_call.1} parent=0
    #allocation2 [shape = 'u8[524288]{0}', space=vmem, size = 0x80000, scoped, tag = 'output window, operand 0, single buffered']
    #allocation3 [shape = 's32[1]{0}', space=sflag, size = 0x4, scoped, tag = 'scoped memory for tpu_custom_call.1']
    %18 = vsyncpa [#allocation3], 0
    // Predicated region
    $region2: #{tpu_custom_call.1} parent=1 // pred_check
      _
    $region3: #{tpu_custom_call.1} parent=1 // pred_check_branch
      %20 = sbr.rel (0) target = $region5
    $region4: #{tpu_custom_call.1} parent=1 // pred_region
      _
    $region5: #{tpu_custom_call.1} parent=1 // pred_fallthru
      _
    // Predicated region
    $region6: #{tpu_custom_call.1} parent=1 // pred_check
      _
    $region7: #{tpu_custom_call.1} parent=1 // pred_check_branch
      %22 = sbr.rel (0) target = $region9
    $region8: #{tpu_custom_call.1} parent=1 // pred_region
      _
    $region9: #{tpu_custom_call.1} parent=1 // pred_fallthru
      _
    // Predicated region
    $region10: #{tpu_custom_call.1} parent=1 // pred_check
      _
    $region11: #{tpu_custom_call.1} parent=1 // pred_check_branch
      %24 = sbr.rel (0) target = $region13
    $region12: #{tpu_custom_call.1} parent=1 // pred_region
      _
    $region13: #{tpu_custom_call.1} parent=1 // pred_fallthru
      _
    // Predicated region
    $region14: #{tpu_custom_call.1} parent=1 // pred_check
      _
    $region15: #{tpu_custom_call.1} parent=1 // pred_check_branch
      %26 = sbr.rel (0) target = $region17
    $region16: #{tpu_custom_call.1} parent=1 // pred_region
      _
    $region17: #{tpu_custom_call.1} parent=1 // pred_fallthru
      _
    // Predicated region
    $region18: #{tpu_custom_call.1} parent=1 // pred_check
      _
    $region19: #{tpu_custom_call.1} parent=1 // pred_check_branch
      %28 = sbr.rel (0) target = $region21
    $region20: #{tpu_custom_call.1} parent=1 // pred_region
      _
    $region21: #{tpu_custom_call.1} parent=1 // pred_fallthru
      _
    // Predicated region
    $region22: #{tpu_custom_call.1} parent=1 // pred_check
      _
    $region23: #{tpu_custom_call.1} parent=1 // pred_check_branch
      %30 = sbr.rel (0) target = $region25
    $region24: #{tpu_custom_call.1} parent=1 // pred_region
      _
    $region25: #{tpu_custom_call.1} parent=1 // pred_fallthru
      _
    // Predicated region
    $region26: #{tpu_custom_call.1} parent=1 // pred_check
      _
    $region27: #{tpu_custom_call.1} parent=1 // pred_check_branch
      %32 = sbr.rel (0) target = $region29
    $region28: #{tpu_custom_call.1} parent=1 // pred_region
      _
    $region29: #{tpu_custom_call.1} parent=1 // pred_fallthru
      _
    // Predicated region
    $region30: #{tpu_custom_call.1} parent=1 // pred_check
      _
    $region31: #{tpu_custom_call.1} parent=1 // pred_check_branch
      %34 = sbr.rel (0) target = $region33
    $region32: #{tpu_custom_call.1} parent=1 // pred_region
      _
    $region33: #{tpu_custom_call.1} parent=1 // pred_fallthru
      _
    // Predicated region
    $region34: #{tpu_custom_call.1} parent=1 // pred_check
      _
    $region35: #{tpu_custom_call.1} parent=1 // pred_check_branch
      %36 = sbr.rel (0) target = $region37
    $region36: #{tpu_custom_call.1} parent=1 // pred_region
      _
    $region37: #{tpu_custom_call.1} parent=1 // pred_fallthru
      _
    // Predicated region
    $region38: #{tpu_custom_call.1} parent=1 // pred_check
      _
    $region39: #{tpu_custom_call.1} parent=1 // pred_check_branch
      %38 = sbr.rel (0) target = $region41
    $region40: #{tpu_custom_call.1} parent=1 // pred_region
      _
    $region41: #{tpu_custom_call.1} parent=1 // pred_fallthru
      _
    // Predicated region
    $region42: #{tpu_custom_call.1} parent=1 // pred_check
      _
    $region43: #{tpu_custom_call.1} parent=1 // pred_check_branch
      %40 = sbr.rel (0) target = $region45
    $region44: #{tpu_custom_call.1} parent=1 // pred_region
      _
    $region45: #{tpu_custom_call.1} parent=1 // pred_fallthru
      _
    // Predicated region
    $region46: #{tpu_custom_call.1} parent=1 // pred_check
      _
    $region47: #{tpu_custom_call.1} parent=1 // pred_check_branch
      %42 = sbr.rel (0) target = $region49
    $region48: #{tpu_custom_call.1} parent=1 // pred_region
      _
    $region49: #{tpu_custom_call.1} parent=1 // pred_fallthru
      _
    // Predicated region
    $region50: #{tpu_custom_call.1} parent=1 // pred_check
      _
    $region51: #{tpu_custom_call.1} parent=1 // pred_check_branch
      %44 = sbr.rel (0) target = $region53
    $region52: #{tpu_custom_call.1} parent=1 // pred_region
      _
    $region53: #{tpu_custom_call.1} parent=1 // pred_fallthru
      _
    %v46 = vld [vmem:[%s0] sm:$0xff]
    %v47 = vld [vmem:[%s0 + $0x8] sm:$0xff]
    %v48 = vld [vmem:[%s0 + $0x10] sm:$0xff]
    %v49 = vld [vmem:[%s0 + $0x18] sm:$0xff]
    %v50 = vld [vmem:[%s0 + $0x20] sm:$0xff]
    %v51 = vld [vmem:[%s0 + $0x28] sm:$0xff]
    %v52 = vld [vmem:[%s0 + $0x30] sm:$0xff]
    %v53 = vld [vmem:[%s0 + $0x38] sm:$0xff]
    %v54 = vld [vmem:[%s0 + $0x40] sm:$0xff]
    %v55 = vld [vmem:[%s0 + $0x48] sm:$0xff]
    %v56 = vld [vmem:[%s0 + $0x50] sm:$0xff]
    %v57 = vld [vmem:[%s0 + $0x58] sm:$0xff]
    %v58 = vld [vmem:[%s0 + $0x60] sm:$0xff]
    %v59 = vld [vmem:[%s0 + $0x68] sm:$0xff]
    %v60 = vld [vmem:[%s0 + $0x70] sm:$0xff]
    %v61 = vld [vmem:[%s0 + $0x78] sm:$0xff]
    %v62 = vld [vmem:[%s0 + $0x80] sm:$0xff]
    %v63 = vld [vmem:[%s0 + $0x88] sm:$0xff]
    %v64 = vld [vmem:[%s0 + $0x90] sm:$0xff]
    %v65 = vld [vmem:[%s0 + $0x98] sm:$0xff]
    %v66 = vld [vmem:[%s0 + $0xa0] sm:$0xff]
    %v67 = vld [vmem:[%s0 + $0xa8] sm:$0xff]
    %v68 = vld [vmem:[%s0 + $0xb0] sm:$0xff]
    %v69 = vld [vmem:[%s0 + $0xb8] sm:$0xff]
    %v70 = vld [vmem:[%s0 + $0xc0] sm:$0xff]
    %v71 = vld [vmem:[%s0 + $0xc8] sm:$0xff]
    %v72 = vld [vmem:[%s0 + $0xd0] sm:$0xff]
    %v73 = vld [vmem:[%s0 + $0xd8] sm:$0xff]
    %v74 = vld [vmem:[%s0 + $0xe0] sm:$0xff]
    %v75 = vld [vmem:[%s0 + $0xe8] sm:$0xff]
    %v76 = vld [vmem:[%s0 + $0xf0] sm:$0xff]
    %v77 = vld [vmem:[%s0 + $0xf8] sm:$0xff]
    %v78 = vld [vmem:[%s0 + $0x100] sm:$0xff]
    %v79 = vld [vmem:[%s0 + $0x108] sm:$0xff]
    %v80 = vld [vmem:[%s0 + $0x110] sm:$0xff]
    %v81 = vld [vmem:[%s0 + $0x118] sm:$0xff]
    %v82 = vld [vmem:[%s0 + $0x120] sm:$0xff]
    %v83 = vld [vmem:[%s0 + $0x128] sm:$0xff]
    %v84 = vld [vmem:[%s0 + $0x130] sm:$0xff]
    %v85 = vld [vmem:[%s0 + $0x138] sm:$0xff]
    %v86 = vld [vmem:[%s0 + $0x140] sm:$0xff]
    %v87 = vld [vmem:[%s0 + $0x148] sm:$0xff]
    %v88 = vld [vmem:[%s0 + $0x150] sm:$0xff]
    %v89 = vld [vmem:[%s0 + $0x158] sm:$0xff]
    %v90 = vld [vmem:[%s0 + $0x160] sm:$0xff]
    %v91 = vld [vmem:[%s0 + $0x168] sm:$0xff]
    %v92 = vld [vmem:[%s0 + $0x170] sm:$0xff]
    %v93 = vld [vmem:[%s0 + $0x178] sm:$0xff]
    %v94 = vld [vmem:[%s0 + $0x180] sm:$0xff]
    %v95 = vld [vmem:[%s0 + $0x188] sm:$0xff]
    %v96 = vld [vmem:[%s0 + $0x190] sm:$0xff]
    %v97 = vld [vmem:[%s0 + $0x198] sm:$0xff]
    %v98 = vld [vmem:[%s0 + $0x1a0] sm:$0xff]
    %v99 = vld [vmem:[%s0 + $0x1a8] sm:$0xff]
    %v100 = vld [vmem:[%s0 + $0x1b0] sm:$0xff]
    %v101 = vld [vmem:[%s0 + $0x1b8] sm:$0xff]
    %v102 = vld [vmem:[%s0 + $0x1c0] sm:$0xff]
    %v103 = vld [vmem:[%s0 + $0x1c8] sm:$0xff]
    %v104 = vld [vmem:[%s0 + $0x1d0] sm:$0xff]
    %v105 = vld [vmem:[%s0 + $0x1d8] sm:$0xff]
    %v106 = vld [vmem:[%s0 + $0x1e0] sm:$0xff]
    %v107 = vld [vmem:[%s0 + $0x1e8] sm:$0xff]
    %v108 = vld [vmem:[%s0 + $0x1f0] sm:$0xff]
    %v109 = vld [vmem:[%s0 + $0x1f8] sm:$0xff]
    %v110 = vld [vmem:[%s0 + $0x200] sm:$0xff]
    %v111 = vld [vmem:[%s0 + $0x208] sm:$0xff]
    %v112 = vld [vmem:[%s0 + $0x210] sm:$0xff]
    %v113 = vld [vmem:[%s0 + $0x218] sm:$0xff]
    %v114 = vld [vmem:[%s0 + $0x220] sm:$0xff]
    %v115 = vld [vmem:[%s0 + $0x228] sm:$0xff]
    %v116 = vld [vmem:[%s0 + $0x230] sm:$0xff]
    %v117 = vld [vmem:[%s0 + $0x238] sm:$0xff]
    %v118 = vld [vmem:[%s0 + $0x240] sm:$0xff]
    %v119 = vld [vmem:[%s0 + $0x248] sm:$0xff]
    %v120 = vld [vmem:[%s0 + $0x250] sm:$0xff]
    %v121 = vld [vmem:[%s0 + $0x258] sm:$0xff]
    %v122 = vld [vmem:[%s0 + $0x260] sm:$0xff]
    %v123 = vld [vmem:[%s0 + $0x268] sm:$0xff]
    %v124 = vld [vmem:[%s0 + $0x270] sm:$0xff]
    %v125 = vld [vmem:[%s0 + $0x278] sm:$0xff]
    %v126 = vld [vmem:[%s0 + $0x280] sm:$0xff]
    %v127 = vld [vmem:[%s0 + $0x288] sm:$0xff]
    %v128 = vld [vmem:[%s0 + $0x290] sm:$0xff]
    %v129 = vld [vmem:[%s0 + $0x298] sm:$0xff]
    %v130 = vld [vmem:[%s0 + $0x2a0] sm:$0xff]
    %v131 = vld [vmem:[%s0 + $0x2a8] sm:$0xff]
    %v132 = vld [vmem:[%s0 + $0x2b0] sm:$0xff]
    %v133 = vld [vmem:[%s0 + $0x2b8] sm:$0xff]
    %v134 = vld [vmem:[%s0 + $0x2c0] sm:$0xff]
    %v135 = vld [vmem:[%s0 + $0x2c8] sm:$0xff]
    %v136 = vld [vmem:[%s0 + $0x2d0] sm:$0xff]
    %v137 = vld [vmem:[%s0 + $0x2d8] sm:$0xff]
    %v138 = vld [vmem:[%s0 + $0x2e0] sm:$0xff]
    %v139 = vld [vmem:[%s0 + $0x2e8] sm:$0xff]
    %v140 = vld [vmem:[%s0 + $0x2f0] sm:$0xff]
    %v141 = vld [vmem:[%s0 + $0x2f8] sm:$0xff]
    %v142 = vld [vmem:[%s0 + $0x300] sm:$0xff]
    %v143 = vld [vmem:[%s0 + $0x308] sm:$0xff]
    %v144 = vld [vmem:[%s0 + $0x310] sm:$0xff]
    %v145 = vld [vmem:[%s0 + $0x318] sm:$0xff]
    %v146 = vld [vmem:[%s0 + $0x320] sm:$0xff]
    %v147 = vld [vmem:[%s0 + $0x328] sm:$0xff]
    %v148 = vld [vmem:[%s0 + $0x330] sm:$0xff]
    %v149 = vld [vmem:[%s0 + $0x338] sm:$0xff]
    %v150 = vld [vmem:[%s0 + $0x340] sm:$0xff]
    %v151 = vld [vmem:[%s0 + $0x348] sm:$0xff]
    %v152 = vld [vmem:[%s0 + $0x350] sm:$0xff]
    %v153 = vld [vmem:[%s0 + $0x358] sm:$0xff]
    %v154 = vld [vmem:[%s0 + $0x360] sm:$0xff]
    %v155 = vld [vmem:[%s0 + $0x368] sm:$0xff]
    %v156 = vld [vmem:[%s0 + $0x370] sm:$0xff]
    %v157 = vld [vmem:[%s0 + $0x378] sm:$0xff]
    %v158 = vld [vmem:[%s0 + $0x380] sm:$0xff]
    %v159 = vld [vmem:[%s0 + $0x388] sm:$0xff]
    %v160 = vld [vmem:[%s0 + $0x390] sm:$0xff]
    %v161 = vld [vmem:[%s0 + $0x398] sm:$0xff]
    %v162 = vld [vmem:[%s0 + $0x3a0] sm:$0xff]
    %v163 = vld [vmem:[%s0 + $0x3a8] sm:$0xff]
    %v164 = vld [vmem:[%s0 + $0x3b0] sm:$0xff]
    %v165 = vld [vmem:[%s0 + $0x3b8] sm:$0xff]
    %v166 = vld [vmem:[%s0 + $0x3c0] sm:$0xff]
    %v167 = vld [vmem:[%s0 + $0x3c8] sm:$0xff]
    %v168 = vld [vmem:[%s0 + $0x3d0] sm:$0xff]
    %v169 = vld [vmem:[%s0 + $0x3d8] sm:$0xff]
    %v170 = vld [vmem:[%s0 + $0x3e0] sm:$0xff]
    %v171 = vld [vmem:[%s0 + $0x3e8] sm:$0xff]
    %v172 = vld [vmem:[%s0 + $0x3f0] sm:$0xff]
    %v173 = vld [vmem:[%s0 + $0x3f8] sm:$0xff]
    %v174 = vld [vmem:[%s1] sm:$0xf]
    %v175 = vld [vmem:[%s2] sm:$0x1]
    %v176 = vpack.c.bf16 %v47, %v46
    %v177 = vpack.c.bf16 %v49, %v48
    %v178 = vpack.c.bf16 %v51, %v50
    %v179 = vpack.c.bf16 %v53, %v52
    %v180 = vpack.c.bf16 %v55, %v54
    %v181 = vpack.c.bf16 %v57, %v56
    %v182 = vpack.c.bf16 %v59, %v58
    %v183 = vpack.c.bf16 %v61, %v60
    %v184 = vpack.c.bf16 %v63, %v62
    %v185 = vpack.c.bf16 %v65, %v64
    %v186 = vpack.c.bf16 %v67, %v66
    %v187 = vpack.c.bf16 %v69, %v68
    %v188 = vpack.c.bf16 %v71, %v70
    %v189 = vpack.c.bf16 %v73, %v72
    %v190 = vpack.c.bf16 %v75, %v74
    %v191 = vpack.c.bf16 %v77, %v76
    %v192 = vpack.c.bf16 %v79, %v78
    %v193 = vpack.c.bf16 %v81, %v80
    %v194 = vpack.c.bf16 %v83, %v82
    %v195 = vpack.c.bf16 %v85, %v84
    %v196 = vpack.c.bf16 %v87, %v86
    %v197 = vpack.c.bf16 %v89, %v88
    %v198 = vpack.c.bf16 %v91, %v90
    %v199 = vpack.c.bf16 %v93, %v92
    %v200 = vpack.c.bf16 %v95, %v94
    %v201 = vpack.c.bf16 %v97, %v96
    %v202 = vpack.c.bf16 %v99, %v98
    %v203 = vpack.c.bf16 %v101, %v100
    %v204 = vpack.c.bf16 %v103, %v102
    %v205 = vpack.c.bf16 %v105, %v104
    %v206 = vpack.c.bf16 %v107, %v106
    %v207 = vpack.c.bf16 %v109, %v108
    %v208 = vpack.c.bf16 %v111, %v110
    %v209 = vpack.c.bf16 %v113, %v112
    %v210 = vpack.c.bf16 %v115, %v114
    %v211 = vpack.c.bf16 %v117, %v116
    %v212 = vpack.c.bf16 %v119, %v118
    %v213 = vpack.c.bf16 %v121, %v120
    %v214 = vpack.c.bf16 %v123, %v122
    %v215 = vpack.c.bf16 %v125, %v124
    %v216 = vpack.c.bf16 %v127, %v126
    %v217 = vpack.c.bf16 %v129, %v128
    %v218 = vpack.c.bf16 %v131, %v130
    %v219 = vpack.c.bf16 %v133, %v132
    %v220 = vpack.c.bf16 %v135, %v134
    %v221 = vpack.c.bf16 %v137, %v136
    %v222 = vpack.c.bf16 %v139, %v138
    %v223 = vpack.c.bf16 %v141, %v140
    %v224 = vpack.c.bf16 %v143, %v142
    %v225 = vpack.c.bf16 %v145, %v144
    %v226 = vpack.c.bf16 %v147, %v146
    %v227 = vpack.c.bf16 %v149, %v148
    %v228 = vpack.c.bf16 %v151, %v150
    %v229 = vpack.c.bf16 %v153, %v152
    %v230 = vpack.c.bf16 %v155, %v154
    %v231 = vpack.c.bf16 %v157, %v156
    %v232 = vpack.c.bf16 %v159, %v158
    %v233 = vpack.c.bf16 %v161, %v160
    %v234 = vpack.c.bf16 %v163, %v162
    %v235 = vpack.c.bf16 %v165, %v164
    %v236 = vpack.c.bf16 %v167, %v166
    %v237 = vpack.c.bf16 %v169, %v168
    %v238 = vpack.c.bf16 %v171, %v170
    %v239 = vpack.c.bf16 %v173, %v172
    %v241 = vlaneseq
    %v242 = vshrl.u32 %v241, 7
    %v243 = vsub.s32 0, %v242
    %v244 = vrot.slane %v175, %v243
    %vm246 = vcmask 64512
    %v248 = vsel %vm246, %v176, 0
    %v251 = vsel %vm246, %v177, 0
    %v254 = vsel %vm246, %v178, 0
    %v257 = vsel %vm246, %v179, 0
    %v260 = vsel %vm246, %v180, 0
    %v263 = vsel %vm246, %v181, 0
    %v266 = vsel %vm246, %v182, 0
    %v269 = vsel %vm246, %v183, 0
    %v272 = vsel %vm246, %v184, 0
    %v275 = vsel %vm246, %v185, 0
    %v278 = vsel %vm246, %v186, 0
    %v281 = vsel %vm246, %v187, 0
    %v284 = vsel %vm246, %v188, 0
    %v287 = vsel %vm246, %v189, 0
    %v290 = vsel %vm246, %v190, 0
    %v293 = vsel %vm246, %v191, 0
    %v296 = vsel %vm246, %v192, 0
    %v299 = vsel %vm246, %v193, 0
    %v302 = vsel %vm246, %v194, 0
    %v305 = vsel %vm246, %v195, 0
    %v308 = vsel %vm246, %v196, 0
    %v311 = vsel %vm246, %v197, 0
    %v314 = vsel %vm246, %v198, 0
    %v317 = vsel %vm246, %v199, 0
    %v320 = vsel %vm246, %v200, 0
    %v323 = vsel %vm246, %v201, 0
    %v326 = vsel %vm246, %v202, 0
    %v329 = vsel %vm246, %v203, 0
    %v332 = vsel %vm246, %v204, 0
    %v335 = vsel %vm246, %v205, 0
    %v338 = vsel %vm246, %v206, 0
    %v341 = vsel %vm246, %v207, 0
    %v344 = vsel %vm246, %v208, 0
    %v347 = vsel %vm246, %v209, 0
    %v350 = vsel %vm246, %v210, 0
    %v353 = vsel %vm246, %v211, 0
    %v356 = vsel %vm246, %v212, 0
    %v359 = vsel %vm246, %v213, 0
    %v362 = vsel %vm246, %v214, 0
    %v365 = vsel %vm246, %v215, 0
    %v368 = vsel %vm246, %v216, 0
    %v371 = vsel %vm246, %v217, 0
    %v374 = vsel %vm246, %v218, 0
    %v377 = vsel %vm246, %v219, 0
    %v380 = vsel %vm246, %v220, 0
    %v383 = vsel %vm246, %v221, 0
    %v386 = vsel %vm246, %v222, 0
    %v389 = vsel %vm246, %v223, 0
    %v392 = vsel %vm246, %v224, 0
    %v395 = vsel %vm246, %v225, 0
    %v398 = vsel %vm246, %v226, 0
    %v401 = vsel %vm246, %v227, 0
    %v404 = vsel %vm246, %v228, 0
    %v407 = vsel %vm246, %v229, 0
    %v410 = vsel %vm246, %v230, 0
    %v413 = vsel %vm246, %v231, 0
    %v416 = vsel %vm246, %v232, 0
    %v419 = vsel %vm246, %v233, 0
    %v422 = vsel %vm246, %v234, 0
    %v425 = vsel %vm246, %v235, 0
    %v428 = vsel %vm246, %v236, 0
    %v431 = vsel %vm246, %v237, 0
    %v434 = vsel %vm246, %v238, 0
    %v437 = vsel %vm246, %v239, 0
    %vm439 = vcmask 1043456
    %v441 = vsel %vm439, %v174, 0
    %443 = vmatprep.subr.bf16.mxu0 0
    %444 = vmatpush1.bf16.msra.mxu0 %v441
    %445 = vmatprep.subr.bf16.mxu0 0
    %446 = vmatpush1.bf16.msra.mxu0 0
    %447 = vmatprep.subr.bf16.mxu0 0
    %448 = vmatpush1.bf16.msra.mxu0 0
    %449 = vmatprep.subr.bf16.mxu0 0
    %450 = vmatpush1.bf16.msra.mxu0 0
    %451 = vmatprep.subr.bf16.mxu0 0
    %452 = vmatpush1.bf16.msra.mxu0 0
    %453 = vmatprep.subr.bf16.mxu0 0
    %454 = vmatpush1.bf16.msra.mxu0 0
    %455 = vmatprep.subr.bf16.mxu0 0
    %456 = vmatpush1.bf16.msra.mxu0 0
    %457 = vmatprep.subr.bf16.mxu0 0
    %458 = vmatpush1.bf16.msra.mxu0 0
    %459 = vmatprep.subr.bf16.mxu0 0
    %460 = vmatpush1.bf16.msra.mxu0 0
    %461 = vmatprep.subr.bf16.mxu0 0
    %462 = vmatpush1.bf16.msra.mxu0 0
    %463 = vmatprep.subr.bf16.mxu0 0
    %464 = vmatpush1.bf16.msra.mxu0 0
    %465 = vmatprep.subr.bf16.mxu0 0
    %466 = vmatpush1.bf16.msra.mxu0 0
    %467 = vmatprep.subr.bf16.mxu0 0
    %468 = vmatpush1.bf16.msra.mxu0 0
    %469 = vmatprep.subr.bf16.mxu0 0
    %470 = vmatpush1.bf16.msra.mxu0 0
    %471 = vmatprep.subr.bf16.mxu0 0
    %472 = vmatpush1.bf16.msra.mxu0 0
    %473 = vmatprep.subr.bf16.mxu0 0
    %474 = vmatpush1.bf16.msra.mxu0 0
    %475 = vmatprep.mubr.bf16.mxu0 0
    %476 = vmatmul.mubr.bf16.gmra.mrb[0].mxu0 %v248
    %v477 = vpop.f32.mrb[0].mxu0
    %v478 = vadd.f32 %v244, %v477
    %v479 = vpop.f32.mrb[0].mxu0
    %v480 = vpop.f32.mrb[0].mxu0
    %v481 = vadd.f32 %v244, %v480
    %v482 = vpop.f32.mrb[0].mxu0
    %483 = vmatprep.mubr.bf16.mxu0 0
    %484 = vmatmul.mubr.bf16.gmra.mrb[0].mxu0 %v251
    %v485 = vpop.f32.mrb[0].mxu0
    %v486 = vadd.f32 %v244, %v485
    %v487 = vpop.f32.mrb[0].mxu0
    %v488 = vpop.f32.mrb[0].mxu0
    %v489 = vadd.f32 %v244, %v488
    %v490 = vpop.f32.mrb[0].mxu0
    %491 = vmatprep.mubr.bf16.mxu0 0
    %492 = vmatmul.mubr.bf16.gmra.mrb[0].mxu0 %v254
    %v493 = vpop.f32.mrb[0].mxu0
    %v494 = vadd.f32 %v244, %v493
    %v495 = vpop.f32.mrb[0].mxu0
    %v496 = vpop.f32.mrb[0].mxu0
    %v497 = vadd.f32 %v244, %v496
    %v498 = vpop.f32.mrb[0].mxu0
    %499 = vmatprep.mubr.bf16.mxu0 0
    %500 = vmatmul.mubr.bf16.gmra.mrb[0].mxu0 %v257
    %v501 = vpop.f32.mrb[0].mxu0
    %v502 = vadd.f32 %v244, %v501
    %v503 = vpop.f32.mrb[0].mxu0
    %v504 = vpop.f32.mrb[0].mxu0
    %v505 = vadd.f32 %v244, %v504
    %v506 = vpop.f32.mrb[0].mxu0
    %507 = vmatprep.mubr.bf16.mxu0 0
    %508 = vmatmul.mubr.bf16.gmra.mrb[0].mxu0 %v260
    %v509 = vpop.f32.mrb[0].mxu0
    %v510 = vadd.f32 %v244, %v509
    %v511 = vpop.f32.mrb[0].mxu0
    %v512 = vpop.f32.mrb[0].mxu0
    %v513 = vadd.f32 %v244, %v512
    %v514 = vpop.f32.mrb[0].mxu0
    %515 = vmatprep.mubr.bf16.mxu0 0
    %516 = vmatmul.mubr.bf16.gmra.mrb[0].mxu0 %v263
    %v517 = vpop.f32.mrb[0].mxu0
    %v518 = vadd.f32 %v244, %v517
    %v519 = vpop.f32.mrb[0].mxu0
    %v520 = vpop.f32.mrb[0].mxu0
    %v521 = vadd.f32 %v244, %v520
    %v522 = vpop.f32.mrb[0].mxu0
    %523 = vmatprep.mubr.bf16.mxu0 0
    %524 = vmatmul.mubr.bf16.gmra.mrb[0].mxu0 %v266
    %v525 = vpop.f32.mrb[0].mxu0
    %v526 = vadd.f32 %v244, %v525
    %v527 = vpop.f32.mrb[0].mxu0
    %v528 = vpop.f32.mrb[0].mxu0
    %v529 = vadd.f32 %v244, %v528
    %v530 = vpop.f32.mrb[0].mxu0
    %531 = vmatprep.mubr.bf16.mxu0 0
    %532 = vmatmul.mubr.bf16.gmra.mrb[0].mxu0 %v269
    %v533 = vpop.f32.mrb[0].mxu0
    %v534 = vadd.f32 %v244, %v533
    %v535 = vpop.f32.mrb[0].mxu0
    %v536 = vpop.f32.mrb[0].mxu0
    %v537 = vadd.f32 %v244, %v536
    %v538 = vpop.f32.mrb[0].mxu0
    %539 = vmatprep.mubr.bf16.mxu0 0
    %540 = vmatmul.mubr.bf16.gmra.mrb[0].mxu0 %v272
    %v541 = vpop.f32.mrb[0].mxu0
    %v542 = vadd.f32 %v244, %v541
    %v543 = vpop.f32.mrb[0].mxu0
    %v544 = vpop.f32.mrb[0].mxu0
    %v545 = vadd.f32 %v244, %v544
    %v546 = vpop.f32.mrb[0].mxu0
    %547 = vmatprep.mubr.bf16.mxu0 0
    %548 = vmatmul.mubr.bf16.gmra.mrb[0].mxu0 %v275
    %v549 = vpop.f32.mrb[0].mxu0
    %v550 = vadd.f32 %v244, %v549
    %v551 = vpop.f32.mrb[0].mxu0
    %v552 = vpop.f32.mrb[0].mxu0
    %v553 = vadd.f32 %v244, %v552
    %v554 = vpop.f32.mrb[0].mxu0
    %555 = vmatprep.mubr.bf16.mxu0 0
    %556 = vmatmul.mubr.bf16.gmra.mrb[0].mxu0 %v278
    %v557 = vpop.f32.mrb[0].mxu0
    %v558 = vadd.f32 %v244, %v557
    %v559 = vpop.f32.mrb[0].mxu0
    %v560 = vpop.f32.mrb[0].mxu0
    %v561 = vadd.f32 %v244, %v560
    %v562 = vpop.f32.mrb[0].mxu0
    %563 = vmatprep.mubr.bf16.mxu0 0
    %564 = vmatmul.mubr.bf16.gmra.mrb[0].mxu0 %v281
    %v565 = vpop.f32.mrb[0].mxu0
    %v566 = vadd.f32 %v244, %v565
    %v567 = vpop.f32.mrb[0].mxu0
    %v568 = vpop.f32.mrb[0].mxu0
    %v569 = vadd.f32 %v244, %v568
    %v570 = vpop.f32.mrb[0].mxu0
    %571 = vmatprep.mubr.bf16.mxu0 0
    %572 = vmatmul.mubr.bf16.gmra.mrb[0].mxu0 %v284
    %v573 = vpop.f32.mrb[0].mxu0
    %v574 = vadd.f32 %v244, %v573
    %v575 = vpop.f32.mrb[0].mxu0
    %v576 = vpop.f32.mrb[0].mxu0
    %v577 = vadd.f32 %v244, %v576
    %v578 = vpop.f32.mrb[0].mxu0
    %579 = vmatprep.mubr.bf16.mxu0 0
    %580 = vmatmul.mubr.bf16.gmra.mrb[0].mxu0 %v287
    %v581 = vpop.f32.mrb[0].mxu0
    %v582 = vadd.f32 %v244, %v581
    %v583 = vpop.f32.mrb[0].mxu0
    %v584 = vpop.f32.mrb[0].mxu0
    %v585 = vadd.f32 %v244, %v584
    %v586 = vpop.f32.mrb[0].mxu0
    %587 = vmatprep.mubr.bf16.mxu0 0
    %588 = vmatmul.mubr.bf16.gmra.mrb[0].mxu0 %v290
    %v589 = vpop.f32.mrb[0].mxu0
    %v590 = vadd.f32 %v244, %v589
    %v591 = vpop.f32.mrb[0].mxu0
    %v592 = vpop.f32.mrb[0].mxu0
    %v593 = vadd.f32 %v244, %v592
    %v594 = vpop.f32.mrb[0].mxu0
    %595 = vmatprep.mubr.bf16.mxu0 0
    %596 = vmatmul.mubr.bf16.gmra.mrb[0].mxu0 %v293
    %v597 = vpop.f32.mrb[0].mxu0
    %v598 = vadd.f32 %v244, %v597
    %v599 = vpop.f32.mrb[0].mxu0
    %v600 = vpop.f32.mrb[0].mxu0
    %v601 = vadd.f32 %v244, %v600
    %v602 = vpop.f32.mrb[0].mxu0
    %603 = vmatprep.mubr.bf16.mxu0 0
    %604 = vmatmul.mubr.bf16.gmra.mrb[0].mxu0 %v296
    %v605 = vpop.f32.mrb[0].mxu0
    %v606 = vadd.f32 %v244, %v605
    %v607 = vpop.f32.mrb[0].mxu0
    %v608 = vpop.f32.mrb[0].mxu0
    %v609 = vadd.f32 %v244, %v608
    %v610 = vpop.f32.mrb[0].mxu0
    %611 = vmatprep.mubr.bf16.mxu0 0
    %612 = vmatmul.mubr.bf16.gmra.mrb[0].mxu0 %v299
    %v613 = vpop.f32.mrb[0].mxu0
    %v614 = vadd.f32 %v244, %v613
    %v615 = vpop.f32.mrb[0].mxu0
    %v616 = vpop.f32.mrb[0].mxu0
    %v617 = vadd.f32 %v244, %v616
    %v618 = vpop.f32.mrb[0].mxu0
    %619 = vmatprep.mubr.bf16.mxu0 0
    %620 = vmatmul.mubr.bf16.gmra.mrb[0].mxu0 %v302
    %v621 = vpop.f32.mrb[0].mxu0
    %v622 = vadd.f32 %v244, %v621
    %v623 = vpop.f32.mrb[0].mxu0
    %v624 = vpop.f32.mrb[0].mxu0
    %v625 = vadd.f32 %v244, %v624
    %v626 = vpop.f32.mrb[0].mxu0
    %627 = vmatprep.mubr.bf16.mxu0 0
    %628 = vmatmul.mubr.bf16.gmra.mrb[0].mxu0 %v305
    %v629 = vpop.f32.mrb[0].mxu0
    %v630 = vadd.f32 %v244, %v629
    %v631 = vpop.f32.mrb[0].mxu0
    %v632 = vpop.f32.mrb[0].mxu0
    %v633 = vadd.f32 %v244, %v632
    %v634 = vpop.f32.mrb[0].mxu0
    %635 = vmatprep.mubr.bf16.mxu0 0
    %636 = vmatmul.mubr.bf16.gmra.mrb[0].mxu0 %v308
    %v637 = vpop.f32.mrb[0].mxu0
    %v638 = vadd.f32 %v244, %v637
    %v639 = vpop.f32.mrb[0].mxu0
    %v640 = vpop.f32.mrb[0].mxu0
    %v641 = vadd.f32 %v244, %v640
    %v642 = vpop.f32.mrb[0].mxu0
    %643 = vmatprep.mubr.bf16.mxu0 0
    %644 = vmatmul.mubr.bf16.gmra.mrb[0].mxu0 %v311
    %v645 = vpop.f32.mrb[0].mxu0
    %v646 = vadd.f32 %v244, %v645
    %v647 = vpop.f32.mrb[0].mxu0
    %v648 = vpop.f32.mrb[0].mxu0
    %v649 = vadd.f32 %v244, %v648
    %v650 = vpop.f32.mrb[0].mxu0
    %651 = vmatprep.mubr.bf16.mxu0 0
    %652 = vmatmul.mubr.bf16.gmra.mrb[0].mxu0 %v314
    %v653 = vpop.f32.mrb[0].mxu0
    %v654 = vadd.f32 %v244, %v653
    %v655 = vpop.f32.mrb[0].mxu0
    %v656 = vpop.f32.mrb[0].mxu0
    %v657 = vadd.f32 %v244, %v656
    %v658 = vpop.f32.mrb[0].mxu0
    %659 = vmatprep.mubr.bf16.mxu0 0
    %660 = vmatmul.mubr.bf16.gmra.mrb[0].mxu0 %v317
    %v661 = vpop.f32.mrb[0].mxu0
    %v662 = vadd.f32 %v244, %v661
    %v663 = vpop.f32.mrb[0].mxu0
    %v664 = vpop.f32.mrb[0].mxu0
    %v665 = vadd.f32 %v244, %v664
    %v666 = vpop.f32.mrb[0].mxu0
    %667 = vmatprep.mubr.bf16.mxu0 0
    %668 = vmatmul.mubr.bf16.gmra.mrb[0].mxu0 %v320
    %v669 = vpop.f32.mrb[0].mxu0
    %v670 = vadd.f32 %v244, %v669
    %v671 = vpop.f32.mrb[0].mxu0
    %v672 = vpop.f32.mrb[0].mxu0
    %v673 = vadd.f32 %v244, %v672
    %v674 = vpop.f32.mrb[0].mxu0
    %675 = vmatprep.mubr.bf16.mxu0 0
    %676 = vmatmul.mubr.bf16.gmra.mrb[0].mxu0 %v323
    %v677 = vpop.f32.mrb[0].mxu0
    %v678 = vadd.f32 %v244, %v677
    %v679 = vpop.f32.mrb[0].mxu0
    %v680 = vpop.f32.mrb[0].mxu0
    %v681 = vadd.f32 %v244, %v680
    %v682 = vpop.f32.mrb[0].mxu0
    %683 = vmatprep.mubr.bf16.mxu0 0
    %684 = vmatmul.mubr.bf16.gmra.mrb[0].mxu0 %v326
    %v685 = vpop.f32.mrb[0].mxu0
    %v686 = vadd.f32 %v244, %v685
    %v687 = vpop.f32.mrb[0].mxu0
    %v688 = vpop.f32.mrb[0].mxu0
    %v689 = vadd.f32 %v244, %v688
    %v690 = vpop.f32.mrb[0].mxu0
    %691 = vmatprep.mubr.bf16.mxu0 0
    %692 = vmatmul.mubr.bf16.gmra.mrb[0].mxu0 %v329
    %v693 = vpop.f32.mrb[0].mxu0
    %v694 = vadd.f32 %v244, %v693
    %v695 = vpop.f32.mrb[0].mxu0
    %v696 = vpop.f32.mrb[0].mxu0
    %v697 = vadd.f32 %v244, %v696
    %v698 = vpop.f32.mrb[0].mxu0
    %699 = vmatprep.mubr.bf16.mxu0 0
    %700 = vmatmul.mubr.bf16.gmra.mrb[0].mxu0 %v332
    %v701 = vpop.f32.mrb[0].mxu0
    %v702 = vadd.f32 %v244, %v701
    %v703 = vpop.f32.mrb[0].mxu0
    %v704 = vpop.f32.mrb[0].mxu0
    %v705 = vadd.f32 %v244, %v704
    %v706 = vpop.f32.mrb[0].mxu0
    %707 = vmatprep.mubr.bf16.mxu0 0
    %708 = vmatmul.mubr.bf16.gmra.mrb[0].mxu0 %v335
    %v709 = vpop.f32.mrb[0].mxu0
    %v710 = vadd.f32 %v244, %v709
    %v711 = vpop.f32.mrb[0].mxu0
    %v712 = vpop.f32.mrb[0].mxu0
    %v713 = vadd.f32 %v244, %v712
    %v714 = vpop.f32.mrb[0].mxu0
    %715 = vmatprep.mubr.bf16.mxu0 0
    %716 = vmatmul.mubr.bf16.gmra.mrb[0].mxu0 %v338
    %v717 = vpop.f32.mrb[0].mxu0
    %v718 = vadd.f32 %v244, %v717
    %v719 = vpop.f32.mrb[0].mxu0
    %v720 = vpop.f32.mrb[0].mxu0
    %v721 = vadd.f32 %v244, %v720
    %v722 = vpop.f32.mrb[0].mxu0
    %723 = vmatprep.mubr.bf16.mxu0 0
    %724 = vmatmul.mubr.bf16.gmra.mrb[0].mxu0 %v341
    %v725 = vpop.f32.mrb[0].mxu0
    %v726 = vadd.f32 %v244, %v725
    %v727 = vpop.f32.mrb[0].mxu0
    %v728 = vpop.f32.mrb[0].mxu0
    %v729 = vadd.f32 %v244, %v728
    %v730 = vpop.f32.mrb[0].mxu0
    %731 = vmatprep.mubr.bf16.mxu0 0
    %732 = vmatmul.mubr.bf16.gmra.mrb[0].mxu0 %v344
    %v733 = vpop.f32.mrb[0].mxu0
    %v734 = vadd.f32 %v244, %v733
    %v735 = vpop.f32.mrb[0].mxu0
    %v736 = vpop.f32.mrb[0].mxu0
    %v737 = vadd.f32 %v244, %v736
    %v738 = vpop.f32.mrb[0].mxu0
    %739 = vmatprep.mubr.bf16.mxu0 0
    %740 = vmatmul.mubr.bf16.gmra.mrb[0].mxu0 %v347
    %v741 = vpop.f32.mrb[0].mxu0
    %v742 = vadd.f32 %v244, %v741
    %v743 = vpop.f32.mrb[0].mxu0
    %v744 = vpop.f32.mrb[0].mxu0
    %v745 = vadd.f32 %v244, %v744
    %v746 = vpop.f32.mrb[0].mxu0
    %747 = vmatprep.mubr.bf16.mxu0 0
    %748 = vmatmul.mubr.bf16.gmra.mrb[0].mxu0 %v350
    %v749 = vpop.f32.mrb[0].mxu0
    %v750 = vadd.f32 %v244, %v749
    %v751 = vpop.f32.mrb[0].mxu0
    %v752 = vpop.f32.mrb[0].mxu0
    %v753 = vadd.f32 %v244, %v752
    %v754 = vpop.f32.mrb[0].mxu0
    %755 = vmatprep.mubr.bf16.mxu0 0
    %756 = vmatmul.mubr.bf16.gmra.mrb[0].mxu0 %v353
    %v757 = vpop.f32.mrb[0].mxu0
    %v758 = vadd.f32 %v244, %v757
    %v759 = vpop.f32.mrb[0].mxu0
    %v760 = vpop.f32.mrb[0].mxu0
    %v761 = vadd.f32 %v244, %v760
    %v762 = vpop.f32.mrb[0].mxu0
    %763 = vmatprep.mubr.bf16.mxu0 0
    %764 = vmatmul.mubr.bf16.gmra.mrb[0].mxu0 %v356
    %v765 = vpop.f32.mrb[0].mxu0
    %v766 = vadd.f32 %v244, %v765
    %v767 = vpop.f32.mrb[0].mxu0
    %v768 = vpop.f32.mrb[0].mxu0
    %v769 = vadd.f32 %v244, %v768
    %v770 = vpop.f32.mrb[0].mxu0
    %771 = vmatprep.mubr.bf16.mxu0 0
    %772 = vmatmul.mubr.bf16.gmra.mrb[0].mxu0 %v359
    %v773 = vpop.f32.mrb[0].mxu0
    %v774 = vadd.f32 %v244, %v773
    %v775 = vpop.f32.mrb[0].mxu0
    %v776 = vpop.f32.mrb[0].mxu0
    %v777 = vadd.f32 %v244, %v776
    %v778 = vpop.f32.mrb[0].mxu0
    %779 = vmatprep.mubr.bf16.mxu0 0
    %780 = vmatmul.mubr.bf16.gmra.mrb[0].mxu0 %v362
    %v781 = vpop.f32.mrb[0].mxu0
    %v782 = vadd.f32 %v244, %v781
    %v783 = vpop.f32.mrb[0].mxu0
    %v784 = vpop.f32.mrb[0].mxu0
    %v785 = vadd.f32 %v244, %v784
    %v786 = vpop.f32.mrb[0].mxu0
    %787 = vmatprep.mubr.bf16.mxu0 0
    %788 = vmatmul.mubr.bf16.gmra.mrb[0].mxu0 %v365
    %v789 = vpop.f32.mrb[0].mxu0
    %v790 = vadd.f32 %v244, %v789
    %v791 = vpop.f32.mrb[0].mxu0
    %v792 = vpop.f32.mrb[0].mxu0
    %v793 = vadd.f32 %v244, %v792
    %v794 = vpop.f32.mrb[0].mxu0
    %795 = vmatprep.mubr.bf16.mxu0 0
    %796 = vmatmul.mubr.bf16.gmra.mrb[0].mxu0 %v368
    %v797 = vpop.f32.mrb[0].mxu0
    %v798 = vadd.f32 %v244, %v797
    %v799 = vpop.f32.mrb[0].mxu0
    %v800 = vpop.f32.mrb[0].mxu0
    %v801 = vadd.f32 %v244, %v800
    %v802 = vpop.f32.mrb[0].mxu0
    %803 = vmatprep.mubr.bf16.mxu0 0
    %804 = vmatmul.mubr.bf16.gmra.mrb[0].mxu0 %v371
    %v805 = vpop.f32.mrb[0].mxu0
    %v806 = vadd.f32 %v244, %v805
    %v807 = vpop.f32.mrb[0].mxu0
    %v808 = vpop.f32.mrb[0].mxu0
    %v809 = vadd.f32 %v244, %v808
    %v810 = vpop.f32.mrb[0].mxu0
    %811 = vmatprep.mubr.bf16.mxu0 0
    %812 = vmatmul.mubr.bf16.gmra.mrb[0].mxu0 %v374
    %v813 = vpop.f32.mrb[0].mxu0
    %v814 = vadd.f32 %v244, %v813
    %v815 = vpop.f32.mrb[0].mxu0
    %v816 = vpop.f32.mrb[0].mxu0
    %v817 = vadd.f32 %v244, %v816
    %v818 = vpop.f32.mrb[0].mxu0
    %819 = vmatprep.mubr.bf16.mxu0 0
    %820 = vmatmul.mubr.bf16.gmra.mrb[0].mxu0 %v377
    %v821 = vpop.f32.mrb[0].mxu0
    %v822 = vadd.f32 %v244, %v821
    %v823 = vpop.f32.mrb[0].mxu0
    %v824 = vpop.f32.mrb[0].mxu0
    %v825 = vadd.f32 %v244, %v824
    %v826 = vpop.f32.mrb[0].mxu0
    %827 = vmatprep.mubr.bf16.mxu0 0
    %828 = vmatmul.mubr.bf16.gmra.mrb[0].mxu0 %v380
    %v829 = vpop.f32.mrb[0].mxu0
    %v830 = vadd.f32 %v244, %v829
    %v831 = vpop.f32.mrb[0].mxu0
    %v832 = vpop.f32.mrb[0].mxu0
    %v833 = vadd.f32 %v244, %v832
    %v834 = vpop.f32.mrb[0].mxu0
    %835 = vmatprep.mubr.bf16.mxu0 0
    %836 = vmatmul.mubr.bf16.gmra.mrb[0].mxu0 %v383
    %v837 = vpop.f32.mrb[0].mxu0
    %v838 = vadd.f32 %v244, %v837
    %v839 = vpop.f32.mrb[0].mxu0
    %v840 = vpop.f32.mrb[0].mxu0
    %v841 = vadd.f32 %v244, %v840
    %v842 = vpop.f32.mrb[0].mxu0
    %843 = vmatprep.mubr.bf16.mxu0 0
    %844 = vmatmul.mubr.bf16.gmra.mrb[0].mxu0 %v386
    %v845 = vpop.f32.mrb[0].mxu0
    %v846 = vadd.f32 %v244, %v845
    %v847 = vpop.f32.mrb[0].mxu0
    %v848 = vpop.f32.mrb[0].mxu0
    %v849 = vadd.f32 %v244, %v848
    %v850 = vpop.f32.mrb[0].mxu0
    %851 = vmatprep.mubr.bf16.mxu0 0
    %852 = vmatmul.mubr.bf16.gmra.mrb[0].mxu0 %v389
    %v853 = vpop.f32.mrb[0].mxu0
    %v854 = vadd.f32 %v244, %v853
    %v855 = vpop.f32.mrb[0].mxu0
    %v856 = vpop.f32.mrb[0].mxu0
    %v857 = vadd.f32 %v244, %v856
    %v858 = vpop.f32.mrb[0].mxu0
    %859 = vmatprep.mubr.bf16.mxu0 0
    %860 = vmatmul.mubr.bf16.gmra.mrb[0].mxu0 %v392
    %v861 = vpop.f32.mrb[0].mxu0
    %v862 = vadd.f32 %v244, %v861
    %v863 = vpop.f32.mrb[0].mxu0
    %v864 = vpop.f32.mrb[0].mxu0
    %v865 = vadd.f32 %v244, %v864
    %v866 = vpop.f32.mrb[0].mxu0
    %867 = vmatprep.mubr.bf16.mxu0 0
    %868 = vmatmul.mubr.bf16.gmra.mrb[0].mxu0 %v395
    %v869 = vpop.f32.mrb[0].mxu0
    %v870 = vadd.f32 %v244, %v869
    %v871 = vpop.f32.mrb[0].mxu0
    %v872 = vpop.f32.mrb[0].mxu0
    %v873 = vadd.f32 %v244, %v872
    %v874 = vpop.f32.mrb[0].mxu0
    %875 = vmatprep.mubr.bf16.mxu0 0
    %876 = vmatmul.mubr.bf16.gmra.mrb[0].mxu0 %v398
    %v877 = vpop.f32.mrb[0].mxu0
    %v878 = vadd.f32 %v244, %v877
    %v879 = vpop.f32.mrb[0].mxu0
    %v880 = vpop.f32.mrb[0].mxu0
    %v881 = vadd.f32 %v244, %v880
    %v882 = vpop.f32.mrb[0].mxu0
    %883 = vmatprep.mubr.bf16.mxu0 0
    %884 = vmatmul.mubr.bf16.gmra.mrb[0].mxu0 %v401
    %v885 = vpop.f32.mrb[0].mxu0
    %v886 = vadd.f32 %v244, %v885
    %v887 = vpop.f32.mrb[0].mxu0
    %v888 = vpop.f32.mrb[0].mxu0
    %v889 = vadd.f32 %v244, %v888
    %v890 = vpop.f32.mrb[0].mxu0
    %891 = vmatprep.mubr.bf16.mxu0 0
    %892 = vmatmul.mubr.bf16.gmra.mrb[0].mxu0 %v404
    %v893 = vpop.f32.mrb[0].mxu0
    %v894 = vadd.f32 %v244, %v893
    %v895 = vpop.f32.mrb[0].mxu0
    %v896 = vpop.f32.mrb[0].mxu0
    %v897 = vadd.f32 %v244, %v896
    %v898 = vpop.f32.mrb[0].mxu0
    %899 = vmatprep.mubr.bf16.mxu0 0
    %900 = vmatmul.mubr.bf16.gmra.mrb[0].mxu0 %v407
    %v901 = vpop.f32.mrb[0].mxu0
    %v902 = vadd.f32 %v244, %v901
    %v903 = vpop.f32.mrb[0].mxu0
    %v904 = vpop.f32.mrb[0].mxu0
    %v905 = vadd.f32 %v244, %v904
    %v906 = vpop.f32.mrb[0].mxu0
    %907 = vmatprep.mubr.bf16.mxu0 0
    %908 = vmatmul.mubr.bf16.gmra.mrb[0].mxu0 %v410
    %v909 = vpop.f32.mrb[0].mxu0
    %v910 = vadd.f32 %v244, %v909
    %v911 = vpop.f32.mrb[0].mxu0
    %v912 = vpop.f32.mrb[0].mxu0
    %v913 = vadd.f32 %v244, %v912
    %v914 = vpop.f32.mrb[0].mxu0
    %915 = vmatprep.mubr.bf16.mxu0 0
    %916 = vmatmul.mubr.bf16.gmra.mrb[0].mxu0 %v413
    %v917 = vpop.f32.mrb[0].mxu0
    %v918 = vadd.f32 %v244, %v917
    %v919 = vpop.f32.mrb[0].mxu0
    %v920 = vpop.f32.mrb[0].mxu0
    %v921 = vadd.f32 %v244, %v920
    %v922 = vpop.f32.mrb[0].mxu0
    %923 = vmatprep.mubr.bf16.mxu0 0
    %924 = vmatmul.mubr.bf16.gmra.mrb[0].mxu0 %v416
    %v925 = vpop.f32.mrb[0].mxu0
    %v926 = vadd.f32 %v244, %v925
    %v927 = vpop.f32.mrb[0].mxu0
    %v928 = vpop.f32.mrb[0].mxu0
    %v929 = vadd.f32 %v244, %v928
    %v930 = vpop.f32.mrb[0].mxu0
    %931 = vmatprep.mubr.bf16.mxu0 0
    %932 = vmatmul.mubr.bf16.gmra.mrb[0].mxu0 %v419
    %v933 = vpop.f32.mrb[0].mxu0
    %v934 = vadd.f32 %v244, %v933
    %v935 = vpop.f32.mrb[0].mxu0
    %v936 = vpop.f32.mrb[0].mxu0
    %v937 = vadd.f32 %v244, %v936
    %v938 = vpop.f32.mrb[0].mxu0
    %939 = vmatprep.mubr.bf16.mxu0 0
    %940 = vmatmul.mubr.bf16.gmra.mrb[0].mxu0 %v422
    %v941 = vpop.f32.mrb[0].mxu0
    %v942 = vadd.f32 %v244, %v941
    %v943 = vpop.f32.mrb[0].mxu0
    %v944 = vpop.f32.mrb[0].mxu0
    %v945 = vadd.f32 %v244, %v944
    %v946 = vpop.f32.mrb[0].mxu0
    %947 = vmatprep.mubr.bf16.mxu0 0
    %948 = vmatmul.mubr.bf16.gmra.mrb[0].mxu0 %v425
    %v949 = vpop.f32.mrb[0].mxu0
    %v950 = vadd.f32 %v244, %v949
    %v951 = vpop.f32.mrb[0].mxu0
    %v952 = vpop.f32.mrb[0].mxu0
    %v953 = vadd.f32 %v244, %v952
    %v954 = vpop.f32.mrb[0].mxu0
    %955 = vmatprep.mubr.bf16.mxu0 0
    %956 = vmatmul.mubr.bf16.gmra.mrb[0].mxu0 %v428
    %v957 = vpop.f32.mrb[0].mxu0
    %v958 = vadd.f32 %v244, %v957
    %v959 = vpop.f32.mrb[0].mxu0
    %v960 = vpop.f32.mrb[0].mxu0
    %v961 = vadd.f32 %v244, %v960
    %v962 = vpop.f32.mrb[0].mxu0
    %963 = vmatprep.mubr.bf16.mxu0 0
    %964 = vmatmul.mubr.bf16.gmra.mrb[0].mxu0 %v431
    %v965 = vpop.f32.mrb[0].mxu0
    %v966 = vadd.f32 %v244, %v965
    %v967 = vpop.f32.mrb[0].mxu0
    %v968 = vpop.f32.mrb[0].mxu0
    %v969 = vadd.f32 %v244, %v968
    %v970 = vpop.f32.mrb[0].mxu0
    %971 = vmatprep.mubr.bf16.mxu0 0
    %972 = vmatmul.mubr.bf16.gmra.mrb[0].mxu0 %v434
    %v973 = vpop.f32.mrb[0].mxu0
    %v974 = vadd.f32 %v244, %v973
    %v975 = vpop.f32.mrb[0].mxu0
    %v976 = vpop.f32.mrb[0].mxu0
    %v977 = vadd.f32 %v244, %v976
    %v978 = vpop.f32.mrb[0].mxu0
    %979 = vmatprep.mubr.bf16.mxu0 0
    %980 = vmatmul.mubr.bf16.gmra.mrb[0].mxu0 %v437
    %v981 = vpop.f32.mrb[0].mxu0
    %v982 = vadd.f32 %v244, %v981
    %v983 = vpop.f32.mrb[0].mxu0
    %v984 = vpop.f32.mrb[0].mxu0
    %v985 = vadd.f32 %v244, %v984
    %v986 = vpop.f32.mrb[0].mxu0
    %987 = vdwg.mxu0
    %988 = vmax.xlane.f32.xlu0 %v478
    %v989 = vpop.xlane.xlu0 %988
    %990 = vmax.xlane.f32.xlu0 %v481
    %v991 = vpop.xlane.xlu0 %990
    %992 = vmax.xlane.f32.xlu0 %v486
    %v993 = vpop.xlane.xlu0 %992
    %994 = vmax.xlane.f32.xlu0 %v489
    %v995 = vpop.xlane.xlu0 %994
    %996 = vmax.xlane.f32.xlu0 %v494
    %v997 = vpop.xlane.xlu0 %996
    %998 = vmax.xlane.f32.xlu0 %v497
    %v999 = vpop.xlane.xlu0 %998
    %1000 = vmax.xlane.f32.xlu0 %v502
    %v1001 = vpop.xlane.xlu0 %1000
    %1002 = vmax.xlane.f32.xlu0 %v505
    %v1003 = vpop.xlane.xlu0 %1002
    %1004 = vmax.xlane.f32.xlu0 %v510
    %v1005 = vpop.xlane.xlu0 %1004
    %1006 = vmax.xlane.f32.xlu0 %v513
    %v1007 = vpop.xlane.xlu0 %1006
    %1008 = vmax.xlane.f32.xlu0 %v518
    %v1009 = vpop.xlane.xlu0 %1008
    %1010 = vmax.xlane.f32.xlu0 %v521
    %v1011 = vpop.xlane.xlu0 %1010
    %1012 = vmax.xlane.f32.xlu0 %v526
    %v1013 = vpop.xlane.xlu0 %1012
    %1014 = vmax.xlane.f32.xlu0 %v529
    %v1015 = vpop.xlane.xlu0 %1014
    %1016 = vmax.xlane.f32.xlu0 %v534
    %v1017 = vpop.xlane.xlu0 %1016
    %1018 = vmax.xlane.f32.xlu0 %v537
    %v1019 = vpop.xlane.xlu0 %1018
    %1020 = vmax.xlane.f32.xlu0 %v542
    %v1021 = vpop.xlane.xlu0 %1020
    %1022 = vmax.xlane.f32.xlu0 %v545
    %v1023 = vpop.xlane.xlu0 %1022
    %1024 = vmax.xlane.f32.xlu0 %v550
    %v1025 = vpop.xlane.xlu0 %1024
    %1026 = vmax.xlane.f32.xlu0 %v553
    %v1027 = vpop.xlane.xlu0 %1026
    %1028 = vmax.xlane.f32.xlu0 %v558
    %v1029 = vpop.xlane.xlu0 %1028
    %1030 = vmax.xlane.f32.xlu0 %v561
    %v1031 = vpop.xlane.xlu0 %1030
    %1032 = vmax.xlane.f32.xlu0 %v566
    %v1033 = vpop.xlane.xlu0 %1032
    %1034 = vmax.xlane.f32.xlu0 %v569
    %v1035 = vpop.xlane.xlu0 %1034
    %1036 = vmax.xlane.f32.xlu0 %v574
    %v1037 = vpop.xlane.xlu0 %1036
    %1038 = vmax.xlane.f32.xlu0 %v577
    %v1039 = vpop.xlane.xlu0 %1038
    %1040 = vmax.xlane.f32.xlu0 %v582
    %v1041 = vpop.xlane.xlu0 %1040
    %1042 = vmax.xlane.f32.xlu0 %v585
    %v1043 = vpop.xlane.xlu0 %1042
    %1044 = vmax.xlane.f32.xlu0 %v590
    %v1045 = vpop.xlane.xlu0 %1044
    %1046 = vmax.xlane.f32.xlu0 %v593
    %v1047 = vpop.xlane.xlu0 %1046
    %1048 = vmax.xlane.f32.xlu0 %v598
    %v1049 = vpop.xlane.xlu0 %1048
    %1050 = vmax.xlane.f32.xlu0 %v601
    %v1051 = vpop.xlane.xlu0 %1050
    %1052 = vmax.xlane.f32.xlu0 %v606
    %v1053 = vpop.xlane.xlu0 %1052
    %1054 = vmax.xlane.f32.xlu0 %v609
    %v1055 = vpop.xlane.xlu0 %1054
    %1056 = vmax.xlane.f32.xlu0 %v614
    %v1057 = vpop.xlane.xlu0 %1056
    %1058 = vmax.xlane.f32.xlu0 %v617
    %v1059 = vpop.xlane.xlu0 %1058
    %1060 = vmax.xlane.f32.xlu0 %v622
    %v1061 = vpop.xlane.xlu0 %1060
    %1062 = vmax.xlane.f32.xlu0 %v625
    %v1063 = vpop.xlane.xlu0 %1062
    %1064 = vmax.xlane.f32.xlu0 %v630
    %v1065 = vpop.xlane.xlu0 %1064
    %1066 = vmax.xlane.f32.xlu0 %v633
    %v1067 = vpop.xlane.xlu0 %1066
    %1068 = vmax.xlane.f32.xlu0 %v638
    %v1069 = vpop.xlane.xlu0 %1068
    %1070 = vmax.xlane.f32.xlu0 %v641
    %v1071 = vpop.xlane.xlu0 %1070
    %1072 = vmax.xlane.f32.xlu0 %v646
    %v1073 = vpop.xlane.xlu0 %1072
    %1074 = vmax.xlane.f32.xlu0 %v649
    %v1075 = vpop.xlane.xlu0 %1074
    %1076 = vmax.xlane.f32.xlu0 %v654
    %v1077 = vpop.xlane.xlu0 %1076
    %1078 = vmax.xlane.f32.xlu0 %v657
    %v1079 = vpop.xlane.xlu0 %1078
    %1080 = vmax.xlane.f32.xlu0 %v662
    %v1081 = vpop.xlane.xlu0 %1080
    %1082 = vmax.xlane.f32.xlu0 %v665
    %v1083 = vpop.xlane.xlu0 %1082
    %1084 = vmax.xlane.f32.xlu0 %v670
    %v1085 = vpop.xlane.xlu0 %1084
    %1086 = vmax.xlane.f32.xlu0 %v673
    %v1087 = vpop.xlane.xlu0 %1086
    %1088 = vmax.xlane.f32.xlu0 %v678
    %v1089 = vpop.xlane.xlu0 %1088
    %1090 = vmax.xlane.f32.xlu0 %v681
    %v1091 = vpop.xlane.xlu0 %1090
    %1092 = vmax.xlane.f32.xlu0 %v686
    %v1093 = vpop.xlane.xlu0 %1092
    %1094 = vmax.xlane.f32.xlu0 %v689
    %v1095 = vpop.xlane.xlu0 %1094
    %1096 = vmax.xlane.f32.xlu0 %v694
    %v1097 = vpop.xlane.xlu0 %1096
    %1098 = vmax.xlane.f32.xlu0 %v697
    %v1099 = vpop.xlane.xlu0 %1098
    %1100 = vmax.xlane.f32.xlu0 %v702
    %v1101 = vpop.xlane.xlu0 %1100
    %1102 = vmax.xlane.f32.xlu0 %v705
    %v1103 = vpop.xlane.xlu0 %1102
    %1104 = vmax.xlane.f32.xlu0 %v710
    %v1105 = vpop.xlane.xlu0 %1104
    %1106 = vmax.xlane.f32.xlu0 %v713
    %v1107 = vpop.xlane.xlu0 %1106
    %1108 = vmax.xlane.f32.xlu0 %v718
    %v1109 = vpop.xlane.xlu0 %1108
    %1110 = vmax.xlane.f32.xlu0 %v721
    %v1111 = vpop.xlane.xlu0 %1110
    %1112 = vmax.xlane.f32.xlu0 %v726
    %v1113 = vpop.xlane.xlu0 %1112
    %1114 = vmax.xlane.f32.xlu0 %v729
    %v1115 = vpop.xlane.xlu0 %1114
    %1116 = vmax.xlane.f32.xlu0 %v734
    %v1117 = vpop.xlane.xlu0 %1116
    %1118 = vmax.xlane.f32.xlu0 %v737
    %v1119 = vpop.xlane.xlu0 %1118
    %1120 = vmax.xlane.f32.xlu0 %v742
    %v1121 = vpop.xlane.xlu0 %1120
    %1122 = vmax.xlane.f32.xlu0 %v745
    %v1123 = vpop.xlane.xlu0 %1122
    %1124 = vmax.xlane.f32.xlu0 %v750
    %v1125 = vpop.xlane.xlu0 %1124
    %1126 = vmax.xlane.f32.xlu0 %v753
    %v1127 = vpop.xlane.xlu0 %1126
    %1128 = vmax.xlane.f32.xlu0 %v758
    %v1129 = vpop.xlane.xlu0 %1128
    %1130 = vmax.xlane.f32.xlu0 %v761
    %v1131 = vpop.xlane.xlu0 %1130
    %1132 = vmax.xlane.f32.xlu0 %v766
    %v1133 = vpop.xlane.xlu0 %1132
    %1134 = vmax.xlane.f32.xlu0 %v769
    %v1135 = vpop.xlane.xlu0 %1134
    %1136 = vmax.xlane.f32.xlu0 %v774
    %v1137 = vpop.xlane.xlu0 %1136
    %1138 = vmax.xlane.f32.xlu0 %v777
    %v1139 = vpop.xlane.xlu0 %1138
    %1140 = vmax.xlane.f32.xlu0 %v782
    %v1141 = vpop.xlane.xlu0 %1140
    %1142 = vmax.xlane.f32.xlu0 %v785
    %v1143 = vpop.xlane.xlu0 %1142
    %1144 = vmax.xlane.f32.xlu0 %v790
    %v1145 = vpop.xlane.xlu0 %1144
    %1146 = vmax.xlane.f32.xlu0 %v793
    %v1147 = vpop.xlane.xlu0 %1146
    %1148 = vmax.xlane.f32.xlu0 %v798
    %v1149 = vpop.xlane.xlu0 %1148
    %1150 = vmax.xlane.f32.xlu0 %v801
    %v1151 = vpop.xlane.xlu0 %1150
    %1152 = vmax.xlane.f32.xlu0 %v806
    %v1153 = vpop.xlane.xlu0 %1152
    %1154 = vmax.xlane.f32.xlu0 %v809
    %v1155 = vpop.xlane.xlu0 %1154
    %1156 = vmax.xlane.f32.xlu0 %v814
    %v1157 = vpop.xlane.xlu0 %1156
    %1158 = vmax.xlane.f32.xlu0 %v817
    %v1159 = vpop.xlane.xlu0 %1158
    %1160 = vmax.xlane.f32.xlu0 %v822
    %v1161 = vpop.xlane.xlu0 %1160
    %1162 = vmax.xlane.f32.xlu0 %v825
    %v1163 = vpop.xlane.xlu0 %1162
    %1164 = vmax.xlane.f32.xlu0 %v830
    %v1165 = vpop.xlane.xlu0 %1164
    %1166 = vmax.xlane.f32.xlu0 %v833
    %v1167 = vpop.xlane.xlu0 %1166
    %1168 = vmax.xlane.f32.xlu0 %v838
    %v1169 = vpop.xlane.xlu0 %1168
    %1170 = vmax.xlane.f32.xlu0 %v841
    %v1171 = vpop.xlane.xlu0 %1170
    %1172 = vmax.xlane.f32.xlu0 %v846
    %v1173 = vpop.xlane.xlu0 %1172
    %1174 = vmax.xlane.f32.xlu0 %v849
    %v1175 = vpop.xlane.xlu0 %1174
    %1176 = vmax.xlane.f32.xlu0 %v854
    %v1177 = vpop.xlane.xlu0 %1176
    %1178 = vmax.xlane.f32.xlu0 %v857
    %v1179 = vpop.xlane.xlu0 %1178
    %1180 = vmax.xlane.f32.xlu0 %v862
    %v1181 = vpop.xlane.xlu0 %1180
    %1182 = vmax.xlane.f32.xlu0 %v865
    %v1183 = vpop.xlane.xlu0 %1182
    %1184 = vmax.xlane.f32.xlu0 %v870
    %v1185 = vpop.xlane.xlu0 %1184
    %1186 = vmax.xlane.f32.xlu0 %v873
    %v1187 = vpop.xlane.xlu0 %1186
    %1188 = vmax.xlane.f32.xlu0 %v878
    %v1189 = vpop.xlane.xlu0 %1188
    %1190 = vmax.xlane.f32.xlu0 %v881
    %v1191 = vpop.xlane.xlu0 %1190
    %1192 = vmax.xlane.f32.xlu0 %v886
    %v1193 = vpop.xlane.xlu0 %1192
    %1194 = vmax.xlane.f32.xlu0 %v889
    %v1195 = vpop.xlane.xlu0 %1194
    %1196 = vmax.xlane.f32.xlu0 %v894
    %v1197 = vpop.xlane.xlu0 %1196
    %1198 = vmax.xlane.f32.xlu0 %v897
    %v1199 = vpop.xlane.xlu0 %1198
    %1200 = vmax.xlane.f32.xlu0 %v902
    %v1201 = vpop.xlane.xlu0 %1200
    %1202 = vmax.xlane.f32.xlu0 %v905
    %v1203 = vpop.xlane.xlu0 %1202
    %1204 = vmax.xlane.f32.xlu0 %v910
    %v1205 = vpop.xlane.xlu0 %1204
    %1206 = vmax.xlane.f32.xlu0 %v913
    %v1207 = vpop.xlane.xlu0 %1206
    %1208 = vmax.xlane.f32.xlu0 %v918
    %v1209 = vpop.xlane.xlu0 %1208
    %1210 = vmax.xlane.f32.xlu0 %v921
    %v1211 = vpop.xlane.xlu0 %1210
    %1212 = vmax.xlane.f32.xlu0 %v926
    %v1213 = vpop.xlane.xlu0 %1212
    %1214 = vmax.xlane.f32.xlu0 %v929
    %v1215 = vpop.xlane.xlu0 %1214
    %1216 = vmax.xlane.f32.xlu0 %v934
    %v1217 = vpop.xlane.xlu0 %1216
    %1218 = vmax.xlane.f32.xlu0 %v937
    %v1219 = vpop.xlane.xlu0 %1218
    %1220 = vmax.xlane.f32.xlu0 %v942
    %v1221 = vpop.xlane.xlu0 %1220
    %1222 = vmax.xlane.f32.xlu0 %v945
    %v1223 = vpop.xlane.xlu0 %1222
    %1224 = vmax.xlane.f32.xlu0 %v950
    %v1225 = vpop.xlane.xlu0 %1224
    %1226 = vmax.xlane.f32.xlu0 %v953
    %v1227 = vpop.xlane.xlu0 %1226
    %1228 = vmax.xlane.f32.xlu0 %v958
    %v1229 = vpop.xlane.xlu0 %1228
    %1230 = vmax.xlane.f32.xlu0 %v961
    %v1231 = vpop.xlane.xlu0 %1230
    %1232 = vmax.xlane.f32.xlu0 %v966
    %v1233 = vpop.xlane.xlu0 %1232
    %1234 = vmax.xlane.f32.xlu0 %v969
    %v1235 = vpop.xlane.xlu0 %1234
    %1236 = vmax.xlane.f32.xlu0 %v974
    %v1237 = vpop.xlane.xlu0 %1236
    %1238 = vmax.xlane.f32.xlu0 %v977
    %v1239 = vpop.xlane.xlu0 %1238
    %1240 = vmax.xlane.f32.xlu0 %v982
    %v1241 = vpop.xlane.xlu0 %1240
    %1242 = vmax.xlane.f32.xlu0 %v985
    %v1243 = vpop.xlane.xlu0 %1242
    %v1244 = vsub.f32 %v478, %v989
    %v1245 = vsub.f32 %v481, %v991
    %v1246 = vsub.f32 %v486, %v993
    %v1247 = vsub.f32 %v489, %v995
    %v1248 = vsub.f32 %v494, %v997
    %v1249 = vsub.f32 %v497, %v999
    %v1250 = vsub.f32 %v502, %v1001
    %v1251 = vsub.f32 %v505, %v1003
    %v1252 = vsub.f32 %v510, %v1005
    %v1253 = vsub.f32 %v513, %v1007
    %v1254 = vsub.f32 %v518, %v1009
    %v1255 = vsub.f32 %v521, %v1011
    %v1256 = vsub.f32 %v526, %v1013
    %v1257 = vsub.f32 %v529, %v1015
    %v1258 = vsub.f32 %v534, %v1017
    %v1259 = vsub.f32 %v537, %v1019
    %v1260 = vsub.f32 %v542, %v1021
    %v1261 = vsub.f32 %v545, %v1023
    %v1262 = vsub.f32 %v550, %v1025
    %v1263 = vsub.f32 %v553, %v1027
    %v1264 = vsub.f32 %v558, %v1029
    %v1265 = vsub.f32 %v561, %v1031
    %v1266 = vsub.f32 %v566, %v1033
    %v1267 = vsub.f32 %v569, %v1035
    %v1268 = vsub.f32 %v574, %v1037
    %v1269 = vsub.f32 %v577, %v1039
    %v1270 = vsub.f32 %v582, %v1041
    %v1271 = vsub.f32 %v585, %v1043
    %v1272 = vsub.f32 %v590, %v1045
    %v1273 = vsub.f32 %v593, %v1047
    %v1274 = vsub.f32 %v598, %v1049
    %v1275 = vsub.f32 %v601, %v1051
    %v1276 = vsub.f32 %v606, %v1053
    %v1277 = vsub.f32 %v609, %v1055
    %v1278 = vsub.f32 %v614, %v1057
    %v1279 = vsub.f32 %v617, %v1059
    %v1280 = vsub.f32 %v622, %v1061
    %v1281 = vsub.f32 %v625, %v1063
    %v1282 = vsub.f32 %v630, %v1065
    %v1283 = vsub.f32 %v633, %v1067
    %v1284 = vsub.f32 %v638, %v1069
    %v1285 = vsub.f32 %v641, %v1071
    %v1286 = vsub.f32 %v646, %v1073
    %v1287 = vsub.f32 %v649, %v1075
    %v1288 = vsub.f32 %v654, %v1077
    %v1289 = vsub.f32 %v657, %v1079
    %v1290 = vsub.f32 %v662, %v1081
    %v1291 = vsub.f32 %v665, %v1083
    %v1292 = vsub.f32 %v670, %v1085
    %v1293 = vsub.f32 %v673, %v1087
    %v1294 = vsub.f32 %v678, %v1089
    %v1295 = vsub.f32 %v681, %v1091
    %v1296 = vsub.f32 %v686, %v1093
    %v1297 = vsub.f32 %v689, %v1095
    %v1298 = vsub.f32 %v694, %v1097
    %v1299 = vsub.f32 %v697, %v1099
    %v1300 = vsub.f32 %v702, %v1101
    %v1301 = vsub.f32 %v705, %v1103
    %v1302 = vsub.f32 %v710, %v1105
    %v1303 = vsub.f32 %v713, %v1107
    %v1304 = vsub.f32 %v718, %v1109
    %v1305 = vsub.f32 %v721, %v1111
    %v1306 = vsub.f32 %v726, %v1113
    %v1307 = vsub.f32 %v729, %v1115
    %v1308 = vsub.f32 %v734, %v1117
    %v1309 = vsub.f32 %v737, %v1119
    %v1310 = vsub.f32 %v742, %v1121
    %v1311 = vsub.f32 %v745, %v1123
    %v1312 = vsub.f32 %v750, %v1125
    %v1313 = vsub.f32 %v753, %v1127
    %v1314 = vsub.f32 %v758, %v1129
    %v1315 = vsub.f32 %v761, %v1131
    %v1316 = vsub.f32 %v766, %v1133
    %v1317 = vsub.f32 %v769, %v1135
    %v1318 = vsub.f32 %v774, %v1137
    %v1319 = vsub.f32 %v777, %v1139
    %v1320 = vsub.f32 %v782, %v1141
    %v1321 = vsub.f32 %v785, %v1143
    %v1322 = vsub.f32 %v790, %v1145
    %v1323 = vsub.f32 %v793, %v1147
    %v1324 = vsub.f32 %v798, %v1149
    %v1325 = vsub.f32 %v801, %v1151
    %v1326 = vsub.f32 %v806, %v1153
    %v1327 = vsub.f32 %v809, %v1155
    %v1328 = vsub.f32 %v814, %v1157
    %v1329 = vsub.f32 %v817, %v1159
    %v1330 = vsub.f32 %v822, %v1161
    %v1331 = vsub.f32 %v825, %v1163
    %v1332 = vsub.f32 %v830, %v1165
    %v1333 = vsub.f32 %v833, %v1167
    %v1334 = vsub.f32 %v838, %v1169
    %v1335 = vsub.f32 %v841, %v1171
    %v1336 = vsub.f32 %v846, %v1173
    %v1337 = vsub.f32 %v849, %v1175
    %v1338 = vsub.f32 %v854, %v1177
    %v1339 = vsub.f32 %v857, %v1179
    %v1340 = vsub.f32 %v862, %v1181
    %v1341 = vsub.f32 %v865, %v1183
    %v1342 = vsub.f32 %v870, %v1185
    %v1343 = vsub.f32 %v873, %v1187
    %v1344 = vsub.f32 %v878, %v1189
    %v1345 = vsub.f32 %v881, %v1191
    %v1346 = vsub.f32 %v886, %v1193
    %v1347 = vsub.f32 %v889, %v1195
    %v1348 = vsub.f32 %v894, %v1197
    %v1349 = vsub.f32 %v897, %v1199
    %v1350 = vsub.f32 %v902, %v1201
    %v1351 = vsub.f32 %v905, %v1203
    %v1352 = vsub.f32 %v910, %v1205
    %v1353 = vsub.f32 %v913, %v1207
    %v1354 = vsub.f32 %v918, %v1209
    %v1355 = vsub.f32 %v921, %v1211
    %v1356 = vsub.f32 %v926, %v1213
    %v1357 = vsub.f32 %v929, %v1215
    %v1358 = vsub.f32 %v934, %v1217
    %v1359 = vsub.f32 %v937, %v1219
    %v1360 = vsub.f32 %v942, %v1221
    %v1361 = vsub.f32 %v945, %v1223
    %v1362 = vsub.f32 %v950, %v1225
    %v1363 = vsub.f32 %v953, %v1227
    %v1364 = vsub.f32 %v958, %v1229
    %v1365 = vsub.f32 %v961, %v1231
    %v1366 = vsub.f32 %v966, %v1233
    %v1367 = vsub.f32 %v969, %v1235
    %v1368 = vsub.f32 %v974, %v1237
    %v1369 = vsub.f32 %v977, %v1239
    %v1370 = vsub.f32 %v982, %v1241
    %v1371 = vsub.f32 %v985, %v1243
    %v1372 = vmul.f32 %v1244, 1.442695
    %v1373 = vpow.pop %v1372
    %v1374 = vmul.f32 %v1245, 1.442695
    %v1375 = vpow.pop %v1374
    %v1376 = vmul.f32 %v1246, 1.442695
    %v1377 = vpow.pop %v1376
    %v1378 = vmul.f32 %v1247, 1.442695
    %v1379 = vpow.pop %v1378
    %v1380 = vmul.f32 %v1248, 1.442695
    %v1381 = vpow.pop %v1380
    %v1382 = vmul.f32 %v1249, 1.442695
    %v1383 = vpow.pop %v1382
    %v1384 = vmul.f32 %v1250, 1.442695
    %v1385 = vpow.pop %v1384
    %v1386 = vmul.f32 %v1251, 1.442695
    %v1387 = vpow.pop %v1386
    %v1388 = vmul.f32 %v1252, 1.442695
    %v1389 = vpow.pop %v1388
    %v1390 = vmul.f32 %v1253, 1.442695
    %v1391 = vpow.pop %v1390
    %v1392 = vmul.f32 %v1254, 1.442695
    %v1393 = vpow.pop %v1392
    %v1394 = vmul.f32 %v1255, 1.442695
    %v1395 = vpow.pop %v1394
    %v1396 = vmul.f32 %v1256, 1.442695
    %v1397 = vpow.pop %v1396
    %v1398 = vmul.f32 %v1257, 1.442695
    %v1399 = vpow.pop %v1398
    %v1400 = vmul.f32 %v1258, 1.442695
    %v1401 = vpow.pop %v1400
    %v1402 = vmul.f32 %v1259, 1.442695
    %v1403 = vpow.pop %v1402
    %v1404 = vmul.f32 %v1260, 1.442695
    %v1405 = vpow.pop %v1404
    %v1406 = vmul.f32 %v1261, 1.442695
    %v1407 = vpow.pop %v1406
    %v1408 = vmul.f32 %v1262, 1.442695
    %v1409 = vpow.pop %v1408
    %v1410 = vmul.f32 %v1263, 1.442695
    %v1411 = vpow.pop %v1410
    %v1412 = vmul.f32 %v1264, 1.442695
    %v1413 = vpow.pop %v1412
    %v1414 = vmul.f32 %v1265, 1.442695
    %v1415 = vpow.pop %v1414
    %v1416 = vmul.f32 %v1266, 1.442695
    %v1417 = vpow.pop %v1416
    %v1418 = vmul.f32 %v1267, 1.442695
    %v1419 = vpow.pop %v1418
    %v1420 = vmul.f32 %v1268, 1.442695
    %v1421 = vpow.pop %v1420
    %v1422 = vmul.f32 %v1269, 1.442695
    %v1423 = vpow.pop %v1422
    %v1424 = vmul.f32 %v1270, 1.442695
    %v1425 = vpow.pop %v1424
    %v1426 = vmul.f32 %v1271, 1.442695
    %v1427 = vpow.pop %v1426
    %v1428 = vmul.f32 %v1272, 1.442695
    %v1429 = vpow.pop %v1428
    %v1430 = vmul.f32 %v1273, 1.442695
    %v1431 = vpow.pop %v1430
    %v1432 = vmul.f32 %v1274, 1.442695
    %v1433 = vpow.pop %v1432
    %v1434 = vmul.f32 %v1275, 1.442695
    %v1435 = vpow.pop %v1434
    %v1436 = vmul.f32 %v1276, 1.442695
    %v1437 = vpow.pop %v1436
    %v1438 = vmul.f32 %v1277, 1.442695
    %v1439 = vpow.pop %v1438
    %v1440 = vmul.f32 %v1278, 1.442695
    %v1441 = vpow.pop %v1440
    %v1442 = vmul.f32 %v1279, 1.442695
    %v1443 = vpow.pop %v1442
    %v1444 = vmul.f32 %v1280, 1.442695
    %v1445 = vpow.pop %v1444
    %v1446 = vmul.f32 %v1281, 1.442695
    %v1447 = vpow.pop %v1446
    %v1448 = vmul.f32 %v1282, 1.442695
    %v1449 = vpow.pop %v1448
    %v1450 = vmul.f32 %v1283, 1.442695
    %v1451 = vpow.pop %v1450
    %v1452 = vmul.f32 %v1284, 1.442695
    %v1453 = vpow.pop %v1452
    %v1454 = vmul.f32 %v1285, 1.442695
    %v1455 = vpow.pop %v1454
    %v1456 = vmul.f32 %v1286, 1.442695
    %v1457 = vpow.pop %v1456
    %v1458 = vmul.f32 %v1287, 1.442695
    %v1459 = vpow.pop %v1458
    %v1460 = vmul.f32 %v1288, 1.442695
    %v1461 = vpow.pop %v1460
    %v1462 = vmul.f32 %v1289, 1.442695
    %v1463 = vpow.pop %v1462
    %v1464 = vmul.f32 %v1290, 1.442695
    %v1465 = vpow.pop %v1464
    %v1466 = vmul.f32 %v1291, 1.442695
    %v1467 = vpow.pop %v1466
    %v1468 = vmul.f32 %v1292, 1.442695
    %v1469 = vpow.pop %v1468
    %v1470 = vmul.f32 %v1293, 1.442695
    %v1471 = vpow.pop %v1470
    %v1472 = vmul.f32 %v1294, 1.442695
    %v1473 = vpow.pop %v1472
    %v1474 = vmul.f32 %v1295, 1.442695
    %v1475 = vpow.pop %v1474
    %v1476 = vmul.f32 %v1296, 1.442695
    %v1477 = vpow.pop %v1476
    %v1478 = vmul.f32 %v1297, 1.442695
    %v1479 = vpow.pop %v1478
    %v1480 = vmul.f32 %v1298, 1.442695
    %v1481 = vpow.pop %v1480
    %v1482 = vmul.f32 %v1299, 1.442695
    %v1483 = vpow.pop %v1482
    %v1484 = vmul.f32 %v1300, 1.442695
    %v1485 = vpow.pop %v1484
    %v1486 = vmul.f32 %v1301, 1.442695
    %v1487 = vpow.pop %v1486
    %v1488 = vmul.f32 %v1302, 1.442695
    %v1489 = vpow.pop %v1488
    %v1490 = vmul.f32 %v1303, 1.442695
    %v1491 = vpow.pop %v1490
    %v1492 = vmul.f32 %v1304, 1.442695
    %v1493 = vpow.pop %v1492
    %v1494 = vmul.f32 %v1305, 1.442695
    %v1495 = vpow.pop %v1494
    %v1496 = vmul.f32 %v1306, 1.442695
    %v1497 = vpow.pop %v1496
    %v1498 = vmul.f32 %v1307, 1.442695
    %v1499 = vpow.pop %v1498
    %v1500 = vmul.f32 %v1308, 1.442695
    %v1501 = vpow.pop %v1500
    %v1502 = vmul.f32 %v1309, 1.442695
    %v1503 = vpow.pop %v1502
    %v1504 = vmul.f32 %v1310, 1.442695
    %v1505 = vpow.pop %v1504
    %v1506 = vmul.f32 %v1311, 1.442695
    %v1507 = vpow.pop %v1506
    %v1508 = vmul.f32 %v1312, 1.442695
    %v1509 = vpow.pop %v1508
    %v1510 = vmul.f32 %v1313, 1.442695
    %v1511 = vpow.pop %v1510
    %v1512 = vmul.f32 %v1314, 1.442695
    %v1513 = vpow.pop %v1512
    %v1514 = vmul.f32 %v1315, 1.442695
    %v1515 = vpow.pop %v1514
    %v1516 = vmul.f32 %v1316, 1.442695
    %v1517 = vpow.pop %v1516
    %v1518 = vmul.f32 %v1317, 1.442695
    %v1519 = vpow.pop %v1518
    %v1520 = vmul.f32 %v1318, 1.442695
    %v1521 = vpow.pop %v1520
    %v1522 = vmul.f32 %v1319, 1.442695
    %v1523 = vpow.pop %v1522
    %v1524 = vmul.f32 %v1320, 1.442695
    %v1525 = vpow.pop %v1524
    %v1526 = vmul.f32 %v1321, 1.442695
    %v1527 = vpow.pop %v1526
    %v1528 = vmul.f32 %v1322, 1.442695
    %v1529 = vpow.pop %v1528
    %v1530 = vmul.f32 %v1323, 1.442695
    %v1531 = vpow.pop %v1530
    %v1532 = vmul.f32 %v1324, 1.442695
    %v1533 = vpow.pop %v1532
    %v1534 = vmul.f32 %v1325, 1.442695
    %v1535 = vpow.pop %v1534
    %v1536 = vmul.f32 %v1326, 1.442695
    %v1537 = vpow.pop %v1536
    %v1538 = vmul.f32 %v1327, 1.442695
    %v1539 = vpow.pop %v1538
    %v1540 = vmul.f32 %v1328, 1.442695
    %v1541 = vpow.pop %v1540
    %v1542 = vmul.f32 %v1329, 1.442695
    %v1543 = vpow.pop %v1542
    %v1544 = vmul.f32 %v1330, 1.442695
    %v1545 = vpow.pop %v1544
    %v1546 = vmul.f32 %v1331, 1.442695
    %v1547 = vpow.pop %v1546
    %v1548 = vmul.f32 %v1332, 1.442695
    %v1549 = vpow.pop %v1548
    %v1550 = vmul.f32 %v1333, 1.442695
    %v1551 = vpow.pop %v1550
    %v1552 = vmul.f32 %v1334, 1.442695
    %v1553 = vpow.pop %v1552
    %v1554 = vmul.f32 %v1335, 1.442695
    %v1555 = vpow.pop %v1554
    %v1556 = vmul.f32 %v1336, 1.442695
    %v1557 = vpow.pop %v1556
    %v1558 = vmul.f32 %v1337, 1.442695
    %v1559 = vpow.pop %v1558
    %v1560 = vmul.f32 %v1338, 1.442695
    %v1561 = vpow.pop %v1560
    %v1562 = vmul.f32 %v1339, 1.442695
    %v1563 = vpow.pop %v1562
    %v1564 = vmul.f32 %v1340, 1.442695
    %v1565 = vpow.pop %v1564
    %v1566 = vmul.f32 %v1341, 1.442695
    %v1567 = vpow.pop %v1566
    %v1568 = vmul.f32 %v1342, 1.442695
    %v1569 = vpow.pop %v1568
    %v1570 = vmul.f32 %v1343, 1.442695
    %v1571 = vpow.pop %v1570
    %v1572 = vmul.f32 %v1344, 1.442695
    %v1573 = vpow.pop %v1572
    %v1574 = vmul.f32 %v1345, 1.442695
    %v1575 = vpow.pop %v1574
    %v1576 = vmul.f32 %v1346, 1.442695
    %v1577 = vpow.pop %v1576
    %v1578 = vmul.f32 %v1347, 1.442695
    %v1579 = vpow.pop %v1578
    %v1580 = vmul.f32 %v1348, 1.442695
    %v1581 = vpow.pop %v1580
    %v1582 = vmul.f32 %v1349, 1.442695
    %v1583 = vpow.pop %v1582
    %v1584 = vmul.f32 %v1350, 1.442695
    %v1585 = vpow.pop %v1584
    %v1586 = vmul.f32 %v1351, 1.442695
    %v1587 = vpow.pop %v1586
    %v1588 = vmul.f32 %v1352, 1.442695
    %v1589 = vpow.pop %v1588
    %v1590 = vmul.f32 %v1353, 1.442695
    %v1591 = vpow.pop %v1590
    %v1592 = vmul.f32 %v1354, 1.442695
    %v1593 = vpow.pop %v1592
    %v1594 = vmul.f32 %v1355, 1.442695
    %v1595 = vpow.pop %v1594
    %v1596 = vmul.f32 %v1356, 1.442695
    %v1597 = vpow.pop %v1596
    %v1598 = vmul.f32 %v1357, 1.442695
    %v1599 = vpow.pop %v1598
    %v1600 = vmul.f32 %v1358, 1.442695
    %v1601 = vpow.pop %v1600
    %v1602 = vmul.f32 %v1359, 1.442695
    %v1603 = vpow.pop %v1602
    %v1604 = vmul.f32 %v1360, 1.442695
    %v1605 = vpow.pop %v1604
    %v1606 = vmul.f32 %v1361, 1.442695
    %v1607 = vpow.pop %v1606
    %v1608 = vmul.f32 %v1362, 1.442695
    %v1609 = vpow.pop %v1608
    %v1610 = vmul.f32 %v1363, 1.442695
    %v1611 = vpow.pop %v1610
    %v1612 = vmul.f32 %v1364, 1.442695
    %v1613 = vpow.pop %v1612
    %v1614 = vmul.f32 %v1365, 1.442695
    %v1615 = vpow.pop %v1614
    %v1616 = vmul.f32 %v1366, 1.442695
    %v1617 = vpow.pop %v1616
    %v1618 = vmul.f32 %v1367, 1.442695
    %v1619 = vpow.pop %v1618
    %v1620 = vmul.f32 %v1368, 1.442695
    %v1621 = vpow.pop %v1620
    %v1622 = vmul.f32 %v1369, 1.442695
    %v1623 = vpow.pop %v1622
    %v1624 = vmul.f32 %v1370, 1.442695
    %v1625 = vpow.pop %v1624
    %v1626 = vmul.f32 %v1371, 1.442695
    %v1627 = vpow.pop %v1626
    %1628 = vadd.xlane.f32.xlu0 %v1373
    %v1629 = vpop.xlane.xlu0 %1628
    %1630 = vadd.xlane.f32.xlu0 %v1375
    %v1631 = vpop.xlane.xlu0 %1630
    %1632 = vadd.xlane.f32.xlu0 %v1377
    %v1633 = vpop.xlane.xlu0 %1632
    %1634 = vadd.xlane.f32.xlu0 %v1379
    %v1635 = vpop.xlane.xlu0 %1634
    %1636 = vadd.xlane.f32.xlu0 %v1381
    %v1637 = vpop.xlane.xlu0 %1636
    %1638 = vadd.xlane.f32.xlu0 %v1383
    %v1639 = vpop.xlane.xlu0 %1638
    %1640 = vadd.xlane.f32.xlu0 %v1385
    %v1641 = vpop.xlane.xlu0 %1640
    %1642 = vadd.xlane.f32.xlu0 %v1387
    %v1643 = vpop.xlane.xlu0 %1642
    %1644 = vadd.xlane.f32.xlu0 %v1389
    %v1645 = vpop.xlane.xlu0 %1644
    %1646 = vadd.xlane.f32.xlu0 %v1391
    %v1647 = vpop.xlane.xlu0 %1646
    %1648 = vadd.xlane.f32.xlu0 %v1393
    %v1649 = vpop.xlane.xlu0 %1648
    %1650 = vadd.xlane.f32.xlu0 %v1395
    %v1651 = vpop.xlane.xlu0 %1650
    %1652 = vadd.xlane.f32.xlu0 %v1397
    %v1653 = vpop.xlane.xlu0 %1652
    %1654 = vadd.xlane.f32.xlu0 %v1399
    %v1655 = vpop.xlane.xlu0 %1654
    %1656 = vadd.xlane.f32.xlu0 %v1401
    %v1657 = vpop.xlane.xlu0 %1656
    %1658 = vadd.xlane.f32.xlu0 %v1403
    %v1659 = vpop.xlane.xlu0 %1658
    %1660 = vadd.xlane.f32.xlu0 %v1405
    %v1661 = vpop.xlane.xlu0 %1660
    %1662 = vadd.xlane.f32.xlu0 %v1407
    %v1663 = vpop.xlane.xlu0 %1662
    %1664 = vadd.xlane.f32.xlu0 %v1409
    %v1665 = vpop.xlane.xlu0 %1664
    %1666 = vadd.xlane.f32.xlu0 %v1411
    %v1667 = vpop.xlane.xlu0 %1666
    %1668 = vadd.xlane.f32.xlu0 %v1413
    %v1669 = vpop.xlane.xlu0 %1668
    %1670 = vadd.xlane.f32.xlu0 %v1415
    %v1671 = vpop.xlane.xlu0 %1670
    %1672 = vadd.xlane.f32.xlu0 %v1417
    %v1673 = vpop.xlane.xlu0 %1672
    %1674 = vadd.xlane.f32.xlu0 %v1419
    %v1675 = vpop.xlane.xlu0 %1674
    %1676 = vadd.xlane.f32.xlu0 %v1421
    %v1677 = vpop.xlane.xlu0 %1676
    %1678 = vadd.xlane.f32.xlu0 %v1423
    %v1679 = vpop.xlane.xlu0 %1678
    %1680 = vadd.xlane.f32.xlu0 %v1425
    %v1681 = vpop.xlane.xlu0 %1680
    %1682 = vadd.xlane.f32.xlu0 %v1427
    %v1683 = vpop.xlane.xlu0 %1682
    %1684 = vadd.xlane.f32.xlu0 %v1429
    %v1685 = vpop.xlane.xlu0 %1684
    %1686 = vadd.xlane.f32.xlu0 %v1431
    %v1687 = vpop.xlane.xlu0 %1686
    %1688 = vadd.xlane.f32.xlu0 %v1433
    %v1689 = vpop.xlane.xlu0 %1688
    %1690 = vadd.xlane.f32.xlu0 %v1435
    %v1691 = vpop.xlane.xlu0 %1690
    %1692 = vadd.xlane.f32.xlu0 %v1437
    %v1693 = vpop.xlane.xlu0 %1692
    %1694 = vadd.xlane.f32.xlu0 %v1439
    %v1695 = vpop.xlane.xlu0 %1694
    %1696 = vadd.xlane.f32.xlu0 %v1441
    %v1697 = vpop.xlane.xlu0 %1696
    %1698 = vadd.xlane.f32.xlu0 %v1443
    %v1699 = vpop.xlane.xlu0 %1698
    %1700 = vadd.xlane.f32.xlu0 %v1445
    %v1701 = vpop.xlane.xlu0 %1700
    %1702 = vadd.xlane.f32.xlu0 %v1447
    %v1703 = vpop.xlane.xlu0 %1702
    %1704 = vadd.xlane.f32.xlu0 %v1449
    %v1705 = vpop.xlane.xlu0 %1704
    %1706 = vadd.xlane.f32.xlu0 %v1451
    %v1707 = vpop.xlane.xlu0 %1706
    %1708 = vadd.xlane.f32.xlu0 %v1453
    %v1709 = vpop.xlane.xlu0 %1708
    %1710 = vadd.xlane.f32.xlu0 %v1455
    %v1711 = vpop.xlane.xlu0 %1710
    %1712 = vadd.xlane.f32.xlu0 %v1457
    %v1713 = vpop.xlane.xlu0 %1712
    %1714 = vadd.xlane.f32.xlu0 %v1459
    %v1715 = vpop.xlane.xlu0 %1714
    %1716 = vadd.xlane.f32.xlu0 %v1461
    %v1717 = vpop.xlane.xlu0 %1716
    %1718 = vadd.xlane.f32.xlu0 %v1463
    %v1719 = vpop.xlane.xlu0 %1718
    %1720 = vadd.xlane.f32.xlu0 %v1465
    %v1721 = vpop.xlane.xlu0 %1720
    %1722 = vadd.xlane.f32.xlu0 %v1467
    %v1723 = vpop.xlane.xlu0 %1722
    %1724 = vadd.xlane.f32.xlu0 %v1469
    %v1725 = vpop.xlane.xlu0 %1724
    %1726 = vadd.xlane.f32.xlu0 %v1471
    %v1727 = vpop.xlane.xlu0 %1726
    %1728 = vadd.xlane.f32.xlu0 %v1473
    %v1729 = vpop.xlane.xlu0 %1728
    %1730 = vadd.xlane.f32.xlu0 %v1475
    %v1731 = vpop.xlane.xlu0 %1730
    %1732 = vadd.xlane.f32.xlu0 %v1477
    %v1733 = vpop.xlane.xlu0 %1732
    %1734 = vadd.xlane.f32.xlu0 %v1479
    %v1735 = vpop.xlane.xlu0 %1734
    %1736 = vadd.xlane.f32.xlu0 %v1481
    %v1737 = vpop.xlane.xlu0 %1736
    %1738 = vadd.xlane.f32.xlu0 %v1483
    %v1739 = vpop.xlane.xlu0 %1738
    %1740 = vadd.xlane.f32.xlu0 %v1485
    %v1741 = vpop.xlane.xlu0 %1740
    %1742 = vadd.xlane.f32.xlu0 %v1487
    %v1743 = vpop.xlane.xlu0 %1742
    %1744 = vadd.xlane.f32.xlu0 %v1489
    %v1745 = vpop.xlane.xlu0 %1744
    %1746 = vadd.xlane.f32.xlu0 %v1491
    %v1747 = vpop.xlane.xlu0 %1746
    %1748 = vadd.xlane.f32.xlu0 %v1493
    %v1749 = vpop.xlane.xlu0 %1748
    %1750 = vadd.xlane.f32.xlu0 %v1495
    %v1751 = vpop.xlane.xlu0 %1750
    %1752 = vadd.xlane.f32.xlu0 %v1497
    %v1753 = vpop.xlane.xlu0 %1752
    %1754 = vadd.xlane.f32.xlu0 %v1499
    %v1755 = vpop.xlane.xlu0 %1754
    %1756 = vadd.xlane.f32.xlu0 %v1501
    %v1757 = vpop.xlane.xlu0 %1756
    %1758 = vadd.xlane.f32.xlu0 %v1503
    %v1759 = vpop.xlane.xlu0 %1758
    %1760 = vadd.xlane.f32.xlu0 %v1505
    %v1761 = vpop.xlane.xlu0 %1760
    %1762 = vadd.xlane.f32.xlu0 %v1507
    %v1763 = vpop.xlane.xlu0 %1762
    %1764 = vadd.xlane.f32.xlu0 %v1509
    %v1765 = vpop.xlane.xlu0 %1764
    %1766 = vadd.xlane.f32.xlu0 %v1511
    %v1767 = vpop.xlane.xlu0 %1766
    %1768 = vadd.xlane.f32.xlu0 %v1513
    %v1769 = vpop.xlane.xlu0 %1768
    %1770 = vadd.xlane.f32.xlu0 %v1515
    %v1771 = vpop.xlane.xlu0 %1770
    %1772 = vadd.xlane.f32.xlu0 %v1517
    %v1773 = vpop.xlane.xlu0 %1772
    %1774 = vadd.xlane.f32.xlu0 %v1519
    %v1775 = vpop.xlane.xlu0 %1774
    %1776 = vadd.xlane.f32.xlu0 %v1521
    %v1777 = vpop.xlane.xlu0 %1776
    %1778 = vadd.xlane.f32.xlu0 %v1523
    %v1779 = vpop.xlane.xlu0 %1778
    %1780 = vadd.xlane.f32.xlu0 %v1525
    %v1781 = vpop.xlane.xlu0 %1780
    %1782 = vadd.xlane.f32.xlu0 %v1527
    %v1783 = vpop.xlane.xlu0 %1782
    %1784 = vadd.xlane.f32.xlu0 %v1529
    %v1785 = vpop.xlane.xlu0 %1784
    %1786 = vadd.xlane.f32.xlu0 %v1531
    %v1787 = vpop.xlane.xlu0 %1786
    %1788 = vadd.xlane.f32.xlu0 %v1533
    %v1789 = vpop.xlane.xlu0 %1788
    %1790 = vadd.xlane.f32.xlu0 %v1535
    %v1791 = vpop.xlane.xlu0 %1790
    %1792 = vadd.xlane.f32.xlu0 %v1537
    %v1793 = vpop.xlane.xlu0 %1792
    %1794 = vadd.xlane.f32.xlu0 %v1539
    %v1795 = vpop.xlane.xlu0 %1794
    %1796 = vadd.xlane.f32.xlu0 %v1541
    %v1797 = vpop.xlane.xlu0 %1796
    %1798 = vadd.xlane.f32.xlu0 %v1543
    %v1799 = vpop.xlane.xlu0 %1798
    %1800 = vadd.xlane.f32.xlu0 %v1545
    %v1801 = vpop.xlane.xlu0 %1800
    %1802 = vadd.xlane.f32.xlu0 %v1547
    %v1803 = vpop.xlane.xlu0 %1802
    %1804 = vadd.xlane.f32.xlu0 %v1549
    %v1805 = vpop.xlane.xlu0 %1804
    %1806 = vadd.xlane.f32.xlu0 %v1551
    %v1807 = vpop.xlane.xlu0 %1806
    %1808 = vadd.xlane.f32.xlu0 %v1553
    %v1809 = vpop.xlane.xlu0 %1808
    %1810 = vadd.xlane.f32.xlu0 %v1555
    %v1811 = vpop.xlane.xlu0 %1810
    %1812 = vadd.xlane.f32.xlu0 %v1557
    %v1813 = vpop.xlane.xlu0 %1812
    %1814 = vadd.xlane.f32.xlu0 %v1559
    %v1815 = vpop.xlane.xlu0 %1814
    %1816 = vadd.xlane.f32.xlu0 %v1561
    %v1817 = vpop.xlane.xlu0 %1816
    %1818 = vadd.xlane.f32.xlu0 %v1563
    %v1819 = vpop.xlane.xlu0 %1818
    %1820 = vadd.xlane.f32.xlu0 %v1565
    %v1821 = vpop.xlane.xlu0 %1820
    %1822 = vadd.xlane.f32.xlu0 %v1567
    %v1823 = vpop.xlane.xlu0 %1822
    %1824 = vadd.xlane.f32.xlu0 %v1569
    %v1825 = vpop.xlane.xlu0 %1824
    %1826 = vadd.xlane.f32.xlu0 %v1571
    %v1827 = vpop.xlane.xlu0 %1826
    %1828 = vadd.xlane.f32.xlu0 %v1573
    %v1829 = vpop.xlane.xlu0 %1828
    %1830 = vadd.xlane.f32.xlu0 %v1575
    %v1831 = vpop.xlane.xlu0 %1830
    %1832 = vadd.xlane.f32.xlu0 %v1577
    %v1833 = vpop.xlane.xlu0 %1832
    %1834 = vadd.xlane.f32.xlu0 %v1579
    %v1835 = vpop.xlane.xlu0 %1834
    %1836 = vadd.xlane.f32.xlu0 %v1581
    %v1837 = vpop.xlane.xlu0 %1836
    %1838 = vadd.xlane.f32.xlu0 %v1583
    %v1839 = vpop.xlane.xlu0 %1838
    %1840 = vadd.xlane.f32.xlu0 %v1585
    %v1841 = vpop.xlane.xlu0 %1840
    %1842 = vadd.xlane.f32.xlu0 %v1587
    %v1843 = vpop.xlane.xlu0 %1842
    %1844 = vadd.xlane.f32.xlu0 %v1589
    %v1845 = vpop.xlane.xlu0 %1844
    %1846 = vadd.xlane.f32.xlu0 %v1591
    %v1847 = vpop.xlane.xlu0 %1846
    %1848 = vadd.xlane.f32.xlu0 %v1593
    %v1849 = vpop.xlane.xlu0 %1848
    %1850 = vadd.xlane.f32.xlu0 %v1595
    %v1851 = vpop.xlane.xlu0 %1850
    %1852 = vadd.xlane.f32.xlu0 %v1597
    %v1853 = vpop.xlane.xlu0 %1852
    %1854 = vadd.xlane.f32.xlu0 %v1599
    %v1855 = vpop.xlane.xlu0 %1854
    %1856 = vadd.xlane.f32.xlu0 %v1601
    %v1857 = vpop.xlane.xlu0 %1856
    %1858 = vadd.xlane.f32.xlu0 %v1603
    %v1859 = vpop.xlane.xlu0 %1858
    %1860 = vadd.xlane.f32.xlu0 %v1605
    %v1861 = vpop.xlane.xlu0 %1860
    %1862 = vadd.xlane.f32.xlu0 %v1607
    %v1863 = vpop.xlane.xlu0 %1862
    %1864 = vadd.xlane.f32.xlu0 %v1609
    %v1865 = vpop.xlane.xlu0 %1864
    %1866 = vadd.xlane.f32.xlu0 %v1611
    %v1867 = vpop.xlane.xlu0 %1866
    %1868 = vadd.xlane.f32.xlu0 %v1613
    %v1869 = vpop.xlane.xlu0 %1868
    %1870 = vadd.xlane.f32.xlu0 %v1615
    %v1871 = vpop.xlane.xlu0 %1870
    %1872 = vadd.xlane.f32.xlu0 %v1617
    %v1873 = vpop.xlane.xlu0 %1872
    %1874 = vadd.xlane.f32.xlu0 %v1619
    %v1875 = vpop.xlane.xlu0 %1874
    %1876 = vadd.xlane.f32.xlu0 %v1621
    %v1877 = vpop.xlane.xlu0 %1876
    %1878 = vadd.xlane.f32.xlu0 %v1623
    %v1879 = vpop.xlane.xlu0 %1878
    %1880 = vadd.xlane.f32.xlu0 %v1625
    %v1881 = vpop.xlane.xlu0 %1880
    %1882 = vadd.xlane.f32.xlu0 %v1627
    %v1883 = vpop.xlane.xlu0 %1882
    %v1884 = vrcp.pop %v1629
    %v1885 = vrcp.pop %v1631
    %v1886 = vrcp.pop %v1633
    %v1887 = vrcp.pop %v1635
    %v1888 = vrcp.pop %v1637
    %v1889 = vrcp.pop %v1639
    %v1890 = vrcp.pop %v1641
    %v1891 = vrcp.pop %v1643
    %v1892 = vrcp.pop %v1645
    %v1893 = vrcp.pop %v1647
    %v1894 = vrcp.pop %v1649
    %v1895 = vrcp.pop %v1651
    %v1896 = vrcp.pop %v1653
    %v1897 = vrcp.pop %v1655
    %v1898 = vrcp.pop %v1657
    %v1899 = vrcp.pop %v1659
    %v1900 = vrcp.pop %v1661
    %v1901 = vrcp.pop %v1663
    %v1902 = vrcp.pop %v1665
    %v1903 = vrcp.pop %v1667
    %v1904 = vrcp.pop %v1669
    %v1905 = vrcp.pop %v1671
    %v1906 = vrcp.pop %v1673
    %v1907 = vrcp.pop %v1675
    %v1908 = vrcp.pop %v1677
    %v1909 = vrcp.pop %v1679
    %v1910 = vrcp.pop %v1681
    %v1911 = vrcp.pop %v1683
    %v1912 = vrcp.pop %v1685
    %v1913 = vrcp.pop %v1687
    %v1914 = vrcp.pop %v1689
    %v1915 = vrcp.pop %v1691
    %v1916 = vrcp.pop %v1693
    %v1917 = vrcp.pop %v1695
    %v1918 = vrcp.pop %v1697
    %v1919 = vrcp.pop %v1699
    %v1920 = vrcp.pop %v1701
    %v1921 = vrcp.pop %v1703
    %v1922 = vrcp.pop %v1705
    %v1923 = vrcp.pop %v1707
    %v1924 = vrcp.pop %v1709
    %v1925 = vrcp.pop %v1711
    %v1926 = vrcp.pop %v1713
    %v1927 = vrcp.pop %v1715
    %v1928 = vrcp.pop %v1717
    %v1929 = vrcp.pop %v1719
    %v1930 = vrcp.pop %v1721
    %v1931 = vrcp.pop %v1723
    %v1932 = vrcp.pop %v1725
    %v1933 = vrcp.pop %v1727
    %v1934 = vrcp.pop %v1729
    %v1935 = vrcp.pop %v1731
    %v1936 = vrcp.pop %v1733
    %v1937 = vrcp.pop %v1735
    %v1938 = vrcp.pop %v1737
    %v1939 = vrcp.pop %v1739
    %v1940 = vrcp.pop %v1741
    %v1941 = vrcp.pop %v1743
    %v1942 = vrcp.pop %v1745
    %v1943 = vrcp.pop %v1747
    %v1944 = vrcp.pop %v1749
    %v1945 = vrcp.pop %v1751
    %v1946 = vrcp.pop %v1753
    %v1947 = vrcp.pop %v1755
    %v1948 = vrcp.pop %v1757
    %v1949 = vrcp.pop %v1759
    %v1950 = vrcp.pop %v1761
    %v1951 = vrcp.pop %v1763
    %v1952 = vrcp.pop %v1765
    %v1953 = vrcp.pop %v1767
    %v1954 = vrcp.pop %v1769
    %v1955 = vrcp.pop %v1771
    %v1956 = vrcp.pop %v1773
    %v1957 = vrcp.pop %v1775
    %v1958 = vrcp.pop %v1777
    %v1959 = vrcp.pop %v1779
    %v1960 = vrcp.pop %v1781
    %v1961 = vrcp.pop %v1783
    %v1962 = vrcp.pop %v1785
    %v1963 = vrcp.pop %v1787
    %v1964 = vrcp.pop %v1789
    %v1965 = vrcp.pop %v1791
    %v1966 = vrcp.pop %v1793
    %v1967 = vrcp.pop %v1795
    %v1968 = vrcp.pop %v1797
    %v1969 = vrcp.pop %v1799
    %v1970 = vrcp.pop %v1801
    %v1971 = vrcp.pop %v1803
    %v1972 = vrcp.pop %v1805
    %v1973 = vrcp.pop %v1807
    %v1974 = vrcp.pop %v1809
    %v1975 = vrcp.pop %v1811
    %v1976 = vrcp.pop %v1813
    %v1977 = vrcp.pop %v1815
    %v1978 = vrcp.pop %v1817
    %v1979 = vrcp.pop %v1819
    %v1980 = vrcp.pop %v1821
    %v1981 = vrcp.pop %v1823
    %v1982 = vrcp.pop %v1825
    %v1983 = vrcp.pop %v1827
    %v1984 = vrcp.pop %v1829
    %v1985 = vrcp.pop %v1831
    %v1986 = vrcp.pop %v1833
    %v1987 = vrcp.pop %v1835
    %v1988 = vrcp.pop %v1837
    %v1989 = vrcp.pop %v1839
    %v1990 = vrcp.pop %v1841
    %v1991 = vrcp.pop %v1843
    %v1992 = vrcp.pop %v1845
    %v1993 = vrcp.pop %v1847
    %v1994 = vrcp.pop %v1849
    %v1995 = vrcp.pop %v1851
    %v1996 = vrcp.pop %v1853
    %v1997 = vrcp.pop %v1855
    %v1998 = vrcp.pop %v1857
    %v1999 = vrcp.pop %v1859
    %v2000 = vrcp.pop %v1861
    %v2001 = vrcp.pop %v1863
    %v2002 = vrcp.pop %v1865
    %v2003 = vrcp.pop %v1867
    %v2004 = vrcp.pop %v1869
    %v2005 = vrcp.pop %v1871
    %v2006 = vrcp.pop %v1873
    %v2007 = vrcp.pop %v1875
    %v2008 = vrcp.pop %v1877
    %v2009 = vrcp.pop %v1879
    %v2010 = vrcp.pop %v1881
    %v2011 = vrcp.pop %v1883
    %v2012 = vmul.f32 %v1373, %v1884
    %v2013 = vmul.f32 %v1375, %v1885
    %v2014 = vmul.f32 %v1377, %v1886
    %v2015 = vmul.f32 %v1379, %v1887
    %v2016 = vmul.f32 %v1381, %v1888
    %v2017 = vmul.f32 %v1383, %v1889
    %v2018 = vmul.f32 %v1385, %v1890
    %v2019 = vmul.f32 %v1387, %v1891
    %v2020 = vmul.f32 %v1389, %v1892
    %v2021 = vmul.f32 %v1391, %v1893
    %v2022 = vmul.f32 %v1393, %v1894
    %v2023 = vmul.f32 %v1395, %v1895
    %v2024 = vmul.f32 %v1397, %v1896
    %v2025 = vmul.f32 %v1399, %v1897
    %v2026 = vmul.f32 %v1401, %v1898
    %v2027 = vmul.f32 %v1403, %v1899
    %v2028 = vmul.f32 %v1405, %v1900
    %v2029 = vmul.f32 %v1407, %v1901
    %v2030 = vmul.f32 %v1409, %v1902
    %v2031 = vmul.f32 %v1411, %v1903
    %v2032 = vmul.f32 %v1413, %v1904
    %v2033 = vmul.f32 %v1415, %v1905
    %v2034 = vmul.f32 %v1417, %v1906
    %v2035 = vmul.f32 %v1419, %v1907
    %v2036 = vmul.f32 %v1421, %v1908
    %v2037 = vmul.f32 %v1423, %v1909
    %v2038 = vmul.f32 %v1425, %v1910
    %v2039 = vmul.f32 %v1427, %v1911
    %v2040 = vmul.f32 %v1429, %v1912
    %v2041 = vmul.f32 %v1431, %v1913
    %v2042 = vmul.f32 %v1433, %v1914
    %v2043 = vmul.f32 %v1435, %v1915
    %v2044 = vmul.f32 %v1437, %v1916
    %v2045 = vmul.f32 %v1439, %v1917
    %v2046 = vmul.f32 %v1441, %v1918
    %v2047 = vmul.f32 %v1443, %v1919
    %v2048 = vmul.f32 %v1445, %v1920
    %v2049 = vmul.f32 %v1447, %v1921
    %v2050 = vmul.f32 %v1449, %v1922
    %v2051 = vmul.f32 %v1451, %v1923
    %v2052 = vmul.f32 %v1453, %v1924
    %v2053 = vmul.f32 %v1455, %v1925
    %v2054 = vmul.f32 %v1457, %v1926
    %v2055 = vmul.f32 %v1459, %v1927
    %v2056 = vmul.f32 %v1461, %v1928
    %v2057 = vmul.f32 %v1463, %v1929
    %v2058 = vmul.f32 %v1465, %v1930
    %v2059 = vmul.f32 %v1467, %v1931
    %v2060 = vmul.f32 %v1469, %v1932
    %v2061 = vmul.f32 %v1471, %v1933
    %v2062 = vmul.f32 %v1473, %v1934
    %v2063 = vmul.f32 %v1475, %v1935
    %v2064 = vmul.f32 %v1477, %v1936
    %v2065 = vmul.f32 %v1479, %v1937
    %v2066 = vmul.f32 %v1481, %v1938
    %v2067 = vmul.f32 %v1483, %v1939
    %v2068 = vmul.f32 %v1485, %v1940
    %v2069 = vmul.f32 %v1487, %v1941
    %v2070 = vmul.f32 %v1489, %v1942
    %v2071 = vmul.f32 %v1491, %v1943
    %v2072 = vmul.f32 %v1493, %v1944
    %v2073 = vmul.f32 %v1495, %v1945
    %v2074 = vmul.f32 %v1497, %v1946
    %v2075 = vmul.f32 %v1499, %v1947
    %v2076 = vmul.f32 %v1501, %v1948
    %v2077 = vmul.f32 %v1503, %v1949
    %v2078 = vmul.f32 %v1505, %v1950
    %v2079 = vmul.f32 %v1507, %v1951
    %v2080 = vmul.f32 %v1509, %v1952
    %v2081 = vmul.f32 %v1511, %v1953
    %v2082 = vmul.f32 %v1513, %v1954
    %v2083 = vmul.f32 %v1515, %v1955
    %v2084 = vmul.f32 %v1517, %v1956
    %v2085 = vmul.f32 %v1519, %v1957
    %v2086 = vmul.f32 %v1521, %v1958
    %v2087 = vmul.f32 %v1523, %v1959
    %v2088 = vmul.f32 %v1525, %v1960
    %v2089 = vmul.f32 %v1527, %v1961
    %v2090 = vmul.f32 %v1529, %v1962
    %v2091 = vmul.f32 %v1531, %v1963
    %v2092 = vmul.f32 %v1533, %v1964
    %v2093 = vmul.f32 %v1535, %v1965
    %v2094 = vmul.f32 %v1537, %v1966
    %v2095 = vmul.f32 %v1539, %v1967
    %v2096 = vmul.f32 %v1541, %v1968
    %v2097 = vmul.f32 %v1543, %v1969
    %v2098 = vmul.f32 %v1545, %v1970
    %v2099 = vmul.f32 %v1547, %v1971
    %v2100 = vmul.f32 %v1549, %v1972
    %v2101 = vmul.f32 %v1551, %v1973
    %v2102 = vmul.f32 %v1553, %v1974
    %v2103 = vmul.f32 %v1555, %v1975
    %v2104 = vmul.f32 %v1557, %v1976
    %v2105 = vmul.f32 %v1559, %v1977
    %v2106 = vmul.f32 %v1561, %v1978
    %v2107 = vmul.f32 %v1563, %v1979
    %v2108 = vmul.f32 %v1565, %v1980
    %v2109 = vmul.f32 %v1567, %v1981
    %v2110 = vmul.f32 %v1569, %v1982
    %v2111 = vmul.f32 %v1571, %v1983
    %v2112 = vmul.f32 %v1573, %v1984
    %v2113 = vmul.f32 %v1575, %v1985
    %v2114 = vmul.f32 %v1577, %v1986
    %v2115 = vmul.f32 %v1579, %v1987
    %v2116 = vmul.f32 %v1581, %v1988
    %v2117 = vmul.f32 %v1583, %v1989
    %v2118 = vmul.f32 %v1585, %v1990
    %v2119 = vmul.f32 %v1587, %v1991
    %v2120 = vmul.f32 %v1589, %v1992
    %v2121 = vmul.f32 %v1591, %v1993
    %v2122 = vmul.f32 %v1593, %v1994
    %v2123 = vmul.f32 %v1595, %v1995
    %v2124 = vmul.f32 %v1597, %v1996
    %v2125 = vmul.f32 %v1599, %v1997
    %v2126 = vmul.f32 %v1601, %v1998
    %v2127 = vmul.f32 %v1603, %v1999
    %v2128 = vmul.f32 %v1605, %v2000
    %v2129 = vmul.f32 %v1607, %v2001
    %v2130 = vmul.f32 %v1609, %v2002
    %v2131 = vmul.f32 %v1611, %v2003
    %v2132 = vmul.f32 %v1613, %v2004
    %v2133 = vmul.f32 %v1615, %v2005
    %v2134 = vmul.f32 %v1617, %v2006
    %v2135 = vmul.f32 %v1619, %v2007
    %v2136 = vmul.f32 %v1621, %v2008
    %v2137 = vmul.f32 %v1623, %v2009
    %v2138 = vmul.f32 %v1625, %v2010
    %v2139 = vmul.f32 %v1627, %v2011
    %v2140 = vld [vmem:[%s3] sm:$0xf]
    %v2141 = vld [vmem:[%s3 + $0x4] sm:$0xf]
    %v2142 = vld [vmem:[%s3 + $0x8] sm:$0xf]
    %v2143 = vld [vmem:[%s3 + $0xc] sm:$0xf]
    %v2144 = vld [vmem:[%s3 + $0x10] sm:$0xf]
    %v2145 = vld [vmem:[%s3 + $0x14] sm:$0xf]
    %v2146 = vld [vmem:[%s3 + $0x18] sm:$0xf]
    %v2147 = vld [vmem:[%s3 + $0x1c] sm:$0xf]
    %v2148 = vld [vmem:[%s3 + $0x20] sm:$0xf]
    %v2149 = vld [vmem:[%s3 + $0x24] sm:$0xf]
    %v2150 = vld [vmem:[%s3 + $0x28] sm:$0xf]
    %v2151 = vld [vmem:[%s3 + $0x2c] sm:$0xf]
    %v2152 = vld [vmem:[%s3 + $0x30] sm:$0xf]
    %v2153 = vld [vmem:[%s3 + $0x34] sm:$0xf]
    %v2154 = vld [vmem:[%s3 + $0x38] sm:$0xf]
    %v2155 = vld [vmem:[%s3 + $0x3c] sm:$0xf]
    %v2156 = vld [vmem:[%s4] sm:$0x1]
    %v2157 = vpack.c.bf16 %v2013, %v2012
    %v2158 = vpack.c.bf16 %v2015, %v2014
    %v2159 = vpack.c.bf16 %v2017, %v2016
    %v2160 = vpack.c.bf16 %v2019, %v2018
    %v2161 = vpack.c.bf16 %v2021, %v2020
    %v2162 = vpack.c.bf16 %v2023, %v2022
    %v2163 = vpack.c.bf16 %v2025, %v2024
    %v2164 = vpack.c.bf16 %v2027, %v2026
    %v2165 = vpack.c.bf16 %v2029, %v2028
    %v2166 = vpack.c.bf16 %v2031, %v2030
    %v2167 = vpack.c.bf16 %v2033, %v2032
    %v2168 = vpack.c.bf16 %v2035, %v2034
    %v2169 = vpack.c.bf16 %v2037, %v2036
    %v2170 = vpack.c.bf16 %v2039, %v2038
    %v2171 = vpack.c.bf16 %v2041, %v2040
    %v2172 = vpack.c.bf16 %v2043, %v2042
    %v2173 = vpack.c.bf16 %v2045, %v2044
    %v2174 = vpack.c.bf16 %v2047, %v2046
    %v2175 = vpack.c.bf16 %v2049, %v2048
    %v2176 = vpack.c.bf16 %v2051, %v2050
    %v2177 = vpack.c.bf16 %v2053, %v2052
    %v2178 = vpack.c.bf16 %v2055, %v2054
    %v2179 = vpack.c.bf16 %v2057, %v2056
    %v2180 = vpack.c.bf16 %v2059, %v2058
    %v2181 = vpack.c.bf16 %v2061, %v2060
    %v2182 = vpack.c.bf16 %v2063, %v2062
    %v2183 = vpack.c.bf16 %v2065, %v2064
    %v2184 = vpack.c.bf16 %v2067, %v2066
    %v2185 = vpack.c.bf16 %v2069, %v2068
    %v2186 = vpack.c.bf16 %v2071, %v2070
    %v2187 = vpack.c.bf16 %v2073, %v2072
    %v2188 = vpack.c.bf16 %v2075, %v2074
    %v2189 = vpack.c.bf16 %v2077, %v2076
    %v2190 = vpack.c.bf16 %v2079, %v2078
    %v2191 = vpack.c.bf16 %v2081, %v2080
    %v2192 = vpack.c.bf16 %v2083, %v2082
    %v2193 = vpack.c.bf16 %v2085, %v2084
    %v2194 = vpack.c.bf16 %v2087, %v2086
    %v2195 = vpack.c.bf16 %v2089, %v2088
    %v2196 = vpack.c.bf16 %v2091, %v2090
    %v2197 = vpack.c.bf16 %v2093, %v2092
    %v2198 = vpack.c.bf16 %v2095, %v2094
    %v2199 = vpack.c.bf16 %v2097, %v2096
    %v2200 = vpack.c.bf16 %v2099, %v2098
    %v2201 = vpack.c.bf16 %v2101, %v2100
    %v2202 = vpack.c.bf16 %v2103, %v2102
    %v2203 = vpack.c.bf16 %v2105, %v2104
    %v2204 = vpack.c.bf16 %v2107, %v2106
    %v2205 = vpack.c.bf16 %v2109, %v2108
    %v2206 = vpack.c.bf16 %v2111, %v2110
    %v2207 = vpack.c.bf16 %v2113, %v2112
    %v2208 = vpack.c.bf16 %v2115, %v2114
    %v2209 = vpack.c.bf16 %v2117, %v2116
    %v2210 = vpack.c.bf16 %v2119, %v2118
    %v2211 = vpack.c.bf16 %v2121, %v2120
    %v2212 = vpack.c.bf16 %v2123, %v2122
    %v2213 = vpack.c.bf16 %v2125, %v2124
    %v2214 = vpack.c.bf16 %v2127, %v2126
    %v2215 = vpack.c.bf16 %v2129, %v2128
    %v2216 = vpack.c.bf16 %v2131, %v2130
    %v2217 = vpack.c.bf16 %v2133, %v2132
    %v2218 = vpack.c.bf16 %v2135, %v2134
    %v2219 = vpack.c.bf16 %v2137, %v2136
    %v2220 = vpack.c.bf16 %v2139, %v2138
    %v2222 = vlaneseq
    %v2223 = vshrl.u32 %v2222, 7
    %v2224 = vsub.s32 0, %v2223
    %v2225 = vrot.slane %v2156, %v2224
    %v2243 = vunpack.c.l.b16 %v2140
    %v2244 = vunpack.c.l.b16 %v2141
    %v2245 = vunpack.c.l.b16 %v2142
    %v2246 = vunpack.c.l.b16 %v2143
    %v2247 = vunpack.c.l.b16 %v2144
    %v2248 = vunpack.c.l.b16 %v2145
    %v2249 = vunpack.c.l.b16 %v2146
    %v2250 = vunpack.c.l.b16 %v2147
    %v2251 = vunpack.c.l.b16 %v2148
    %v2252 = vunpack.c.l.b16 %v2149
    %v2253 = vunpack.c.l.b16 %v2150
    %v2254 = vunpack.c.l.b16 %v2151
    %v2255 = vunpack.c.l.b16 %v2152
    %v2256 = vunpack.c.l.b16 %v2153
    %v2257 = vunpack.c.l.b16 %v2154
    %v2258 = vunpack.c.l.b16 %v2155
    %v2259 = vpack.c.b16 %v2244, %v2243
    %v2260 = vpack.c.b16 %v2246, %v2245
    %v2261 = vpack.c.b16 %v2248, %v2247
    %v2262 = vpack.c.b16 %v2250, %v2249
    %v2263 = vpack.c.b16 %v2252, %v2251
    %v2264 = vpack.c.b16 %v2254, %v2253
    %v2265 = vpack.c.b16 %v2256, %v2255
    %v2266 = vpack.c.b16 %v2258, %v2257
    %2275 = vmatprep.subr.bf16.mxu0 0
    %2276 = vmatpush1.bf16.msra.mxu0 %v2259
    %2277 = vmatprep.subr.bf16.mxu0 0
    %2278 = vmatpush1.bf16.msra.mxu0 %v2260
    %2279 = vmatprep.subr.bf16.mxu0 0
    %2280 = vmatpush1.bf16.msra.mxu0 %v2261
    %2281 = vmatprep.subr.bf16.mxu0 0
    %2282 = vmatpush1.bf16.msra.mxu0 %v2262
    %2283 = vmatprep.subr.bf16.mxu0 0
    %2284 = vmatpush1.bf16.msra.mxu0 %v2263
    %2285 = vmatprep.subr.bf16.mxu0 0
    %2286 = vmatpush1.bf16.msra.mxu0 %v2264
    %2287 = vmatprep.subr.bf16.mxu0 0
    %2288 = vmatpush1.bf16.msra.mxu0 %v2265
    %2289 = vmatprep.subr.bf16.mxu0 0
    %2290 = vmatpush1.bf16.msra.mxu0 %v2266
    %2291 = vmatprep.subr.bf16.mxu0 0
    %2292 = vmatpush1.bf16.msra.mxu0 0
    %2293 = vmatprep.subr.bf16.mxu0 0
    %2294 = vmatpush1.bf16.msra.mxu0 0
    %2295 = vmatprep.subr.bf16.mxu0 0
    %2296 = vmatpush1.bf16.msra.mxu0 0
    %2297 = vmatprep.subr.bf16.mxu0 0
    %2298 = vmatpush1.bf16.msra.mxu0 0
    %2299 = vmatprep.subr.bf16.mxu0 0
    %2300 = vmatpush1.bf16.msra.mxu0 0
    %2301 = vmatprep.subr.bf16.mxu0 0
    %2302 = vmatpush1.bf16.msra.mxu0 0
    %2303 = vmatprep.subr.bf16.mxu0 0
    %2304 = vmatpush1.bf16.msra.mxu0 0
    %2305 = vmatprep.subr.bf16.mxu0 0
    %2306 = vmatpush1.bf16.msra.mxu0 0
    %2307 = vmatprep.mubr.bf16.mxu0 0
    %2308 = vmatmul.mubr.bf16.gmra.mrb[0].mxu0 %v2157
    %v2309 = vpop.f32.mrb[0].mxu0
    %v2310 = vadd.f32 %v2225, %v2309
    %v2311 = vpop.f32.mrb[0].mxu0
    %v2312 = vpop.f32.mrb[0].mxu0
    %v2313 = vadd.f32 %v2225, %v2312
    %v2314 = vpop.f32.mrb[0].mxu0
    %2315 = vmatprep.mubr.bf16.mxu0 0
    %2316 = vmatmul.mubr.bf16.gmra.mrb[0].mxu0 %v2158
    %v2317 = vpop.f32.mrb[0].mxu0
    %v2318 = vadd.f32 %v2225, %v2317
    %v2319 = vpop.f32.mrb[0].mxu0
    %v2320 = vpop.f32.mrb[0].mxu0
    %v2321 = vadd.f32 %v2225, %v2320
    %v2322 = vpop.f32.mrb[0].mxu0
    %2323 = vmatprep.mubr.bf16.mxu0 0
    %2324 = vmatmul.mubr.bf16.gmra.mrb[0].mxu0 %v2159
    %v2325 = vpop.f32.mrb[0].mxu0
    %v2326 = vadd.f32 %v2225, %v2325
    %v2327 = vpop.f32.mrb[0].mxu0
    %v2328 = vpop.f32.mrb[0].mxu0
    %v2329 = vadd.f32 %v2225, %v2328
    %v2330 = vpop.f32.mrb[0].mxu0
    %2331 = vmatprep.mubr.bf16.mxu0 0
    %2332 = vmatmul.mubr.bf16.gmra.mrb[0].mxu0 %v2160
    %v2333 = vpop.f32.mrb[0].mxu0
    %v2334 = vadd.f32 %v2225, %v2333
    %v2335 = vpop.f32.mrb[0].mxu0
    %v2336 = vpop.f32.mrb[0].mxu0
    %v2337 = vadd.f32 %v2225, %v2336
    %v2338 = vpop.f32.mrb[0].mxu0
    %2339 = vmatprep.mubr.bf16.mxu0 0
    %2340 = vmatmul.mubr.bf16.gmra.mrb[0].mxu0 %v2161
    %v2341 = vpop.f32.mrb[0].mxu0
    %v2342 = vadd.f32 %v2225, %v2341
    %v2343 = vpop.f32.mrb[0].mxu0
    %v2344 = vpop.f32.mrb[0].mxu0
    %v2345 = vadd.f32 %v2225, %v2344
    %v2346 = vpop.f32.mrb[0].mxu0
    %2347 = vmatprep.mubr.bf16.mxu0 0
    %2348 = vmatmul.mubr.bf16.gmra.mrb[0].mxu0 %v2162
    %v2349 = vpop.f32.mrb[0].mxu0
    %v2350 = vadd.f32 %v2225, %v2349
    %v2351 = vpop.f32.mrb[0].mxu0
    %v2352 = vpop.f32.mrb[0].mxu0
    %v2353 = vadd.f32 %v2225, %v2352
    %v2354 = vpop.f32.mrb[0].mxu0
    %2355 = vmatprep.mubr.bf16.mxu0 0
    %2356 = vmatmul.mubr.bf16.gmra.mrb[0].mxu0 %v2163
    %v2357 = vpop.f32.mrb[0].mxu0
    %v2358 = vadd.f32 %v2225, %v2357
    %v2359 = vpop.f32.mrb[0].mxu0
    %v2360 = vpop.f32.mrb[0].mxu0
    %v2361 = vadd.f32 %v2225, %v2360
    %v2362 = vpop.f32.mrb[0].mxu0
    %2363 = vmatprep.mubr.bf16.mxu0 0
    %2364 = vmatmul.mubr.bf16.gmra.mrb[0].mxu0 %v2164
    %v2365 = vpop.f32.mrb[0].mxu0
    %v2366 = vadd.f32 %v2225, %v2365
    %v2367 = vpop.f32.mrb[0].mxu0
    %v2368 = vpop.f32.mrb[0].mxu0
    %v2369 = vadd.f32 %v2225, %v2368
    %v2370 = vpop.f32.mrb[0].mxu0
    %2371 = vmatprep.mubr.bf16.mxu0 0
    %2372 = vmatmul.mubr.bf16.gmra.mrb[0].mxu0 %v2165
    %v2373 = vpop.f32.mrb[0].mxu0
    %v2374 = vadd.f32 %v2225, %v2373
    %v2375 = vpop.f32.mrb[0].mxu0
    %v2376 = vpop.f32.mrb[0].mxu0
    %v2377 = vadd.f32 %v2225, %v2376
    %v2378 = vpop.f32.mrb[0].mxu0
    %2379 = vmatprep.mubr.bf16.mxu0 0
    %2380 = vmatmul.mubr.bf16.gmra.mrb[0].mxu0 %v2166
    %v2381 = vpop.f32.mrb[0].mxu0
    %v2382 = vadd.f32 %v2225, %v2381
    %v2383 = vpop.f32.mrb[0].mxu0
    %v2384 = vpop.f32.mrb[0].mxu0
    %v2385 = vadd.f32 %v2225, %v2384
    %v2386 = vpop.f32.mrb[0].mxu0
    %2387 = vmatprep.mubr.bf16.mxu0 0
    %2388 = vmatmul.mubr.bf16.gmra.mrb[0].mxu0 %v2167
    %v2389 = vpop.f32.mrb[0].mxu0
    %v2390 = vadd.f32 %v2225, %v2389
    %v2391 = vpop.f32.mrb[0].mxu0
    %v2392 = vpop.f32.mrb[0].mxu0
    %v2393 = vadd.f32 %v2225, %v2392
    %v2394 = vpop.f32.mrb[0].mxu0
    %2395 = vmatprep.mubr.bf16.mxu0 0
    %2396 = vmatmul.mubr.bf16.gmra.mrb[0].mxu0 %v2168
    %v2397 = vpop.f32.mrb[0].mxu0
    %v2398 = vadd.f32 %v2225, %v2397
    %v2399 = vpop.f32.mrb[0].mxu0
    %v2400 = vpop.f32.mrb[0].mxu0
    %v2401 = vadd.f32 %v2225, %v2400
    %v2402 = vpop.f32.mrb[0].mxu0
    %2403 = vmatprep.mubr.bf16.mxu0 0
    %2404 = vmatmul.mubr.bf16.gmra.mrb[0].mxu0 %v2169
    %v2405 = vpop.f32.mrb[0].mxu0
    %v2406 = vadd.f32 %v2225, %v2405
    %v2407 = vpop.f32.mrb[0].mxu0
    %v2408 = vpop.f32.mrb[0].mxu0
    %v2409 = vadd.f32 %v2225, %v2408
    %v2410 = vpop.f32.mrb[0].mxu0
    %2411 = vmatprep.mubr.bf16.mxu0 0
    %2412 = vmatmul.mubr.bf16.gmra.mrb[0].mxu0 %v2170
    %v2413 = vpop.f32.mrb[0].mxu0
    %v2414 = vadd.f32 %v2225, %v2413
    %v2415 = vpop.f32.mrb[0].mxu0
    %v2416 = vpop.f32.mrb[0].mxu0
    %v2417 = vadd.f32 %v2225, %v2416
    %v2418 = vpop.f32.mrb[0].mxu0
    %2419 = vmatprep.mubr.bf16.mxu0 0
    %2420 = vmatmul.mubr.bf16.gmra.mrb[0].mxu0 %v2171
    %v2421 = vpop.f32.mrb[0].mxu0
    %v2422 = vadd.f32 %v2225, %v2421
    %v2423 = vpop.f32.mrb[0].mxu0
    %v2424 = vpop.f32.mrb[0].mxu0
    %v2425 = vadd.f32 %v2225, %v2424
    %v2426 = vpop.f32.mrb[0].mxu0
    %2427 = vmatprep.mubr.bf16.mxu0 0
    %2428 = vmatmul.mubr.bf16.gmra.mrb[0].mxu0 %v2172
    %v2429 = vpop.f32.mrb[0].mxu0
    %v2430 = vadd.f32 %v2225, %v2429
    %v2431 = vpop.f32.mrb[0].mxu0
    %v2432 = vpop.f32.mrb[0].mxu0
    %v2433 = vadd.f32 %v2225, %v2432
    %v2434 = vpop.f32.mrb[0].mxu0
    %2435 = vmatprep.mubr.bf16.mxu0 0
    %2436 = vmatmul.mubr.bf16.gmra.mrb[0].mxu0 %v2173
    %v2437 = vpop.f32.mrb[0].mxu0
    %v2438 = vadd.f32 %v2225, %v2437
    %v2439 = vpop.f32.mrb[0].mxu0
    %v2440 = vpop.f32.mrb[0].mxu0
    %v2441 = vadd.f32 %v2225, %v2440
    %v2442 = vpop.f32.mrb[0].mxu0
    %2443 = vmatprep.mubr.bf16.mxu0 0
    %2444 = vmatmul.mubr.bf16.gmra.mrb[0].mxu0 %v2174
    %v2445 = vpop.f32.mrb[0].mxu0
    %v2446 = vadd.f32 %v2225, %v2445
    %v2447 = vpop.f32.mrb[0].mxu0
    %v2448 = vpop.f32.mrb[0].mxu0
    %v2449 = vadd.f32 %v2225, %v2448
    %v2450 = vpop.f32.mrb[0].mxu0
    %2451 = vmatprep.mubr.bf16.mxu0 0
    %2452 = vmatmul.mubr.bf16.gmra.mrb[0].mxu0 %v2175
    %v2453 = vpop.f32.mrb[0].mxu0
    %v2454 = vadd.f32 %v2225, %v2453
    %v2455 = vpop.f32.mrb[0].mxu0
    %v2456 = vpop.f32.mrb[0].mxu0
    %v2457 = vadd.f32 %v2225, %v2456
    %v2458 = vpop.f32.mrb[0].mxu0
    %2459 = vmatprep.mubr.bf16.mxu0 0
    %2460 = vmatmul.mubr.bf16.gmra.mrb[0].mxu0 %v2176
    %v2461 = vpop.f32.mrb[0].mxu0
    %v2462 = vadd.f32 %v2225, %v2461
    %v2463 = vpop.f32.mrb[0].mxu0
    %v2464 = vpop.f32.mrb[0].mxu0
    %v2465 = vadd.f32 %v2225, %v2464
    %v2466 = vpop.f32.mrb[0].mxu0
    %2467 = vmatprep.mubr.bf16.mxu0 0
    %2468 = vmatmul.mubr.bf16.gmra.mrb[0].mxu0 %v2177
    %v2469 = vpop.f32.mrb[0].mxu0
    %v2470 = vadd.f32 %v2225, %v2469
    %v2471 = vpop.f32.mrb[0].mxu0
    %v2472 = vpop.f32.mrb[0].mxu0
    %v2473 = vadd.f32 %v2225, %v2472
    %v2474 = vpop.f32.mrb[0].mxu0
    %2475 = vmatprep.mubr.bf16.mxu0 0
    %2476 = vmatmul.mubr.bf16.gmra.mrb[0].mxu0 %v2178
    %v2477 = vpop.f32.mrb[0].mxu0
    %v2478 = vadd.f32 %v2225, %v2477
    %v2479 = vpop.f32.mrb[0].mxu0
    %v2480 = vpop.f32.mrb[0].mxu0
    %v2481 = vadd.f32 %v2225, %v2480
    %v2482 = vpop.f32.mrb[0].mxu0
    %2483 = vmatprep.mubr.bf16.mxu0 0
    %2484 = vmatmul.mubr.bf16.gmra.mrb[0].mxu0 %v2179
    %v2485 = vpop.f32.mrb[0].mxu0
    %v2486 = vadd.f32 %v2225, %v2485
    %v2487 = vpop.f32.mrb[0].mxu0
    %v2488 = vpop.f32.mrb[0].mxu0
    %v2489 = vadd.f32 %v2225, %v2488
    %v2490 = vpop.f32.mrb[0].mxu0
    %2491 = vmatprep.mubr.bf16.mxu0 0
    %2492 = vmatmul.mubr.bf16.gmra.mrb[0].mxu0 %v2180
    %v2493 = vpop.f32.mrb[0].mxu0
    %v2494 = vadd.f32 %v2225, %v2493
    %v2495 = vpop.f32.mrb[0].mxu0
    %v2496 = vpop.f32.mrb[0].mxu0
    %v2497 = vadd.f32 %v2225, %v2496
    %v2498 = vpop.f32.mrb[0].mxu0
    %2499 = vmatprep.mubr.bf16.mxu0 0
    %2500 = vmatmul.mubr.bf16.gmra.mrb[0].mxu0 %v2181
    %v2501 = vpop.f32.mrb[0].mxu0
    %v2502 = vadd.f32 %v2225, %v2501
    %v2503 = vpop.f32.mrb[0].mxu0
    %v2504 = vpop.f32.mrb[0].mxu0
    %v2505 = vadd.f32 %v2225, %v2504
    %v2506 = vpop.f32.mrb[0].mxu0
    %2507 = vmatprep.mubr.bf16.mxu0 0
    %2508 = vmatmul.mubr.bf16.gmra.mrb[0].mxu0 %v2182
    %v2509 = vpop.f32.mrb[0].mxu0
    %v2510 = vadd.f32 %v2225, %v2509
    %v2511 = vpop.f32.mrb[0].mxu0
    %v2512 = vpop.f32.mrb[0].mxu0
    %v2513 = vadd.f32 %v2225, %v2512
    %v2514 = vpop.f32.mrb[0].mxu0
    %2515 = vmatprep.mubr.bf16.mxu0 0
    %2516 = vmatmul.mubr.bf16.gmra.mrb[0].mxu0 %v2183
    %v2517 = vpop.f32.mrb[0].mxu0
    %v2518 = vadd.f32 %v2225, %v2517
    %v2519 = vpop.f32.mrb[0].mxu0
    %v2520 = vpop.f32.mrb[0].mxu0
    %v2521 = vadd.f32 %v2225, %v2520
    %v2522 = vpop.f32.mrb[0].mxu0
    %2523 = vmatprep.mubr.bf16.mxu0 0
    %2524 = vmatmul.mubr.bf16.gmra.mrb[0].mxu0 %v2184
    %v2525 = vpop.f32.mrb[0].mxu0
    %v2526 = vadd.f32 %v2225, %v2525
    %v2527 = vpop.f32.mrb[0].mxu0
    %v2528 = vpop.f32.mrb[0].mxu0
    %v2529 = vadd.f32 %v2225, %v2528
    %v2530 = vpop.f32.mrb[0].mxu0
    %2531 = vmatprep.mubr.bf16.mxu0 0
    %2532 = vmatmul.mubr.bf16.gmra.mrb[0].mxu0 %v2185
    %v2533 = vpop.f32.mrb[0].mxu0
    %v2534 = vadd.f32 %v2225, %v2533
    %v2535 = vpop.f32.mrb[0].mxu0
    %v2536 = vpop.f32.mrb[0].mxu0
    %v2537 = vadd.f32 %v2225, %v2536
    %v2538 = vpop.f32.mrb[0].mxu0
    %2539 = vmatprep.mubr.bf16.mxu0 0
    %2540 = vmatmul.mubr.bf16.gmra.mrb[0].mxu0 %v2186
    %v2541 = vpop.f32.mrb[0].mxu0
    %v2542 = vadd.f32 %v2225, %v2541
    %v2543 = vpop.f32.mrb[0].mxu0
    %v2544 = vpop.f32.mrb[0].mxu0
    %v2545 = vadd.f32 %v2225, %v2544
    %v2546 = vpop.f32.mrb[0].mxu0
    %2547 = vmatprep.mubr.bf16.mxu0 0
    %2548 = vmatmul.mubr.bf16.gmra.mrb[0].mxu0 %v2187
    %v2549 = vpop.f32.mrb[0].mxu0
    %v2550 = vadd.f32 %v2225, %v2549
    %v2551 = vpop.f32.mrb[0].mxu0
    %v2552 = vpop.f32.mrb[0].mxu0
    %v2553 = vadd.f32 %v2225, %v2552
    %v2554 = vpop.f32.mrb[0].mxu0
    %2555 = vmatprep.mubr.bf16.mxu0 0
    %2556 = vmatmul.mubr.bf16.gmra.mrb[0].mxu0 %v2188
    %v2557 = vpop.f32.mrb[0].mxu0
    %v2558 = vadd.f32 %v2225, %v2557
    %v2559 = vpop.f32.mrb[0].mxu0
    %v2560 = vpop.f32.mrb[0].mxu0
    %v2561 = vadd.f32 %v2225, %v2560
    %v2562 = vpop.f32.mrb[0].mxu0
    %2563 = vmatprep.mubr.bf16.mxu0 0
    %2564 = vmatmul.mubr.bf16.gmra.mrb[0].mxu0 %v2189
    %v2565 = vpop.f32.mrb[0].mxu0
    %v2566 = vadd.f32 %v2225, %v2565
    %v2567 = vpop.f32.mrb[0].mxu0
    %v2568 = vpop.f32.mrb[0].mxu0
    %v2569 = vadd.f32 %v2225, %v2568
    %v2570 = vpop.f32.mrb[0].mxu0
    %2571 = vmatprep.mubr.bf16.mxu0 0
    %2572 = vmatmul.mubr.bf16.gmra.mrb[0].mxu0 %v2190
    %v2573 = vpop.f32.mrb[0].mxu0
    %v2574 = vadd.f32 %v2225, %v2573
    %v2575 = vpop.f32.mrb[0].mxu0
    %v2576 = vpop.f32.mrb[0].mxu0
    %v2577 = vadd.f32 %v2225, %v2576
    %v2578 = vpop.f32.mrb[0].mxu0
    %2579 = vmatprep.mubr.bf16.mxu0 0
    %2580 = vmatmul.mubr.bf16.gmra.mrb[0].mxu0 %v2191
    %v2581 = vpop.f32.mrb[0].mxu0
    %v2582 = vadd.f32 %v2225, %v2581
    %v2583 = vpop.f32.mrb[0].mxu0
    %v2584 = vpop.f32.mrb[0].mxu0
    %v2585 = vadd.f32 %v2225, %v2584
    %v2586 = vpop.f32.mrb[0].mxu0
    %2587 = vmatprep.mubr.bf16.mxu0 0
    %2588 = vmatmul.mubr.bf16.gmra.mrb[0].mxu0 %v2192
    %v2589 = vpop.f32.mrb[0].mxu0
    %v2590 = vadd.f32 %v2225, %v2589
    %v2591 = vpop.f32.mrb[0].mxu0
    %v2592 = vpop.f32.mrb[0].mxu0
    %v2593 = vadd.f32 %v2225, %v2592
    %v2594 = vpop.f32.mrb[0].mxu0
    %2595 = vmatprep.mubr.bf16.mxu0 0
    %2596 = vmatmul.mubr.bf16.gmra.mrb[0].mxu0 %v2193
    %v2597 = vpop.f32.mrb[0].mxu0
    %v2598 = vadd.f32 %v2225, %v2597
    %v2599 = vpop.f32.mrb[0].mxu0
    %v2600 = vpop.f32.mrb[0].mxu0
    %v2601 = vadd.f32 %v2225, %v2600
    %v2602 = vpop.f32.mrb[0].mxu0
    %2603 = vmatprep.mubr.bf16.mxu0 0
    %2604 = vmatmul.mubr.bf16.gmra.mrb[0].mxu0 %v2194
    %v2605 = vpop.f32.mrb[0].mxu0
    %v2606 = vadd.f32 %v2225, %v2605
    %v2607 = vpop.f32.mrb[0].mxu0
    %v2608 = vpop.f32.mrb[0].mxu0
    %v2609 = vadd.f32 %v2225, %v2608
    %v2610 = vpop.f32.mrb[0].mxu0
    %2611 = vmatprep.mubr.bf16.mxu0 0
    %2612 = vmatmul.mubr.bf16.gmra.mrb[0].mxu0 %v2195
    %v2613 = vpop.f32.mrb[0].mxu0
    %v2614 = vadd.f32 %v2225, %v2613
    %v2615 = vpop.f32.mrb[0].mxu0
    %v2616 = vpop.f32.mrb[0].mxu0
    %v2617 = vadd.f32 %v2225, %v2616
    %v2618 = vpop.f32.mrb[0].mxu0
    %2619 = vmatprep.mubr.bf16.mxu0 0
    %2620 = vmatmul.mubr.bf16.gmra.mrb[0].mxu0 %v2196
    %v2621 = vpop.f32.mrb[0].mxu0
    %v2622 = vadd.f32 %v2225, %v2621
    %v2623 = vpop.f32.mrb[0].mxu0
    %v2624 = vpop.f32.mrb[0].mxu0
    %v2625 = vadd.f32 %v2225, %v2624
    %v2626 = vpop.f32.mrb[0].mxu0
    %2627 = vmatprep.mubr.bf16.mxu0 0
    %2628 = vmatmul.mubr.bf16.gmra.mrb[0].mxu0 %v2197
    %v2629 = vpop.f32.mrb[0].mxu0
    %v2630 = vadd.f32 %v2225, %v2629
    %v2631 = vpop.f32.mrb[0].mxu0
    %v2632 = vpop.f32.mrb[0].mxu0
    %v2633 = vadd.f32 %v2225, %v2632
    %v2634 = vpop.f32.mrb[0].mxu0
    %2635 = vmatprep.mubr.bf16.mxu0 0
    %2636 = vmatmul.mubr.bf16.gmra.mrb[0].mxu0 %v2198
    %v2637 = vpop.f32.mrb[0].mxu0
    %v2638 = vadd.f32 %v2225, %v2637
    %v2639 = vpop.f32.mrb[0].mxu0
    %v2640 = vpop.f32.mrb[0].mxu0
    %v2641 = vadd.f32 %v2225, %v2640
    %v2642 = vpop.f32.mrb[0].mxu0
    %2643 = vmatprep.mubr.bf16.mxu0 0
    %2644 = vmatmul.mubr.bf16.gmra.mrb[0].mxu0 %v2199
    %v2645 = vpop.f32.mrb[0].mxu0
    %v2646 = vadd.f32 %v2225, %v2645
    %v2647 = vpop.f32.mrb[0].mxu0
    %v2648 = vpop.f32.mrb[0].mxu0
    %v2649 = vadd.f32 %v2225, %v2648
    %v2650 = vpop.f32.mrb[0].mxu0
    %2651 = vmatprep.mubr.bf16.mxu0 0
    %2652 = vmatmul.mubr.bf16.gmra.mrb[0].mxu0 %v2200
    %v2653 = vpop.f32.mrb[0].mxu0
    %v2654 = vadd.f32 %v2225, %v2653
    %v2655 = vpop.f32.mrb[0].mxu0
    %v2656 = vpop.f32.mrb[0].mxu0
    %v2657 = vadd.f32 %v2225, %v2656
    %v2658 = vpop.f32.mrb[0].mxu0
    %2659 = vmatprep.mubr.bf16.mxu0 0
    %2660 = vmatmul.mubr.bf16.gmra.mrb[0].mxu0 %v2201
    %v2661 = vpop.f32.mrb[0].mxu0
    %v2662 = vadd.f32 %v2225, %v2661
    %v2663 = vpop.f32.mrb[0].mxu0
    %v2664 = vpop.f32.mrb[0].mxu0
    %v2665 = vadd.f32 %v2225, %v2664
    %v2666 = vpop.f32.mrb[0].mxu0
    %2667 = vmatprep.mubr.bf16.mxu0 0
    %2668 = vmatmul.mubr.bf16.gmra.mrb[0].mxu0 %v2202
    %v2669 = vpop.f32.mrb[0].mxu0
    %v2670 = vadd.f32 %v2225, %v2669
    %v2671 = vpop.f32.mrb[0].mxu0
    %v2672 = vpop.f32.mrb[0].mxu0
    %v2673 = vadd.f32 %v2225, %v2672
    %v2674 = vpop.f32.mrb[0].mxu0
    %2675 = vmatprep.mubr.bf16.mxu0 0
    %2676 = vmatmul.mubr.bf16.gmra.mrb[0].mxu0 %v2203
    %v2677 = vpop.f32.mrb[0].mxu0
    %v2678 = vadd.f32 %v2225, %v2677
    %v2679 = vpop.f32.mrb[0].mxu0
    %v2680 = vpop.f32.mrb[0].mxu0
    %v2681 = vadd.f32 %v2225, %v2680
    %v2682 = vpop.f32.mrb[0].mxu0
    %2683 = vmatprep.mubr.bf16.mxu0 0
    %2684 = vmatmul.mubr.bf16.gmra.mrb[0].mxu0 %v2204
    %v2685 = vpop.f32.mrb[0].mxu0
    %v2686 = vadd.f32 %v2225, %v2685
    %v2687 = vpop.f32.mrb[0].mxu0
    %v2688 = vpop.f32.mrb[0].mxu0
    %v2689 = vadd.f32 %v2225, %v2688
    %v2690 = vpop.f32.mrb[0].mxu0
    %2691 = vmatprep.mubr.bf16.mxu0 0
    %2692 = vmatmul.mubr.bf16.gmra.mrb[0].mxu0 %v2205
    %v2693 = vpop.f32.mrb[0].mxu0
    %v2694 = vadd.f32 %v2225, %v2693
    %v2695 = vpop.f32.mrb[0].mxu0
    %v2696 = vpop.f32.mrb[0].mxu0
    %v2697 = vadd.f32 %v2225, %v2696
    %v2698 = vpop.f32.mrb[0].mxu0
    %2699 = vmatprep.mubr.bf16.mxu0 0
    %2700 = vmatmul.mubr.bf16.gmra.mrb[0].mxu0 %v2206
    %v2701 = vpop.f32.mrb[0].mxu0
    %v2702 = vadd.f32 %v2225, %v2701
    %v2703 = vpop.f32.mrb[0].mxu0
    %v2704 = vpop.f32.mrb[0].mxu0
    %v2705 = vadd.f32 %v2225, %v2704
    %v2706 = vpop.f32.mrb[0].mxu0
    %2707 = vmatprep.mubr.bf16.mxu0 0
    %2708 = vmatmul.mubr.bf16.gmra.mrb[0].mxu0 %v2207
    %v2709 = vpop.f32.mrb[0].mxu0
    %v2710 = vadd.f32 %v2225, %v2709
    %v2711 = vpop.f32.mrb[0].mxu0
    %v2712 = vpop.f32.mrb[0].mxu0
    %v2713 = vadd.f32 %v2225, %v2712
    %v2714 = vpop.f32.mrb[0].mxu0
    %2715 = vmatprep.mubr.bf16.mxu0 0
    %2716 = vmatmul.mubr.bf16.gmra.mrb[0].mxu0 %v2208
    %v2717 = vpop.f32.mrb[0].mxu0
    %v2718 = vadd.f32 %v2225, %v2717
    %v2719 = vpop.f32.mrb[0].mxu0
    %v2720 = vpop.f32.mrb[0].mxu0
    %v2721 = vadd.f32 %v2225, %v2720
    %v2722 = vpop.f32.mrb[0].mxu0
    %2723 = vmatprep.mubr.bf16.mxu0 0
    %2724 = vmatmul.mubr.bf16.gmra.mrb[0].mxu0 %v2209
    %v2725 = vpop.f32.mrb[0].mxu0
    %v2726 = vadd.f32 %v2225, %v2725
    %v2727 = vpop.f32.mrb[0].mxu0
    %v2728 = vpop.f32.mrb[0].mxu0
    %v2729 = vadd.f32 %v2225, %v2728
    %v2730 = vpop.f32.mrb[0].mxu0
    %2731 = vmatprep.mubr.bf16.mxu0 0
    %2732 = vmatmul.mubr.bf16.gmra.mrb[0].mxu0 %v2210
    %v2733 = vpop.f32.mrb[0].mxu0
    %v2734 = vadd.f32 %v2225, %v2733
    %v2735 = vpop.f32.mrb[0].mxu0
    %v2736 = vpop.f32.mrb[0].mxu0
    %v2737 = vadd.f32 %v2225, %v2736
    %v2738 = vpop.f32.mrb[0].mxu0
    %2739 = vmatprep.mubr.bf16.mxu0 0
    %2740 = vmatmul.mubr.bf16.gmra.mrb[0].mxu0 %v2211
    %v2741 = vpop.f32.mrb[0].mxu0
    %v2742 = vadd.f32 %v2225, %v2741
    %v2743 = vpop.f32.mrb[0].mxu0
    %v2744 = vpop.f32.mrb[0].mxu0
    %v2745 = vadd.f32 %v2225, %v2744
    %v2746 = vpop.f32.mrb[0].mxu0
    %2747 = vmatprep.mubr.bf16.mxu0 0
    %2748 = vmatmul.mubr.bf16.gmra.mrb[0].mxu0 %v2212
    %v2749 = vpop.f32.mrb[0].mxu0
    %v2750 = vadd.f32 %v2225, %v2749
    %v2751 = vpop.f32.mrb[0].mxu0
    %v2752 = vpop.f32.mrb[0].mxu0
    %v2753 = vadd.f32 %v2225, %v2752
    %v2754 = vpop.f32.mrb[0].mxu0
    %2755 = vmatprep.mubr.bf16.mxu0 0
    %2756 = vmatmul.mubr.bf16.gmra.mrb[0].mxu0 %v2213
    %v2757 = vpop.f32.mrb[0].mxu0
    %v2758 = vadd.f32 %v2225, %v2757
    %v2759 = vpop.f32.mrb[0].mxu0
    %v2760 = vpop.f32.mrb[0].mxu0
    %v2761 = vadd.f32 %v2225, %v2760
    %v2762 = vpop.f32.mrb[0].mxu0
    %2763 = vmatprep.mubr.bf16.mxu0 0
    %2764 = vmatmul.mubr.bf16.gmra.mrb[0].mxu0 %v2214
    %v2765 = vpop.f32.mrb[0].mxu0
    %v2766 = vadd.f32 %v2225, %v2765
    %v2767 = vpop.f32.mrb[0].mxu0
    %v2768 = vpop.f32.mrb[0].mxu0
    %v2769 = vadd.f32 %v2225, %v2768
    %v2770 = vpop.f32.mrb[0].mxu0
    %2771 = vmatprep.mubr.bf16.mxu0 0
    %2772 = vmatmul.mubr.bf16.gmra.mrb[0].mxu0 %v2215
    %v2773 = vpop.f32.mrb[0].mxu0
    %v2774 = vadd.f32 %v2225, %v2773
    %v2775 = vpop.f32.mrb[0].mxu0
    %v2776 = vpop.f32.mrb[0].mxu0
    %v2777 = vadd.f32 %v2225, %v2776
    %v2778 = vpop.f32.mrb[0].mxu0
    %2779 = vmatprep.mubr.bf16.mxu0 0
    %2780 = vmatmul.mubr.bf16.gmra.mrb[0].mxu0 %v2216
    %v2781 = vpop.f32.mrb[0].mxu0
    %v2782 = vadd.f32 %v2225, %v2781
    %v2783 = vpop.f32.mrb[0].mxu0
    %v2784 = vpop.f32.mrb[0].mxu0
    %v2785 = vadd.f32 %v2225, %v2784
    %v2786 = vpop.f32.mrb[0].mxu0
    %2787 = vmatprep.mubr.bf16.mxu0 0
    %2788 = vmatmul.mubr.bf16.gmra.mrb[0].mxu0 %v2217
    %v2789 = vpop.f32.mrb[0].mxu0
    %v2790 = vadd.f32 %v2225, %v2789
    %v2791 = vpop.f32.mrb[0].mxu0
    %v2792 = vpop.f32.mrb[0].mxu0
    %v2793 = vadd.f32 %v2225, %v2792
    %v2794 = vpop.f32.mrb[0].mxu0
    %2795 = vmatprep.mubr.bf16.mxu0 0
    %2796 = vmatmul.mubr.bf16.gmra.mrb[0].mxu0 %v2218
    %v2797 = vpop.f32.mrb[0].mxu0
    %v2798 = vadd.f32 %v2225, %v2797
    %v2799 = vpop.f32.mrb[0].mxu0
    %v2800 = vpop.f32.mrb[0].mxu0
    %v2801 = vadd.f32 %v2225, %v2800
    %v2802 = vpop.f32.mrb[0].mxu0
    %2803 = vmatprep.mubr.bf16.mxu0 0
    %2804 = vmatmul.mubr.bf16.gmra.mrb[0].mxu0 %v2219
    %v2805 = vpop.f32.mrb[0].mxu0
    %v2806 = vadd.f32 %v2225, %v2805
    %v2807 = vpop.f32.mrb[0].mxu0
    %v2808 = vpop.f32.mrb[0].mxu0
    %v2809 = vadd.f32 %v2225, %v2808
    %v2810 = vpop.f32.mrb[0].mxu0
    %2811 = vmatprep.mubr.bf16.mxu0 0
    %2812 = vmatmul.mubr.bf16.gmra.mrb[0].mxu0 %v2220
    %v2813 = vpop.f32.mrb[0].mxu0
    %v2814 = vadd.f32 %v2225, %v2813
    %v2815 = vpop.f32.mrb[0].mxu0
    %v2816 = vpop.f32.mrb[0].mxu0
    %v2817 = vadd.f32 %v2225, %v2816
    %v2818 = vpop.f32.mrb[0].mxu0
    %2819 = vdwg.mxu0
    %2820 = vmax.xlane.f32.xlu0 %v2310
    %v2821 = vpop.xlane.xlu0 %2820
    %2822 = vmax.xlane.f32.xlu0 %v2313
    %v2823 = vpop.xlane.xlu0 %2822
    %2824 = vmax.xlane.f32.xlu0 %v2318
    %v2825 = vpop.xlane.xlu0 %2824
    %2826 = vmax.xlane.f32.xlu0 %v2321
    %v2827 = vpop.xlane.xlu0 %2826
    %2828 = vmax.xlane.f32.xlu0 %v2326
    %v2829 = vpop.xlane.xlu0 %2828
    %2830 = vmax.xlane.f32.xlu0 %v2329
    %v2831 = vpop.xlane.xlu0 %2830
    %2832 = vmax.xlane.f32.xlu0 %v2334
    %v2833 = vpop.xlane.xlu0 %2832
    %2834 = vmax.xlane.f32.xlu0 %v2337
    %v2835 = vpop.xlane.xlu0 %2834
    %2836 = vmax.xlane.f32.xlu0 %v2342
    %v2837 = vpop.xlane.xlu0 %2836
    %2838 = vmax.xlane.f32.xlu0 %v2345
    %v2839 = vpop.xlane.xlu0 %2838
    %2840 = vmax.xlane.f32.xlu0 %v2350
    %v2841 = vpop.xlane.xlu0 %2840
    %2842 = vmax.xlane.f32.xlu0 %v2353
    %v2843 = vpop.xlane.xlu0 %2842
    %2844 = vmax.xlane.f32.xlu0 %v2358
    %v2845 = vpop.xlane.xlu0 %2844
    %2846 = vmax.xlane.f32.xlu0 %v2361
    %v2847 = vpop.xlane.xlu0 %2846
    %2848 = vmax.xlane.f32.xlu0 %v2366
    %v2849 = vpop.xlane.xlu0 %2848
    %2850 = vmax.xlane.f32.xlu0 %v2369
    %v2851 = vpop.xlane.xlu0 %2850
    %2852 = vmax.xlane.f32.xlu0 %v2374
    %v2853 = vpop.xlane.xlu0 %2852
    %2854 = vmax.xlane.f32.xlu0 %v2377
    %v2855 = vpop.xlane.xlu0 %2854
    %2856 = vmax.xlane.f32.xlu0 %v2382
    %v2857 = vpop.xlane.xlu0 %2856
    %2858 = vmax.xlane.f32.xlu0 %v2385
    %v2859 = vpop.xlane.xlu0 %2858
    %2860 = vmax.xlane.f32.xlu0 %v2390
    %v2861 = vpop.xlane.xlu0 %2860
    %2862 = vmax.xlane.f32.xlu0 %v2393
    %v2863 = vpop.xlane.xlu0 %2862
    %2864 = vmax.xlane.f32.xlu0 %v2398
    %v2865 = vpop.xlane.xlu0 %2864
    %2866 = vmax.xlane.f32.xlu0 %v2401
    %v2867 = vpop.xlane.xlu0 %2866
    %2868 = vmax.xlane.f32.xlu0 %v2406
    %v2869 = vpop.xlane.xlu0 %2868
    %2870 = vmax.xlane.f32.xlu0 %v2409
    %v2871 = vpop.xlane.xlu0 %2870
    %2872 = vmax.xlane.f32.xlu0 %v2414
    %v2873 = vpop.xlane.xlu0 %2872
    %2874 = vmax.xlane.f32.xlu0 %v2417
    %v2875 = vpop.xlane.xlu0 %2874
    %2876 = vmax.xlane.f32.xlu0 %v2422
    %v2877 = vpop.xlane.xlu0 %2876
    %2878 = vmax.xlane.f32.xlu0 %v2425
    %v2879 = vpop.xlane.xlu0 %2878
    %2880 = vmax.xlane.f32.xlu0 %v2430
    %v2881 = vpop.xlane.xlu0 %2880
    %2882 = vmax.xlane.f32.xlu0 %v2433
    %v2883 = vpop.xlane.xlu0 %2882
    %2884 = vmax.xlane.f32.xlu0 %v2438
    %v2885 = vpop.xlane.xlu0 %2884
    %2886 = vmax.xlane.f32.xlu0 %v2441
    %v2887 = vpop.xlane.xlu0 %2886
    %2888 = vmax.xlane.f32.xlu0 %v2446
    %v2889 = vpop.xlane.xlu0 %2888
    %2890 = vmax.xlane.f32.xlu0 %v2449
    %v2891 = vpop.xlane.xlu0 %2890
    %2892 = vmax.xlane.f32.xlu0 %v2454
    %v2893 = vpop.xlane.xlu0 %2892
    %2894 = vmax.xlane.f32.xlu0 %v2457
    %v2895 = vpop.xlane.xlu0 %2894
    %2896 = vmax.xlane.f32.xlu0 %v2462
    %v2897 = vpop.xlane.xlu0 %2896
    %2898 = vmax.xlane.f32.xlu0 %v2465
    %v2899 = vpop.xlane.xlu0 %2898
    %2900 = vmax.xlane.f32.xlu0 %v2470
    %v2901 = vpop.xlane.xlu0 %2900
    %2902 = vmax.xlane.f32.xlu0 %v2473
    %v2903 = vpop.xlane.xlu0 %2902
    %2904 = vmax.xlane.f32.xlu0 %v2478
    %v2905 = vpop.xlane.xlu0 %2904
    %2906 = vmax.xlane.f32.xlu0 %v2481
    %v2907 = vpop.xlane.xlu0 %2906
    %2908 = vmax.xlane.f32.xlu0 %v2486
    %v2909 = vpop.xlane.xlu0 %2908
    %2910 = vmax.xlane.f32.xlu0 %v2489
    %v2911 = vpop.xlane.xlu0 %2910
    %2912 = vmax.xlane.f32.xlu0 %v2494
    %v2913 = vpop.xlane.xlu0 %2912
    %2914 = vmax.xlane.f32.xlu0 %v2497
    %v2915 = vpop.xlane.xlu0 %2914
    %2916 = vmax.xlane.f32.xlu0 %v2502
    %v2917 = vpop.xlane.xlu0 %2916
    %2918 = vmax.xlane.f32.xlu0 %v2505
    %v2919 = vpop.xlane.xlu0 %2918
    %2920 = vmax.xlane.f32.xlu0 %v2510
    %v2921 = vpop.xlane.xlu0 %2920
    %2922 = vmax.xlane.f32.xlu0 %v2513
    %v2923 = vpop.xlane.xlu0 %2922
    %2924 = vmax.xlane.f32.xlu0 %v2518
    %v2925 = vpop.xlane.xlu0 %2924
    %2926 = vmax.xlane.f32.xlu0 %v2521
    %v2927 = vpop.xlane.xlu0 %2926
    %2928 = vmax.xlane.f32.xlu0 %v2526
    %v2929 = vpop.xlane.xlu0 %2928
    %2930 = vmax.xlane.f32.xlu0 %v2529
    %v2931 = vpop.xlane.xlu0 %2930
    %2932 = vmax.xlane.f32.xlu0 %v2534
    %v2933 = vpop.xlane.xlu0 %2932
    %2934 = vmax.xlane.f32.xlu0 %v2537
    %v2935 = vpop.xlane.xlu0 %2934
    %2936 = vmax.xlane.f32.xlu0 %v2542
    %v2937 = vpop.xlane.xlu0 %2936
    %2938 = vmax.xlane.f32.xlu0 %v2545
    %v2939 = vpop.xlane.xlu0 %2938
    %2940 = vmax.xlane.f32.xlu0 %v2550
    %v2941 = vpop.xlane.xlu0 %2940
    %2942 = vmax.xlane.f32.xlu0 %v2553
    %v2943 = vpop.xlane.xlu0 %2942
    %2944 = vmax.xlane.f32.xlu0 %v2558
    %v2945 = vpop.xlane.xlu0 %2944
    %2946 = vmax.xlane.f32.xlu0 %v2561
    %v2947 = vpop.xlane.xlu0 %2946
    %2948 = vmax.xlane.f32.xlu0 %v2566
    %v2949 = vpop.xlane.xlu0 %2948
    %2950 = vmax.xlane.f32.xlu0 %v2569
    %v2951 = vpop.xlane.xlu0 %2950
    %2952 = vmax.xlane.f32.xlu0 %v2574
    %v2953 = vpop.xlane.xlu0 %2952
    %2954 = vmax.xlane.f32.xlu0 %v2577
    %v2955 = vpop.xlane.xlu0 %2954
    %2956 = vmax.xlane.f32.xlu0 %v2582
    %v2957 = vpop.xlane.xlu0 %2956
    %2958 = vmax.xlane.f32.xlu0 %v2585
    %v2959 = vpop.xlane.xlu0 %2958
    %2960 = vmax.xlane.f32.xlu0 %v2590
    %v2961 = vpop.xlane.xlu0 %2960
    %2962 = vmax.xlane.f32.xlu0 %v2593
    %v2963 = vpop.xlane.xlu0 %2962
    %2964 = vmax.xlane.f32.xlu0 %v2598
    %v2965 = vpop.xlane.xlu0 %2964
    %2966 = vmax.xlane.f32.xlu0 %v2601
    %v2967 = vpop.xlane.xlu0 %2966
    %2968 = vmax.xlane.f32.xlu0 %v2606
    %v2969 = vpop.xlane.xlu0 %2968
    %2970 = vmax.xlane.f32.xlu0 %v2609
    %v2971 = vpop.xlane.xlu0 %2970
    %2972 = vmax.xlane.f32.xlu0 %v2614
    %v2973 = vpop.xlane.xlu0 %2972
    %2974 = vmax.xlane.f32.xlu0 %v2617
    %v2975 = vpop.xlane.xlu0 %2974
    %2976 = vmax.xlane.f32.xlu0 %v2622
    %v2977 = vpop.xlane.xlu0 %2976
    %2978 = vmax.xlane.f32.xlu0 %v2625
    %v2979 = vpop.xlane.xlu0 %2978
    %2980 = vmax.xlane.f32.xlu0 %v2630
    %v2981 = vpop.xlane.xlu0 %2980
    %2982 = vmax.xlane.f32.xlu0 %v2633
    %v2983 = vpop.xlane.xlu0 %2982
    %2984 = vmax.xlane.f32.xlu0 %v2638
    %v2985 = vpop.xlane.xlu0 %2984
    %2986 = vmax.xlane.f32.xlu0 %v2641
    %v2987 = vpop.xlane.xlu0 %2986
    %2988 = vmax.xlane.f32.xlu0 %v2646
    %v2989 = vpop.xlane.xlu0 %2988
    %2990 = vmax.xlane.f32.xlu0 %v2649
    %v2991 = vpop.xlane.xlu0 %2990
    %2992 = vmax.xlane.f32.xlu0 %v2654
    %v2993 = vpop.xlane.xlu0 %2992
    %2994 = vmax.xlane.f32.xlu0 %v2657
    %v2995 = vpop.xlane.xlu0 %2994
    %2996 = vmax.xlane.f32.xlu0 %v2662
    %v2997 = vpop.xlane.xlu0 %2996
    %2998 = vmax.xlane.f32.xlu0 %v2665
    %v2999 = vpop.xlane.xlu0 %2998
    %3000 = vmax.xlane.f32.xlu0 %v2670
    %v3001 = vpop.xlane.xlu0 %3000
    %3002 = vmax.xlane.f32.xlu0 %v2673
    %v3003 = vpop.xlane.xlu0 %3002
    %3004 = vmax.xlane.f32.xlu0 %v2678
    %v3005 = vpop.xlane.xlu0 %3004
    %3006 = vmax.xlane.f32.xlu0 %v2681
    %v3007 = vpop.xlane.xlu0 %3006
    %3008 = vmax.xlane.f32.xlu0 %v2686
    %v3009 = vpop.xlane.xlu0 %3008
    %3010 = vmax.xlane.f32.xlu0 %v2689
    %v3011 = vpop.xlane.xlu0 %3010
    %3012 = vmax.xlane.f32.xlu0 %v2694
    %v3013 = vpop.xlane.xlu0 %3012
    %3014 = vmax.xlane.f32.xlu0 %v2697
    %v3015 = vpop.xlane.xlu0 %3014
    %3016 = vmax.xlane.f32.xlu0 %v2702
    %v3017 = vpop.xlane.xlu0 %3016
    %3018 = vmax.xlane.f32.xlu0 %v2705
    %v3019 = vpop.xlane.xlu0 %3018
    %3020 = vmax.xlane.f32.xlu0 %v2710
    %v3021 = vpop.xlane.xlu0 %3020
    %3022 = vmax.xlane.f32.xlu0 %v2713
    %v3023 = vpop.xlane.xlu0 %3022
    %3024 = vmax.xlane.f32.xlu0 %v2718
    %v3025 = vpop.xlane.xlu0 %3024
    %3026 = vmax.xlane.f32.xlu0 %v2721
    %v3027 = vpop.xlane.xlu0 %3026
    %3028 = vmax.xlane.f32.xlu0 %v2726
    %v3029 = vpop.xlane.xlu0 %3028
    %3030 = vmax.xlane.f32.xlu0 %v2729
    %v3031 = vpop.xlane.xlu0 %3030
    %3032 = vmax.xlane.f32.xlu0 %v2734
    %v3033 = vpop.xlane.xlu0 %3032
    %3034 = vmax.xlane.f32.xlu0 %v2737
    %v3035 = vpop.xlane.xlu0 %3034
    %3036 = vmax.xlane.f32.xlu0 %v2742
    %v3037 = vpop.xlane.xlu0 %3036
    %3038 = vmax.xlane.f32.xlu0 %v2745
    %v3039 = vpop.xlane.xlu0 %3038
    %3040 = vmax.xlane.f32.xlu0 %v2750
    %v3041 = vpop.xlane.xlu0 %3040
    %3042 = vmax.xlane.f32.xlu0 %v2753
    %v3043 = vpop.xlane.xlu0 %3042
    %3044 = vmax.xlane.f32.xlu0 %v2758
    %v3045 = vpop.xlane.xlu0 %3044
    %3046 = vmax.xlane.f32.xlu0 %v2761
    %v3047 = vpop.xlane.xlu0 %3046
    %3048 = vmax.xlane.f32.xlu0 %v2766
    %v3049 = vpop.xlane.xlu0 %3048
    %3050 = vmax.xlane.f32.xlu0 %v2769
    %v3051 = vpop.xlane.xlu0 %3050
    %3052 = vmax.xlane.f32.xlu0 %v2774
    %v3053 = vpop.xlane.xlu0 %3052
    %3054 = vmax.xlane.f32.xlu0 %v2777
    %v3055 = vpop.xlane.xlu0 %3054
    %3056 = vmax.xlane.f32.xlu0 %v2782
    %v3057 = vpop.xlane.xlu0 %3056
    %3058 = vmax.xlane.f32.xlu0 %v2785
    %v3059 = vpop.xlane.xlu0 %3058
    %3060 = vmax.xlane.f32.xlu0 %v2790
    %v3061 = vpop.xlane.xlu0 %3060
    %3062 = vmax.xlane.f32.xlu0 %v2793
    %v3063 = vpop.xlane.xlu0 %3062
    %3064 = vmax.xlane.f32.xlu0 %v2798
    %v3065 = vpop.xlane.xlu0 %3064
    %3066 = vmax.xlane.f32.xlu0 %v2801
    %v3067 = vpop.xlane.xlu0 %3066
    %3068 = vmax.xlane.f32.xlu0 %v2806
    %v3069 = vpop.xlane.xlu0 %3068
    %3070 = vmax.xlane.f32.xlu0 %v2809
    %v3071 = vpop.xlane.xlu0 %3070
    %3072 = vmax.xlane.f32.xlu0 %v2814
    %v3073 = vpop.xlane.xlu0 %3072
    %3074 = vmax.xlane.f32.xlu0 %v2817
    %v3075 = vpop.xlane.xlu0 %3074
    %v3076 = vsub.f32 %v2310, %v2821
    %v3077 = vsub.f32 %v2313, %v2823
    %v3078 = vsub.f32 %v2318, %v2825
    %v3079 = vsub.f32 %v2321, %v2827
    %v3080 = vsub.f32 %v2326, %v2829
    %v3081 = vsub.f32 %v2329, %v2831
    %v3082 = vsub.f32 %v2334, %v2833
    %v3083 = vsub.f32 %v2337, %v2835
    %v3084 = vsub.f32 %v2342, %v2837
    %v3085 = vsub.f32 %v2345, %v2839
    %v3086 = vsub.f32 %v2350, %v2841
    %v3087 = vsub.f32 %v2353, %v2843
    %v3088 = vsub.f32 %v2358, %v2845
    %v3089 = vsub.f32 %v2361, %v2847
    %v3090 = vsub.f32 %v2366, %v2849
    %v3091 = vsub.f32 %v2369, %v2851
    %v3092 = vsub.f32 %v2374, %v2853
    %v3093 = vsub.f32 %v2377, %v2855
    %v3094 = vsub.f32 %v2382, %v2857
    %v3095 = vsub.f32 %v2385, %v2859
    %v3096 = vsub.f32 %v2390, %v2861
    %v3097 = vsub.f32 %v2393, %v2863
    %v3098 = vsub.f32 %v2398, %v2865
    %v3099 = vsub.f32 %v2401, %v2867
    %v3100 = vsub.f32 %v2406, %v2869
    %v3101 = vsub.f32 %v2409, %v2871
    %v3102 = vsub.f32 %v2414, %v2873
    %v3103 = vsub.f32 %v2417, %v2875
    %v3104 = vsub.f32 %v2422, %v2877
    %v3105 = vsub.f32 %v2425, %v2879
    %v3106 = vsub.f32 %v2430, %v2881
    %v3107 = vsub.f32 %v2433, %v2883
    %v3108 = vsub.f32 %v2438, %v2885
    %v3109 = vsub.f32 %v2441, %v2887
    %v3110 = vsub.f32 %v2446, %v2889
    %v3111 = vsub.f32 %v2449, %v2891
    %v3112 = vsub.f32 %v2454, %v2893
    %v3113 = vsub.f32 %v2457, %v2895
    %v3114 = vsub.f32 %v2462, %v2897
    %v3115 = vsub.f32 %v2465, %v2899
    %v3116 = vsub.f32 %v2470, %v2901
    %v3117 = vsub.f32 %v2473, %v2903
    %v3118 = vsub.f32 %v2478, %v2905
    %v3119 = vsub.f32 %v2481, %v2907
    %v3120 = vsub.f32 %v2486, %v2909
    %v3121 = vsub.f32 %v2489, %v2911
    %v3122 = vsub.f32 %v2494, %v2913
    %v3123 = vsub.f32 %v2497, %v2915
    %v3124 = vsub.f32 %v2502, %v2917
    %v3125 = vsub.f32 %v2505, %v2919
    %v3126 = vsub.f32 %v2510, %v2921
    %v3127 = vsub.f32 %v2513, %v2923
    %v3128 = vsub.f32 %v2518, %v2925
    %v3129 = vsub.f32 %v2521, %v2927
    %v3130 = vsub.f32 %v2526, %v2929
    %v3131 = vsub.f32 %v2529, %v2931
    %v3132 = vsub.f32 %v2534, %v2933
    %v3133 = vsub.f32 %v2537, %v2935
    %v3134 = vsub.f32 %v2542, %v2937
    %v3135 = vsub.f32 %v2545, %v2939
    %v3136 = vsub.f32 %v2550, %v2941
    %v3137 = vsub.f32 %v2553, %v2943
    %v3138 = vsub.f32 %v2558, %v2945
    %v3139 = vsub.f32 %v2561, %v2947
    %v3140 = vsub.f32 %v2566, %v2949
    %v3141 = vsub.f32 %v2569, %v2951
    %v3142 = vsub.f32 %v2574, %v2953
    %v3143 = vsub.f32 %v2577, %v2955
    %v3144 = vsub.f32 %v2582, %v2957
    %v3145 = vsub.f32 %v2585, %v2959
    %v3146 = vsub.f32 %v2590, %v2961
    %v3147 = vsub.f32 %v2593, %v2963
    %v3148 = vsub.f32 %v2598, %v2965
    %v3149 = vsub.f32 %v2601, %v2967
    %v3150 = vsub.f32 %v2606, %v2969
    %v3151 = vsub.f32 %v2609, %v2971
    %v3152 = vsub.f32 %v2614, %v2973
    %v3153 = vsub.f32 %v2617, %v2975
    %v3154 = vsub.f32 %v2622, %v2977
    %v3155 = vsub.f32 %v2625, %v2979
    %v3156 = vsub.f32 %v2630, %v2981
    %v3157 = vsub.f32 %v2633, %v2983
    %v3158 = vsub.f32 %v2638, %v2985
    %v3159 = vsub.f32 %v2641, %v2987
    %v3160 = vsub.f32 %v2646, %v2989
    %v3161 = vsub.f32 %v2649, %v2991
    %v3162 = vsub.f32 %v2654, %v2993
    %v3163 = vsub.f32 %v2657, %v2995
    %v3164 = vsub.f32 %v2662, %v2997
    %v3165 = vsub.f32 %v2665, %v2999
    %v3166 = vsub.f32 %v2670, %v3001
    %v3167 = vsub.f32 %v2673, %v3003
    %v3168 = vsub.f32 %v2678, %v3005
    %v3169 = vsub.f32 %v2681, %v3007
    %v3170 = vsub.f32 %v2686, %v3009
    %v3171 = vsub.f32 %v2689, %v3011
    %v3172 = vsub.f32 %v2694, %v3013
    %v3173 = vsub.f32 %v2697, %v3015
    %v3174 = vsub.f32 %v2702, %v3017
    %v3175 = vsub.f32 %v2705, %v3019
    %v3176 = vsub.f32 %v2710, %v3021
    %v3177 = vsub.f32 %v2713, %v3023
    %v3178 = vsub.f32 %v2718, %v3025
    %v3179 = vsub.f32 %v2721, %v3027
    %v3180 = vsub.f32 %v2726, %v3029
    %v3181 = vsub.f32 %v2729, %v3031
    %v3182 = vsub.f32 %v2734, %v3033
    %v3183 = vsub.f32 %v2737, %v3035
    %v3184 = vsub.f32 %v2742, %v3037
    %v3185 = vsub.f32 %v2745, %v3039
    %v3186 = vsub.f32 %v2750, %v3041
    %v3187 = vsub.f32 %v2753, %v3043
    %v3188 = vsub.f32 %v2758, %v3045
    %v3189 = vsub.f32 %v2761, %v3047
    %v3190 = vsub.f32 %v2766, %v3049
    %v3191 = vsub.f32 %v2769, %v3051
    %v3192 = vsub.f32 %v2774, %v3053
    %v3193 = vsub.f32 %v2777, %v3055
    %v3194 = vsub.f32 %v2782, %v3057
    %v3195 = vsub.f32 %v2785, %v3059
    %v3196 = vsub.f32 %v2790, %v3061
    %v3197 = vsub.f32 %v2793, %v3063
    %v3198 = vsub.f32 %v2798, %v3065
    %v3199 = vsub.f32 %v2801, %v3067
    %v3200 = vsub.f32 %v2806, %v3069
    %v3201 = vsub.f32 %v2809, %v3071
    %v3202 = vsub.f32 %v2814, %v3073
    %v3203 = vsub.f32 %v2817, %v3075
    %v3204 = vmul.f32 %v3076, 1.442695
    %v3205 = vpow.pop %v3204
    %v3206 = vmul.f32 %v3077, 1.442695
    %v3207 = vpow.pop %v3206
    %v3208 = vmul.f32 %v3078, 1.442695
    %v3209 = vpow.pop %v3208
    %v3210 = vmul.f32 %v3079, 1.442695
    %v3211 = vpow.pop %v3210
    %v3212 = vmul.f32 %v3080, 1.442695
    %v3213 = vpow.pop %v3212
    %v3214 = vmul.f32 %v3081, 1.442695
    %v3215 = vpow.pop %v3214
    %v3216 = vmul.f32 %v3082, 1.442695
    %v3217 = vpow.pop %v3216
    %v3218 = vmul.f32 %v3083, 1.442695
    %v3219 = vpow.pop %v3218
    %v3220 = vmul.f32 %v3084, 1.442695
    %v3221 = vpow.pop %v3220
    %v3222 = vmul.f32 %v3085, 1.442695
    %v3223 = vpow.pop %v3222
    %v3224 = vmul.f32 %v3086, 1.442695
    %v3225 = vpow.pop %v3224
    %v3226 = vmul.f32 %v3087, 1.442695
    %v3227 = vpow.pop %v3226
    %v3228 = vmul.f32 %v3088, 1.442695
    %v3229 = vpow.pop %v3228
    %v3230 = vmul.f32 %v3089, 1.442695
    %v3231 = vpow.pop %v3230
    %v3232 = vmul.f32 %v3090, 1.442695
    %v3233 = vpow.pop %v3232
    %v3234 = vmul.f32 %v3091, 1.442695
    %v3235 = vpow.pop %v3234
    %v3236 = vmul.f32 %v3092, 1.442695
    %v3237 = vpow.pop %v3236
    %v3238 = vmul.f32 %v3093, 1.442695
    %v3239 = vpow.pop %v3238
    %v3240 = vmul.f32 %v3094, 1.442695
    %v3241 = vpow.pop %v3240
    %v3242 = vmul.f32 %v3095, 1.442695
    %v3243 = vpow.pop %v3242
    %v3244 = vmul.f32 %v3096, 1.442695
    %v3245 = vpow.pop %v3244
    %v3246 = vmul.f32 %v3097, 1.442695
    %v3247 = vpow.pop %v3246
    %v3248 = vmul.f32 %v3098, 1.442695
    %v3249 = vpow.pop %v3248
    %v3250 = vmul.f32 %v3099, 1.442695
    %v3251 = vpow.pop %v3250
    %v3252 = vmul.f32 %v3100, 1.442695
    %v3253 = vpow.pop %v3252
    %v3254 = vmul.f32 %v3101, 1.442695
    %v3255 = vpow.pop %v3254
    %v3256 = vmul.f32 %v3102, 1.442695
    %v3257 = vpow.pop %v3256
    %v3258 = vmul.f32 %v3103, 1.442695
    %v3259 = vpow.pop %v3258
    %v3260 = vmul.f32 %v3104, 1.442695
    %v3261 = vpow.pop %v3260
    %v3262 = vmul.f32 %v3105, 1.442695
    %v3263 = vpow.pop %v3262
    %v3264 = vmul.f32 %v3106, 1.442695
    %v3265 = vpow.pop %v3264
    %v3266 = vmul.f32 %v3107, 1.442695
    %v3267 = vpow.pop %v3266
    %v3268 = vmul.f32 %v3108, 1.442695
    %v3269 = vpow.pop %v3268
    %v3270 = vmul.f32 %v3109, 1.442695
    %v3271 = vpow.pop %v3270
    %v3272 = vmul.f32 %v3110, 1.442695
    %v3273 = vpow.pop %v3272
    %v3274 = vmul.f32 %v3111, 1.442695
    %v3275 = vpow.pop %v3274
    %v3276 = vmul.f32 %v3112, 1.442695
    %v3277 = vpow.pop %v3276
    %v3278 = vmul.f32 %v3113, 1.442695
    %v3279 = vpow.pop %v3278
    %v3280 = vmul.f32 %v3114, 1.442695
    %v3281 = vpow.pop %v3280
    %v3282 = vmul.f32 %v3115, 1.442695
    %v3283 = vpow.pop %v3282
    %v3284 = vmul.f32 %v3116, 1.442695
    %v3285 = vpow.pop %v3284
    %v3286 = vmul.f32 %v3117, 1.442695
    %v3287 = vpow.pop %v3286
    %v3288 = vmul.f32 %v3118, 1.442695
    %v3289 = vpow.pop %v3288
    %v3290 = vmul.f32 %v3119, 1.442695
    %v3291 = vpow.pop %v3290
    %v3292 = vmul.f32 %v3120, 1.442695
    %v3293 = vpow.pop %v3292
    %v3294 = vmul.f32 %v3121, 1.442695
    %v3295 = vpow.pop %v3294
    %v3296 = vmul.f32 %v3122, 1.442695
    %v3297 = vpow.pop %v3296
    %v3298 = vmul.f32 %v3123, 1.442695
    %v3299 = vpow.pop %v3298
    %v3300 = vmul.f32 %v3124, 1.442695
    %v3301 = vpow.pop %v3300
    %v3302 = vmul.f32 %v3125, 1.442695
    %v3303 = vpow.pop %v3302
    %v3304 = vmul.f32 %v3126, 1.442695
    %v3305 = vpow.pop %v3304
    %v3306 = vmul.f32 %v3127, 1.442695
    %v3307 = vpow.pop %v3306
    %v3308 = vmul.f32 %v3128, 1.442695
    %v3309 = vpow.pop %v3308
    %v3310 = vmul.f32 %v3129, 1.442695
    %v3311 = vpow.pop %v3310
    %v3312 = vmul.f32 %v3130, 1.442695
    %v3313 = vpow.pop %v3312
    %v3314 = vmul.f32 %v3131, 1.442695
    %v3315 = vpow.pop %v3314
    %v3316 = vmul.f32 %v3132, 1.442695
    %v3317 = vpow.pop %v3316
    %v3318 = vmul.f32 %v3133, 1.442695
    %v3319 = vpow.pop %v3318
    %v3320 = vmul.f32 %v3134, 1.442695
    %v3321 = vpow.pop %v3320
    %v3322 = vmul.f32 %v3135, 1.442695
    %v3323 = vpow.pop %v3322
    %v3324 = vmul.f32 %v3136, 1.442695
    %v3325 = vpow.pop %v3324
    %v3326 = vmul.f32 %v3137, 1.442695
    %v3327 = vpow.pop %v3326
    %v3328 = vmul.f32 %v3138, 1.442695
    %v3329 = vpow.pop %v3328
    %v3330 = vmul.f32 %v3139, 1.442695
    %v3331 = vpow.pop %v3330
    %v3332 = vmul.f32 %v3140, 1.442695
    %v3333 = vpow.pop %v3332
    %v3334 = vmul.f32 %v3141, 1.442695
    %v3335 = vpow.pop %v3334
    %v3336 = vmul.f32 %v3142, 1.442695
    %v3337 = vpow.pop %v3336
    %v3338 = vmul.f32 %v3143, 1.442695
    %v3339 = vpow.pop %v3338
    %v3340 = vmul.f32 %v3144, 1.442695
    %v3341 = vpow.pop %v3340
    %v3342 = vmul.f32 %v3145, 1.442695
    %v3343 = vpow.pop %v3342
    %v3344 = vmul.f32 %v3146, 1.442695
    %v3345 = vpow.pop %v3344
    %v3346 = vmul.f32 %v3147, 1.442695
    %v3347 = vpow.pop %v3346
    %v3348 = vmul.f32 %v3148, 1.442695
    %v3349 = vpow.pop %v3348
    %v3350 = vmul.f32 %v3149, 1.442695
    %v3351 = vpow.pop %v3350
    %v3352 = vmul.f32 %v3150, 1.442695
    %v3353 = vpow.pop %v3352
    %v3354 = vmul.f32 %v3151, 1.442695
    %v3355 = vpow.pop %v3354
    %v3356 = vmul.f32 %v3152, 1.442695
    %v3357 = vpow.pop %v3356
    %v3358 = vmul.f32 %v3153, 1.442695
    %v3359 = vpow.pop %v3358
    %v3360 = vmul.f32 %v3154, 1.442695
    %v3361 = vpow.pop %v3360
    %v3362 = vmul.f32 %v3155, 1.442695
    %v3363 = vpow.pop %v3362
    %v3364 = vmul.f32 %v3156, 1.442695
    %v3365 = vpow.pop %v3364
    %v3366 = vmul.f32 %v3157, 1.442695
    %v3367 = vpow.pop %v3366
    %v3368 = vmul.f32 %v3158, 1.442695
    %v3369 = vpow.pop %v3368
    %v3370 = vmul.f32 %v3159, 1.442695
    %v3371 = vpow.pop %v3370
    %v3372 = vmul.f32 %v3160, 1.442695
    %v3373 = vpow.pop %v3372
    %v3374 = vmul.f32 %v3161, 1.442695
    %v3375 = vpow.pop %v3374
    %v3376 = vmul.f32 %v3162, 1.442695
    %v3377 = vpow.pop %v3376
    %v3378 = vmul.f32 %v3163, 1.442695
    %v3379 = vpow.pop %v3378
    %v3380 = vmul.f32 %v3164, 1.442695
    %v3381 = vpow.pop %v3380
    %v3382 = vmul.f32 %v3165, 1.442695
    %v3383 = vpow.pop %v3382
    %v3384 = vmul.f32 %v3166, 1.442695
    %v3385 = vpow.pop %v3384
    %v3386 = vmul.f32 %v3167, 1.442695
    %v3387 = vpow.pop %v3386
    %v3388 = vmul.f32 %v3168, 1.442695
    %v3389 = vpow.pop %v3388
    %v3390 = vmul.f32 %v3169, 1.442695
    %v3391 = vpow.pop %v3390
    %v3392 = vmul.f32 %v3170, 1.442695
    %v3393 = vpow.pop %v3392
    %v3394 = vmul.f32 %v3171, 1.442695
    %v3395 = vpow.pop %v3394
    %v3396 = vmul.f32 %v3172, 1.442695
    %v3397 = vpow.pop %v3396
    %v3398 = vmul.f32 %v3173, 1.442695
    %v3399 = vpow.pop %v3398
    %v3400 = vmul.f32 %v3174, 1.442695
    %v3401 = vpow.pop %v3400
    %v3402 = vmul.f32 %v3175, 1.442695
    %v3403 = vpow.pop %v3402
    %v3404 = vmul.f32 %v3176, 1.442695
    %v3405 = vpow.pop %v3404
    %v3406 = vmul.f32 %v3177, 1.442695
    %v3407 = vpow.pop %v3406
    %v3408 = vmul.f32 %v3178, 1.442695
    %v3409 = vpow.pop %v3408
    %v3410 = vmul.f32 %v3179, 1.442695
    %v3411 = vpow.pop %v3410
    %v3412 = vmul.f32 %v3180, 1.442695
    %v3413 = vpow.pop %v3412
    %v3414 = vmul.f32 %v3181, 1.442695
    %v3415 = vpow.pop %v3414
    %v3416 = vmul.f32 %v3182, 1.442695
    %v3417 = vpow.pop %v3416
    %v3418 = vmul.f32 %v3183, 1.442695
    %v3419 = vpow.pop %v3418
    %v3420 = vmul.f32 %v3184, 1.442695
    %v3421 = vpow.pop %v3420
    %v3422 = vmul.f32 %v3185, 1.442695
    %v3423 = vpow.pop %v3422
    %v3424 = vmul.f32 %v3186, 1.442695
    %v3425 = vpow.pop %v3424
    %v3426 = vmul.f32 %v3187, 1.442695
    %v3427 = vpow.pop %v3426
    %v3428 = vmul.f32 %v3188, 1.442695
    %v3429 = vpow.pop %v3428
    %v3430 = vmul.f32 %v3189, 1.442695
    %v3431 = vpow.pop %v3430
    %v3432 = vmul.f32 %v3190, 1.442695
    %v3433 = vpow.pop %v3432
    %v3434 = vmul.f32 %v3191, 1.442695
    %v3435 = vpow.pop %v3434
    %v3436 = vmul.f32 %v3192, 1.442695
    %v3437 = vpow.pop %v3436
    %v3438 = vmul.f32 %v3193, 1.442695
    %v3439 = vpow.pop %v3438
    %v3440 = vmul.f32 %v3194, 1.442695
    %v3441 = vpow.pop %v3440
    %v3442 = vmul.f32 %v3195, 1.442695
    %v3443 = vpow.pop %v3442
    %v3444 = vmul.f32 %v3196, 1.442695
    %v3445 = vpow.pop %v3444
    %v3446 = vmul.f32 %v3197, 1.442695
    %v3447 = vpow.pop %v3446
    %v3448 = vmul.f32 %v3198, 1.442695
    %v3449 = vpow.pop %v3448
    %v3450 = vmul.f32 %v3199, 1.442695
    %v3451 = vpow.pop %v3450
    %v3452 = vmul.f32 %v3200, 1.442695
    %v3453 = vpow.pop %v3452
    %v3454 = vmul.f32 %v3201, 1.442695
    %v3455 = vpow.pop %v3454
    %v3456 = vmul.f32 %v3202, 1.442695
    %v3457 = vpow.pop %v3456
    %v3458 = vmul.f32 %v3203, 1.442695
    %v3459 = vpow.pop %v3458
    %3460 = vadd.xlane.f32.xlu0 %v3205
    %v3461 = vpop.xlane.xlu0 %3460
    %3462 = vadd.xlane.f32.xlu0 %v3207
    %v3463 = vpop.xlane.xlu0 %3462
    %3464 = vadd.xlane.f32.xlu0 %v3209
    %v3465 = vpop.xlane.xlu0 %3464
    %3466 = vadd.xlane.f32.xlu0 %v3211
    %v3467 = vpop.xlane.xlu0 %3466
    %3468 = vadd.xlane.f32.xlu0 %v3213
    %v3469 = vpop.xlane.xlu0 %3468
    %3470 = vadd.xlane.f32.xlu0 %v3215
    %v3471 = vpop.xlane.xlu0 %3470
    %3472 = vadd.xlane.f32.xlu0 %v3217
    %v3473 = vpop.xlane.xlu0 %3472
    %3474 = vadd.xlane.f32.xlu0 %v3219
    %v3475 = vpop.xlane.xlu0 %3474
    %3476 = vadd.xlane.f32.xlu0 %v3221
    %v3477 = vpop.xlane.xlu0 %3476
    %3478 = vadd.xlane.f32.xlu0 %v3223
    %v3479 = vpop.xlane.xlu0 %3478
    %3480 = vadd.xlane.f32.xlu0 %v3225
    %v3481 = vpop.xlane.xlu0 %3480
    %3482 = vadd.xlane.f32.xlu0 %v3227
    %v3483 = vpop.xlane.xlu0 %3482
    %3484 = vadd.xlane.f32.xlu0 %v3229
    %v3485 = vpop.xlane.xlu0 %3484
    %3486 = vadd.xlane.f32.xlu0 %v3231
    %v3487 = vpop.xlane.xlu0 %3486
    %3488 = vadd.xlane.f32.xlu0 %v3233
    %v3489 = vpop.xlane.xlu0 %3488
    %3490 = vadd.xlane.f32.xlu0 %v3235
    %v3491 = vpop.xlane.xlu0 %3490
    %3492 = vadd.xlane.f32.xlu0 %v3237
    %v3493 = vpop.xlane.xlu0 %3492
    %3494 = vadd.xlane.f32.xlu0 %v3239
    %v3495 = vpop.xlane.xlu0 %3494
    %3496 = vadd.xlane.f32.xlu0 %v3241
    %v3497 = vpop.xlane.xlu0 %3496
    %3498 = vadd.xlane.f32.xlu0 %v3243
    %v3499 = vpop.xlane.xlu0 %3498
    %3500 = vadd.xlane.f32.xlu0 %v3245
    %v3501 = vpop.xlane.xlu0 %3500
    %3502 = vadd.xlane.f32.xlu0 %v3247
    %v3503 = vpop.xlane.xlu0 %3502
    %3504 = vadd.xlane.f32.xlu0 %v3249
    %v3505 = vpop.xlane.xlu0 %3504
    %3506 = vadd.xlane.f32.xlu0 %v3251
    %v3507 = vpop.xlane.xlu0 %3506
    %3508 = vadd.xlane.f32.xlu0 %v3253
    %v3509 = vpop.xlane.xlu0 %3508
    %3510 = vadd.xlane.f32.xlu0 %v3255
    %v3511 = vpop.xlane.xlu0 %3510
    %3512 = vadd.xlane.f32.xlu0 %v3257
    %v3513 = vpop.xlane.xlu0 %3512
    %3514 = vadd.xlane.f32.xlu0 %v3259
    %v3515 = vpop.xlane.xlu0 %3514
    %3516 = vadd.xlane.f32.xlu0 %v3261
    %v3517 = vpop.xlane.xlu0 %3516
    %3518 = vadd.xlane.f32.xlu0 %v3263
    %v3519 = vpop.xlane.xlu0 %3518
    %3520 = vadd.xlane.f32.xlu0 %v3265
    %v3521 = vpop.xlane.xlu0 %3520
    %3522 = vadd.xlane.f32.xlu0 %v3267
    %v3523 = vpop.xlane.xlu0 %3522
    %3524 = vadd.xlane.f32.xlu0 %v3269
    %v3525 = vpop.xlane.xlu0 %3524
    %3526 = vadd.xlane.f32.xlu0 %v3271
    %v3527 = vpop.xlane.xlu0 %3526
    %3528 = vadd.xlane.f32.xlu0 %v3273
    %v3529 = vpop.xlane.xlu0 %3528
    %3530 = vadd.xlane.f32.xlu0 %v3275
    %v3531 = vpop.xlane.xlu0 %3530
    %3532 = vadd.xlane.f32.xlu0 %v3277
    %v3533 = vpop.xlane.xlu0 %3532
    %3534 = vadd.xlane.f32.xlu0 %v3279
    %v3535 = vpop.xlane.xlu0 %3534
    %3536 = vadd.xlane.f32.xlu0 %v3281
    %v3537 = vpop.xlane.xlu0 %3536
    %3538 = vadd.xlane.f32.xlu0 %v3283
    %v3539 = vpop.xlane.xlu0 %3538
    %3540 = vadd.xlane.f32.xlu0 %v3285
    %v3541 = vpop.xlane.xlu0 %3540
    %3542 = vadd.xlane.f32.xlu0 %v3287
    %v3543 = vpop.xlane.xlu0 %3542
    %3544 = vadd.xlane.f32.xlu0 %v3289
    %v3545 = vpop.xlane.xlu0 %3544
    %3546 = vadd.xlane.f32.xlu0 %v3291
    %v3547 = vpop.xlane.xlu0 %3546
    %3548 = vadd.xlane.f32.xlu0 %v3293
    %v3549 = vpop.xlane.xlu0 %3548
    %3550 = vadd.xlane.f32.xlu0 %v3295
    %v3551 = vpop.xlane.xlu0 %3550
    %3552 = vadd.xlane.f32.xlu0 %v3297
    %v3553 = vpop.xlane.xlu0 %3552
    %3554 = vadd.xlane.f32.xlu0 %v3299
    %v3555 = vpop.xlane.xlu0 %3554
    %3556 = vadd.xlane.f32.xlu0 %v3301
    %v3557 = vpop.xlane.xlu0 %3556
    %3558 = vadd.xlane.f32.xlu0 %v3303
    %v3559 = vpop.xlane.xlu0 %3558
    %3560 = vadd.xlane.f32.xlu0 %v3305
    %v3561 = vpop.xlane.xlu0 %3560
    %3562 = vadd.xlane.f32.xlu0 %v3307
    %v3563 = vpop.xlane.xlu0 %3562
    %3564 = vadd.xlane.f32.xlu0 %v3309
    %v3565 = vpop.xlane.xlu0 %3564
    %3566 = vadd.xlane.f32.xlu0 %v3311
    %v3567 = vpop.xlane.xlu0 %3566
    %3568 = vadd.xlane.f32.xlu0 %v3313
    %v3569 = vpop.xlane.xlu0 %3568
    %3570 = vadd.xlane.f32.xlu0 %v3315
    %v3571 = vpop.xlane.xlu0 %3570
    %3572 = vadd.xlane.f32.xlu0 %v3317
    %v3573 = vpop.xlane.xlu0 %3572
    %3574 = vadd.xlane.f32.xlu0 %v3319
    %v3575 = vpop.xlane.xlu0 %3574
    %3576 = vadd.xlane.f32.xlu0 %v3321
    %v3577 = vpop.xlane.xlu0 %3576
    %3578 = vadd.xlane.f32.xlu0 %v3323
    %v3579 = vpop.xlane.xlu0 %3578
    %3580 = vadd.xlane.f32.xlu0 %v3325
    %v3581 = vpop.xlane.xlu0 %3580
    %3582 = vadd.xlane.f32.xlu0 %v3327
    %v3583 = vpop.xlane.xlu0 %3582
    %3584 = vadd.xlane.f32.xlu0 %v3329
    %v3585 = vpop.xlane.xlu0 %3584
    %3586 = vadd.xlane.f32.xlu0 %v3331
    %v3587 = vpop.xlane.xlu0 %3586
    %3588 = vadd.xlane.f32.xlu0 %v3333
    %v3589 = vpop.xlane.xlu0 %3588
    %3590 = vadd.xlane.f32.xlu0 %v3335
    %v3591 = vpop.xlane.xlu0 %3590
    %3592 = vadd.xlane.f32.xlu0 %v3337
    %v3593 = vpop.xlane.xlu0 %3592
    %3594 = vadd.xlane.f32.xlu0 %v3339
    %v3595 = vpop.xlane.xlu0 %3594
    %3596 = vadd.xlane.f32.xlu0 %v3341
    %v3597 = vpop.xlane.xlu0 %3596
    %3598 = vadd.xlane.f32.xlu0 %v3343
    %v3599 = vpop.xlane.xlu0 %3598
    %3600 = vadd.xlane.f32.xlu0 %v3345
    %v3601 = vpop.xlane.xlu0 %3600
    %3602 = vadd.xlane.f32.xlu0 %v3347
    %v3603 = vpop.xlane.xlu0 %3602
    %3604 = vadd.xlane.f32.xlu0 %v3349
    %v3605 = vpop.xlane.xlu0 %3604
    %3606 = vadd.xlane.f32.xlu0 %v3351
    %v3607 = vpop.xlane.xlu0 %3606
    %3608 = vadd.xlane.f32.xlu0 %v3353
    %v3609 = vpop.xlane.xlu0 %3608
    %3610 = vadd.xlane.f32.xlu0 %v3355
    %v3611 = vpop.xlane.xlu0 %3610
    %3612 = vadd.xlane.f32.xlu0 %v3357
    %v3613 = vpop.xlane.xlu0 %3612
    %3614 = vadd.xlane.f32.xlu0 %v3359
    %v3615 = vpop.xlane.xlu0 %3614
    %3616 = vadd.xlane.f32.xlu0 %v3361
    %v3617 = vpop.xlane.xlu0 %3616
    %3618 = vadd.xlane.f32.xlu0 %v3363
    %v3619 = vpop.xlane.xlu0 %3618
    %3620 = vadd.xlane.f32.xlu0 %v3365
    %v3621 = vpop.xlane.xlu0 %3620
    %3622 = vadd.xlane.f32.xlu0 %v3367
    %v3623 = vpop.xlane.xlu0 %3622
    %3624 = vadd.xlane.f32.xlu0 %v3369
    %v3625 = vpop.xlane.xlu0 %3624
    %3626 = vadd.xlane.f32.xlu0 %v3371
    %v3627 = vpop.xlane.xlu0 %3626
    %3628 = vadd.xlane.f32.xlu0 %v3373
    %v3629 = vpop.xlane.xlu0 %3628
    %3630 = vadd.xlane.f32.xlu0 %v3375
    %v3631 = vpop.xlane.xlu0 %3630
    %3632 = vadd.xlane.f32.xlu0 %v3377
    %v3633 = vpop.xlane.xlu0 %3632
    %3634 = vadd.xlane.f32.xlu0 %v3379
    %v3635 = vpop.xlane.xlu0 %3634
    %3636 = vadd.xlane.f32.xlu0 %v3381
    %v3637 = vpop.xlane.xlu0 %3636
    %3638 = vadd.xlane.f32.xlu0 %v3383
    %v3639 = vpop.xlane.xlu0 %3638
    %3640 = vadd.xlane.f32.xlu0 %v3385
    %v3641 = vpop.xlane.xlu0 %3640
    %3642 = vadd.xlane.f32.xlu0 %v3387
    %v3643 = vpop.xlane.xlu0 %3642
    %3644 = vadd.xlane.f32.xlu0 %v3389
    %v3645 = vpop.xlane.xlu0 %3644
    %3646 = vadd.xlane.f32.xlu0 %v3391
    %v3647 = vpop.xlane.xlu0 %3646
    %3648 = vadd.xlane.f32.xlu0 %v3393
    %v3649 = vpop.xlane.xlu0 %3648
    %3650 = vadd.xlane.f32.xlu0 %v3395
    %v3651 = vpop.xlane.xlu0 %3650
    %3652 = vadd.xlane.f32.xlu0 %v3397
    %v3653 = vpop.xlane.xlu0 %3652
    %3654 = vadd.xlane.f32.xlu0 %v3399
    %v3655 = vpop.xlane.xlu0 %3654
    %3656 = vadd.xlane.f32.xlu0 %v3401
    %v3657 = vpop.xlane.xlu0 %3656
    %3658 = vadd.xlane.f32.xlu0 %v3403
    %v3659 = vpop.xlane.xlu0 %3658
    %3660 = vadd.xlane.f32.xlu0 %v3405
    %v3661 = vpop.xlane.xlu0 %3660
    %3662 = vadd.xlane.f32.xlu0 %v3407
    %v3663 = vpop.xlane.xlu0 %3662
    %3664 = vadd.xlane.f32.xlu0 %v3409
    %v3665 = vpop.xlane.xlu0 %3664
    %3666 = vadd.xlane.f32.xlu0 %v3411
    %v3667 = vpop.xlane.xlu0 %3666
    %3668 = vadd.xlane.f32.xlu0 %v3413
    %v3669 = vpop.xlane.xlu0 %3668
    %3670 = vadd.xlane.f32.xlu0 %v3415
    %v3671 = vpop.xlane.xlu0 %3670
    %3672 = vadd.xlane.f32.xlu0 %v3417
    %v3673 = vpop.xlane.xlu0 %3672
    %3674 = vadd.xlane.f32.xlu0 %v3419
    %v3675 = vpop.xlane.xlu0 %3674
    %3676 = vadd.xlane.f32.xlu0 %v3421
    %v3677 = vpop.xlane.xlu0 %3676
    %3678 = vadd.xlane.f32.xlu0 %v3423
    %v3679 = vpop.xlane.xlu0 %3678
    %3680 = vadd.xlane.f32.xlu0 %v3425
    %v3681 = vpop.xlane.xlu0 %3680
    %3682 = vadd.xlane.f32.xlu0 %v3427
    %v3683 = vpop.xlane.xlu0 %3682
    %3684 = vadd.xlane.f32.xlu0 %v3429
    %v3685 = vpop.xlane.xlu0 %3684
    %3686 = vadd.xlane.f32.xlu0 %v3431
    %v3687 = vpop.xlane.xlu0 %3686
    %3688 = vadd.xlane.f32.xlu0 %v3433
    %v3689 = vpop.xlane.xlu0 %3688
    %3690 = vadd.xlane.f32.xlu0 %v3435
    %v3691 = vpop.xlane.xlu0 %3690
    %3692 = vadd.xlane.f32.xlu0 %v3437
    %v3693 = vpop.xlane.xlu0 %3692
    %3694 = vadd.xlane.f32.xlu0 %v3439
    %v3695 = vpop.xlane.xlu0 %3694
    %3696 = vadd.xlane.f32.xlu0 %v3441
    %v3697 = vpop.xlane.xlu0 %3696
    %3698 = vadd.xlane.f32.xlu0 %v3443
    %v3699 = vpop.xlane.xlu0 %3698
    %3700 = vadd.xlane.f32.xlu0 %v3445
    %v3701 = vpop.xlane.xlu0 %3700
    %3702 = vadd.xlane.f32.xlu0 %v3447
    %v3703 = vpop.xlane.xlu0 %3702
    %3704 = vadd.xlane.f32.xlu0 %v3449
    %v3705 = vpop.xlane.xlu0 %3704
    %3706 = vadd.xlane.f32.xlu0 %v3451
    %v3707 = vpop.xlane.xlu0 %3706
    %3708 = vadd.xlane.f32.xlu0 %v3453
    %v3709 = vpop.xlane.xlu0 %3708
    %3710 = vadd.xlane.f32.xlu0 %v3455
    %v3711 = vpop.xlane.xlu0 %3710
    %3712 = vadd.xlane.f32.xlu0 %v3457
    %v3713 = vpop.xlane.xlu0 %3712
    %3714 = vadd.xlane.f32.xlu0 %v3459
    %v3715 = vpop.xlane.xlu0 %3714
    %v3716 = vrcp.pop %v3461
    %v3717 = vrcp.pop %v3463
    %v3718 = vrcp.pop %v3465
    %v3719 = vrcp.pop %v3467
    %v3720 = vrcp.pop %v3469
    %v3721 = vrcp.pop %v3471
    %v3722 = vrcp.pop %v3473
    %v3723 = vrcp.pop %v3475
    %v3724 = vrcp.pop %v3477
    %v3725 = vrcp.pop %v3479
    %v3726 = vrcp.pop %v3481
    %v3727 = vrcp.pop %v3483
    %v3728 = vrcp.pop %v3485
    %v3729 = vrcp.pop %v3487
    %v3730 = vrcp.pop %v3489
    %v3731 = vrcp.pop %v3491
    %v3732 = vrcp.pop %v3493
    %v3733 = vrcp.pop %v3495
    %v3734 = vrcp.pop %v3497
    %v3735 = vrcp.pop %v3499
    %v3736 = vrcp.pop %v3501
    %v3737 = vrcp.pop %v3503
    %v3738 = vrcp.pop %v3505
    %v3739 = vrcp.pop %v3507
    %v3740 = vrcp.pop %v3509
    %v3741 = vrcp.pop %v3511
    %v3742 = vrcp.pop %v3513
    %v3743 = vrcp.pop %v3515
    %v3744 = vrcp.pop %v3517
    %v3745 = vrcp.pop %v3519
    %v3746 = vrcp.pop %v3521
    %v3747 = vrcp.pop %v3523
    %v3748 = vrcp.pop %v3525
    %v3749 = vrcp.pop %v3527
    %v3750 = vrcp.pop %v3529
    %v3751 = vrcp.pop %v3531
    %v3752 = vrcp.pop %v3533
    %v3753 = vrcp.pop %v3535
    %v3754 = vrcp.pop %v3537
    %v3755 = vrcp.pop %v3539
    %v3756 = vrcp.pop %v3541
    %v3757 = vrcp.pop %v3543
    %v3758 = vrcp.pop %v3545
    %v3759 = vrcp.pop %v3547
    %v3760 = vrcp.pop %v3549
    %v3761 = vrcp.pop %v3551
    %v3762 = vrcp.pop %v3553
    %v3763 = vrcp.pop %v3555
    %v3764 = vrcp.pop %v3557
    %v3765 = vrcp.pop %v3559
    %v3766 = vrcp.pop %v3561
    %v3767 = vrcp.pop %v3563
    %v3768 = vrcp.pop %v3565
    %v3769 = vrcp.pop %v3567
    %v3770 = vrcp.pop %v3569
    %v3771 = vrcp.pop %v3571
    %v3772 = vrcp.pop %v3573
    %v3773 = vrcp.pop %v3575
    %v3774 = vrcp.pop %v3577
    %v3775 = vrcp.pop %v3579
    %v3776 = vrcp.pop %v3581
    %v3777 = vrcp.pop %v3583
    %v3778 = vrcp.pop %v3585
    %v3779 = vrcp.pop %v3587
    %v3780 = vrcp.pop %v3589
    %v3781 = vrcp.pop %v3591
    %v3782 = vrcp.pop %v3593
    %v3783 = vrcp.pop %v3595
    %v3784 = vrcp.pop %v3597
    %v3785 = vrcp.pop %v3599
    %v3786 = vrcp.pop %v3601
    %v3787 = vrcp.pop %v3603
    %v3788 = vrcp.pop %v3605
    %v3789 = vrcp.pop %v3607
    %v3790 = vrcp.pop %v3609
    %v3791 = vrcp.pop %v3611
    %v3792 = vrcp.pop %v3613
    %v3793 = vrcp.pop %v3615
    %v3794 = vrcp.pop %v3617
    %v3795 = vrcp.pop %v3619
    %v3796 = vrcp.pop %v3621
    %v3797 = vrcp.pop %v3623
    %v3798 = vrcp.pop %v3625
    %v3799 = vrcp.pop %v3627
    %v3800 = vrcp.pop %v3629
    %v3801 = vrcp.pop %v3631
    %v3802 = vrcp.pop %v3633
    %v3803 = vrcp.pop %v3635
    %v3804 = vrcp.pop %v3637
    %v3805 = vrcp.pop %v3639
    %v3806 = vrcp.pop %v3641
    %v3807 = vrcp.pop %v3643
    %v3808 = vrcp.pop %v3645
    %v3809 = vrcp.pop %v3647
    %v3810 = vrcp.pop %v3649
    %v3811 = vrcp.pop %v3651
    %v3812 = vrcp.pop %v3653
    %v3813 = vrcp.pop %v3655
    %v3814 = vrcp.pop %v3657
    %v3815 = vrcp.pop %v3659
    %v3816 = vrcp.pop %v3661
    %v3817 = vrcp.pop %v3663
    %v3818 = vrcp.pop %v3665
    %v3819 = vrcp.pop %v3667
    %v3820 = vrcp.pop %v3669
    %v3821 = vrcp.pop %v3671
    %v3822 = vrcp.pop %v3673
    %v3823 = vrcp.pop %v3675
    %v3824 = vrcp.pop %v3677
    %v3825 = vrcp.pop %v3679
    %v3826 = vrcp.pop %v3681
    %v3827 = vrcp.pop %v3683
    %v3828 = vrcp.pop %v3685
    %v3829 = vrcp.pop %v3687
    %v3830 = vrcp.pop %v3689
    %v3831 = vrcp.pop %v3691
    %v3832 = vrcp.pop %v3693
    %v3833 = vrcp.pop %v3695
    %v3834 = vrcp.pop %v3697
    %v3835 = vrcp.pop %v3699
    %v3836 = vrcp.pop %v3701
    %v3837 = vrcp.pop %v3703
    %v3838 = vrcp.pop %v3705
    %v3839 = vrcp.pop %v3707
    %v3840 = vrcp.pop %v3709
    %v3841 = vrcp.pop %v3711
    %v3842 = vrcp.pop %v3713
    %v3843 = vrcp.pop %v3715
    %v3844 = vmul.f32 %v3205, %v3716
    %v3845 = vmul.f32 %v3207, %v3717
    %v3846 = vmul.f32 %v3209, %v3718
    %v3847 = vmul.f32 %v3211, %v3719
    %v3848 = vmul.f32 %v3213, %v3720
    %v3849 = vmul.f32 %v3215, %v3721
    %v3850 = vmul.f32 %v3217, %v3722
    %v3851 = vmul.f32 %v3219, %v3723
    %v3852 = vmul.f32 %v3221, %v3724
    %v3853 = vmul.f32 %v3223, %v3725
    %v3854 = vmul.f32 %v3225, %v3726
    %v3855 = vmul.f32 %v3227, %v3727
    %v3856 = vmul.f32 %v3229, %v3728
    %v3857 = vmul.f32 %v3231, %v3729
    %v3858 = vmul.f32 %v3233, %v3730
    %v3859 = vmul.f32 %v3235, %v3731
    %v3860 = vmul.f32 %v3237, %v3732
    %v3861 = vmul.f32 %v3239, %v3733
    %v3862 = vmul.f32 %v3241, %v3734
    %v3863 = vmul.f32 %v3243, %v3735
    %v3864 = vmul.f32 %v3245, %v3736
    %v3865 = vmul.f32 %v3247, %v3737
    %v3866 = vmul.f32 %v3249, %v3738
    %v3867 = vmul.f32 %v3251, %v3739
    %v3868 = vmul.f32 %v3253, %v3740
    %v3869 = vmul.f32 %v3255, %v3741
    %v3870 = vmul.f32 %v3257, %v3742
    %v3871 = vmul.f32 %v3259, %v3743
    %v3872 = vmul.f32 %v3261, %v3744
    %v3873 = vmul.f32 %v3263, %v3745
    %v3874 = vmul.f32 %v3265, %v3746
    %v3875 = vmul.f32 %v3267, %v3747
    %v3876 = vmul.f32 %v3269, %v3748
    %v3877 = vmul.f32 %v3271, %v3749
    %v3878 = vmul.f32 %v3273, %v3750
    %v3879 = vmul.f32 %v3275, %v3751
    %v3880 = vmul.f32 %v3277, %v3752
    %v3881 = vmul.f32 %v3279, %v3753
    %v3882 = vmul.f32 %v3281, %v3754
    %v3883 = vmul.f32 %v3283, %v3755
    %v3884 = vmul.f32 %v3285, %v3756
    %v3885 = vmul.f32 %v3287, %v3757
    %v3886 = vmul.f32 %v3289, %v3758
    %v3887 = vmul.f32 %v3291, %v3759
    %v3888 = vmul.f32 %v3293, %v3760
    %v3889 = vmul.f32 %v3295, %v3761
    %v3890 = vmul.f32 %v3297, %v3762
    %v3891 = vmul.f32 %v3299, %v3763
    %v3892 = vmul.f32 %v3301, %v3764
    %v3893 = vmul.f32 %v3303, %v3765
    %v3894 = vmul.f32 %v3305, %v3766
    %v3895 = vmul.f32 %v3307, %v3767
    %v3896 = vmul.f32 %v3309, %v3768
    %v3897 = vmul.f32 %v3311, %v3769
    %v3898 = vmul.f32 %v3313, %v3770
    %v3899 = vmul.f32 %v3315, %v3771
    %v3900 = vmul.f32 %v3317, %v3772
    %v3901 = vmul.f32 %v3319, %v3773
    %v3902 = vmul.f32 %v3321, %v3774
    %v3903 = vmul.f32 %v3323, %v3775
    %v3904 = vmul.f32 %v3325, %v3776
    %v3905 = vmul.f32 %v3327, %v3777
    %v3906 = vmul.f32 %v3329, %v3778
    %v3907 = vmul.f32 %v3331, %v3779
    %v3908 = vmul.f32 %v3333, %v3780
    %v3909 = vmul.f32 %v3335, %v3781
    %v3910 = vmul.f32 %v3337, %v3782
    %v3911 = vmul.f32 %v3339, %v3783
    %v3912 = vmul.f32 %v3341, %v3784
    %v3913 = vmul.f32 %v3343, %v3785
    %v3914 = vmul.f32 %v3345, %v3786
    %v3915 = vmul.f32 %v3347, %v3787
    %v3916 = vmul.f32 %v3349, %v3788
    %v3917 = vmul.f32 %v3351, %v3789
    %v3918 = vmul.f32 %v3353, %v3790
    %v3919 = vmul.f32 %v3355, %v3791
    %v3920 = vmul.f32 %v3357, %v3792
    %v3921 = vmul.f32 %v3359, %v3793
    %v3922 = vmul.f32 %v3361, %v3794
    %v3923 = vmul.f32 %v3363, %v3795
    %v3924 = vmul.f32 %v3365, %v3796
    %v3925 = vmul.f32 %v3367, %v3797
    %v3926 = vmul.f32 %v3369, %v3798
    %v3927 = vmul.f32 %v3371, %v3799
    %v3928 = vmul.f32 %v3373, %v3800
    %v3929 = vmul.f32 %v3375, %v3801
    %v3930 = vmul.f32 %v3377, %v3802
    %v3931 = vmul.f32 %v3379, %v3803
    %v3932 = vmul.f32 %v3381, %v3804
    %v3933 = vmul.f32 %v3383, %v3805
    %v3934 = vmul.f32 %v3385, %v3806
    %v3935 = vmul.f32 %v3387, %v3807
    %v3936 = vmul.f32 %v3389, %v3808
    %v3937 = vmul.f32 %v3391, %v3809
    %v3938 = vmul.f32 %v3393, %v3810
    %v3939 = vmul.f32 %v3395, %v3811
    %v3940 = vmul.f32 %v3397, %v3812
    %v3941 = vmul.f32 %v3399, %v3813
    %v3942 = vmul.f32 %v3401, %v3814
    %v3943 = vmul.f32 %v3403, %v3815
    %v3944 = vmul.f32 %v3405, %v3816
    %v3945 = vmul.f32 %v3407, %v3817
    %v3946 = vmul.f32 %v3409, %v3818
    %v3947 = vmul.f32 %v3411, %v3819
    %v3948 = vmul.f32 %v3413, %v3820
    %v3949 = vmul.f32 %v3415, %v3821
    %v3950 = vmul.f32 %v3417, %v3822
    %v3951 = vmul.f32 %v3419, %v3823
    %v3952 = vmul.f32 %v3421, %v3824
    %v3953 = vmul.f32 %v3423, %v3825
    %v3954 = vmul.f32 %v3425, %v3826
    %v3955 = vmul.f32 %v3427, %v3827
    %v3956 = vmul.f32 %v3429, %v3828
    %v3957 = vmul.f32 %v3431, %v3829
    %v3958 = vmul.f32 %v3433, %v3830
    %v3959 = vmul.f32 %v3435, %v3831
    %v3960 = vmul.f32 %v3437, %v3832
    %v3961 = vmul.f32 %v3439, %v3833
    %v3962 = vmul.f32 %v3441, %v3834
    %v3963 = vmul.f32 %v3443, %v3835
    %v3964 = vmul.f32 %v3445, %v3836
    %v3965 = vmul.f32 %v3447, %v3837
    %v3966 = vmul.f32 %v3449, %v3838
    %v3967 = vmul.f32 %v3451, %v3839
    %v3968 = vmul.f32 %v3453, %v3840
    %v3969 = vmul.f32 %v3455, %v3841
    %v3970 = vmul.f32 %v3457, %v3842
    %v3971 = vmul.f32 %v3459, %v3843
    %v3972 = vld [vmem:[%s5] sm:$0xf]
    %v3973 = vld [vmem:[%s5 + $0x4] sm:$0xf]
    %v3974 = vld [vmem:[%s5 + $0x8] sm:$0xf]
    %v3975 = vld [vmem:[%s5 + $0xc] sm:$0xf]
    %v3976 = vld [vmem:[%s5 + $0x10] sm:$0xf]
    %v3977 = vld [vmem:[%s5 + $0x14] sm:$0xf]
    %v3978 = vld [vmem:[%s5 + $0x18] sm:$0xf]
    %v3979 = vld [vmem:[%s5 + $0x1c] sm:$0xf]
    %v3980 = vld [vmem:[%s5 + $0x20] sm:$0xf]
    %v3981 = vld [vmem:[%s5 + $0x24] sm:$0xf]
    %v3982 = vld [vmem:[%s5 + $0x28] sm:$0xf]
    %v3983 = vld [vmem:[%s5 + $0x2c] sm:$0xf]
    %v3984 = vld [vmem:[%s5 + $0x30] sm:$0xf]
    %v3985 = vld [vmem:[%s5 + $0x34] sm:$0xf]
    %v3986 = vld [vmem:[%s5 + $0x38] sm:$0xf]
    %v3987 = vld [vmem:[%s5 + $0x3c] sm:$0xf]
    %v3988 = vld [vmem:[%s6] sm:$0x1]
    %v3989 = vpack.c.bf16 %v3845, %v3844
    %v3990 = vpack.c.bf16 %v3847, %v3846
    %v3991 = vpack.c.bf16 %v3849, %v3848
    %v3992 = vpack.c.bf16 %v3851, %v3850
    %v3993 = vpack.c.bf16 %v3853, %v3852
    %v3994 = vpack.c.bf16 %v3855, %v3854
    %v3995 = vpack.c.bf16 %v3857, %v3856
    %v3996 = vpack.c.bf16 %v3859, %v3858
    %v3997 = vpack.c.bf16 %v3861, %v3860
    %v3998 = vpack.c.bf16 %v3863, %v3862
    %v3999 = vpack.c.bf16 %v3865, %v3864
    %v4000 = vpack.c.bf16 %v3867, %v3866
    %v4001 = vpack.c.bf16 %v3869, %v3868
    %v4002 = vpack.c.bf16 %v3871, %v3870
    %v4003 = vpack.c.bf16 %v3873, %v3872
    %v4004 = vpack.c.bf16 %v3875, %v3874
    %v4005 = vpack.c.bf16 %v3877, %v3876
    %v4006 = vpack.c.bf16 %v3879, %v3878
    %v4007 = vpack.c.bf16 %v3881, %v3880
    %v4008 = vpack.c.bf16 %v3883, %v3882
    %v4009 = vpack.c.bf16 %v3885, %v3884
    %v4010 = vpack.c.bf16 %v3887, %v3886
    %v4011 = vpack.c.bf16 %v3889, %v3888
    %v4012 = vpack.c.bf16 %v3891, %v3890
    %v4013 = vpack.c.bf16 %v3893, %v3892
    %v4014 = vpack.c.bf16 %v3895, %v3894
    %v4015 = vpack.c.bf16 %v3897, %v3896
    %v4016 = vpack.c.bf16 %v3899, %v3898
    %v4017 = vpack.c.bf16 %v3901, %v3900
    %v4018 = vpack.c.bf16 %v3903, %v3902
    %v4019 = vpack.c.bf16 %v3905, %v3904
    %v4020 = vpack.c.bf16 %v3907, %v3906
    %v4021 = vpack.c.bf16 %v3909, %v3908
    %v4022 = vpack.c.bf16 %v3911, %v3910
    %v4023 = vpack.c.bf16 %v3913, %v3912
    %v4024 = vpack.c.bf16 %v3915, %v3914
    %v4025 = vpack.c.bf16 %v3917, %v3916
    %v4026 = vpack.c.bf16 %v3919, %v3918
    %v4027 = vpack.c.bf16 %v3921, %v3920
    %v4028 = vpack.c.bf16 %v3923, %v3922
    %v4029 = vpack.c.bf16 %v3925, %v3924
    %v4030 = vpack.c.bf16 %v3927, %v3926
    %v4031 = vpack.c.bf16 %v3929, %v3928
    %v4032 = vpack.c.bf16 %v3931, %v3930
    %v4033 = vpack.c.bf16 %v3933, %v3932
    %v4034 = vpack.c.bf16 %v3935, %v3934
    %v4035 = vpack.c.bf16 %v3937, %v3936
    %v4036 = vpack.c.bf16 %v3939, %v3938
    %v4037 = vpack.c.bf16 %v3941, %v3940
    %v4038 = vpack.c.bf16 %v3943, %v3942
    %v4039 = vpack.c.bf16 %v3945, %v3944
    %v4040 = vpack.c.bf16 %v3947, %v3946
    %v4041 = vpack.c.bf16 %v3949, %v3948
    %v4042 = vpack.c.bf16 %v3951, %v3950
    %v4043 = vpack.c.bf16 %v3953, %v3952
    %v4044 = vpack.c.bf16 %v3955, %v3954
    %v4045 = vpack.c.bf16 %v3957, %v3956
    %v4046 = vpack.c.bf16 %v3959, %v3958
    %v4047 = vpack.c.bf16 %v3961, %v3960
    %v4048 = vpack.c.bf16 %v3963, %v3962
    %v4049 = vpack.c.bf16 %v3965, %v3964
    %v4050 = vpack.c.bf16 %v3967, %v3966
    %v4051 = vpack.c.bf16 %v3969, %v3968
    %v4052 = vpack.c.bf16 %v3971, %v3970
    %v4054 = vlaneseq
    %v4055 = vshrl.u32 %v4054, 7
    %v4056 = vsub.s32 0, %v4055
    %v4057 = vrot.slane %v3988, %v4056
    %v4075 = vunpack.c.l.b16 %v3972
    %v4076 = vunpack.c.l.b16 %v3973
    %v4077 = vunpack.c.l.b16 %v3974
    %v4078 = vunpack.c.l.b16 %v3975
    %v4079 = vunpack.c.l.b16 %v3976
    %v4080 = vunpack.c.l.b16 %v3977
    %v4081 = vunpack.c.l.b16 %v3978
    %v4082 = vunpack.c.l.b16 %v3979
    %v4083 = vunpack.c.l.b16 %v3980
    %v4084 = vunpack.c.l.b16 %v3981
    %v4085 = vunpack.c.l.b16 %v3982
    %v4086 = vunpack.c.l.b16 %v3983
    %v4087 = vunpack.c.l.b16 %v3984
    %v4088 = vunpack.c.l.b16 %v3985
    %v4089 = vunpack.c.l.b16 %v3986
    %v4090 = vunpack.c.l.b16 %v3987
    %v4091 = vpack.c.b16 %v4076, %v4075
    %v4092 = vpack.c.b16 %v4078, %v4077
    %v4093 = vpack.c.b16 %v4080, %v4079
    %v4094 = vpack.c.b16 %v4082, %v4081
    %v4095 = vpack.c.b16 %v4084, %v4083
    %v4096 = vpack.c.b16 %v4086, %v4085
    %v4097 = vpack.c.b16 %v4088, %v4087
    %v4098 = vpack.c.b16 %v4090, %v4089
    %4107 = vmatprep.subr.bf16.mxu0 0
    %4108 = vmatpush1.bf16.msra.mxu0 %v4091
    %4109 = vmatprep.subr.bf16.mxu0 0
    %4110 = vmatpush1.bf16.msra.mxu0 %v4092
    %4111 = vmatprep.subr.bf16.mxu0 0
    %4112 = vmatpush1.bf16.msra.mxu0 %v4093
    %4113 = vmatprep.subr.bf16.mxu0 0
    %4114 = vmatpush1.bf16.msra.mxu0 %v4094
    %4115 = vmatprep.subr.bf16.mxu0 0
    %4116 = vmatpush1.bf16.msra.mxu0 %v4095
    %4117 = vmatprep.subr.bf16.mxu0 0
    %4118 = vmatpush1.bf16.msra.mxu0 %v4096
    %4119 = vmatprep.subr.bf16.mxu0 0
    %4120 = vmatpush1.bf16.msra.mxu0 %v4097
    %4121 = vmatprep.subr.bf16.mxu0 0
    %4122 = vmatpush1.bf16.msra.mxu0 %v4098
    %4123 = vmatprep.subr.bf16.mxu0 0
    %4124 = vmatpush1.bf16.msra.mxu0 0
    %4125 = vmatprep.subr.bf16.mxu0 0
    %4126 = vmatpush1.bf16.msra.mxu0 0
    %4127 = vmatprep.subr.bf16.mxu0 0
    %4128 = vmatpush1.bf16.msra.mxu0 0
    %4129 = vmatprep.subr.bf16.mxu0 0
    %4130 = vmatpush1.bf16.msra.mxu0 0
    %4131 = vmatprep.subr.bf16.mxu0 0
    %4132 = vmatpush1.bf16.msra.mxu0 0
    %4133 = vmatprep.subr.bf16.mxu0 0
    %4134 = vmatpush1.bf16.msra.mxu0 0
    %4135 = vmatprep.subr.bf16.mxu0 0
    %4136 = vmatpush1.bf16.msra.mxu0 0
    %4137 = vmatprep.subr.bf16.mxu0 0
    %4138 = vmatpush1.bf16.msra.mxu0 0
    %4139 = vmatprep.mubr.bf16.mxu0 0
    %4140 = vmatmul.mubr.bf16.gmra.mrb[0].mxu0 %v3989
    %v4141 = vpop.f32.mrb[0].mxu0
    %v4142 = vadd.f32 %v4057, %v4141
    %v4143 = vpop.f32.mrb[0].mxu0
    %v4144 = vpop.f32.mrb[0].mxu0
    %v4145 = vadd.f32 %v4057, %v4144
    %v4146 = vpop.f32.mrb[0].mxu0
    %4147 = vmatprep.mubr.bf16.mxu0 0
    %4148 = vmatmul.mubr.bf16.gmra.mrb[0].mxu0 %v3990
    %v4149 = vpop.f32.mrb[0].mxu0
    %v4150 = vadd.f32 %v4057, %v4149
    %v4151 = vpop.f32.mrb[0].mxu0
    %v4152 = vpop.f32.mrb[0].mxu0
    %v4153 = vadd.f32 %v4057, %v4152
    %v4154 = vpop.f32.mrb[0].mxu0
    %4155 = vmatprep.mubr.bf16.mxu0 0
    %4156 = vmatmul.mubr.bf16.gmra.mrb[0].mxu0 %v3991
    %v4157 = vpop.f32.mrb[0].mxu0
    %v4158 = vadd.f32 %v4057, %v4157
    %v4159 = vpop.f32.mrb[0].mxu0
    %v4160 = vpop.f32.mrb[0].mxu0
    %v4161 = vadd.f32 %v4057, %v4160
    %v4162 = vpop.f32.mrb[0].mxu0
    %4163 = vmatprep.mubr.bf16.mxu0 0
    %4164 = vmatmul.mubr.bf16.gmra.mrb[0].mxu0 %v3992
    %v4165 = vpop.f32.mrb[0].mxu0
    %v4166 = vadd.f32 %v4057, %v4165
    %v4167 = vpop.f32.mrb[0].mxu0
    %v4168 = vpop.f32.mrb[0].mxu0
    %v4169 = vadd.f32 %v4057, %v4168
    %v4170 = vpop.f32.mrb[0].mxu0
    %4171 = vmatprep.mubr.bf16.mxu0 0
    %4172 = vmatmul.mubr.bf16.gmra.mrb[0].mxu0 %v3993
    %v4173 = vpop.f32.mrb[0].mxu0
    %v4174 = vadd.f32 %v4057, %v4173
    %v4175 = vpop.f32.mrb[0].mxu0
    %v4176 = vpop.f32.mrb[0].mxu0
    %v4177 = vadd.f32 %v4057, %v4176
    %v4178 = vpop.f32.mrb[0].mxu0
    %4179 = vmatprep.mubr.bf16.mxu0 0
    %4180 = vmatmul.mubr.bf16.gmra.mrb[0].mxu0 %v3994
    %v4181 = vpop.f32.mrb[0].mxu0
    %v4182 = vadd.f32 %v4057, %v4181
    %v4183 = vpop.f32.mrb[0].mxu0
    %v4184 = vpop.f32.mrb[0].mxu0
    %v4185 = vadd.f32 %v4057, %v4184
    %v4186 = vpop.f32.mrb[0].mxu0
    %4187 = vmatprep.mubr.bf16.mxu0 0
    %4188 = vmatmul.mubr.bf16.gmra.mrb[0].mxu0 %v3995
    %v4189 = vpop.f32.mrb[0].mxu0
    %v4190 = vadd.f32 %v4057, %v4189
    %v4191 = vpop.f32.mrb[0].mxu0
    %v4192 = vpop.f32.mrb[0].mxu0
    %v4193 = vadd.f32 %v4057, %v4192
    %v4194 = vpop.f32.mrb[0].mxu0
    %4195 = vmatprep.mubr.bf16.mxu0 0
    %4196 = vmatmul.mubr.bf16.gmra.mrb[0].mxu0 %v3996
    %v4197 = vpop.f32.mrb[0].mxu0
    %v4198 = vadd.f32 %v4057, %v4197
    %v4199 = vpop.f32.mrb[0].mxu0
    %v4200 = vpop.f32.mrb[0].mxu0
    %v4201 = vadd.f32 %v4057, %v4200
    %v4202 = vpop.f32.mrb[0].mxu0
    %4203 = vmatprep.mubr.bf16.mxu0 0
    %4204 = vmatmul.mubr.bf16.gmra.mrb[0].mxu0 %v3997
    %v4205 = vpop.f32.mrb[0].mxu0
    %v4206 = vadd.f32 %v4057, %v4205
    %v4207 = vpop.f32.mrb[0].mxu0
    %v4208 = vpop.f32.mrb[0].mxu0
    %v4209 = vadd.f32 %v4057, %v4208
    %v4210 = vpop.f32.mrb[0].mxu0
    %4211 = vmatprep.mubr.bf16.mxu0 0
    %4212 = vmatmul.mubr.bf16.gmra.mrb[0].mxu0 %v3998
    %v4213 = vpop.f32.mrb[0].mxu0
    %v4214 = vadd.f32 %v4057, %v4213
    %v4215 = vpop.f32.mrb[0].mxu0
    %v4216 = vpop.f32.mrb[0].mxu0
    %v4217 = vadd.f32 %v4057, %v4216
    %v4218 = vpop.f32.mrb[0].mxu0
    %4219 = vmatprep.mubr.bf16.mxu0 0
    %4220 = vmatmul.mubr.bf16.gmra.mrb[0].mxu0 %v3999
    %v4221 = vpop.f32.mrb[0].mxu0
    %v4222 = vadd.f32 %v4057, %v4221
    %v4223 = vpop.f32.mrb[0].mxu0
    %v4224 = vpop.f32.mrb[0].mxu0
    %v4225 = vadd.f32 %v4057, %v4224
    %v4226 = vpop.f32.mrb[0].mxu0
    %4227 = vmatprep.mubr.bf16.mxu0 0
    %4228 = vmatmul.mubr.bf16.gmra.mrb[0].mxu0 %v4000
    %v4229 = vpop.f32.mrb[0].mxu0
    %v4230 = vadd.f32 %v4057, %v4229
    %v4231 = vpop.f32.mrb[0].mxu0
    %v4232 = vpop.f32.mrb[0].mxu0
    %v4233 = vadd.f32 %v4057, %v4232
    %v4234 = vpop.f32.mrb[0].mxu0
    %4235 = vmatprep.mubr.bf16.mxu0 0
    %4236 = vmatmul.mubr.bf16.gmra.mrb[0].mxu0 %v4001
    %v4237 = vpop.f32.mrb[0].mxu0
    %v4238 = vadd.f32 %v4057, %v4237
    %v4239 = vpop.f32.mrb[0].mxu0
    %v4240 = vpop.f32.mrb[0].mxu0
    %v4241 = vadd.f32 %v4057, %v4240
    %v4242 = vpop.f32.mrb[0].mxu0
    %4243 = vmatprep.mubr.bf16.mxu0 0
    %4244 = vmatmul.mubr.bf16.gmra.mrb[0].mxu0 %v4002
    %v4245 = vpop.f32.mrb[0].mxu0
    %v4246 = vadd.f32 %v4057, %v4245
    %v4247 = vpop.f32.mrb[0].mxu0
    %v4248 = vpop.f32.mrb[0].mxu0
    %v4249 = vadd.f32 %v4057, %v4248
    %v4250 = vpop.f32.mrb[0].mxu0
    %4251 = vmatprep.mubr.bf16.mxu0 0
    %4252 = vmatmul.mubr.bf16.gmra.mrb[0].mxu0 %v4003
    %v4253 = vpop.f32.mrb[0].mxu0
    %v4254 = vadd.f32 %v4057, %v4253
    %v4255 = vpop.f32.mrb[0].mxu0
    %v4256 = vpop.f32.mrb[0].mxu0
    %v4257 = vadd.f32 %v4057, %v4256
    %v4258 = vpop.f32.mrb[0].mxu0
    %4259 = vmatprep.mubr.bf16.mxu0 0
    %4260 = vmatmul.mubr.bf16.gmra.mrb[0].mxu0 %v4004
    %v4261 = vpop.f32.mrb[0].mxu0
    %v4262 = vadd.f32 %v4057, %v4261
    %v4263 = vpop.f32.mrb[0].mxu0
    %v4264 = vpop.f32.mrb[0].mxu0
    %v4265 = vadd.f32 %v4057, %v4264
    %v4266 = vpop.f32.mrb[0].mxu0
    %4267 = vmatprep.mubr.bf16.mxu0 0
    %4268 = vmatmul.mubr.bf16.gmra.mrb[0].mxu0 %v4005
    %v4269 = vpop.f32.mrb[0].mxu0
    %v4270 = vadd.f32 %v4057, %v4269
    %v4271 = vpop.f32.mrb[0].mxu0
    %v4272 = vpop.f32.mrb[0].mxu0
    %v4273 = vadd.f32 %v4057, %v4272
    %v4274 = vpop.f32.mrb[0].mxu0
    %4275 = vmatprep.mubr.bf16.mxu0 0
    %4276 = vmatmul.mubr.bf16.gmra.mrb[0].mxu0 %v4006
    %v4277 = vpop.f32.mrb[0].mxu0
    %v4278 = vadd.f32 %v4057, %v4277
    %v4279 = vpop.f32.mrb[0].mxu0
    %v4280 = vpop.f32.mrb[0].mxu0
    %v4281 = vadd.f32 %v4057, %v4280
    %v4282 = vpop.f32.mrb[0].mxu0
    %4283 = vmatprep.mubr.bf16.mxu0 0
    %4284 = vmatmul.mubr.bf16.gmra.mrb[0].mxu0 %v4007
    %v4285 = vpop.f32.mrb[0].mxu0
    %v4286 = vadd.f32 %v4057, %v4285
    %v4287 = vpop.f32.mrb[0].mxu0
    %v4288 = vpop.f32.mrb[0].mxu0
    %v4289 = vadd.f32 %v4057, %v4288
    %v4290 = vpop.f32.mrb[0].mxu0
    %4291 = vmatprep.mubr.bf16.mxu0 0
    %4292 = vmatmul.mubr.bf16.gmra.mrb[0].mxu0 %v4008
    %v4293 = vpop.f32.mrb[0].mxu0
    %v4294 = vadd.f32 %v4057, %v4293
    %v4295 = vpop.f32.mrb[0].mxu0
    %v4296 = vpop.f32.mrb[0].mxu0
    %v4297 = vadd.f32 %v4057, %v4296
    %v4298 = vpop.f32.mrb[0].mxu0
    %4299 = vmatprep.mubr.bf16.mxu0 0
    %4300 = vmatmul.mubr.bf16.gmra.mrb[0].mxu0 %v4009
    %v4301 = vpop.f32.mrb[0].mxu0
    %v4302 = vadd.f32 %v4057, %v4301
    %v4303 = vpop.f32.mrb[0].mxu0
    %v4304 = vpop.f32.mrb[0].mxu0
    %v4305 = vadd.f32 %v4057, %v4304
    %v4306 = vpop.f32.mrb[0].mxu0
    %4307 = vmatprep.mubr.bf16.mxu0 0
    %4308 = vmatmul.mubr.bf16.gmra.mrb[0].mxu0 %v4010
    %v4309 = vpop.f32.mrb[0].mxu0
    %v4310 = vadd.f32 %v4057, %v4309
    %v4311 = vpop.f32.mrb[0].mxu0
    %v4312 = vpop.f32.mrb[0].mxu0
    %v4313 = vadd.f32 %v4057, %v4312
    %v4314 = vpop.f32.mrb[0].mxu0
    %4315 = vmatprep.mubr.bf16.mxu0 0
    %4316 = vmatmul.mubr.bf16.gmra.mrb[0].mxu0 %v4011
    %v4317 = vpop.f32.mrb[0].mxu0
    %v4318 = vadd.f32 %v4057, %v4317
    %v4319 = vpop.f32.mrb[0].mxu0
    %v4320 = vpop.f32.mrb[0].mxu0
    %v4321 = vadd.f32 %v4057, %v4320
    %v4322 = vpop.f32.mrb[0].mxu0
    %4323 = vmatprep.mubr.bf16.mxu0 0
    %4324 = vmatmul.mubr.bf16.gmra.mrb[0].mxu0 %v4012
    %v4325 = vpop.f32.mrb[0].mxu0
    %v4326 = vadd.f32 %v4057, %v4325
    %v4327 = vpop.f32.mrb[0].mxu0
    %v4328 = vpop.f32.mrb[0].mxu0
    %v4329 = vadd.f32 %v4057, %v4328
    %v4330 = vpop.f32.mrb[0].mxu0
    %4331 = vmatprep.mubr.bf16.mxu0 0
    %4332 = vmatmul.mubr.bf16.gmra.mrb[0].mxu0 %v4013
    %v4333 = vpop.f32.mrb[0].mxu0
    %v4334 = vadd.f32 %v4057, %v4333
    %v4335 = vpop.f32.mrb[0].mxu0
    %v4336 = vpop.f32.mrb[0].mxu0
    %v4337 = vadd.f32 %v4057, %v4336
    %v4338 = vpop.f32.mrb[0].mxu0
    %4339 = vmatprep.mubr.bf16.mxu0 0
    %4340 = vmatmul.mubr.bf16.gmra.mrb[0].mxu0 %v4014
    %v4341 = vpop.f32.mrb[0].mxu0
    %v4342 = vadd.f32 %v4057, %v4341
    %v4343 = vpop.f32.mrb[0].mxu0
    %v4344 = vpop.f32.mrb[0].mxu0
    %v4345 = vadd.f32 %v4057, %v4344
    %v4346 = vpop.f32.mrb[0].mxu0
    %4347 = vmatprep.mubr.bf16.mxu0 0
    %4348 = vmatmul.mubr.bf16.gmra.mrb[0].mxu0 %v4015
    %v4349 = vpop.f32.mrb[0].mxu0
    %v4350 = vadd.f32 %v4057, %v4349
    %v4351 = vpop.f32.mrb[0].mxu0
    %v4352 = vpop.f32.mrb[0].mxu0
    %v4353 = vadd.f32 %v4057, %v4352
    %v4354 = vpop.f32.mrb[0].mxu0
    %4355 = vmatprep.mubr.bf16.mxu0 0
    %4356 = vmatmul.mubr.bf16.gmra.mrb[0].mxu0 %v4016
    %v4357 = vpop.f32.mrb[0].mxu0
    %v4358 = vadd.f32 %v4057, %v4357
    %v4359 = vpop.f32.mrb[0].mxu0
    %v4360 = vpop.f32.mrb[0].mxu0
    %v4361 = vadd.f32 %v4057, %v4360
    %v4362 = vpop.f32.mrb[0].mxu0
    %4363 = vmatprep.mubr.bf16.mxu0 0
    %4364 = vmatmul.mubr.bf16.gmra.mrb[0].mxu0 %v4017
    %v4365 = vpop.f32.mrb[0].mxu0
    %v4366 = vadd.f32 %v4057, %v4365
    %v4367 = vpop.f32.mrb[0].mxu0
    %v4368 = vpop.f32.mrb[0].mxu0
    %v4369 = vadd.f32 %v4057, %v4368
    %v4370 = vpop.f32.mrb[0].mxu0
    %4371 = vmatprep.mubr.bf16.mxu0 0
    %4372 = vmatmul.mubr.bf16.gmra.mrb[0].mxu0 %v4018
    %v4373 = vpop.f32.mrb[0].mxu0
    %v4374 = vadd.f32 %v4057, %v4373
    %v4375 = vpop.f32.mrb[0].mxu0
    %v4376 = vpop.f32.mrb[0].mxu0
    %v4377 = vadd.f32 %v4057, %v4376
    %v4378 = vpop.f32.mrb[0].mxu0
    %4379 = vmatprep.mubr.bf16.mxu0 0
    %4380 = vmatmul.mubr.bf16.gmra.mrb[0].mxu0 %v4019
    %v4381 = vpop.f32.mrb[0].mxu0
    %v4382 = vadd.f32 %v4057, %v4381
    %v4383 = vpop.f32.mrb[0].mxu0
    %v4384 = vpop.f32.mrb[0].mxu0
    %v4385 = vadd.f32 %v4057, %v4384
    %v4386 = vpop.f32.mrb[0].mxu0
    %4387 = vmatprep.mubr.bf16.mxu0 0
    %4388 = vmatmul.mubr.bf16.gmra.mrb[0].mxu0 %v4020
    %v4389 = vpop.f32.mrb[0].mxu0
    %v4390 = vadd.f32 %v4057, %v4389
    %v4391 = vpop.f32.mrb[0].mxu0
    %v4392 = vpop.f32.mrb[0].mxu0
    %v4393 = vadd.f32 %v4057, %v4392
    %v4394 = vpop.f32.mrb[0].mxu0
    %4395 = vmatprep.mubr.bf16.mxu0 0
    %4396 = vmatmul.mubr.bf16.gmra.mrb[0].mxu0 %v4021
    %v4397 = vpop.f32.mrb[0].mxu0
    %v4398 = vadd.f32 %v4057, %v4397
    %v4399 = vpop.f32.mrb[0].mxu0
    %v4400 = vpop.f32.mrb[0].mxu0
    %v4401 = vadd.f32 %v4057, %v4400
    %v4402 = vpop.f32.mrb[0].mxu0
    %4403 = vmatprep.mubr.bf16.mxu0 0
    %4404 = vmatmul.mubr.bf16.gmra.mrb[0].mxu0 %v4022
    %v4405 = vpop.f32.mrb[0].mxu0
    %v4406 = vadd.f32 %v4057, %v4405
    %v4407 = vpop.f32.mrb[0].mxu0
    %v4408 = vpop.f32.mrb[0].mxu0
    %v4409 = vadd.f32 %v4057, %v4408
    %v4410 = vpop.f32.mrb[0].mxu0
    %4411 = vmatprep.mubr.bf16.mxu0 0
    %4412 = vmatmul.mubr.bf16.gmra.mrb[0].mxu0 %v4023
    %v4413 = vpop.f32.mrb[0].mxu0
    %v4414 = vadd.f32 %v4057, %v4413
    %v4415 = vpop.f32.mrb[0].mxu0
    %v4416 = vpop.f32.mrb[0].mxu0
    %v4417 = vadd.f32 %v4057, %v4416
    %v4418 = vpop.f32.mrb[0].mxu0
    %4419 = vmatprep.mubr.bf16.mxu0 0
    %4420 = vmatmul.mubr.bf16.gmra.mrb[0].mxu0 %v4024
    %v4421 = vpop.f32.mrb[0].mxu0
    %v4422 = vadd.f32 %v4057, %v4421
    %v4423 = vpop.f32.mrb[0].mxu0
    %v4424 = vpop.f32.mrb[0].mxu0
    %v4425 = vadd.f32 %v4057, %v4424
    %v4426 = vpop.f32.mrb[0].mxu0
    %4427 = vmatprep.mubr.bf16.mxu0 0
    %4428 = vmatmul.mubr.bf16.gmra.mrb[0].mxu0 %v4025
    %v4429 = vpop.f32.mrb[0].mxu0
    %v4430 = vadd.f32 %v4057, %v4429
    %v4431 = vpop.f32.mrb[0].mxu0
    %v4432 = vpop.f32.mrb[0].mxu0
    %v4433 = vadd.f32 %v4057, %v4432
    %v4434 = vpop.f32.mrb[0].mxu0
    %4435 = vmatprep.mubr.bf16.mxu0 0
    %4436 = vmatmul.mubr.bf16.gmra.mrb[0].mxu0 %v4026
    %v4437 = vpop.f32.mrb[0].mxu0
    %v4438 = vadd.f32 %v4057, %v4437
    %v4439 = vpop.f32.mrb[0].mxu0
    %v4440 = vpop.f32.mrb[0].mxu0
    %v4441 = vadd.f32 %v4057, %v4440
    %v4442 = vpop.f32.mrb[0].mxu0
    %4443 = vmatprep.mubr.bf16.mxu0 0
    %4444 = vmatmul.mubr.bf16.gmra.mrb[0].mxu0 %v4027
    %v4445 = vpop.f32.mrb[0].mxu0
    %v4446 = vadd.f32 %v4057, %v4445
    %v4447 = vpop.f32.mrb[0].mxu0
    %v4448 = vpop.f32.mrb[0].mxu0
    %v4449 = vadd.f32 %v4057, %v4448
    %v4450 = vpop.f32.mrb[0].mxu0
    %4451 = vmatprep.mubr.bf16.mxu0 0
    %4452 = vmatmul.mubr.bf16.gmra.mrb[0].mxu0 %v4028
    %v4453 = vpop.f32.mrb[0].mxu0
    %v4454 = vadd.f32 %v4057, %v4453
    %v4455 = vpop.f32.mrb[0].mxu0
    %v4456 = vpop.f32.mrb[0].mxu0
    %v4457 = vadd.f32 %v4057, %v4456
    %v4458 = vpop.f32.mrb[0].mxu0
    %4459 = vmatprep.mubr.bf16.mxu0 0
    %4460 = vmatmul.mubr.bf16.gmra.mrb[0].mxu0 %v4029
    %v4461 = vpop.f32.mrb[0].mxu0
    %v4462 = vadd.f32 %v4057, %v4461
    %v4463 = vpop.f32.mrb[0].mxu0
    %v4464 = vpop.f32.mrb[0].mxu0
    %v4465 = vadd.f32 %v4057, %v4464
    %v4466 = vpop.f32.mrb[0].mxu0
    %4467 = vmatprep.mubr.bf16.mxu0 0
    %4468 = vmatmul.mubr.bf16.gmra.mrb[0].mxu0 %v4030
    %v4469 = vpop.f32.mrb[0].mxu0
    %v4470 = vadd.f32 %v4057, %v4469
    %v4471 = vpop.f32.mrb[0].mxu0
    %v4472 = vpop.f32.mrb[0].mxu0
    %v4473 = vadd.f32 %v4057, %v4472
    %v4474 = vpop.f32.mrb[0].mxu0
    %4475 = vmatprep.mubr.bf16.mxu0 0
    %4476 = vmatmul.mubr.bf16.gmra.mrb[0].mxu0 %v4031
    %v4477 = vpop.f32.mrb[0].mxu0
    %v4478 = vadd.f32 %v4057, %v4477
    %v4479 = vpop.f32.mrb[0].mxu0
    %v4480 = vpop.f32.mrb[0].mxu0
    %v4481 = vadd.f32 %v4057, %v4480
    %v4482 = vpop.f32.mrb[0].mxu0
    %4483 = vmatprep.mubr.bf16.mxu0 0
    %4484 = vmatmul.mubr.bf16.gmra.mrb[0].mxu0 %v4032
    %v4485 = vpop.f32.mrb[0].mxu0
    %v4486 = vadd.f32 %v4057, %v4485
    %v4487 = vpop.f32.mrb[0].mxu0
    %v4488 = vpop.f32.mrb[0].mxu0
    %v4489 = vadd.f32 %v4057, %v4488
    %v4490 = vpop.f32.mrb[0].mxu0
    %4491 = vmatprep.mubr.bf16.mxu0 0
    %4492 = vmatmul.mubr.bf16.gmra.mrb[0].mxu0 %v4033
    %v4493 = vpop.f32.mrb[0].mxu0
    %v4494 = vadd.f32 %v4057, %v4493
    %v4495 = vpop.f32.mrb[0].mxu0
    %v4496 = vpop.f32.mrb[0].mxu0
    %v4497 = vadd.f32 %v4057, %v4496
    %v4498 = vpop.f32.mrb[0].mxu0
    %4499 = vmatprep.mubr.bf16.mxu0 0
    %4500 = vmatmul.mubr.bf16.gmra.mrb[0].mxu0 %v4034
    %v4501 = vpop.f32.mrb[0].mxu0
    %v4502 = vadd.f32 %v4057, %v4501
    %v4503 = vpop.f32.mrb[0].mxu0
    %v4504 = vpop.f32.mrb[0].mxu0
    %v4505 = vadd.f32 %v4057, %v4504
    %v4506 = vpop.f32.mrb[0].mxu0
    %4507 = vmatprep.mubr.bf16.mxu0 0
    %4508 = vmatmul.mubr.bf16.gmra.mrb[0].mxu0 %v4035
    %v4509 = vpop.f32.mrb[0].mxu0
    %v4510 = vadd.f32 %v4057, %v4509
    %v4511 = vpop.f32.mrb[0].mxu0
    %v4512 = vpop.f32.mrb[0].mxu0
    %v4513 = vadd.f32 %v4057, %v4512
    %v4514 = vpop.f32.mrb[0].mxu0
    %4515 = vmatprep.mubr.bf16.mxu0 0
    %4516 = vmatmul.mubr.bf16.gmra.mrb[0].mxu0 %v4036
    %v4517 = vpop.f32.mrb[0].mxu0
    %v4518 = vadd.f32 %v4057, %v4517
    %v4519 = vpop.f32.mrb[0].mxu0
    %v4520 = vpop.f32.mrb[0].mxu0
    %v4521 = vadd.f32 %v4057, %v4520
    %v4522 = vpop.f32.mrb[0].mxu0
    %4523 = vmatprep.mubr.bf16.mxu0 0
    %4524 = vmatmul.mubr.bf16.gmra.mrb[0].mxu0 %v4037
    %v4525 = vpop.f32.mrb[0].mxu0
    %v4526 = vadd.f32 %v4057, %v4525
    %v4527 = vpop.f32.mrb[0].mxu0
    %v4528 = vpop.f32.mrb[0].mxu0
    %v4529 = vadd.f32 %v4057, %v4528
    %v4530 = vpop.f32.mrb[0].mxu0
    %4531 = vmatprep.mubr.bf16.mxu0 0
    %4532 = vmatmul.mubr.bf16.gmra.mrb[0].mxu0 %v4038
    %v4533 = vpop.f32.mrb[0].mxu0
    %v4534 = vadd.f32 %v4057, %v4533
    %v4535 = vpop.f32.mrb[0].mxu0
    %v4536 = vpop.f32.mrb[0].mxu0
    %v4537 = vadd.f32 %v4057, %v4536
    %v4538 = vpop.f32.mrb[0].mxu0
    %4539 = vmatprep.mubr.bf16.mxu0 0
    %4540 = vmatmul.mubr.bf16.gmra.mrb[0].mxu0 %v4039
    %v4541 = vpop.f32.mrb[0].mxu0
    %v4542 = vadd.f32 %v4057, %v4541
    %v4543 = vpop.f32.mrb[0].mxu0
    %v4544 = vpop.f32.mrb[0].mxu0
    %v4545 = vadd.f32 %v4057, %v4544
    %v4546 = vpop.f32.mrb[0].mxu0
    %4547 = vmatprep.mubr.bf16.mxu0 0
    %4548 = vmatmul.mubr.bf16.gmra.mrb[0].mxu0 %v4040
    %v4549 = vpop.f32.mrb[0].mxu0
    %v4550 = vadd.f32 %v4057, %v4549
    %v4551 = vpop.f32.mrb[0].mxu0
    %v4552 = vpop.f32.mrb[0].mxu0
    %v4553 = vadd.f32 %v4057, %v4552
    %v4554 = vpop.f32.mrb[0].mxu0
    %4555 = vmatprep.mubr.bf16.mxu0 0
    %4556 = vmatmul.mubr.bf16.gmra.mrb[0].mxu0 %v4041
    %v4557 = vpop.f32.mrb[0].mxu0
    %v4558 = vadd.f32 %v4057, %v4557
    %v4559 = vpop.f32.mrb[0].mxu0
    %v4560 = vpop.f32.mrb[0].mxu0
    %v4561 = vadd.f32 %v4057, %v4560
    %v4562 = vpop.f32.mrb[0].mxu0
    %4563 = vmatprep.mubr.bf16.mxu0 0
    %4564 = vmatmul.mubr.bf16.gmra.mrb[0].mxu0 %v4042
    %v4565 = vpop.f32.mrb[0].mxu0
    %v4566 = vadd.f32 %v4057, %v4565
    %v4567 = vpop.f32.mrb[0].mxu0
    %v4568 = vpop.f32.mrb[0].mxu0
    %v4569 = vadd.f32 %v4057, %v4568
    %v4570 = vpop.f32.mrb[0].mxu0
    %4571 = vmatprep.mubr.bf16.mxu0 0
    %4572 = vmatmul.mubr.bf16.gmra.mrb[0].mxu0 %v4043
    %v4573 = vpop.f32.mrb[0].mxu0
    %v4574 = vadd.f32 %v4057, %v4573
    %v4575 = vpop.f32.mrb[0].mxu0
    %v4576 = vpop.f32.mrb[0].mxu0
    %v4577 = vadd.f32 %v4057, %v4576
    %v4578 = vpop.f32.mrb[0].mxu0
    %4579 = vmatprep.mubr.bf16.mxu0 0
    %4580 = vmatmul.mubr.bf16.gmra.mrb[0].mxu0 %v4044
    %v4581 = vpop.f32.mrb[0].mxu0
    %v4582 = vadd.f32 %v4057, %v4581
    %v4583 = vpop.f32.mrb[0].mxu0
    %v4584 = vpop.f32.mrb[0].mxu0
    %v4585 = vadd.f32 %v4057, %v4584
    %v4586 = vpop.f32.mrb[0].mxu0
    %4587 = vmatprep.mubr.bf16.mxu0 0
    %4588 = vmatmul.mubr.bf16.gmra.mrb[0].mxu0 %v4045
    %v4589 = vpop.f32.mrb[0].mxu0
    %v4590 = vadd.f32 %v4057, %v4589
    %v4591 = vpop.f32.mrb[0].mxu0
    %v4592 = vpop.f32.mrb[0].mxu0
    %v4593 = vadd.f32 %v4057, %v4592
    %v4594 = vpop.f32.mrb[0].mxu0
    %4595 = vmatprep.mubr.bf16.mxu0 0
    %4596 = vmatmul.mubr.bf16.gmra.mrb[0].mxu0 %v4046
    %v4597 = vpop.f32.mrb[0].mxu0
    %v4598 = vadd.f32 %v4057, %v4597
    %v4599 = vpop.f32.mrb[0].mxu0
    %v4600 = vpop.f32.mrb[0].mxu0
    %v4601 = vadd.f32 %v4057, %v4600
    %v4602 = vpop.f32.mrb[0].mxu0
    %4603 = vmatprep.mubr.bf16.mxu0 0
    %4604 = vmatmul.mubr.bf16.gmra.mrb[0].mxu0 %v4047
    %v4605 = vpop.f32.mrb[0].mxu0
    %v4606 = vadd.f32 %v4057, %v4605
    %v4607 = vpop.f32.mrb[0].mxu0
    %v4608 = vpop.f32.mrb[0].mxu0
    %v4609 = vadd.f32 %v4057, %v4608
    %v4610 = vpop.f32.mrb[0].mxu0
    %4611 = vmatprep.mubr.bf16.mxu0 0
    %4612 = vmatmul.mubr.bf16.gmra.mrb[0].mxu0 %v4048
    %v4613 = vpop.f32.mrb[0].mxu0
    %v4614 = vadd.f32 %v4057, %v4613
    %v4615 = vpop.f32.mrb[0].mxu0
    %v4616 = vpop.f32.mrb[0].mxu0
    %v4617 = vadd.f32 %v4057, %v4616
    %v4618 = vpop.f32.mrb[0].mxu0
    %4619 = vmatprep.mubr.bf16.mxu0 0
    %4620 = vmatmul.mubr.bf16.gmra.mrb[0].mxu0 %v4049
    %v4621 = vpop.f32.mrb[0].mxu0
    %v4622 = vadd.f32 %v4057, %v4621
    %v4623 = vpop.f32.mrb[0].mxu0
    %v4624 = vpop.f32.mrb[0].mxu0
    %v4625 = vadd.f32 %v4057, %v4624
    %v4626 = vpop.f32.mrb[0].mxu0
    %4627 = vmatprep.mubr.bf16.mxu0 0
    %4628 = vmatmul.mubr.bf16.gmra.mrb[0].mxu0 %v4050
    %v4629 = vpop.f32.mrb[0].mxu0
    %v4630 = vadd.f32 %v4057, %v4629
    %v4631 = vpop.f32.mrb[0].mxu0
    %v4632 = vpop.f32.mrb[0].mxu0
    %v4633 = vadd.f32 %v4057, %v4632
    %v4634 = vpop.f32.mrb[0].mxu0
    %4635 = vmatprep.mubr.bf16.mxu0 0
    %4636 = vmatmul.mubr.bf16.gmra.mrb[0].mxu0 %v4051
    %v4637 = vpop.f32.mrb[0].mxu0
    %v4638 = vadd.f32 %v4057, %v4637
    %v4639 = vpop.f32.mrb[0].mxu0
    %v4640 = vpop.f32.mrb[0].mxu0
    %v4641 = vadd.f32 %v4057, %v4640
    %v4642 = vpop.f32.mrb[0].mxu0
    %4643 = vmatprep.mubr.bf16.mxu0 0
    %4644 = vmatmul.mubr.bf16.gmra.mrb[0].mxu0 %v4052
    %v4645 = vpop.f32.mrb[0].mxu0
    %v4646 = vadd.f32 %v4057, %v4645
    %v4647 = vpop.f32.mrb[0].mxu0
    %v4648 = vpop.f32.mrb[0].mxu0
    %v4649 = vadd.f32 %v4057, %v4648
    %v4650 = vpop.f32.mrb[0].mxu0
    %4651 = vdwg.mxu0
    %4652 = vmax.xlane.f32.xlu0 %v4142
    %v4653 = vpop.xlane.xlu0 %4652
    %4654 = vmax.xlane.f32.xlu0 %v4145
    %v4655 = vpop.xlane.xlu0 %4654
    %4656 = vmax.xlane.f32.xlu0 %v4150
    %v4657 = vpop.xlane.xlu0 %4656
    %4658 = vmax.xlane.f32.xlu0 %v4153
    %v4659 = vpop.xlane.xlu0 %4658
    %4660 = vmax.xlane.f32.xlu0 %v4158
    %v4661 = vpop.xlane.xlu0 %4660
    %4662 = vmax.xlane.f32.xlu0 %v4161
    %v4663 = vpop.xlane.xlu0 %4662
    %4664 = vmax.xlane.f32.xlu0 %v4166
    %v4665 = vpop.xlane.xlu0 %4664
    %4666 = vmax.xlane.f32.xlu0 %v4169
    %v4667 = vpop.xlane.xlu0 %4666
    %4668 = vmax.xlane.f32.xlu0 %v4174
    %v4669 = vpop.xlane.xlu0 %4668
    %4670 = vmax.xlane.f32.xlu0 %v4177
    %v4671 = vpop.xlane.xlu0 %4670
    %4672 = vmax.xlane.f32.xlu0 %v4182
    %v4673 = vpop.xlane.xlu0 %4672
    %4674 = vmax.xlane.f32.xlu0 %v4185
    %v4675 = vpop.xlane.xlu0 %4674
    %4676 = vmax.xlane.f32.xlu0 %v4190
    %v4677 = vpop.xlane.xlu0 %4676
    %4678 = vmax.xlane.f32.xlu0 %v4193
    %v4679 = vpop.xlane.xlu0 %4678
    %4680 = vmax.xlane.f32.xlu0 %v4198
    %v4681 = vpop.xlane.xlu0 %4680
    %4682 = vmax.xlane.f32.xlu0 %v4201
    %v4683 = vpop.xlane.xlu0 %4682
    %4684 = vmax.xlane.f32.xlu0 %v4206
    %v4685 = vpop.xlane.xlu0 %4684
    %4686 = vmax.xlane.f32.xlu0 %v4209
    %v4687 = vpop.xlane.xlu0 %4686
    %4688 = vmax.xlane.f32.xlu0 %v4214
    %v4689 = vpop.xlane.xlu0 %4688
    %4690 = vmax.xlane.f32.xlu0 %v4217
    %v4691 = vpop.xlane.xlu0 %4690
    %4692 = vmax.xlane.f32.xlu0 %v4222
    %v4693 = vpop.xlane.xlu0 %4692
    %4694 = vmax.xlane.f32.xlu0 %v4225
    %v4695 = vpop.xlane.xlu0 %4694
    %4696 = vmax.xlane.f32.xlu0 %v4230
    %v4697 = vpop.xlane.xlu0 %4696
    %4698 = vmax.xlane.f32.xlu0 %v4233
    %v4699 = vpop.xlane.xlu0 %4698
    %4700 = vmax.xlane.f32.xlu0 %v4238
    %v4701 = vpop.xlane.xlu0 %4700
    %4702 = vmax.xlane.f32.xlu0 %v4241
    %v4703 = vpop.xlane.xlu0 %4702
    %4704 = vmax.xlane.f32.xlu0 %v4246
    %v4705 = vpop.xlane.xlu0 %4704
    %4706 = vmax.xlane.f32.xlu0 %v4249
    %v4707 = vpop.xlane.xlu0 %4706
    %4708 = vmax.xlane.f32.xlu0 %v4254
    %v4709 = vpop.xlane.xlu0 %4708
    %4710 = vmax.xlane.f32.xlu0 %v4257
    %v4711 = vpop.xlane.xlu0 %4710
    %4712 = vmax.xlane.f32.xlu0 %v4262
    %v4713 = vpop.xlane.xlu0 %4712
    %4714 = vmax.xlane.f32.xlu0 %v4265
    %v4715 = vpop.xlane.xlu0 %4714
    %4716 = vmax.xlane.f32.xlu0 %v4270
    %v4717 = vpop.xlane.xlu0 %4716
    %4718 = vmax.xlane.f32.xlu0 %v4273
    %v4719 = vpop.xlane.xlu0 %4718
    %4720 = vmax.xlane.f32.xlu0 %v4278
    %v4721 = vpop.xlane.xlu0 %4720
    %4722 = vmax.xlane.f32.xlu0 %v4281
    %v4723 = vpop.xlane.xlu0 %4722
    %4724 = vmax.xlane.f32.xlu0 %v4286
    %v4725 = vpop.xlane.xlu0 %4724
    %4726 = vmax.xlane.f32.xlu0 %v4289
    %v4727 = vpop.xlane.xlu0 %4726
    %4728 = vmax.xlane.f32.xlu0 %v4294
    %v4729 = vpop.xlane.xlu0 %4728
    %4730 = vmax.xlane.f32.xlu0 %v4297
    %v4731 = vpop.xlane.xlu0 %4730
    %4732 = vmax.xlane.f32.xlu0 %v4302
    %v4733 = vpop.xlane.xlu0 %4732
    %4734 = vmax.xlane.f32.xlu0 %v4305
    %v4735 = vpop.xlane.xlu0 %4734
    %4736 = vmax.xlane.f32.xlu0 %v4310
    %v4737 = vpop.xlane.xlu0 %4736
    %4738 = vmax.xlane.f32.xlu0 %v4313
    %v4739 = vpop.xlane.xlu0 %4738
    %4740 = vmax.xlane.f32.xlu0 %v4318
    %v4741 = vpop.xlane.xlu0 %4740
    %4742 = vmax.xlane.f32.xlu0 %v4321
    %v4743 = vpop.xlane.xlu0 %4742
    %4744 = vmax.xlane.f32.xlu0 %v4326
    %v4745 = vpop.xlane.xlu0 %4744
    %4746 = vmax.xlane.f32.xlu0 %v4329
    %v4747 = vpop.xlane.xlu0 %4746
    %4748 = vmax.xlane.f32.xlu0 %v4334
    %v4749 = vpop.xlane.xlu0 %4748
    %4750 = vmax.xlane.f32.xlu0 %v4337
    %v4751 = vpop.xlane.xlu0 %4750
    %4752 = vmax.xlane.f32.xlu0 %v4342
    %v4753 = vpop.xlane.xlu0 %4752
    %4754 = vmax.xlane.f32.xlu0 %v4345
    %v4755 = vpop.xlane.xlu0 %4754
    %4756 = vmax.xlane.f32.xlu0 %v4350
    %v4757 = vpop.xlane.xlu0 %4756
    %4758 = vmax.xlane.f32.xlu0 %v4353
    %v4759 = vpop.xlane.xlu0 %4758
    %4760 = vmax.xlane.f32.xlu0 %v4358
    %v4761 = vpop.xlane.xlu0 %4760
    %4762 = vmax.xlane.f32.xlu0 %v4361
    %v4763 = vpop.xlane.xlu0 %4762
    %4764 = vmax.xlane.f32.xlu0 %v4366
    %v4765 = vpop.xlane.xlu0 %4764
    %4766 = vmax.xlane.f32.xlu0 %v4369
    %v4767 = vpop.xlane.xlu0 %4766
    %4768 = vmax.xlane.f32.xlu0 %v4374
    %v4769 = vpop.xlane.xlu0 %4768
    %4770 = vmax.xlane.f32.xlu0 %v4377
    %v4771 = vpop.xlane.xlu0 %4770
    %4772 = vmax.xlane.f32.xlu0 %v4382
    %v4773 = vpop.xlane.xlu0 %4772
    %4774 = vmax.xlane.f32.xlu0 %v4385
    %v4775 = vpop.xlane.xlu0 %4774
    %4776 = vmax.xlane.f32.xlu0 %v4390
    %v4777 = vpop.xlane.xlu0 %4776
    %4778 = vmax.xlane.f32.xlu0 %v4393
    %v4779 = vpop.xlane.xlu0 %4778
    %4780 = vmax.xlane.f32.xlu0 %v4398
    %v4781 = vpop.xlane.xlu0 %4780
    %4782 = vmax.xlane.f32.xlu0 %v4401
    %v4783 = vpop.xlane.xlu0 %4782
    %4784 = vmax.xlane.f32.xlu0 %v4406
    %v4785 = vpop.xlane.xlu0 %4784
    %4786 = vmax.xlane.f32.xlu0 %v4409
    %v4787 = vpop.xlane.xlu0 %4786
    %4788 = vmax.xlane.f32.xlu0 %v4414
    %v4789 = vpop.xlane.xlu0 %4788
    %4790 = vmax.xlane.f32.xlu0 %v4417
    %v4791 = vpop.xlane.xlu0 %4790
    %4792 = vmax.xlane.f32.xlu0 %v4422
    %v4793 = vpop.xlane.xlu0 %4792
    %4794 = vmax.xlane.f32.xlu0 %v4425
    %v4795 = vpop.xlane.xlu0 %4794
    %4796 = vmax.xlane.f32.xlu0 %v4430
    %v4797 = vpop.xlane.xlu0 %4796
    %4798 = vmax.xlane.f32.xlu0 %v4433
    %v4799 = vpop.xlane.xlu0 %4798
    %4800 = vmax.xlane.f32.xlu0 %v4438
    %v4801 = vpop.xlane.xlu0 %4800
    %4802 = vmax.xlane.f32.xlu0 %v4441
    %v4803 = vpop.xlane.xlu0 %4802
    %4804 = vmax.xlane.f32.xlu0 %v4446
    %v4805 = vpop.xlane.xlu0 %4804
    %4806 = vmax.xlane.f32.xlu0 %v4449
    %v4807 = vpop.xlane.xlu0 %4806
    %4808 = vmax.xlane.f32.xlu0 %v4454
    %v4809 = vpop.xlane.xlu0 %4808
    %4810 = vmax.xlane.f32.xlu0 %v4457
    %v4811 = vpop.xlane.xlu0 %4810
    %4812 = vmax.xlane.f32.xlu0 %v4462
    %v4813 = vpop.xlane.xlu0 %4812
    %4814 = vmax.xlane.f32.xlu0 %v4465
    %v4815 = vpop.xlane.xlu0 %4814
    %4816 = vmax.xlane.f32.xlu0 %v4470
    %v4817 = vpop.xlane.xlu0 %4816
    %4818 = vmax.xlane.f32.xlu0 %v4473
    %v4819 = vpop.xlane.xlu0 %4818
    %4820 = vmax.xlane.f32.xlu0 %v4478
    %v4821 = vpop.xlane.xlu0 %4820
    %4822 = vmax.xlane.f32.xlu0 %v4481
    %v4823 = vpop.xlane.xlu0 %4822
    %4824 = vmax.xlane.f32.xlu0 %v4486
    %v4825 = vpop.xlane.xlu0 %4824
    %4826 = vmax.xlane.f32.xlu0 %v4489
    %v4827 = vpop.xlane.xlu0 %4826
    %4828 = vmax.xlane.f32.xlu0 %v4494
    %v4829 = vpop.xlane.xlu0 %4828
    %4830 = vmax.xlane.f32.xlu0 %v4497
    %v4831 = vpop.xlane.xlu0 %4830
    %4832 = vmax.xlane.f32.xlu0 %v4502
    %v4833 = vpop.xlane.xlu0 %4832
    %4834 = vmax.xlane.f32.xlu0 %v4505
    %v4835 = vpop.xlane.xlu0 %4834
    %4836 = vmax.xlane.f32.xlu0 %v4510
    %v4837 = vpop.xlane.xlu0 %4836
    %4838 = vmax.xlane.f32.xlu0 %v4513
    %v4839 = vpop.xlane.xlu0 %4838
    %4840 = vmax.xlane.f32.xlu0 %v4518
    %v4841 = vpop.xlane.xlu0 %4840
    %4842 = vmax.xlane.f32.xlu0 %v4521
    %v4843 = vpop.xlane.xlu0 %4842
    %4844 = vmax.xlane.f32.xlu0 %v4526
    %v4845 = vpop.xlane.xlu0 %4844
    %4846 = vmax.xlane.f32.xlu0 %v4529
    %v4847 = vpop.xlane.xlu0 %4846
    %4848 = vmax.xlane.f32.xlu0 %v4534
    %v4849 = vpop.xlane.xlu0 %4848
    %4850 = vmax.xlane.f32.xlu0 %v4537
    %v4851 = vpop.xlane.xlu0 %4850
    %4852 = vmax.xlane.f32.xlu0 %v4542
    %v4853 = vpop.xlane.xlu0 %4852
    %4854 = vmax.xlane.f32.xlu0 %v4545
    %v4855 = vpop.xlane.xlu0 %4854
    %4856 = vmax.xlane.f32.xlu0 %v4550
    %v4857 = vpop.xlane.xlu0 %4856
    %4858 = vmax.xlane.f32.xlu0 %v4553
    %v4859 = vpop.xlane.xlu0 %4858
    %4860 = vmax.xlane.f32.xlu0 %v4558
    %v4861 = vpop.xlane.xlu0 %4860
    %4862 = vmax.xlane.f32.xlu0 %v4561
    %v4863 = vpop.xlane.xlu0 %4862
    %4864 = vmax.xlane.f32.xlu0 %v4566
    %v4865 = vpop.xlane.xlu0 %4864
    %4866 = vmax.xlane.f32.xlu0 %v4569
    %v4867 = vpop.xlane.xlu0 %4866
    %4868 = vmax.xlane.f32.xlu0 %v4574
    %v4869 = vpop.xlane.xlu0 %4868
    %4870 = vmax.xlane.f32.xlu0 %v4577
    %v4871 = vpop.xlane.xlu0 %4870
    %4872 = vmax.xlane.f32.xlu0 %v4582
    %v4873 = vpop.xlane.xlu0 %4872
    %4874 = vmax.xlane.f32.xlu0 %v4585
    %v4875 = vpop.xlane.xlu0 %4874
    %4876 = vmax.xlane.f32.xlu0 %v4590
    %v4877 = vpop.xlane.xlu0 %4876
    %4878 = vmax.xlane.f32.xlu0 %v4593
    %v4879 = vpop.xlane.xlu0 %4878
    %4880 = vmax.xlane.f32.xlu0 %v4598
    %v4881 = vpop.xlane.xlu0 %4880
    %4882 = vmax.xlane.f32.xlu0 %v4601
    %v4883 = vpop.xlane.xlu0 %4882
    %4884 = vmax.xlane.f32.xlu0 %v4606
    %v4885 = vpop.xlane.xlu0 %4884
    %4886 = vmax.xlane.f32.xlu0 %v4609
    %v4887 = vpop.xlane.xlu0 %4886
    %4888 = vmax.xlane.f32.xlu0 %v4614
    %v4889 = vpop.xlane.xlu0 %4888
    %4890 = vmax.xlane.f32.xlu0 %v4617
    %v4891 = vpop.xlane.xlu0 %4890
    %4892 = vmax.xlane.f32.xlu0 %v4622
    %v4893 = vpop.xlane.xlu0 %4892
    %4894 = vmax.xlane.f32.xlu0 %v4625
    %v4895 = vpop.xlane.xlu0 %4894
    %4896 = vmax.xlane.f32.xlu0 %v4630
    %v4897 = vpop.xlane.xlu0 %4896
    %4898 = vmax.xlane.f32.xlu0 %v4633
    %v4899 = vpop.xlane.xlu0 %4898
    %4900 = vmax.xlane.f32.xlu0 %v4638
    %v4901 = vpop.xlane.xlu0 %4900
    %4902 = vmax.xlane.f32.xlu0 %v4641
    %v4903 = vpop.xlane.xlu0 %4902
    %4904 = vmax.xlane.f32.xlu0 %v4646
    %v4905 = vpop.xlane.xlu0 %4904
    %4906 = vmax.xlane.f32.xlu0 %v4649
    %v4907 = vpop.xlane.xlu0 %4906
    %v4908 = vsub.f32 %v4142, %v4653
    %v4909 = vsub.f32 %v4145, %v4655
    %v4910 = vsub.f32 %v4150, %v4657
    %v4911 = vsub.f32 %v4153, %v4659
    %v4912 = vsub.f32 %v4158, %v4661
    %v4913 = vsub.f32 %v4161, %v4663
    %v4914 = vsub.f32 %v4166, %v4665
    %v4915 = vsub.f32 %v4169, %v4667
    %v4916 = vsub.f32 %v4174, %v4669
    %v4917 = vsub.f32 %v4177, %v4671
    %v4918 = vsub.f32 %v4182, %v4673
    %v4919 = vsub.f32 %v4185, %v4675
    %v4920 = vsub.f32 %v4190, %v4677
    %v4921 = vsub.f32 %v4193, %v4679
    %v4922 = vsub.f32 %v4198, %v4681
    %v4923 = vsub.f32 %v4201, %v4683
    %v4924 = vsub.f32 %v4206, %v4685
    %v4925 = vsub.f32 %v4209, %v4687
    %v4926 = vsub.f32 %v4214, %v4689
    %v4927 = vsub.f32 %v4217, %v4691
    %v4928 = vsub.f32 %v4222, %v4693
    %v4929 = vsub.f32 %v4225, %v4695
    %v4930 = vsub.f32 %v4230, %v4697
    %v4931 = vsub.f32 %v4233, %v4699
    %v4932 = vsub.f32 %v4238, %v4701
    %v4933 = vsub.f32 %v4241, %v4703
    %v4934 = vsub.f32 %v4246, %v4705
    %v4935 = vsub.f32 %v4249, %v4707
    %v4936 = vsub.f32 %v4254, %v4709
    %v4937 = vsub.f32 %v4257, %v4711
    %v4938 = vsub.f32 %v4262, %v4713
    %v4939 = vsub.f32 %v4265, %v4715
    %v4940 = vsub.f32 %v4270, %v4717
    %v4941 = vsub.f32 %v4273, %v4719
    %v4942 = vsub.f32 %v4278, %v4721
    %v4943 = vsub.f32 %v4281, %v4723
    %v4944 = vsub.f32 %v4286, %v4725
    %v4945 = vsub.f32 %v4289, %v4727
    %v4946 = vsub.f32 %v4294, %v4729
    %v4947 = vsub.f32 %v4297, %v4731
    %v4948 = vsub.f32 %v4302, %v4733
    %v4949 = vsub.f32 %v4305, %v4735
    %v4950 = vsub.f32 %v4310, %v4737
    %v4951 = vsub.f32 %v4313, %v4739
    %v4952 = vsub.f32 %v4318, %v4741
    %v4953 = vsub.f32 %v4321, %v4743
    %v4954 = vsub.f32 %v4326, %v4745
    %v4955 = vsub.f32 %v4329, %v4747
    %v4956 = vsub.f32 %v4334, %v4749
    %v4957 = vsub.f32 %v4337, %v4751
    %v4958 = vsub.f32 %v4342, %v4753
    %v4959 = vsub.f32 %v4345, %v4755
    %v4960 = vsub.f32 %v4350, %v4757
    %v4961 = vsub.f32 %v4353, %v4759
    %v4962 = vsub.f32 %v4358, %v4761
    %v4963 = vsub.f32 %v4361, %v4763
    %v4964 = vsub.f32 %v4366, %v4765
    %v4965 = vsub.f32 %v4369, %v4767
    %v4966 = vsub.f32 %v4374, %v4769
    %v4967 = vsub.f32 %v4377, %v4771
    %v4968 = vsub.f32 %v4382, %v4773
    %v4969 = vsub.f32 %v4385, %v4775
    %v4970 = vsub.f32 %v4390, %v4777
    %v4971 = vsub.f32 %v4393, %v4779
    %v4972 = vsub.f32 %v4398, %v4781
    %v4973 = vsub.f32 %v4401, %v4783
    %v4974 = vsub.f32 %v4406, %v4785
    %v4975 = vsub.f32 %v4409, %v4787
    %v4976 = vsub.f32 %v4414, %v4789
    %v4977 = vsub.f32 %v4417, %v4791
    %v4978 = vsub.f32 %v4422, %v4793
    %v4979 = vsub.f32 %v4425, %v4795
    %v4980 = vsub.f32 %v4430, %v4797
    %v4981 = vsub.f32 %v4433, %v4799
    %v4982 = vsub.f32 %v4438, %v4801
    %v4983 = vsub.f32 %v4441, %v4803
    %v4984 = vsub.f32 %v4446, %v4805
    %v4985 = vsub.f32 %v4449, %v4807
    %v4986 = vsub.f32 %v4454, %v4809
    %v4987 = vsub.f32 %v4457, %v4811
    %v4988 = vsub.f32 %v4462, %v4813
    %v4989 = vsub.f32 %v4465, %v4815
    %v4990 = vsub.f32 %v4470, %v4817
    %v4991 = vsub.f32 %v4473, %v4819
    %v4992 = vsub.f32 %v4478, %v4821
    %v4993 = vsub.f32 %v4481, %v4823
    %v4994 = vsub.f32 %v4486, %v4825
    %v4995 = vsub.f32 %v4489, %v4827
    %v4996 = vsub.f32 %v4494, %v4829
    %v4997 = vsub.f32 %v4497, %v4831
    %v4998 = vsub.f32 %v4502, %v4833
    %v4999 = vsub.f32 %v4505, %v4835
    %v5000 = vsub.f32 %v4510, %v4837
    %v5001 = vsub.f32 %v4513, %v4839
    %v5002 = vsub.f32 %v4518, %v4841
    %v5003 = vsub.f32 %v4521, %v4843
    %v5004 = vsub.f32 %v4526, %v4845
    %v5005 = vsub.f32 %v4529, %v4847
    %v5006 = vsub.f32 %v4534, %v4849
    %v5007 = vsub.f32 %v4537, %v4851
    %v5008 = vsub.f32 %v4542, %v4853
    %v5009 = vsub.f32 %v4545, %v4855
    %v5010 = vsub.f32 %v4550, %v4857
    %v5011 = vsub.f32 %v4553, %v4859
    %v5012 = vsub.f32 %v4558, %v4861
    %v5013 = vsub.f32 %v4561, %v4863
    %v5014 = vsub.f32 %v4566, %v4865
    %v5015 = vsub.f32 %v4569, %v4867
    %v5016 = vsub.f32 %v4574, %v4869
    %v5017 = vsub.f32 %v4577, %v4871
    %v5018 = vsub.f32 %v4582, %v4873
    %v5019 = vsub.f32 %v4585, %v4875
    %v5020 = vsub.f32 %v4590, %v4877
    %v5021 = vsub.f32 %v4593, %v4879
    %v5022 = vsub.f32 %v4598, %v4881
    %v5023 = vsub.f32 %v4601, %v4883
    %v5024 = vsub.f32 %v4606, %v4885
    %v5025 = vsub.f32 %v4609, %v4887
    %v5026 = vsub.f32 %v4614, %v4889
    %v5027 = vsub.f32 %v4617, %v4891
    %v5028 = vsub.f32 %v4622, %v4893
    %v5029 = vsub.f32 %v4625, %v4895
    %v5030 = vsub.f32 %v4630, %v4897
    %v5031 = vsub.f32 %v4633, %v4899
    %v5032 = vsub.f32 %v4638, %v4901
    %v5033 = vsub.f32 %v4641, %v4903
    %v5034 = vsub.f32 %v4646, %v4905
    %v5035 = vsub.f32 %v4649, %v4907
    %v5036 = vmul.f32 %v4908, 1.442695
    %v5037 = vpow.pop %v5036
    %v5038 = vmul.f32 %v4909, 1.442695
    %v5039 = vpow.pop %v5038
    %v5040 = vmul.f32 %v4910, 1.442695
    %v5041 = vpow.pop %v5040
    %v5042 = vmul.f32 %v4911, 1.442695
    %v5043 = vpow.pop %v5042
    %v5044 = vmul.f32 %v4912, 1.442695
    %v5045 = vpow.pop %v5044
    %v5046 = vmul.f32 %v4913, 1.442695
    %v5047 = vpow.pop %v5046
    %v5048 = vmul.f32 %v4914, 1.442695
    %v5049 = vpow.pop %v5048
    %v5050 = vmul.f32 %v4915, 1.442695
    %v5051 = vpow.pop %v5050
    %v5052 = vmul.f32 %v4916, 1.442695
    %v5053 = vpow.pop %v5052
    %v5054 = vmul.f32 %v4917, 1.442695
    %v5055 = vpow.pop %v5054
    %v5056 = vmul.f32 %v4918, 1.442695
    %v5057 = vpow.pop %v5056
    %v5058 = vmul.f32 %v4919, 1.442695
    %v5059 = vpow.pop %v5058
    %v5060 = vmul.f32 %v4920, 1.442695
    %v5061 = vpow.pop %v5060
    %v5062 = vmul.f32 %v4921, 1.442695
    %v5063 = vpow.pop %v5062
    %v5064 = vmul.f32 %v4922, 1.442695
    %v5065 = vpow.pop %v5064
    %v5066 = vmul.f32 %v4923, 1.442695
    %v5067 = vpow.pop %v5066
    %v5068 = vmul.f32 %v4924, 1.442695
    %v5069 = vpow.pop %v5068
    %v5070 = vmul.f32 %v4925, 1.442695
    %v5071 = vpow.pop %v5070
    %v5072 = vmul.f32 %v4926, 1.442695
    %v5073 = vpow.pop %v5072
    %v5074 = vmul.f32 %v4927, 1.442695
    %v5075 = vpow.pop %v5074
    %v5076 = vmul.f32 %v4928, 1.442695
    %v5077 = vpow.pop %v5076
    %v5078 = vmul.f32 %v4929, 1.442695
    %v5079 = vpow.pop %v5078
    %v5080 = vmul.f32 %v4930, 1.442695
    %v5081 = vpow.pop %v5080
    %v5082 = vmul.f32 %v4931, 1.442695
    %v5083 = vpow.pop %v5082
    %v5084 = vmul.f32 %v4932, 1.442695
    %v5085 = vpow.pop %v5084
    %v5086 = vmul.f32 %v4933, 1.442695
    %v5087 = vpow.pop %v5086
    %v5088 = vmul.f32 %v4934, 1.442695
    %v5089 = vpow.pop %v5088
    %v5090 = vmul.f32 %v4935, 1.442695
    %v5091 = vpow.pop %v5090
    %v5092 = vmul.f32 %v4936, 1.442695
    %v5093 = vpow.pop %v5092
    %v5094 = vmul.f32 %v4937, 1.442695
    %v5095 = vpow.pop %v5094
    %v5096 = vmul.f32 %v4938, 1.442695
    %v5097 = vpow.pop %v5096
    %v5098 = vmul.f32 %v4939, 1.442695
    %v5099 = vpow.pop %v5098
    %v5100 = vmul.f32 %v4940, 1.442695
    %v5101 = vpow.pop %v5100
    %v5102 = vmul.f32 %v4941, 1.442695
    %v5103 = vpow.pop %v5102
    %v5104 = vmul.f32 %v4942, 1.442695
    %v5105 = vpow.pop %v5104
    %v5106 = vmul.f32 %v4943, 1.442695
    %v5107 = vpow.pop %v5106
    %v5108 = vmul.f32 %v4944, 1.442695
    %v5109 = vpow.pop %v5108
    %v5110 = vmul.f32 %v4945, 1.442695
    %v5111 = vpow.pop %v5110
    %v5112 = vmul.f32 %v4946, 1.442695
    %v5113 = vpow.pop %v5112
    %v5114 = vmul.f32 %v4947, 1.442695
    %v5115 = vpow.pop %v5114
    %v5116 = vmul.f32 %v4948, 1.442695
    %v5117 = vpow.pop %v5116
    %v5118 = vmul.f32 %v4949, 1.442695
    %v5119 = vpow.pop %v5118
    %v5120 = vmul.f32 %v4950, 1.442695
    %v5121 = vpow.pop %v5120
    %v5122 = vmul.f32 %v4951, 1.442695
    %v5123 = vpow.pop %v5122
    %v5124 = vmul.f32 %v4952, 1.442695
    %v5125 = vpow.pop %v5124
    %v5126 = vmul.f32 %v4953, 1.442695
    %v5127 = vpow.pop %v5126
    %v5128 = vmul.f32 %v4954, 1.442695
    %v5129 = vpow.pop %v5128
    %v5130 = vmul.f32 %v4955, 1.442695
    %v5131 = vpow.pop %v5130
    %v5132 = vmul.f32 %v4956, 1.442695
    %v5133 = vpow.pop %v5132
    %v5134 = vmul.f32 %v4957, 1.442695
    %v5135 = vpow.pop %v5134
    %v5136 = vmul.f32 %v4958, 1.442695
    %v5137 = vpow.pop %v5136
    %v5138 = vmul.f32 %v4959, 1.442695
    %v5139 = vpow.pop %v5138
    %v5140 = vmul.f32 %v4960, 1.442695
    %v5141 = vpow.pop %v5140
    %v5142 = vmul.f32 %v4961, 1.442695
    %v5143 = vpow.pop %v5142
    %v5144 = vmul.f32 %v4962, 1.442695
    %v5145 = vpow.pop %v5144
    %v5146 = vmul.f32 %v4963, 1.442695
    %v5147 = vpow.pop %v5146
    %v5148 = vmul.f32 %v4964, 1.442695
    %v5149 = vpow.pop %v5148
    %v5150 = vmul.f32 %v4965, 1.442695
    %v5151 = vpow.pop %v5150
    %v5152 = vmul.f32 %v4966, 1.442695
    %v5153 = vpow.pop %v5152
    %v5154 = vmul.f32 %v4967, 1.442695
    %v5155 = vpow.pop %v5154
    %v5156 = vmul.f32 %v4968, 1.442695
    %v5157 = vpow.pop %v5156
    %v5158 = vmul.f32 %v4969, 1.442695
    %v5159 = vpow.pop %v5158
    %v5160 = vmul.f32 %v4970, 1.442695
    %v5161 = vpow.pop %v5160
    %v5162 = vmul.f32 %v4971, 1.442695
    %v5163 = vpow.pop %v5162
    %v5164 = vmul.f32 %v4972, 1.442695
    %v5165 = vpow.pop %v5164
    %v5166 = vmul.f32 %v4973, 1.442695
    %v5167 = vpow.pop %v5166
    %v5168 = vmul.f32 %v4974, 1.442695
    %v5169 = vpow.pop %v5168
    %v5170 = vmul.f32 %v4975, 1.442695
    %v5171 = vpow.pop %v5170
    %v5172 = vmul.f32 %v4976, 1.442695
    %v5173 = vpow.pop %v5172
    %v5174 = vmul.f32 %v4977, 1.442695
    %v5175 = vpow.pop %v5174
    %v5176 = vmul.f32 %v4978, 1.442695
    %v5177 = vpow.pop %v5176
    %v5178 = vmul.f32 %v4979, 1.442695
    %v5179 = vpow.pop %v5178
    %v5180 = vmul.f32 %v4980, 1.442695
    %v5181 = vpow.pop %v5180
    %v5182 = vmul.f32 %v4981, 1.442695
    %v5183 = vpow.pop %v5182
    %v5184 = vmul.f32 %v4982, 1.442695
    %v5185 = vpow.pop %v5184
    %v5186 = vmul.f32 %v4983, 1.442695
    %v5187 = vpow.pop %v5186
    %v5188 = vmul.f32 %v4984, 1.442695
    %v5189 = vpow.pop %v5188
    %v5190 = vmul.f32 %v4985, 1.442695
    %v5191 = vpow.pop %v5190
    %v5192 = vmul.f32 %v4986, 1.442695
    %v5193 = vpow.pop %v5192
    %v5194 = vmul.f32 %v4987, 1.442695
    %v5195 = vpow.pop %v5194
    %v5196 = vmul.f32 %v4988, 1.442695
    %v5197 = vpow.pop %v5196
    %v5198 = vmul.f32 %v4989, 1.442695
    %v5199 = vpow.pop %v5198
    %v5200 = vmul.f32 %v4990, 1.442695
    %v5201 = vpow.pop %v5200
    %v5202 = vmul.f32 %v4991, 1.442695
    %v5203 = vpow.pop %v5202
    %v5204 = vmul.f32 %v4992, 1.442695
    %v5205 = vpow.pop %v5204
    %v5206 = vmul.f32 %v4993, 1.442695
    %v5207 = vpow.pop %v5206
    %v5208 = vmul.f32 %v4994, 1.442695
    %v5209 = vpow.pop %v5208
    %v5210 = vmul.f32 %v4995, 1.442695
    %v5211 = vpow.pop %v5210
    %v5212 = vmul.f32 %v4996, 1.442695
    %v5213 = vpow.pop %v5212
    %v5214 = vmul.f32 %v4997, 1.442695
    %v5215 = vpow.pop %v5214
    %v5216 = vmul.f32 %v4998, 1.442695
    %v5217 = vpow.pop %v5216
    %v5218 = vmul.f32 %v4999, 1.442695
    %v5219 = vpow.pop %v5218
    %v5220 = vmul.f32 %v5000, 1.442695
    %v5221 = vpow.pop %v5220
    %v5222 = vmul.f32 %v5001, 1.442695
    %v5223 = vpow.pop %v5222
    %v5224 = vmul.f32 %v5002, 1.442695
    %v5225 = vpow.pop %v5224
    %v5226 = vmul.f32 %v5003, 1.442695
    %v5227 = vpow.pop %v5226
    %v5228 = vmul.f32 %v5004, 1.442695
    %v5229 = vpow.pop %v5228
    %v5230 = vmul.f32 %v5005, 1.442695
    %v5231 = vpow.pop %v5230
    %v5232 = vmul.f32 %v5006, 1.442695
    %v5233 = vpow.pop %v5232
    %v5234 = vmul.f32 %v5007, 1.442695
    %v5235 = vpow.pop %v5234
    %v5236 = vmul.f32 %v5008, 1.442695
    %v5237 = vpow.pop %v5236
    %v5238 = vmul.f32 %v5009, 1.442695
    %v5239 = vpow.pop %v5238
    %v5240 = vmul.f32 %v5010, 1.442695
    %v5241 = vpow.pop %v5240
    %v5242 = vmul.f32 %v5011, 1.442695
    %v5243 = vpow.pop %v5242
    %v5244 = vmul.f32 %v5012, 1.442695
    %v5245 = vpow.pop %v5244
    %v5246 = vmul.f32 %v5013, 1.442695
    %v5247 = vpow.pop %v5246
    %v5248 = vmul.f32 %v5014, 1.442695
    %v5249 = vpow.pop %v5248
    %v5250 = vmul.f32 %v5015, 1.442695
    %v5251 = vpow.pop %v5250
    %v5252 = vmul.f32 %v5016, 1.442695
    %v5253 = vpow.pop %v5252
    %v5254 = vmul.f32 %v5017, 1.442695
    %v5255 = vpow.pop %v5254
    %v5256 = vmul.f32 %v5018, 1.442695
    %v5257 = vpow.pop %v5256
    %v5258 = vmul.f32 %v5019, 1.442695
    %v5259 = vpow.pop %v5258
    %v5260 = vmul.f32 %v5020, 1.442695
    %v5261 = vpow.pop %v5260
    %v5262 = vmul.f32 %v5021, 1.442695
    %v5263 = vpow.pop %v5262
    %v5264 = vmul.f32 %v5022, 1.442695
    %v5265 = vpow.pop %v5264
    %v5266 = vmul.f32 %v5023, 1.442695
    %v5267 = vpow.pop %v5266
    %v5268 = vmul.f32 %v5024, 1.442695
    %v5269 = vpow.pop %v5268
    %v5270 = vmul.f32 %v5025, 1.442695
    %v5271 = vpow.pop %v5270
    %v5272 = vmul.f32 %v5026, 1.442695
    %v5273 = vpow.pop %v5272
    %v5274 = vmul.f32 %v5027, 1.442695
    %v5275 = vpow.pop %v5274
    %v5276 = vmul.f32 %v5028, 1.442695
    %v5277 = vpow.pop %v5276
    %v5278 = vmul.f32 %v5029, 1.442695
    %v5279 = vpow.pop %v5278
    %v5280 = vmul.f32 %v5030, 1.442695
    %v5281 = vpow.pop %v5280
    %v5282 = vmul.f32 %v5031, 1.442695
    %v5283 = vpow.pop %v5282
    %v5284 = vmul.f32 %v5032, 1.442695
    %v5285 = vpow.pop %v5284
    %v5286 = vmul.f32 %v5033, 1.442695
    %v5287 = vpow.pop %v5286
    %v5288 = vmul.f32 %v5034, 1.442695
    %v5289 = vpow.pop %v5288
    %v5290 = vmul.f32 %v5035, 1.442695
    %v5291 = vpow.pop %v5290
    %5292 = vadd.xlane.f32.xlu0 %v5037
    %v5293 = vpop.xlane.xlu0 %5292
    %5294 = vadd.xlane.f32.xlu0 %v5039
    %v5295 = vpop.xlane.xlu0 %5294
    %5296 = vadd.xlane.f32.xlu0 %v5041
    %v5297 = vpop.xlane.xlu0 %5296
    %5298 = vadd.xlane.f32.xlu0 %v5043
    %v5299 = vpop.xlane.xlu0 %5298
    %5300 = vadd.xlane.f32.xlu0 %v5045
    %v5301 = vpop.xlane.xlu0 %5300
    %5302 = vadd.xlane.f32.xlu0 %v5047
    %v5303 = vpop.xlane.xlu0 %5302
    %5304 = vadd.xlane.f32.xlu0 %v5049
    %v5305 = vpop.xlane.xlu0 %5304
    %5306 = vadd.xlane.f32.xlu0 %v5051
    %v5307 = vpop.xlane.xlu0 %5306
    %5308 = vadd.xlane.f32.xlu0 %v5053
    %v5309 = vpop.xlane.xlu0 %5308
    %5310 = vadd.xlane.f32.xlu0 %v5055
    %v5311 = vpop.xlane.xlu0 %5310
    %5312 = vadd.xlane.f32.xlu0 %v5057
    %v5313 = vpop.xlane.xlu0 %5312
    %5314 = vadd.xlane.f32.xlu0 %v5059
    %v5315 = vpop.xlane.xlu0 %5314
    %5316 = vadd.xlane.f32.xlu0 %v5061
    %v5317 = vpop.xlane.xlu0 %5316
    %5318 = vadd.xlane.f32.xlu0 %v5063
    %v5319 = vpop.xlane.xlu0 %5318
    %5320 = vadd.xlane.f32.xlu0 %v5065
    %v5321 = vpop.xlane.xlu0 %5320
    %5322 = vadd.xlane.f32.xlu0 %v5067
    %v5323 = vpop.xlane.xlu0 %5322
    %5324 = vadd.xlane.f32.xlu0 %v5069
    %v5325 = vpop.xlane.xlu0 %5324
    %5326 = vadd.xlane.f32.xlu0 %v5071
    %v5327 = vpop.xlane.xlu0 %5326
    %5328 = vadd.xlane.f32.xlu0 %v5073
    %v5329 = vpop.xlane.xlu0 %5328
    %5330 = vadd.xlane.f32.xlu0 %v5075
    %v5331 = vpop.xlane.xlu0 %5330
    %5332 = vadd.xlane.f32.xlu0 %v5077
    %v5333 = vpop.xlane.xlu0 %5332
    %5334 = vadd.xlane.f32.xlu0 %v5079
    %v5335 = vpop.xlane.xlu0 %5334
    %5336 = vadd.xlane.f32.xlu0 %v5081
    %v5337 = vpop.xlane.xlu0 %5336
    %5338 = vadd.xlane.f32.xlu0 %v5083
    %v5339 = vpop.xlane.xlu0 %5338
    %5340 = vadd.xlane.f32.xlu0 %v5085
    %v5341 = vpop.xlane.xlu0 %5340
    %5342 = vadd.xlane.f32.xlu0 %v5087
    %v5343 = vpop.xlane.xlu0 %5342
    %5344 = vadd.xlane.f32.xlu0 %v5089
    %v5345 = vpop.xlane.xlu0 %5344
    %5346 = vadd.xlane.f32.xlu0 %v5091
    %v5347 = vpop.xlane.xlu0 %5346
    %5348 = vadd.xlane.f32.xlu0 %v5093
    %v5349 = vpop.xlane.xlu0 %5348
    %5350 = vadd.xlane.f32.xlu0 %v5095
    %v5351 = vpop.xlane.xlu0 %5350
    %5352 = vadd.xlane.f32.xlu0 %v5097
    %v5353 = vpop.xlane.xlu0 %5352
    %5354 = vadd.xlane.f32.xlu0 %v5099
    %v5355 = vpop.xlane.xlu0 %5354
    %5356 = vadd.xlane.f32.xlu0 %v5101
    %v5357 = vpop.xlane.xlu0 %5356
    %5358 = vadd.xlane.f32.xlu0 %v5103
    %v5359 = vpop.xlane.xlu0 %5358
    %5360 = vadd.xlane.f32.xlu0 %v5105
    %v5361 = vpop.xlane.xlu0 %5360
    %5362 = vadd.xlane.f32.xlu0 %v5107
    %v5363 = vpop.xlane.xlu0 %5362
    %5364 = vadd.xlane.f32.xlu0 %v5109
    %v5365 = vpop.xlane.xlu0 %5364
    %5366 = vadd.xlane.f32.xlu0 %v5111
    %v5367 = vpop.xlane.xlu0 %5366
    %5368 = vadd.xlane.f32.xlu0 %v5113
    %v5369 = vpop.xlane.xlu0 %5368
    %5370 = vadd.xlane.f32.xlu0 %v5115
    %v5371 = vpop.xlane.xlu0 %5370
    %5372 = vadd.xlane.f32.xlu0 %v5117
    %v5373 = vpop.xlane.xlu0 %5372
    %5374 = vadd.xlane.f32.xlu0 %v5119
    %v5375 = vpop.xlane.xlu0 %5374
    %5376 = vadd.xlane.f32.xlu0 %v5121
    %v5377 = vpop.xlane.xlu0 %5376
    %5378 = vadd.xlane.f32.xlu0 %v5123
    %v5379 = vpop.xlane.xlu0 %5378
    %5380 = vadd.xlane.f32.xlu0 %v5125
    %v5381 = vpop.xlane.xlu0 %5380
    %5382 = vadd.xlane.f32.xlu0 %v5127
    %v5383 = vpop.xlane.xlu0 %5382
    %5384 = vadd.xlane.f32.xlu0 %v5129
    %v5385 = vpop.xlane.xlu0 %5384
    %5386 = vadd.xlane.f32.xlu0 %v5131
    %v5387 = vpop.xlane.xlu0 %5386
    %5388 = vadd.xlane.f32.xlu0 %v5133
    %v5389 = vpop.xlane.xlu0 %5388
    %5390 = vadd.xlane.f32.xlu0 %v5135
    %v5391 = vpop.xlane.xlu0 %5390
    %5392 = vadd.xlane.f32.xlu0 %v5137
    %v5393 = vpop.xlane.xlu0 %5392
    %5394 = vadd.xlane.f32.xlu0 %v5139
    %v5395 = vpop.xlane.xlu0 %5394
    %5396 = vadd.xlane.f32.xlu0 %v5141
    %v5397 = vpop.xlane.xlu0 %5396
    %5398 = vadd.xlane.f32.xlu0 %v5143
    %v5399 = vpop.xlane.xlu0 %5398
    %5400 = vadd.xlane.f32.xlu0 %v5145
    %v5401 = vpop.xlane.xlu0 %5400
    %5402 = vadd.xlane.f32.xlu0 %v5147
    %v5403 = vpop.xlane.xlu0 %5402
    %5404 = vadd.xlane.f32.xlu0 %v5149
    %v5405 = vpop.xlane.xlu0 %5404
    %5406 = vadd.xlane.f32.xlu0 %v5151
    %v5407 = vpop.xlane.xlu0 %5406
    %5408 = vadd.xlane.f32.xlu0 %v5153
    %v5409 = vpop.xlane.xlu0 %5408
    %5410 = vadd.xlane.f32.xlu0 %v5155
    %v5411 = vpop.xlane.xlu0 %5410
    %5412 = vadd.xlane.f32.xlu0 %v5157
    %v5413 = vpop.xlane.xlu0 %5412
    %5414 = vadd.xlane.f32.xlu0 %v5159
    %v5415 = vpop.xlane.xlu0 %5414
    %5416 = vadd.xlane.f32.xlu0 %v5161
    %v5417 = vpop.xlane.xlu0 %5416
    %5418 = vadd.xlane.f32.xlu0 %v5163
    %v5419 = vpop.xlane.xlu0 %5418
    %5420 = vadd.xlane.f32.xlu0 %v5165
    %v5421 = vpop.xlane.xlu0 %5420
    %5422 = vadd.xlane.f32.xlu0 %v5167
    %v5423 = vpop.xlane.xlu0 %5422
    %5424 = vadd.xlane.f32.xlu0 %v5169
    %v5425 = vpop.xlane.xlu0 %5424
    %5426 = vadd.xlane.f32.xlu0 %v5171
    %v5427 = vpop.xlane.xlu0 %5426
    %5428 = vadd.xlane.f32.xlu0 %v5173
    %v5429 = vpop.xlane.xlu0 %5428
    %5430 = vadd.xlane.f32.xlu0 %v5175
    %v5431 = vpop.xlane.xlu0 %5430
    %5432 = vadd.xlane.f32.xlu0 %v5177
    %v5433 = vpop.xlane.xlu0 %5432
    %5434 = vadd.xlane.f32.xlu0 %v5179
    %v5435 = vpop.xlane.xlu0 %5434
    %5436 = vadd.xlane.f32.xlu0 %v5181
    %v5437 = vpop.xlane.xlu0 %5436
    %5438 = vadd.xlane.f32.xlu0 %v5183
    %v5439 = vpop.xlane.xlu0 %5438
    %5440 = vadd.xlane.f32.xlu0 %v5185
    %v5441 = vpop.xlane.xlu0 %5440
    %5442 = vadd.xlane.f32.xlu0 %v5187
    %v5443 = vpop.xlane.xlu0 %5442
    %5444 = vadd.xlane.f32.xlu0 %v5189
    %v5445 = vpop.xlane.xlu0 %5444
    %5446 = vadd.xlane.f32.xlu0 %v5191
    %v5447 = vpop.xlane.xlu0 %5446
    %5448 = vadd.xlane.f32.xlu0 %v5193
    %v5449 = vpop.xlane.xlu0 %5448
    %5450 = vadd.xlane.f32.xlu0 %v5195
    %v5451 = vpop.xlane.xlu0 %5450
    %5452 = vadd.xlane.f32.xlu0 %v5197
    %v5453 = vpop.xlane.xlu0 %5452
    %5454 = vadd.xlane.f32.xlu0 %v5199
    %v5455 = vpop.xlane.xlu0 %5454
    %5456 = vadd.xlane.f32.xlu0 %v5201
    %v5457 = vpop.xlane.xlu0 %5456
    %5458 = vadd.xlane.f32.xlu0 %v5203
    %v5459 = vpop.xlane.xlu0 %5458
    %5460 = vadd.xlane.f32.xlu0 %v5205
    %v5461 = vpop.xlane.xlu0 %5460
    %5462 = vadd.xlane.f32.xlu0 %v5207
    %v5463 = vpop.xlane.xlu0 %5462
    %5464 = vadd.xlane.f32.xlu0 %v5209
    %v5465 = vpop.xlane.xlu0 %5464
    %5466 = vadd.xlane.f32.xlu0 %v5211
    %v5467 = vpop.xlane.xlu0 %5466
    %5468 = vadd.xlane.f32.xlu0 %v5213
    %v5469 = vpop.xlane.xlu0 %5468
    %5470 = vadd.xlane.f32.xlu0 %v5215
    %v5471 = vpop.xlane.xlu0 %5470
    %5472 = vadd.xlane.f32.xlu0 %v5217
    %v5473 = vpop.xlane.xlu0 %5472
    %5474 = vadd.xlane.f32.xlu0 %v5219
    %v5475 = vpop.xlane.xlu0 %5474
    %5476 = vadd.xlane.f32.xlu0 %v5221
    %v5477 = vpop.xlane.xlu0 %5476
    %5478 = vadd.xlane.f32.xlu0 %v5223
    %v5479 = vpop.xlane.xlu0 %5478
    %5480 = vadd.xlane.f32.xlu0 %v5225
    %v5481 = vpop.xlane.xlu0 %5480
    %5482 = vadd.xlane.f32.xlu0 %v5227
    %v5483 = vpop.xlane.xlu0 %5482
    %5484 = vadd.xlane.f32.xlu0 %v5229
    %v5485 = vpop.xlane.xlu0 %5484
    %5486 = vadd.xlane.f32.xlu0 %v5231
    %v5487 = vpop.xlane.xlu0 %5486
    %5488 = vadd.xlane.f32.xlu0 %v5233
    %v5489 = vpop.xlane.xlu0 %5488
    %5490 = vadd.xlane.f32.xlu0 %v5235
    %v5491 = vpop.xlane.xlu0 %5490
    %5492 = vadd.xlane.f32.xlu0 %v5237
    %v5493 = vpop.xlane.xlu0 %5492
    %5494 = vadd.xlane.f32.xlu0 %v5239
    %v5495 = vpop.xlane.xlu0 %5494
    %5496 = vadd.xlane.f32.xlu0 %v5241
    %v5497 = vpop.xlane.xlu0 %5496
    %5498 = vadd.xlane.f32.xlu0 %v5243
    %v5499 = vpop.xlane.xlu0 %5498
    %5500 = vadd.xlane.f32.xlu0 %v5245
    %v5501 = vpop.xlane.xlu0 %5500
    %5502 = vadd.xlane.f32.xlu0 %v5247
    %v5503 = vpop.xlane.xlu0 %5502
    %5504 = vadd.xlane.f32.xlu0 %v5249
    %v5505 = vpop.xlane.xlu0 %5504
    %5506 = vadd.xlane.f32.xlu0 %v5251
    %v5507 = vpop.xlane.xlu0 %5506
    %5508 = vadd.xlane.f32.xlu0 %v5253
    %v5509 = vpop.xlane.xlu0 %5508
    %5510 = vadd.xlane.f32.xlu0 %v5255
    %v5511 = vpop.xlane.xlu0 %5510
    %5512 = vadd.xlane.f32.xlu0 %v5257
    %v5513 = vpop.xlane.xlu0 %5512
    %5514 = vadd.xlane.f32.xlu0 %v5259
    %v5515 = vpop.xlane.xlu0 %5514
    %5516 = vadd.xlane.f32.xlu0 %v5261
    %v5517 = vpop.xlane.xlu0 %5516
    %5518 = vadd.xlane.f32.xlu0 %v5263
    %v5519 = vpop.xlane.xlu0 %5518
    %5520 = vadd.xlane.f32.xlu0 %v5265
    %v5521 = vpop.xlane.xlu0 %5520
    %5522 = vadd.xlane.f32.xlu0 %v5267
    %v5523 = vpop.xlane.xlu0 %5522
    %5524 = vadd.xlane.f32.xlu0 %v5269
    %v5525 = vpop.xlane.xlu0 %5524
    %5526 = vadd.xlane.f32.xlu0 %v5271
    %v5527 = vpop.xlane.xlu0 %5526
    %5528 = vadd.xlane.f32.xlu0 %v5273
    %v5529 = vpop.xlane.xlu0 %5528
    %5530 = vadd.xlane.f32.xlu0 %v5275
    %v5531 = vpop.xlane.xlu0 %5530
    %5532 = vadd.xlane.f32.xlu0 %v5277
    %v5533 = vpop.xlane.xlu0 %5532
    %5534 = vadd.xlane.f32.xlu0 %v5279
    %v5535 = vpop.xlane.xlu0 %5534
    %5536 = vadd.xlane.f32.xlu0 %v5281
    %v5537 = vpop.xlane.xlu0 %5536
    %5538 = vadd.xlane.f32.xlu0 %v5283
    %v5539 = vpop.xlane.xlu0 %5538
    %5540 = vadd.xlane.f32.xlu0 %v5285
    %v5541 = vpop.xlane.xlu0 %5540
    %5542 = vadd.xlane.f32.xlu0 %v5287
    %v5543 = vpop.xlane.xlu0 %5542
    %5544 = vadd.xlane.f32.xlu0 %v5289
    %v5545 = vpop.xlane.xlu0 %5544
    %5546 = vadd.xlane.f32.xlu0 %v5291
    %v5547 = vpop.xlane.xlu0 %5546
    %v5548 = vrcp.pop %v5293
    %v5549 = vrcp.pop %v5295
    %v5550 = vrcp.pop %v5297
    %v5551 = vrcp.pop %v5299
    %v5552 = vrcp.pop %v5301
    %v5553 = vrcp.pop %v5303
    %v5554 = vrcp.pop %v5305
    %v5555 = vrcp.pop %v5307
    %v5556 = vrcp.pop %v5309
    %v5557 = vrcp.pop %v5311
    %v5558 = vrcp.pop %v5313
    %v5559 = vrcp.pop %v5315
    %v5560 = vrcp.pop %v5317
    %v5561 = vrcp.pop %v5319
    %v5562 = vrcp.pop %v5321
    %v5563 = vrcp.pop %v5323
    %v5564 = vrcp.pop %v5325
    %v5565 = vrcp.pop %v5327
    %v5566 = vrcp.pop %v5329
    %v5567 = vrcp.pop %v5331
    %v5568 = vrcp.pop %v5333
    %v5569 = vrcp.pop %v5335
    %v5570 = vrcp.pop %v5337
    %v5571 = vrcp.pop %v5339
    %v5572 = vrcp.pop %v5341
    %v5573 = vrcp.pop %v5343
    %v5574 = vrcp.pop %v5345
    %v5575 = vrcp.pop %v5347
    %v5576 = vrcp.pop %v5349
    %v5577 = vrcp.pop %v5351
    %v5578 = vrcp.pop %v5353
    %v5579 = vrcp.pop %v5355
    %v5580 = vrcp.pop %v5357
    %v5581 = vrcp.pop %v5359
    %v5582 = vrcp.pop %v5361
    %v5583 = vrcp.pop %v5363
    %v5584 = vrcp.pop %v5365
    %v5585 = vrcp.pop %v5367
    %v5586 = vrcp.pop %v5369
    %v5587 = vrcp.pop %v5371
    %v5588 = vrcp.pop %v5373
    %v5589 = vrcp.pop %v5375
    %v5590 = vrcp.pop %v5377
    %v5591 = vrcp.pop %v5379
    %v5592 = vrcp.pop %v5381
    %v5593 = vrcp.pop %v5383
    %v5594 = vrcp.pop %v5385
    %v5595 = vrcp.pop %v5387
    %v5596 = vrcp.pop %v5389
    %v5597 = vrcp.pop %v5391
    %v5598 = vrcp.pop %v5393
    %v5599 = vrcp.pop %v5395
    %v5600 = vrcp.pop %v5397
    %v5601 = vrcp.pop %v5399
    %v5602 = vrcp.pop %v5401
    %v5603 = vrcp.pop %v5403
    %v5604 = vrcp.pop %v5405
    %v5605 = vrcp.pop %v5407
    %v5606 = vrcp.pop %v5409
    %v5607 = vrcp.pop %v5411
    %v5608 = vrcp.pop %v5413
    %v5609 = vrcp.pop %v5415
    %v5610 = vrcp.pop %v5417
    %v5611 = vrcp.pop %v5419
    %v5612 = vrcp.pop %v5421
    %v5613 = vrcp.pop %v5423
    %v5614 = vrcp.pop %v5425
    %v5615 = vrcp.pop %v5427
    %v5616 = vrcp.pop %v5429
    %v5617 = vrcp.pop %v5431
    %v5618 = vrcp.pop %v5433
    %v5619 = vrcp.pop %v5435
    %v5620 = vrcp.pop %v5437
    %v5621 = vrcp.pop %v5439
    %v5622 = vrcp.pop %v5441
    %v5623 = vrcp.pop %v5443
    %v5624 = vrcp.pop %v5445
    %v5625 = vrcp.pop %v5447
    %v5626 = vrcp.pop %v5449
    %v5627 = vrcp.pop %v5451
    %v5628 = vrcp.pop %v5453
    %v5629 = vrcp.pop %v5455
    %v5630 = vrcp.pop %v5457
    %v5631 = vrcp.pop %v5459
    %v5632 = vrcp.pop %v5461
    %v5633 = vrcp.pop %v5463
    %v5634 = vrcp.pop %v5465
    %v5635 = vrcp.pop %v5467
    %v5636 = vrcp.pop %v5469
    %v5637 = vrcp.pop %v5471
    %v5638 = vrcp.pop %v5473
    %v5639 = vrcp.pop %v5475
    %v5640 = vrcp.pop %v5477
    %v5641 = vrcp.pop %v5479
    %v5642 = vrcp.pop %v5481
    %v5643 = vrcp.pop %v5483
    %v5644 = vrcp.pop %v5485
    %v5645 = vrcp.pop %v5487
    %v5646 = vrcp.pop %v5489
    %v5647 = vrcp.pop %v5491
    %v5648 = vrcp.pop %v5493
    %v5649 = vrcp.pop %v5495
    %v5650 = vrcp.pop %v5497
    %v5651 = vrcp.pop %v5499
    %v5652 = vrcp.pop %v5501
    %v5653 = vrcp.pop %v5503
    %v5654 = vrcp.pop %v5505
    %v5655 = vrcp.pop %v5507
    %v5656 = vrcp.pop %v5509
    %v5657 = vrcp.pop %v5511
    %v5658 = vrcp.pop %v5513
    %v5659 = vrcp.pop %v5515
    %v5660 = vrcp.pop %v5517
    %v5661 = vrcp.pop %v5519
    %v5662 = vrcp.pop %v5521
    %v5663 = vrcp.pop %v5523
    %v5664 = vrcp.pop %v5525
    %v5665 = vrcp.pop %v5527
    %v5666 = vrcp.pop %v5529
    %v5667 = vrcp.pop %v5531
    %v5668 = vrcp.pop %v5533
    %v5669 = vrcp.pop %v5535
    %v5670 = vrcp.pop %v5537
    %v5671 = vrcp.pop %v5539
    %v5672 = vrcp.pop %v5541
    %v5673 = vrcp.pop %v5543
    %v5674 = vrcp.pop %v5545
    %v5675 = vrcp.pop %v5547
    %v5676 = vmul.f32 %v5037, %v5548
    %v5677 = vmul.f32 %v5039, %v5549
    %v5678 = vmul.f32 %v5041, %v5550
    %v5679 = vmul.f32 %v5043, %v5551
    %v5680 = vmul.f32 %v5045, %v5552
    %v5681 = vmul.f32 %v5047, %v5553
    %v5682 = vmul.f32 %v5049, %v5554
    %v5683 = vmul.f32 %v5051, %v5555
    %v5684 = vmul.f32 %v5053, %v5556
    %v5685 = vmul.f32 %v5055, %v5557
    %v5686 = vmul.f32 %v5057, %v5558
    %v5687 = vmul.f32 %v5059, %v5559
    %v5688 = vmul.f32 %v5061, %v5560
    %v5689 = vmul.f32 %v5063, %v5561
    %v5690 = vmul.f32 %v5065, %v5562
    %v5691 = vmul.f32 %v5067, %v5563
    %v5692 = vmul.f32 %v5069, %v5564
    %v5693 = vmul.f32 %v5071, %v5565
    %v5694 = vmul.f32 %v5073, %v5566
    %v5695 = vmul.f32 %v5075, %v5567
    %v5696 = vmul.f32 %v5077, %v5568
    %v5697 = vmul.f32 %v5079, %v5569
    %v5698 = vmul.f32 %v5081, %v5570
    %v5699 = vmul.f32 %v5083, %v5571
    %v5700 = vmul.f32 %v5085, %v5572
    %v5701 = vmul.f32 %v5087, %v5573
    %v5702 = vmul.f32 %v5089, %v5574
    %v5703 = vmul.f32 %v5091, %v5575
    %v5704 = vmul.f32 %v5093, %v5576
    %v5705 = vmul.f32 %v5095, %v5577
    %v5706 = vmul.f32 %v5097, %v5578
    %v5707 = vmul.f32 %v5099, %v5579
    %v5708 = vmul.f32 %v5101, %v5580
    %v5709 = vmul.f32 %v5103, %v5581
    %v5710 = vmul.f32 %v5105, %v5582
    %v5711 = vmul.f32 %v5107, %v5583
    %v5712 = vmul.f32 %v5109, %v5584
    %v5713 = vmul.f32 %v5111, %v5585
    %v5714 = vmul.f32 %v5113, %v5586
    %v5715 = vmul.f32 %v5115, %v5587
    %v5716 = vmul.f32 %v5117, %v5588
    %v5717 = vmul.f32 %v5119, %v5589
    %v5718 = vmul.f32 %v5121, %v5590
    %v5719 = vmul.f32 %v5123, %v5591
    %v5720 = vmul.f32 %v5125, %v5592
    %v5721 = vmul.f32 %v5127, %v5593
    %v5722 = vmul.f32 %v5129, %v5594
    %v5723 = vmul.f32 %v5131, %v5595
    %v5724 = vmul.f32 %v5133, %v5596
    %v5725 = vmul.f32 %v5135, %v5597
    %v5726 = vmul.f32 %v5137, %v5598
    %v5727 = vmul.f32 %v5139, %v5599
    %v5728 = vmul.f32 %v5141, %v5600
    %v5729 = vmul.f32 %v5143, %v5601
    %v5730 = vmul.f32 %v5145, %v5602
    %v5731 = vmul.f32 %v5147, %v5603
    %v5732 = vmul.f32 %v5149, %v5604
    %v5733 = vmul.f32 %v5151, %v5605
    %v5734 = vmul.f32 %v5153, %v5606
    %v5735 = vmul.f32 %v5155, %v5607
    %v5736 = vmul.f32 %v5157, %v5608
    %v5737 = vmul.f32 %v5159, %v5609
    %v5738 = vmul.f32 %v5161, %v5610
    %v5739 = vmul.f32 %v5163, %v5611
    %v5740 = vmul.f32 %v5165, %v5612
    %v5741 = vmul.f32 %v5167, %v5613
    %v5742 = vmul.f32 %v5169, %v5614
    %v5743 = vmul.f32 %v5171, %v5615
    %v5744 = vmul.f32 %v5173, %v5616
    %v5745 = vmul.f32 %v5175, %v5617
    %v5746 = vmul.f32 %v5177, %v5618
    %v5747 = vmul.f32 %v5179, %v5619
    %v5748 = vmul.f32 %v5181, %v5620
    %v5749 = vmul.f32 %v5183, %v5621
    %v5750 = vmul.f32 %v5185, %v5622
    %v5751 = vmul.f32 %v5187, %v5623
    %v5752 = vmul.f32 %v5189, %v5624
    %v5753 = vmul.f32 %v5191, %v5625
    %v5754 = vmul.f32 %v5193, %v5626
    %v5755 = vmul.f32 %v5195, %v5627
    %v5756 = vmul.f32 %v5197, %v5628
    %v5757 = vmul.f32 %v5199, %v5629
    %v5758 = vmul.f32 %v5201, %v5630
    %v5759 = vmul.f32 %v5203, %v5631
    %v5760 = vmul.f32 %v5205, %v5632
    %v5761 = vmul.f32 %v5207, %v5633
    %v5762 = vmul.f32 %v5209, %v5634
    %v5763 = vmul.f32 %v5211, %v5635
    %v5764 = vmul.f32 %v5213, %v5636
    %v5765 = vmul.f32 %v5215, %v5637
    %v5766 = vmul.f32 %v5217, %v5638
    %v5767 = vmul.f32 %v5219, %v5639
    %v5768 = vmul.f32 %v5221, %v5640
    %v5769 = vmul.f32 %v5223, %v5641
    %v5770 = vmul.f32 %v5225, %v5642
    %v5771 = vmul.f32 %v5227, %v5643
    %v5772 = vmul.f32 %v5229, %v5644
    %v5773 = vmul.f32 %v5231, %v5645
    %v5774 = vmul.f32 %v5233, %v5646
    %v5775 = vmul.f32 %v5235, %v5647
    %v5776 = vmul.f32 %v5237, %v5648
    %v5777 = vmul.f32 %v5239, %v5649
    %v5778 = vmul.f32 %v5241, %v5650
    %v5779 = vmul.f32 %v5243, %v5651
    %v5780 = vmul.f32 %v5245, %v5652
    %v5781 = vmul.f32 %v5247, %v5653
    %v5782 = vmul.f32 %v5249, %v5654
    %v5783 = vmul.f32 %v5251, %v5655
    %v5784 = vmul.f32 %v5253, %v5656
    %v5785 = vmul.f32 %v5255, %v5657
    %v5786 = vmul.f32 %v5257, %v5658
    %v5787 = vmul.f32 %v5259, %v5659
    %v5788 = vmul.f32 %v5261, %v5660
    %v5789 = vmul.f32 %v5263, %v5661
    %v5790 = vmul.f32 %v5265, %v5662
    %v5791 = vmul.f32 %v5267, %v5663
    %v5792 = vmul.f32 %v5269, %v5664
    %v5793 = vmul.f32 %v5271, %v5665
    %v5794 = vmul.f32 %v5273, %v5666
    %v5795 = vmul.f32 %v5275, %v5667
    %v5796 = vmul.f32 %v5277, %v5668
    %v5797 = vmul.f32 %v5279, %v5669
    %v5798 = vmul.f32 %v5281, %v5670
    %v5799 = vmul.f32 %v5283, %v5671
    %v5800 = vmul.f32 %v5285, %v5672
    %v5801 = vmul.f32 %v5287, %v5673
    %v5802 = vmul.f32 %v5289, %v5674
    %v5803 = vmul.f32 %v5291, %v5675
    %v5804 = vld [vmem:[%s7] sm:$0xf]
    %v5805 = vld [vmem:[%s7 + $0x4] sm:$0xf]
    %v5806 = vld [vmem:[%s7 + $0x8] sm:$0xf]
    %v5807 = vld [vmem:[%s7 + $0xc] sm:$0xf]
    %v5808 = vld [vmem:[%s7 + $0x10] sm:$0xf]
    %v5809 = vld [vmem:[%s7 + $0x14] sm:$0xf]
    %v5810 = vld [vmem:[%s7 + $0x18] sm:$0xf]
    %v5811 = vld [vmem:[%s7 + $0x1c] sm:$0xf]
    %v5812 = vld [vmem:[%s7 + $0x20] sm:$0xf]
    %v5813 = vld [vmem:[%s7 + $0x24] sm:$0xf]
    %v5814 = vld [vmem:[%s7 + $0x28] sm:$0xf]
    %v5815 = vld [vmem:[%s7 + $0x2c] sm:$0xf]
    %v5816 = vld [vmem:[%s7 + $0x30] sm:$0xf]
    %v5817 = vld [vmem:[%s7 + $0x34] sm:$0xf]
    %v5818 = vld [vmem:[%s7 + $0x38] sm:$0xf]
    %v5819 = vld [vmem:[%s7 + $0x3c] sm:$0xf]
    %v5820 = vld [vmem:[%s8] sm:$0x1]
    %v5821 = vpack.c.bf16 %v5677, %v5676
    %v5822 = vpack.c.bf16 %v5679, %v5678
    %v5823 = vpack.c.bf16 %v5681, %v5680
    %v5824 = vpack.c.bf16 %v5683, %v5682
    %v5825 = vpack.c.bf16 %v5685, %v5684
    %v5826 = vpack.c.bf16 %v5687, %v5686
    %v5827 = vpack.c.bf16 %v5689, %v5688
    %v5828 = vpack.c.bf16 %v5691, %v5690
    %v5829 = vpack.c.bf16 %v5693, %v5692
    %v5830 = vpack.c.bf16 %v5695, %v5694
    %v5831 = vpack.c.bf16 %v5697, %v5696
    %v5832 = vpack.c.bf16 %v5699, %v5698
    %v5833 = vpack.c.bf16 %v5701, %v5700
    %v5834 = vpack.c.bf16 %v5703, %v5702
    %v5835 = vpack.c.bf16 %v5705, %v5704
    %v5836 = vpack.c.bf16 %v5707, %v5706
    %v5837 = vpack.c.bf16 %v5709, %v5708
    %v5838 = vpack.c.bf16 %v5711, %v5710
    %v5839 = vpack.c.bf16 %v5713, %v5712
    %v5840 = vpack.c.bf16 %v5715, %v5714
    %v5841 = vpack.c.bf16 %v5717, %v5716
    %v5842 = vpack.c.bf16 %v5719, %v5718
    %v5843 = vpack.c.bf16 %v5721, %v5720
    %v5844 = vpack.c.bf16 %v5723, %v5722
    %v5845 = vpack.c.bf16 %v5725, %v5724
    %v5846 = vpack.c.bf16 %v5727, %v5726
    %v5847 = vpack.c.bf16 %v5729, %v5728
    %v5848 = vpack.c.bf16 %v5731, %v5730
    %v5849 = vpack.c.bf16 %v5733, %v5732
    %v5850 = vpack.c.bf16 %v5735, %v5734
    %v5851 = vpack.c.bf16 %v5737, %v5736
    %v5852 = vpack.c.bf16 %v5739, %v5738
    %v5853 = vpack.c.bf16 %v5741, %v5740
    %v5854 = vpack.c.bf16 %v5743, %v5742
    %v5855 = vpack.c.bf16 %v5745, %v5744
    %v5856 = vpack.c.bf16 %v5747, %v5746
    %v5857 = vpack.c.bf16 %v5749, %v5748
    %v5858 = vpack.c.bf16 %v5751, %v5750
    %v5859 = vpack.c.bf16 %v5753, %v5752
    %v5860 = vpack.c.bf16 %v5755, %v5754
    %v5861 = vpack.c.bf16 %v5757, %v5756
    %v5862 = vpack.c.bf16 %v5759, %v5758
    %v5863 = vpack.c.bf16 %v5761, %v5760
    %v5864 = vpack.c.bf16 %v5763, %v5762
    %v5865 = vpack.c.bf16 %v5765, %v5764
    %v5866 = vpack.c.bf16 %v5767, %v5766
    %v5867 = vpack.c.bf16 %v5769, %v5768
    %v5868 = vpack.c.bf16 %v5771, %v5770
    %v5869 = vpack.c.bf16 %v5773, %v5772
    %v5870 = vpack.c.bf16 %v5775, %v5774
    %v5871 = vpack.c.bf16 %v5777, %v5776
    %v5872 = vpack.c.bf16 %v5779, %v5778
    %v5873 = vpack.c.bf16 %v5781, %v5780
    %v5874 = vpack.c.bf16 %v5783, %v5782
    %v5875 = vpack.c.bf16 %v5785, %v5784
    %v5876 = vpack.c.bf16 %v5787, %v5786
    %v5877 = vpack.c.bf16 %v5789, %v5788
    %v5878 = vpack.c.bf16 %v5791, %v5790
    %v5879 = vpack.c.bf16 %v5793, %v5792
    %v5880 = vpack.c.bf16 %v5795, %v5794
    %v5881 = vpack.c.bf16 %v5797, %v5796
    %v5882 = vpack.c.bf16 %v5799, %v5798
    %v5883 = vpack.c.bf16 %v5801, %v5800
    %v5884 = vpack.c.bf16 %v5803, %v5802
    %v5886 = vlaneseq
    %v5887 = vshrl.u32 %v5886, 7
    %v5888 = vsub.s32 0, %v5887
    %v5889 = vrot.slane %v5820, %v5888
    %v5907 = vunpack.c.l.b16 %v5804
    %v5908 = vunpack.c.l.b16 %v5805
    %v5909 = vunpack.c.l.b16 %v5806
    %v5910 = vunpack.c.l.b16 %v5807
    %v5911 = vunpack.c.l.b16 %v5808
    %v5912 = vunpack.c.l.b16 %v5809
    %v5913 = vunpack.c.l.b16 %v5810
    %v5914 = vunpack.c.l.b16 %v5811
    %v5915 = vunpack.c.l.b16 %v5812
    %v5916 = vunpack.c.l.b16 %v5813
    %v5917 = vunpack.c.l.b16 %v5814
    %v5918 = vunpack.c.l.b16 %v5815
    %v5919 = vunpack.c.l.b16 %v5816
    %v5920 = vunpack.c.l.b16 %v5817
    %v5921 = vunpack.c.l.b16 %v5818
    %v5922 = vunpack.c.l.b16 %v5819
    %v5923 = vpack.c.b16 %v5908, %v5907
    %v5924 = vpack.c.b16 %v5910, %v5909
    %v5925 = vpack.c.b16 %v5912, %v5911
    %v5926 = vpack.c.b16 %v5914, %v5913
    %v5927 = vpack.c.b16 %v5916, %v5915
    %v5928 = vpack.c.b16 %v5918, %v5917
    %v5929 = vpack.c.b16 %v5920, %v5919
    %v5930 = vpack.c.b16 %v5922, %v5921
    %5939 = vmatprep.subr.bf16.mxu0 0
    %5940 = vmatpush1.bf16.msra.mxu0 %v5923
    %5941 = vmatprep.subr.bf16.mxu0 0
    %5942 = vmatpush1.bf16.msra.mxu0 %v5924
    %5943 = vmatprep.subr.bf16.mxu0 0
    %5944 = vmatpush1.bf16.msra.mxu0 %v5925
    %5945 = vmatprep.subr.bf16.mxu0 0
    %5946 = vmatpush1.bf16.msra.mxu0 %v5926
    %5947 = vmatprep.subr.bf16.mxu0 0
    %5948 = vmatpush1.bf16.msra.mxu0 %v5927
    %5949 = vmatprep.subr.bf16.mxu0 0
    %5950 = vmatpush1.bf16.msra.mxu0 %v5928
    %5951 = vmatprep.subr.bf16.mxu0 0
    %5952 = vmatpush1.bf16.msra.mxu0 %v5929
    %5953 = vmatprep.subr.bf16.mxu0 0
    %5954 = vmatpush1.bf16.msra.mxu0 %v5930
    %5955 = vmatprep.subr.bf16.mxu0 0
    %5956 = vmatpush1.bf16.msra.mxu0 0
    %5957 = vmatprep.subr.bf16.mxu0 0
    %5958 = vmatpush1.bf16.msra.mxu0 0
    %5959 = vmatprep.subr.bf16.mxu0 0
    %5960 = vmatpush1.bf16.msra.mxu0 0
    %5961 = vmatprep.subr.bf16.mxu0 0
    %5962 = vmatpush1.bf16.msra.mxu0 0
    %5963 = vmatprep.subr.bf16.mxu0 0
    %5964 = vmatpush1.bf16.msra.mxu0 0
    %5965 = vmatprep.subr.bf16.mxu0 0
    %5966 = vmatpush1.bf16.msra.mxu0 0
    %5967 = vmatprep.subr.bf16.mxu0 0
    %5968 = vmatpush1.bf16.msra.mxu0 0
    %5969 = vmatprep.subr.bf16.mxu0 0
    %5970 = vmatpush1.bf16.msra.mxu0 0
    %5971 = vmatprep.mubr.bf16.mxu0 0
    %5972 = vmatmul.mubr.bf16.gmra.mrb[0].mxu0 %v5821
    %v5973 = vpop.f32.mrb[0].mxu0
    %v5974 = vadd.f32 %v5889, %v5973
    %v5975 = vpop.f32.mrb[0].mxu0
    %v5976 = vpop.f32.mrb[0].mxu0
    %v5977 = vadd.f32 %v5889, %v5976
    %v5978 = vpop.f32.mrb[0].mxu0
    %5979 = vmatprep.mubr.bf16.mxu0 0
    %5980 = vmatmul.mubr.bf16.gmra.mrb[0].mxu0 %v5822
    %v5981 = vpop.f32.mrb[0].mxu0
    %v5982 = vadd.f32 %v5889, %v5981
    %v5983 = vpop.f32.mrb[0].mxu0
    %v5984 = vpop.f32.mrb[0].mxu0
    %v5985 = vadd.f32 %v5889, %v5984
    %v5986 = vpop.f32.mrb[0].mxu0
    %5987 = vmatprep.mubr.bf16.mxu0 0
    %5988 = vmatmul.mubr.bf16.gmra.mrb[0].mxu0 %v5823
    %v5989 = vpop.f32.mrb[0].mxu0
    %v5990 = vadd.f32 %v5889, %v5989
    %v5991 = vpop.f32.mrb[0].mxu0
    %v5992 = vpop.f32.mrb[0].mxu0
    %v5993 = vadd.f32 %v5889, %v5992
    %v5994 = vpop.f32.mrb[0].mxu0
    %5995 = vmatprep.mubr.bf16.mxu0 0
    %5996 = vmatmul.mubr.bf16.gmra.mrb[0].mxu0 %v5824
    %v5997 = vpop.f32.mrb[0].mxu0
    %v5998 = vadd.f32 %v5889, %v5997
    %v5999 = vpop.f32.mrb[0].mxu0
    %v6000 = vpop.f32.mrb[0].mxu0
    %v6001 = vadd.f32 %v5889, %v6000
    %v6002 = vpop.f32.mrb[0].mxu0
    %6003 = vmatprep.mubr.bf16.mxu0 0
    %6004 = vmatmul.mubr.bf16.gmra.mrb[0].mxu0 %v5825
    %v6005 = vpop.f32.mrb[0].mxu0
    %v6006 = vadd.f32 %v5889, %v6005
    %v6007 = vpop.f32.mrb[0].mxu0
    %v6008 = vpop.f32.mrb[0].mxu0
    %v6009 = vadd.f32 %v5889, %v6008
    %v6010 = vpop.f32.mrb[0].mxu0
    %6011 = vmatprep.mubr.bf16.mxu0 0
    %6012 = vmatmul.mubr.bf16.gmra.mrb[0].mxu0 %v5826
    %v6013 = vpop.f32.mrb[0].mxu0
    %v6014 = vadd.f32 %v5889, %v6013
    %v6015 = vpop.f32.mrb[0].mxu0
    %v6016 = vpop.f32.mrb[0].mxu0
    %v6017 = vadd.f32 %v5889, %v6016
    %v6018 = vpop.f32.mrb[0].mxu0
    %6019 = vmatprep.mubr.bf16.mxu0 0
    %6020 = vmatmul.mubr.bf16.gmra.mrb[0].mxu0 %v5827
    %v6021 = vpop.f32.mrb[0].mxu0
    %v6022 = vadd.f32 %v5889, %v6021
    %v6023 = vpop.f32.mrb[0].mxu0
    %v6024 = vpop.f32.mrb[0].mxu0
    %v6025 = vadd.f32 %v5889, %v6024
    %v6026 = vpop.f32.mrb[0].mxu0
    %6027 = vmatprep.mubr.bf16.mxu0 0
    %6028 = vmatmul.mubr.bf16.gmra.mrb[0].mxu0 %v5828
    %v6029 = vpop.f32.mrb[0].mxu0
    %v6030 = vadd.f32 %v5889, %v6029
    %v6031 = vpop.f32.mrb[0].mxu0
    %v6032 = vpop.f32.mrb[0].mxu0
    %v6033 = vadd.f32 %v5889, %v6032
    %v6034 = vpop.f32.mrb[0].mxu0
    %6035 = vmatprep.mubr.bf16.mxu0 0
    %6036 = vmatmul.mubr.bf16.gmra.mrb[0].mxu0 %v5829
    %v6037 = vpop.f32.mrb[0].mxu0
    %v6038 = vadd.f32 %v5889, %v6037
    %v6039 = vpop.f32.mrb[0].mxu0
    %v6040 = vpop.f32.mrb[0].mxu0
    %v6041 = vadd.f32 %v5889, %v6040
    %v6042 = vpop.f32.mrb[0].mxu0
    %6043 = vmatprep.mubr.bf16.mxu0 0
    %6044 = vmatmul.mubr.bf16.gmra.mrb[0].mxu0 %v5830
    %v6045 = vpop.f32.mrb[0].mxu0
    %v6046 = vadd.f32 %v5889, %v6045
    %v6047 = vpop.f32.mrb[0].mxu0
    %v6048 = vpop.f32.mrb[0].mxu0
    %v6049 = vadd.f32 %v5889, %v6048
    %v6050 = vpop.f32.mrb[0].mxu0
    %6051 = vmatprep.mubr.bf16.mxu0 0
    %6052 = vmatmul.mubr.bf16.gmra.mrb[0].mxu0 %v5831
    %v6053 = vpop.f32.mrb[0].mxu0
    %v6054 = vadd.f32 %v5889, %v6053
    %v6055 = vpop.f32.mrb[0].mxu0
    %v6056 = vpop.f32.mrb[0].mxu0
    %v6057 = vadd.f32 %v5889, %v6056
    %v6058 = vpop.f32.mrb[0].mxu0
    %6059 = vmatprep.mubr.bf16.mxu0 0
    %6060 = vmatmul.mubr.bf16.gmra.mrb[0].mxu0 %v5832
    %v6061 = vpop.f32.mrb[0].mxu0
    %v6062 = vadd.f32 %v5889, %v6061
    %v6063 = vpop.f32.mrb[0].mxu0
    %v6064 = vpop.f32.mrb[0].mxu0
    %v6065 = vadd.f32 %v5889, %v6064
    %v6066 = vpop.f32.mrb[0].mxu0
    %6067 = vmatprep.mubr.bf16.mxu0 0
    %6068 = vmatmul.mubr.bf16.gmra.mrb[0].mxu0 %v5833
    %v6069 = vpop.f32.mrb[0].mxu0
    %v6070 = vadd.f32 %v5889, %v6069
    %v6071 = vpop.f32.mrb[0].mxu0
    %v6072 = vpop.f32.mrb[0].mxu0
    %v6073 = vadd.f32 %v5889, %v6072
    %v6074 = vpop.f32.mrb[0].mxu0
    %6075 = vmatprep.mubr.bf16.mxu0 0
    %6076 = vmatmul.mubr.bf16.gmra.mrb[0].mxu0 %v5834
    %v6077 = vpop.f32.mrb[0].mxu0
    %v6078 = vadd.f32 %v5889, %v6077
    %v6079 = vpop.f32.mrb[0].mxu0
    %v6080 = vpop.f32.mrb[0].mxu0
    %v6081 = vadd.f32 %v5889, %v6080
    %v6082 = vpop.f32.mrb[0].mxu0
    %6083 = vmatprep.mubr.bf16.mxu0 0
    %6084 = vmatmul.mubr.bf16.gmra.mrb[0].mxu0 %v5835
    %v6085 = vpop.f32.mrb[0].mxu0
    %v6086 = vadd.f32 %v5889, %v6085
    %v6087 = vpop.f32.mrb[0].mxu0
    %v6088 = vpop.f32.mrb[0].mxu0
    %v6089 = vadd.f32 %v5889, %v6088
    %v6090 = vpop.f32.mrb[0].mxu0
    %6091 = vmatprep.mubr.bf16.mxu0 0
    %6092 = vmatmul.mubr.bf16.gmra.mrb[0].mxu0 %v5836
    %v6093 = vpop.f32.mrb[0].mxu0
    %v6094 = vadd.f32 %v5889, %v6093
    %v6095 = vpop.f32.mrb[0].mxu0
    %v6096 = vpop.f32.mrb[0].mxu0
    %v6097 = vadd.f32 %v5889, %v6096
    %v6098 = vpop.f32.mrb[0].mxu0
    %6099 = vmatprep.mubr.bf16.mxu0 0
    %6100 = vmatmul.mubr.bf16.gmra.mrb[0].mxu0 %v5837
    %v6101 = vpop.f32.mrb[0].mxu0
    %v6102 = vadd.f32 %v5889, %v6101
    %v6103 = vpop.f32.mrb[0].mxu0
    %v6104 = vpop.f32.mrb[0].mxu0
    %v6105 = vadd.f32 %v5889, %v6104
    %v6106 = vpop.f32.mrb[0].mxu0
    %6107 = vmatprep.mubr.bf16.mxu0 0
    %6108 = vmatmul.mubr.bf16.gmra.mrb[0].mxu0 %v5838
    %v6109 = vpop.f32.mrb[0].mxu0
    %v6110 = vadd.f32 %v5889, %v6109
    %v6111 = vpop.f32.mrb[0].mxu0
    %v6112 = vpop.f32.mrb[0].mxu0
    %v6113 = vadd.f32 %v5889, %v6112
    %v6114 = vpop.f32.mrb[0].mxu0
    %6115 = vmatprep.mubr.bf16.mxu0 0
    %6116 = vmatmul.mubr.bf16.gmra.mrb[0].mxu0 %v5839
    %v6117 = vpop.f32.mrb[0].mxu0
    %v6118 = vadd.f32 %v5889, %v6117
    %v6119 = vpop.f32.mrb[0].mxu0
    %v6120 = vpop.f32.mrb[0].mxu0
    %v6121 = vadd.f32 %v5889, %v6120
    %v6122 = vpop.f32.mrb[0].mxu0
    %6123 = vmatprep.mubr.bf16.mxu0 0
    %6124 = vmatmul.mubr.bf16.gmra.mrb[0].mxu0 %v5840
    %v6125 = vpop.f32.mrb[0].mxu0
    %v6126 = vadd.f32 %v5889, %v6125
    %v6127 = vpop.f32.mrb[0].mxu0
    %v6128 = vpop.f32.mrb[0].mxu0
    %v6129 = vadd.f32 %v5889, %v6128
    %v6130 = vpop.f32.mrb[0].mxu0
    %6131 = vmatprep.mubr.bf16.mxu0 0
    %6132 = vmatmul.mubr.bf16.gmra.mrb[0].mxu0 %v5841
    %v6133 = vpop.f32.mrb[0].mxu0
    %v6134 = vadd.f32 %v5889, %v6133
    %v6135 = vpop.f32.mrb[0].mxu0
    %v6136 = vpop.f32.mrb[0].mxu0
    %v6137 = vadd.f32 %v5889, %v6136
    %v6138 = vpop.f32.mrb[0].mxu0
    %6139 = vmatprep.mubr.bf16.mxu0 0
    %6140 = vmatmul.mubr.bf16.gmra.mrb[0].mxu0 %v5842
    %v6141 = vpop.f32.mrb[0].mxu0
    %v6142 = vadd.f32 %v5889, %v6141
    %v6143 = vpop.f32.mrb[0].mxu0
    %v6144 = vpop.f32.mrb[0].mxu0
    %v6145 = vadd.f32 %v5889, %v6144
    %v6146 = vpop.f32.mrb[0].mxu0
    %6147 = vmatprep.mubr.bf16.mxu0 0
    %6148 = vmatmul.mubr.bf16.gmra.mrb[0].mxu0 %v5843
    %v6149 = vpop.f32.mrb[0].mxu0
    %v6150 = vadd.f32 %v5889, %v6149
    %v6151 = vpop.f32.mrb[0].mxu0
    %v6152 = vpop.f32.mrb[0].mxu0
    %v6153 = vadd.f32 %v5889, %v6152
    %v6154 = vpop.f32.mrb[0].mxu0
    %6155 = vmatprep.mubr.bf16.mxu0 0
    %6156 = vmatmul.mubr.bf16.gmra.mrb[0].mxu0 %v5844
    %v6157 = vpop.f32.mrb[0].mxu0
    %v6158 = vadd.f32 %v5889, %v6157
    %v6159 = vpop.f32.mrb[0].mxu0
    %v6160 = vpop.f32.mrb[0].mxu0
    %v6161 = vadd.f32 %v5889, %v6160
    %v6162 = vpop.f32.mrb[0].mxu0
    %6163 = vmatprep.mubr.bf16.mxu0 0
    %6164 = vmatmul.mubr.bf16.gmra.mrb[0].mxu0 %v5845
    %v6165 = vpop.f32.mrb[0].mxu0
    %v6166 = vadd.f32 %v5889, %v6165
    %v6167 = vpop.f32.mrb[0].mxu0
    %v6168 = vpop.f32.mrb[0].mxu0
    %v6169 = vadd.f32 %v5889, %v6168
    %v6170 = vpop.f32.mrb[0].mxu0
    %6171 = vmatprep.mubr.bf16.mxu0 0
    %6172 = vmatmul.mubr.bf16.gmra.mrb[0].mxu0 %v5846
    %v6173 = vpop.f32.mrb[0].mxu0
    %v6174 = vadd.f32 %v5889, %v6173
    %v6175 = vpop.f32.mrb[0].mxu0
    %v6176 = vpop.f32.mrb[0].mxu0
    %v6177 = vadd.f32 %v5889, %v6176
    %v6178 = vpop.f32.mrb[0].mxu0
    %6179 = vmatprep.mubr.bf16.mxu0 0
    %6180 = vmatmul.mubr.bf16.gmra.mrb[0].mxu0 %v5847
    %v6181 = vpop.f32.mrb[0].mxu0
    %v6182 = vadd.f32 %v5889, %v6181
    %v6183 = vpop.f32.mrb[0].mxu0
    %v6184 = vpop.f32.mrb[0].mxu0
    %v6185 = vadd.f32 %v5889, %v6184
    %v6186 = vpop.f32.mrb[0].mxu0
    %6187 = vmatprep.mubr.bf16.mxu0 0
    %6188 = vmatmul.mubr.bf16.gmra.mrb[0].mxu0 %v5848
    %v6189 = vpop.f32.mrb[0].mxu0
    %v6190 = vadd.f32 %v5889, %v6189
    %v6191 = vpop.f32.mrb[0].mxu0
    %v6192 = vpop.f32.mrb[0].mxu0
    %v6193 = vadd.f32 %v5889, %v6192
    %v6194 = vpop.f32.mrb[0].mxu0
    %6195 = vmatprep.mubr.bf16.mxu0 0
    %6196 = vmatmul.mubr.bf16.gmra.mrb[0].mxu0 %v5849
    %v6197 = vpop.f32.mrb[0].mxu0
    %v6198 = vadd.f32 %v5889, %v6197
    %v6199 = vpop.f32.mrb[0].mxu0
    %v6200 = vpop.f32.mrb[0].mxu0
    %v6201 = vadd.f32 %v5889, %v6200
    %v6202 = vpop.f32.mrb[0].mxu0
    %6203 = vmatprep.mubr.bf16.mxu0 0
    %6204 = vmatmul.mubr.bf16.gmra.mrb[0].mxu0 %v5850
    %v6205 = vpop.f32.mrb[0].mxu0
    %v6206 = vadd.f32 %v5889, %v6205
    %v6207 = vpop.f32.mrb[0].mxu0
    %v6208 = vpop.f32.mrb[0].mxu0
    %v6209 = vadd.f32 %v5889, %v6208
    %v6210 = vpop.f32.mrb[0].mxu0
    %6211 = vmatprep.mubr.bf16.mxu0 0
    %6212 = vmatmul.mubr.bf16.gmra.mrb[0].mxu0 %v5851
    %v6213 = vpop.f32.mrb[0].mxu0
    %v6214 = vadd.f32 %v5889, %v6213
    %v6215 = vpop.f32.mrb[0].mxu0
    %v6216 = vpop.f32.mrb[0].mxu0
    %v6217 = vadd.f32 %v5889, %v6216
    %v6218 = vpop.f32.mrb[0].mxu0
    %6219 = vmatprep.mubr.bf16.mxu0 0
    %6220 = vmatmul.mubr.bf16.gmra.mrb[0].mxu0 %v5852
    %v6221 = vpop.f32.mrb[0].mxu0
    %v6222 = vadd.f32 %v5889, %v6221
    %v6223 = vpop.f32.mrb[0].mxu0
    %v6224 = vpop.f32.mrb[0].mxu0
    %v6225 = vadd.f32 %v5889, %v6224
    %v6226 = vpop.f32.mrb[0].mxu0
    %6227 = vmatprep.mubr.bf16.mxu0 0
    %6228 = vmatmul.mubr.bf16.gmra.mrb[0].mxu0 %v5853
    %v6229 = vpop.f32.mrb[0].mxu0
    %v6230 = vadd.f32 %v5889, %v6229
    %v6231 = vpop.f32.mrb[0].mxu0
    %v6232 = vpop.f32.mrb[0].mxu0
    %v6233 = vadd.f32 %v5889, %v6232
    %v6234 = vpop.f32.mrb[0].mxu0
    %6235 = vmatprep.mubr.bf16.mxu0 0
    %6236 = vmatmul.mubr.bf16.gmra.mrb[0].mxu0 %v5854
    %v6237 = vpop.f32.mrb[0].mxu0
    %v6238 = vadd.f32 %v5889, %v6237
    %v6239 = vpop.f32.mrb[0].mxu0
    %v6240 = vpop.f32.mrb[0].mxu0
    %v6241 = vadd.f32 %v5889, %v6240
    %v6242 = vpop.f32.mrb[0].mxu0
    %6243 = vmatprep.mubr.bf16.mxu0 0
    %6244 = vmatmul.mubr.bf16.gmra.mrb[0].mxu0 %v5855
    %v6245 = vpop.f32.mrb[0].mxu0
    %v6246 = vadd.f32 %v5889, %v6245
    %v6247 = vpop.f32.mrb[0].mxu0
    %v6248 = vpop.f32.mrb[0].mxu0
    %v6249 = vadd.f32 %v5889, %v6248
    %v6250 = vpop.f32.mrb[0].mxu0
    %6251 = vmatprep.mubr.bf16.mxu0 0
    %6252 = vmatmul.mubr.bf16.gmra.mrb[0].mxu0 %v5856
    %v6253 = vpop.f32.mrb[0].mxu0
    %v6254 = vadd.f32 %v5889, %v6253
    %v6255 = vpop.f32.mrb[0].mxu0
    %v6256 = vpop.f32.mrb[0].mxu0
    %v6257 = vadd.f32 %v5889, %v6256
    %v6258 = vpop.f32.mrb[0].mxu0
    %6259 = vmatprep.mubr.bf16.mxu0 0
    %6260 = vmatmul.mubr.bf16.gmra.mrb[0].mxu0 %v5857
    %v6261 = vpop.f32.mrb[0].mxu0
    %v6262 = vadd.f32 %v5889, %v6261
    %v6263 = vpop.f32.mrb[0].mxu0
    %v6264 = vpop.f32.mrb[0].mxu0
    %v6265 = vadd.f32 %v5889, %v6264
    %v6266 = vpop.f32.mrb[0].mxu0
    %6267 = vmatprep.mubr.bf16.mxu0 0
    %6268 = vmatmul.mubr.bf16.gmra.mrb[0].mxu0 %v5858
    %v6269 = vpop.f32.mrb[0].mxu0
    %v6270 = vadd.f32 %v5889, %v6269
    %v6271 = vpop.f32.mrb[0].mxu0
    %v6272 = vpop.f32.mrb[0].mxu0
    %v6273 = vadd.f32 %v5889, %v6272
    %v6274 = vpop.f32.mrb[0].mxu0
    %6275 = vmatprep.mubr.bf16.mxu0 0
    %6276 = vmatmul.mubr.bf16.gmra.mrb[0].mxu0 %v5859
    %v6277 = vpop.f32.mrb[0].mxu0
    %v6278 = vadd.f32 %v5889, %v6277
    %v6279 = vpop.f32.mrb[0].mxu0
    %v6280 = vpop.f32.mrb[0].mxu0
    %v6281 = vadd.f32 %v5889, %v6280
    %v6282 = vpop.f32.mrb[0].mxu0
    %6283 = vmatprep.mubr.bf16.mxu0 0
    %6284 = vmatmul.mubr.bf16.gmra.mrb[0].mxu0 %v5860
    %v6285 = vpop.f32.mrb[0].mxu0
    %v6286 = vadd.f32 %v5889, %v6285
    %v6287 = vpop.f32.mrb[0].mxu0
    %v6288 = vpop.f32.mrb[0].mxu0
    %v6289 = vadd.f32 %v5889, %v6288
    %v6290 = vpop.f32.mrb[0].mxu0
    %6291 = vmatprep.mubr.bf16.mxu0 0
    %6292 = vmatmul.mubr.bf16.gmra.mrb[0].mxu0 %v5861
    %v6293 = vpop.f32.mrb[0].mxu0
    %v6294 = vadd.f32 %v5889, %v6293
    %v6295 = vpop.f32.mrb[0].mxu0
    %v6296 = vpop.f32.mrb[0].mxu0
    %v6297 = vadd.f32 %v5889, %v6296
    %v6298 = vpop.f32.mrb[0].mxu0
    %6299 = vmatprep.mubr.bf16.mxu0 0
    %6300 = vmatmul.mubr.bf16.gmra.mrb[0].mxu0 %v5862
    %v6301 = vpop.f32.mrb[0].mxu0
    %v6302 = vadd.f32 %v5889, %v6301
    %v6303 = vpop.f32.mrb[0].mxu0
    %v6304 = vpop.f32.mrb[0].mxu0
    %v6305 = vadd.f32 %v5889, %v6304
    %v6306 = vpop.f32.mrb[0].mxu0
    %6307 = vmatprep.mubr.bf16.mxu0 0
    %6308 = vmatmul.mubr.bf16.gmra.mrb[0].mxu0 %v5863
    %v6309 = vpop.f32.mrb[0].mxu0
    %v6310 = vadd.f32 %v5889, %v6309
    %v6311 = vpop.f32.mrb[0].mxu0
    %v6312 = vpop.f32.mrb[0].mxu0
    %v6313 = vadd.f32 %v5889, %v6312
    %v6314 = vpop.f32.mrb[0].mxu0
    %6315 = vmatprep.mubr.bf16.mxu0 0
    %6316 = vmatmul.mubr.bf16.gmra.mrb[0].mxu0 %v5864
    %v6317 = vpop.f32.mrb[0].mxu0
    %v6318 = vadd.f32 %v5889, %v6317
    %v6319 = vpop.f32.mrb[0].mxu0
    %v6320 = vpop.f32.mrb[0].mxu0
    %v6321 = vadd.f32 %v5889, %v6320
    %v6322 = vpop.f32.mrb[0].mxu0
    %6323 = vmatprep.mubr.bf16.mxu0 0
    %6324 = vmatmul.mubr.bf16.gmra.mrb[0].mxu0 %v5865
    %v6325 = vpop.f32.mrb[0].mxu0
    %v6326 = vadd.f32 %v5889, %v6325
    %v6327 = vpop.f32.mrb[0].mxu0
    %v6328 = vpop.f32.mrb[0].mxu0
    %v6329 = vadd.f32 %v5889, %v6328
    %v6330 = vpop.f32.mrb[0].mxu0
    %6331 = vmatprep.mubr.bf16.mxu0 0
    %6332 = vmatmul.mubr.bf16.gmra.mrb[0].mxu0 %v5866
    %v6333 = vpop.f32.mrb[0].mxu0
    %v6334 = vadd.f32 %v5889, %v6333
    %v6335 = vpop.f32.mrb[0].mxu0
    %v6336 = vpop.f32.mrb[0].mxu0
    %v6337 = vadd.f32 %v5889, %v6336
    %v6338 = vpop.f32.mrb[0].mxu0
    %6339 = vmatprep.mubr.bf16.mxu0 0
    %6340 = vmatmul.mubr.bf16.gmra.mrb[0].mxu0 %v5867
    %v6341 = vpop.f32.mrb[0].mxu0
    %v6342 = vadd.f32 %v5889, %v6341
    %v6343 = vpop.f32.mrb[0].mxu0
    %v6344 = vpop.f32.mrb[0].mxu0
    %v6345 = vadd.f32 %v5889, %v6344
    %v6346 = vpop.f32.mrb[0].mxu0
    %6347 = vmatprep.mubr.bf16.mxu0 0
    %6348 = vmatmul.mubr.bf16.gmra.mrb[0].mxu0 %v5868
    %v6349 = vpop.f32.mrb[0].mxu0
    %v6350 = vadd.f32 %v5889, %v6349
    %v6351 = vpop.f32.mrb[0].mxu0
    %v6352 = vpop.f32.mrb[0].mxu0
    %v6353 = vadd.f32 %v5889, %v6352
    %v6354 = vpop.f32.mrb[0].mxu0
    %6355 = vmatprep.mubr.bf16.mxu0 0
    %6356 = vmatmul.mubr.bf16.gmra.mrb[0].mxu0 %v5869
    %v6357 = vpop.f32.mrb[0].mxu0
    %v6358 = vadd.f32 %v5889, %v6357
    %v6359 = vpop.f32.mrb[0].mxu0
    %v6360 = vpop.f32.mrb[0].mxu0
    %v6361 = vadd.f32 %v5889, %v6360
    %v6362 = vpop.f32.mrb[0].mxu0
    %6363 = vmatprep.mubr.bf16.mxu0 0
    %6364 = vmatmul.mubr.bf16.gmra.mrb[0].mxu0 %v5870
    %v6365 = vpop.f32.mrb[0].mxu0
    %v6366 = vadd.f32 %v5889, %v6365
    %v6367 = vpop.f32.mrb[0].mxu0
    %v6368 = vpop.f32.mrb[0].mxu0
    %v6369 = vadd.f32 %v5889, %v6368
    %v6370 = vpop.f32.mrb[0].mxu0
    %6371 = vmatprep.mubr.bf16.mxu0 0
    %6372 = vmatmul.mubr.bf16.gmra.mrb[0].mxu0 %v5871
    %v6373 = vpop.f32.mrb[0].mxu0
    %v6374 = vadd.f32 %v5889, %v6373
    %v6375 = vpop.f32.mrb[0].mxu0
    %v6376 = vpop.f32.mrb[0].mxu0
    %v6377 = vadd.f32 %v5889, %v6376
    %v6378 = vpop.f32.mrb[0].mxu0
    %6379 = vmatprep.mubr.bf16.mxu0 0
    %6380 = vmatmul.mubr.bf16.gmra.mrb[0].mxu0 %v5872
    %v6381 = vpop.f32.mrb[0].mxu0
    %v6382 = vadd.f32 %v5889, %v6381
    %v6383 = vpop.f32.mrb[0].mxu0
    %v6384 = vpop.f32.mrb[0].mxu0
    %v6385 = vadd.f32 %v5889, %v6384
    %v6386 = vpop.f32.mrb[0].mxu0
    %6387 = vmatprep.mubr.bf16.mxu0 0
    %6388 = vmatmul.mubr.bf16.gmra.mrb[0].mxu0 %v5873
    %v6389 = vpop.f32.mrb[0].mxu0
    %v6390 = vadd.f32 %v5889, %v6389
    %v6391 = vpop.f32.mrb[0].mxu0
    %v6392 = vpop.f32.mrb[0].mxu0
    %v6393 = vadd.f32 %v5889, %v6392
    %v6394 = vpop.f32.mrb[0].mxu0
    %6395 = vmatprep.mubr.bf16.mxu0 0
    %6396 = vmatmul.mubr.bf16.gmra.mrb[0].mxu0 %v5874
    %v6397 = vpop.f32.mrb[0].mxu0
    %v6398 = vadd.f32 %v5889, %v6397
    %v6399 = vpop.f32.mrb[0].mxu0
    %v6400 = vpop.f32.mrb[0].mxu0
    %v6401 = vadd.f32 %v5889, %v6400
    %v6402 = vpop.f32.mrb[0].mxu0
    %6403 = vmatprep.mubr.bf16.mxu0 0
    %6404 = vmatmul.mubr.bf16.gmra.mrb[0].mxu0 %v5875
    %v6405 = vpop.f32.mrb[0].mxu0
    %v6406 = vadd.f32 %v5889, %v6405
    %v6407 = vpop.f32.mrb[0].mxu0
    %v6408 = vpop.f32.mrb[0].mxu0
    %v6409 = vadd.f32 %v5889, %v6408
    %v6410 = vpop.f32.mrb[0].mxu0
    %6411 = vmatprep.mubr.bf16.mxu0 0
    %6412 = vmatmul.mubr.bf16.gmra.mrb[0].mxu0 %v5876
    %v6413 = vpop.f32.mrb[0].mxu0
    %v6414 = vadd.f32 %v5889, %v6413
    %v6415 = vpop.f32.mrb[0].mxu0
    %v6416 = vpop.f32.mrb[0].mxu0
    %v6417 = vadd.f32 %v5889, %v6416
    %v6418 = vpop.f32.mrb[0].mxu0
    %6419 = vmatprep.mubr.bf16.mxu0 0
    %6420 = vmatmul.mubr.bf16.gmra.mrb[0].mxu0 %v5877
    %v6421 = vpop.f32.mrb[0].mxu0
    %v6422 = vadd.f32 %v5889, %v6421
    %v6423 = vpop.f32.mrb[0].mxu0
    %v6424 = vpop.f32.mrb[0].mxu0
    %v6425 = vadd.f32 %v5889, %v6424
    %v6426 = vpop.f32.mrb[0].mxu0
    %6427 = vmatprep.mubr.bf16.mxu0 0
    %6428 = vmatmul.mubr.bf16.gmra.mrb[0].mxu0 %v5878
    %v6429 = vpop.f32.mrb[0].mxu0
    %v6430 = vadd.f32 %v5889, %v6429
    %v6431 = vpop.f32.mrb[0].mxu0
    %v6432 = vpop.f32.mrb[0].mxu0
    %v6433 = vadd.f32 %v5889, %v6432
    %v6434 = vpop.f32.mrb[0].mxu0
    %6435 = vmatprep.mubr.bf16.mxu0 0
    %6436 = vmatmul.mubr.bf16.gmra.mrb[0].mxu0 %v5879
    %v6437 = vpop.f32.mrb[0].mxu0
    %v6438 = vadd.f32 %v5889, %v6437
    %v6439 = vpop.f32.mrb[0].mxu0
    %v6440 = vpop.f32.mrb[0].mxu0
    %v6441 = vadd.f32 %v5889, %v6440
    %v6442 = vpop.f32.mrb[0].mxu0
    %6443 = vmatprep.mubr.bf16.mxu0 0
    %6444 = vmatmul.mubr.bf16.gmra.mrb[0].mxu0 %v5880
    %v6445 = vpop.f32.mrb[0].mxu0
    %v6446 = vadd.f32 %v5889, %v6445
    %v6447 = vpop.f32.mrb[0].mxu0
    %v6448 = vpop.f32.mrb[0].mxu0
    %v6449 = vadd.f32 %v5889, %v6448
    %v6450 = vpop.f32.mrb[0].mxu0
    %6451 = vmatprep.mubr.bf16.mxu0 0
    %6452 = vmatmul.mubr.bf16.gmra.mrb[0].mxu0 %v5881
    %v6453 = vpop.f32.mrb[0].mxu0
    %v6454 = vadd.f32 %v5889, %v6453
    %v6455 = vpop.f32.mrb[0].mxu0
    %v6456 = vpop.f32.mrb[0].mxu0
    %v6457 = vadd.f32 %v5889, %v6456
    %v6458 = vpop.f32.mrb[0].mxu0
    %6459 = vmatprep.mubr.bf16.mxu0 0
    %6460 = vmatmul.mubr.bf16.gmra.mrb[0].mxu0 %v5882
    %v6461 = vpop.f32.mrb[0].mxu0
    %v6462 = vadd.f32 %v5889, %v6461
    %v6463 = vpop.f32.mrb[0].mxu0
    %v6464 = vpop.f32.mrb[0].mxu0
    %v6465 = vadd.f32 %v5889, %v6464
    %v6466 = vpop.f32.mrb[0].mxu0
    %6467 = vmatprep.mubr.bf16.mxu0 0
    %6468 = vmatmul.mubr.bf16.gmra.mrb[0].mxu0 %v5883
    %v6469 = vpop.f32.mrb[0].mxu0
    %v6470 = vadd.f32 %v5889, %v6469
    %v6471 = vpop.f32.mrb[0].mxu0
    %v6472 = vpop.f32.mrb[0].mxu0
    %v6473 = vadd.f32 %v5889, %v6472
    %v6474 = vpop.f32.mrb[0].mxu0
    %6475 = vmatprep.mubr.bf16.mxu0 0
    %6476 = vmatmul.mubr.bf16.gmra.mrb[0].mxu0 %v5884
    %v6477 = vpop.f32.mrb[0].mxu0
    %v6478 = vadd.f32 %v5889, %v6477
    %v6479 = vpop.f32.mrb[0].mxu0
    %v6480 = vpop.f32.mrb[0].mxu0
    %v6481 = vadd.f32 %v5889, %v6480
    %v6482 = vpop.f32.mrb[0].mxu0
    %6483 = vdwg.mxu0
    %6484 = vmax.xlane.f32.xlu0 %v5974
    %v6485 = vpop.xlane.xlu0 %6484
    %6486 = vmax.xlane.f32.xlu0 %v5977
    %v6487 = vpop.xlane.xlu0 %6486
    %6488 = vmax.xlane.f32.xlu0 %v5982
    %v6489 = vpop.xlane.xlu0 %6488
    %6490 = vmax.xlane.f32.xlu0 %v5985
    %v6491 = vpop.xlane.xlu0 %6490
    %6492 = vmax.xlane.f32.xlu0 %v5990
    %v6493 = vpop.xlane.xlu0 %6492
    %6494 = vmax.xlane.f32.xlu0 %v5993
    %v6495 = vpop.xlane.xlu0 %6494
    %6496 = vmax.xlane.f32.xlu0 %v5998
    %v6497 = vpop.xlane.xlu0 %6496
    %6498 = vmax.xlane.f32.xlu0 %v6001
    %v6499 = vpop.xlane.xlu0 %6498
    %6500 = vmax.xlane.f32.xlu0 %v6006
    %v6501 = vpop.xlane.xlu0 %6500
    %6502 = vmax.xlane.f32.xlu0 %v6009
    %v6503 = vpop.xlane.xlu0 %6502
    %6504 = vmax.xlane.f32.xlu0 %v6014
    %v6505 = vpop.xlane.xlu0 %6504
    %6506 = vmax.xlane.f32.xlu0 %v6017
    %v6507 = vpop.xlane.xlu0 %6506
    %6508 = vmax.xlane.f32.xlu0 %v6022
    %v6509 = vpop.xlane.xlu0 %6508
    %6510 = vmax.xlane.f32.xlu0 %v6025
    %v6511 = vpop.xlane.xlu0 %6510
    %6512 = vmax.xlane.f32.xlu0 %v6030
    %v6513 = vpop.xlane.xlu0 %6512
    %6514 = vmax.xlane.f32.xlu0 %v6033
    %v6515 = vpop.xlane.xlu0 %6514
    %6516 = vmax.xlane.f32.xlu0 %v6038
    %v6517 = vpop.xlane.xlu0 %6516
    %6518 = vmax.xlane.f32.xlu0 %v6041
    %v6519 = vpop.xlane.xlu0 %6518
    %6520 = vmax.xlane.f32.xlu0 %v6046
    %v6521 = vpop.xlane.xlu0 %6520
    %6522 = vmax.xlane.f32.xlu0 %v6049
    %v6523 = vpop.xlane.xlu0 %6522
    %6524 = vmax.xlane.f32.xlu0 %v6054
    %v6525 = vpop.xlane.xlu0 %6524
    %6526 = vmax.xlane.f32.xlu0 %v6057
    %v6527 = vpop.xlane.xlu0 %6526
    %6528 = vmax.xlane.f32.xlu0 %v6062
    %v6529 = vpop.xlane.xlu0 %6528
    %6530 = vmax.xlane.f32.xlu0 %v6065
    %v6531 = vpop.xlane.xlu0 %6530
    %6532 = vmax.xlane.f32.xlu0 %v6070
    %v6533 = vpop.xlane.xlu0 %6532
    %6534 = vmax.xlane.f32.xlu0 %v6073
    %v6535 = vpop.xlane.xlu0 %6534
    %6536 = vmax.xlane.f32.xlu0 %v6078
    %v6537 = vpop.xlane.xlu0 %6536
    %6538 = vmax.xlane.f32.xlu0 %v6081
    %v6539 = vpop.xlane.xlu0 %6538
    %6540 = vmax.xlane.f32.xlu0 %v6086
    %v6541 = vpop.xlane.xlu0 %6540
    %6542 = vmax.xlane.f32.xlu0 %v6089
    %v6543 = vpop.xlane.xlu0 %6542
    %6544 = vmax.xlane.f32.xlu0 %v6094
    %v6545 = vpop.xlane.xlu0 %6544
    %6546 = vmax.xlane.f32.xlu0 %v6097
    %v6547 = vpop.xlane.xlu0 %6546
    %6548 = vmax.xlane.f32.xlu0 %v6102
    %v6549 = vpop.xlane.xlu0 %6548
    %6550 = vmax.xlane.f32.xlu0 %v6105
    %v6551 = vpop.xlane.xlu0 %6550
    %6552 = vmax.xlane.f32.xlu0 %v6110
    %v6553 = vpop.xlane.xlu0 %6552
    %6554 = vmax.xlane.f32.xlu0 %v6113
    %v6555 = vpop.xlane.xlu0 %6554
    %6556 = vmax.xlane.f32.xlu0 %v6118
    %v6557 = vpop.xlane.xlu0 %6556
    %6558 = vmax.xlane.f32.xlu0 %v6121
    %v6559 = vpop.xlane.xlu0 %6558
    %6560 = vmax.xlane.f32.xlu0 %v6126
    %v6561 = vpop.xlane.xlu0 %6560
    %6562 = vmax.xlane.f32.xlu0 %v6129
    %v6563 = vpop.xlane.xlu0 %6562
    %6564 = vmax.xlane.f32.xlu0 %v6134
    %v6565 = vpop.xlane.xlu0 %6564
    %6566 = vmax.xlane.f32.xlu0 %v6137
    %v6567 = vpop.xlane.xlu0 %6566
    %6568 = vmax.xlane.f32.xlu0 %v6142
    %v6569 = vpop.xlane.xlu0 %6568
    %6570 = vmax.xlane.f32.xlu0 %v6145
    %v6571 = vpop.xlane.xlu0 %6570
    %6572 = vmax.xlane.f32.xlu0 %v6150
    %v6573 = vpop.xlane.xlu0 %6572
    %6574 = vmax.xlane.f32.xlu0 %v6153
    %v6575 = vpop.xlane.xlu0 %6574
    %6576 = vmax.xlane.f32.xlu0 %v6158
    %v6577 = vpop.xlane.xlu0 %6576
    %6578 = vmax.xlane.f32.xlu0 %v6161
    %v6579 = vpop.xlane.xlu0 %6578
    %6580 = vmax.xlane.f32.xlu0 %v6166
    %v6581 = vpop.xlane.xlu0 %6580
    %6582 = vmax.xlane.f32.xlu0 %v6169
    %v6583 = vpop.xlane.xlu0 %6582
    %6584 = vmax.xlane.f32.xlu0 %v6174
    %v6585 = vpop.xlane.xlu0 %6584
    %6586 = vmax.xlane.f32.xlu0 %v6177
    %v6587 = vpop.xlane.xlu0 %6586
    %6588 = vmax.xlane.f32.xlu0 %v6182
    %v6589 = vpop.xlane.xlu0 %6588
    %6590 = vmax.xlane.f32.xlu0 %v6185
    %v6591 = vpop.xlane.xlu0 %6590
    %6592 = vmax.xlane.f32.xlu0 %v6190
    %v6593 = vpop.xlane.xlu0 %6592
    %6594 = vmax.xlane.f32.xlu0 %v6193
    %v6595 = vpop.xlane.xlu0 %6594
    %6596 = vmax.xlane.f32.xlu0 %v6198
    %v6597 = vpop.xlane.xlu0 %6596
    %6598 = vmax.xlane.f32.xlu0 %v6201
    %v6599 = vpop.xlane.xlu0 %6598
    %6600 = vmax.xlane.f32.xlu0 %v6206
    %v6601 = vpop.xlane.xlu0 %6600
    %6602 = vmax.xlane.f32.xlu0 %v6209
    %v6603 = vpop.xlane.xlu0 %6602
    %6604 = vmax.xlane.f32.xlu0 %v6214
    %v6605 = vpop.xlane.xlu0 %6604
    %6606 = vmax.xlane.f32.xlu0 %v6217
    %v6607 = vpop.xlane.xlu0 %6606
    %6608 = vmax.xlane.f32.xlu0 %v6222
    %v6609 = vpop.xlane.xlu0 %6608
    %6610 = vmax.xlane.f32.xlu0 %v6225
    %v6611 = vpop.xlane.xlu0 %6610
    %6612 = vmax.xlane.f32.xlu0 %v6230
    %v6613 = vpop.xlane.xlu0 %6612
    %6614 = vmax.xlane.f32.xlu0 %v6233
    %v6615 = vpop.xlane.xlu0 %6614
    %6616 = vmax.xlane.f32.xlu0 %v6238
    %v6617 = vpop.xlane.xlu0 %6616
    %6618 = vmax.xlane.f32.xlu0 %v6241
    %v6619 = vpop.xlane.xlu0 %6618
    %6620 = vmax.xlane.f32.xlu0 %v6246
    %v6621 = vpop.xlane.xlu0 %6620
    %6622 = vmax.xlane.f32.xlu0 %v6249
    %v6623 = vpop.xlane.xlu0 %6622
    %6624 = vmax.xlane.f32.xlu0 %v6254
    %v6625 = vpop.xlane.xlu0 %6624
    %6626 = vmax.xlane.f32.xlu0 %v6257
    %v6627 = vpop.xlane.xlu0 %6626
    %6628 = vmax.xlane.f32.xlu0 %v6262
    %v6629 = vpop.xlane.xlu0 %6628
    %6630 = vmax.xlane.f32.xlu0 %v6265
    %v6631 = vpop.xlane.xlu0 %6630
    %6632 = vmax.xlane.f32.xlu0 %v6270
    %v6633 = vpop.xlane.xlu0 %6632
    %6634 = vmax.xlane.f32.xlu0 %v6273
    %v6635 = vpop.xlane.xlu0 %6634
    %6636 = vmax.xlane.f32.xlu0 %v6278
    %v6637 = vpop.xlane.xlu0 %6636
    %6638 = vmax.xlane.f32.xlu0 %v6281
    %v6639 = vpop.xlane.xlu0 %6638
    %6640 = vmax.xlane.f32.xlu0 %v6286
    %v6641 = vpop.xlane.xlu0 %6640
    %6642 = vmax.xlane.f32.xlu0 %v6289
    %v6643 = vpop.xlane.xlu0 %6642
    %6644 = vmax.xlane.f32.xlu0 %v6294
    %v6645 = vpop.xlane.xlu0 %6644
    %6646 = vmax.xlane.f32.xlu0 %v6297
    %v6647 = vpop.xlane.xlu0 %6646
    %6648 = vmax.xlane.f32.xlu0 %v6302
    %v6649 = vpop.xlane.xlu0 %6648
    %6650 = vmax.xlane.f32.xlu0 %v6305
    %v6651 = vpop.xlane.xlu0 %6650
    %6652 = vmax.xlane.f32.xlu0 %v6310
    %v6653 = vpop.xlane.xlu0 %6652
    %6654 = vmax.xlane.f32.xlu0 %v6313
    %v6655 = vpop.xlane.xlu0 %6654
    %6656 = vmax.xlane.f32.xlu0 %v6318
    %v6657 = vpop.xlane.xlu0 %6656
    %6658 = vmax.xlane.f32.xlu0 %v6321
    %v6659 = vpop.xlane.xlu0 %6658
    %6660 = vmax.xlane.f32.xlu0 %v6326
    %v6661 = vpop.xlane.xlu0 %6660
    %6662 = vmax.xlane.f32.xlu0 %v6329
    %v6663 = vpop.xlane.xlu0 %6662
    %6664 = vmax.xlane.f32.xlu0 %v6334
    %v6665 = vpop.xlane.xlu0 %6664
    %6666 = vmax.xlane.f32.xlu0 %v6337
    %v6667 = vpop.xlane.xlu0 %6666
    %6668 = vmax.xlane.f32.xlu0 %v6342
    %v6669 = vpop.xlane.xlu0 %6668
    %6670 = vmax.xlane.f32.xlu0 %v6345
    %v6671 = vpop.xlane.xlu0 %6670
    %6672 = vmax.xlane.f32.xlu0 %v6350
    %v6673 = vpop.xlane.xlu0 %6672
    %6674 = vmax.xlane.f32.xlu0 %v6353
    %v6675 = vpop.xlane.xlu0 %6674
    %6676 = vmax.xlane.f32.xlu0 %v6358
    %v6677 = vpop.xlane.xlu0 %6676
    %6678 = vmax.xlane.f32.xlu0 %v6361
    %v6679 = vpop.xlane.xlu0 %6678
    %6680 = vmax.xlane.f32.xlu0 %v6366
    %v6681 = vpop.xlane.xlu0 %6680
    %6682 = vmax.xlane.f32.xlu0 %v6369
    %v6683 = vpop.xlane.xlu0 %6682
    %6684 = vmax.xlane.f32.xlu0 %v6374
    %v6685 = vpop.xlane.xlu0 %6684
    %6686 = vmax.xlane.f32.xlu0 %v6377
    %v6687 = vpop.xlane.xlu0 %6686
    %6688 = vmax.xlane.f32.xlu0 %v6382
    %v6689 = vpop.xlane.xlu0 %6688
    %6690 = vmax.xlane.f32.xlu0 %v6385
    %v6691 = vpop.xlane.xlu0 %6690
    %6692 = vmax.xlane.f32.xlu0 %v6390
    %v6693 = vpop.xlane.xlu0 %6692
    %6694 = vmax.xlane.f32.xlu0 %v6393
    %v6695 = vpop.xlane.xlu0 %6694
    %6696 = vmax.xlane.f32.xlu0 %v6398
    %v6697 = vpop.xlane.xlu0 %6696
    %6698 = vmax.xlane.f32.xlu0 %v6401
    %v6699 = vpop.xlane.xlu0 %6698
    %6700 = vmax.xlane.f32.xlu0 %v6406
    %v6701 = vpop.xlane.xlu0 %6700
    %6702 = vmax.xlane.f32.xlu0 %v6409
    %v6703 = vpop.xlane.xlu0 %6702
    %6704 = vmax.xlane.f32.xlu0 %v6414
    %v6705 = vpop.xlane.xlu0 %6704
    %6706 = vmax.xlane.f32.xlu0 %v6417
    %v6707 = vpop.xlane.xlu0 %6706
    %6708 = vmax.xlane.f32.xlu0 %v6422
    %v6709 = vpop.xlane.xlu0 %6708
    %6710 = vmax.xlane.f32.xlu0 %v6425
    %v6711 = vpop.xlane.xlu0 %6710
    %6712 = vmax.xlane.f32.xlu0 %v6430
    %v6713 = vpop.xlane.xlu0 %6712
    %6714 = vmax.xlane.f32.xlu0 %v6433
    %v6715 = vpop.xlane.xlu0 %6714
    %6716 = vmax.xlane.f32.xlu0 %v6438
    %v6717 = vpop.xlane.xlu0 %6716
    %6718 = vmax.xlane.f32.xlu0 %v6441
    %v6719 = vpop.xlane.xlu0 %6718
    %6720 = vmax.xlane.f32.xlu0 %v6446
    %v6721 = vpop.xlane.xlu0 %6720
    %6722 = vmax.xlane.f32.xlu0 %v6449
    %v6723 = vpop.xlane.xlu0 %6722
    %6724 = vmax.xlane.f32.xlu0 %v6454
    %v6725 = vpop.xlane.xlu0 %6724
    %6726 = vmax.xlane.f32.xlu0 %v6457
    %v6727 = vpop.xlane.xlu0 %6726
    %6728 = vmax.xlane.f32.xlu0 %v6462
    %v6729 = vpop.xlane.xlu0 %6728
    %6730 = vmax.xlane.f32.xlu0 %v6465
    %v6731 = vpop.xlane.xlu0 %6730
    %6732 = vmax.xlane.f32.xlu0 %v6470
    %v6733 = vpop.xlane.xlu0 %6732
    %6734 = vmax.xlane.f32.xlu0 %v6473
    %v6735 = vpop.xlane.xlu0 %6734
    %6736 = vmax.xlane.f32.xlu0 %v6478
    %v6737 = vpop.xlane.xlu0 %6736
    %6738 = vmax.xlane.f32.xlu0 %v6481
    %v6739 = vpop.xlane.xlu0 %6738
    %v6740 = vsub.f32 %v5974, %v6485
    %v6741 = vsub.f32 %v5977, %v6487
    %v6742 = vsub.f32 %v5982, %v6489
    %v6743 = vsub.f32 %v5985, %v6491
    %v6744 = vsub.f32 %v5990, %v6493
    %v6745 = vsub.f32 %v5993, %v6495
    %v6746 = vsub.f32 %v5998, %v6497
    %v6747 = vsub.f32 %v6001, %v6499
    %v6748 = vsub.f32 %v6006, %v6501
    %v6749 = vsub.f32 %v6009, %v6503
    %v6750 = vsub.f32 %v6014, %v6505
    %v6751 = vsub.f32 %v6017, %v6507
    %v6752 = vsub.f32 %v6022, %v6509
    %v6753 = vsub.f32 %v6025, %v6511
    %v6754 = vsub.f32 %v6030, %v6513
    %v6755 = vsub.f32 %v6033, %v6515
    %v6756 = vsub.f32 %v6038, %v6517
    %v6757 = vsub.f32 %v6041, %v6519
    %v6758 = vsub.f32 %v6046, %v6521
    %v6759 = vsub.f32 %v6049, %v6523
    %v6760 = vsub.f32 %v6054, %v6525
    %v6761 = vsub.f32 %v6057, %v6527
    %v6762 = vsub.f32 %v6062, %v6529
    %v6763 = vsub.f32 %v6065, %v6531
    %v6764 = vsub.f32 %v6070, %v6533
    %v6765 = vsub.f32 %v6073, %v6535
    %v6766 = vsub.f32 %v6078, %v6537
    %v6767 = vsub.f32 %v6081, %v6539
    %v6768 = vsub.f32 %v6086, %v6541
    %v6769 = vsub.f32 %v6089, %v6543
    %v6770 = vsub.f32 %v6094, %v6545
    %v6771 = vsub.f32 %v6097, %v6547
    %v6772 = vsub.f32 %v6102, %v6549
    %v6773 = vsub.f32 %v6105, %v6551
    %v6774 = vsub.f32 %v6110, %v6553
    %v6775 = vsub.f32 %v6113, %v6555
    %v6776 = vsub.f32 %v6118, %v6557
    %v6777 = vsub.f32 %v6121, %v6559
    %v6778 = vsub.f32 %v6126, %v6561
    %v6779 = vsub.f32 %v6129, %v6563
    %v6780 = vsub.f32 %v6134, %v6565
    %v6781 = vsub.f32 %v6137, %v6567
    %v6782 = vsub.f32 %v6142, %v6569
    %v6783 = vsub.f32 %v6145, %v6571
    %v6784 = vsub.f32 %v6150, %v6573
    %v6785 = vsub.f32 %v6153, %v6575
    %v6786 = vsub.f32 %v6158, %v6577
    %v6787 = vsub.f32 %v6161, %v6579
    %v6788 = vsub.f32 %v6166, %v6581
    %v6789 = vsub.f32 %v6169, %v6583
    %v6790 = vsub.f32 %v6174, %v6585
    %v6791 = vsub.f32 %v6177, %v6587
    %v6792 = vsub.f32 %v6182, %v6589
    %v6793 = vsub.f32 %v6185, %v6591
    %v6794 = vsub.f32 %v6190, %v6593
    %v6795 = vsub.f32 %v6193, %v6595
    %v6796 = vsub.f32 %v6198, %v6597
    %v6797 = vsub.f32 %v6201, %v6599
    %v6798 = vsub.f32 %v6206, %v6601
    %v6799 = vsub.f32 %v6209, %v6603
    %v6800 = vsub.f32 %v6214, %v6605
    %v6801 = vsub.f32 %v6217, %v6607
    %v6802 = vsub.f32 %v6222, %v6609
    %v6803 = vsub.f32 %v6225, %v6611
    %v6804 = vsub.f32 %v6230, %v6613
    %v6805 = vsub.f32 %v6233, %v6615
    %v6806 = vsub.f32 %v6238, %v6617
    %v6807 = vsub.f32 %v6241, %v6619
    %v6808 = vsub.f32 %v6246, %v6621
    %v6809 = vsub.f32 %v6249, %v6623
    %v6810 = vsub.f32 %v6254, %v6625
    %v6811 = vsub.f32 %v6257, %v6627
    %v6812 = vsub.f32 %v6262, %v6629
    %v6813 = vsub.f32 %v6265, %v6631
    %v6814 = vsub.f32 %v6270, %v6633
    %v6815 = vsub.f32 %v6273, %v6635
    %v6816 = vsub.f32 %v6278, %v6637
    %v6817 = vsub.f32 %v6281, %v6639
    %v6818 = vsub.f32 %v6286, %v6641
    %v6819 = vsub.f32 %v6289, %v6643
    %v6820 = vsub.f32 %v6294, %v6645
    %v6821 = vsub.f32 %v6297, %v6647
    %v6822 = vsub.f32 %v6302, %v6649
    %v6823 = vsub.f32 %v6305, %v6651
    %v6824 = vsub.f32 %v6310, %v6653
    %v6825 = vsub.f32 %v6313, %v6655
    %v6826 = vsub.f32 %v6318, %v6657
    %v6827 = vsub.f32 %v6321, %v6659
    %v6828 = vsub.f32 %v6326, %v6661
    %v6829 = vsub.f32 %v6329, %v6663
    %v6830 = vsub.f32 %v6334, %v6665
    %v6831 = vsub.f32 %v6337, %v6667
    %v6832 = vsub.f32 %v6342, %v6669
    %v6833 = vsub.f32 %v6345, %v6671
    %v6834 = vsub.f32 %v6350, %v6673
    %v6835 = vsub.f32 %v6353, %v6675
    %v6836 = vsub.f32 %v6358, %v6677
    %v6837 = vsub.f32 %v6361, %v6679
    %v6838 = vsub.f32 %v6366, %v6681
    %v6839 = vsub.f32 %v6369, %v6683
    %v6840 = vsub.f32 %v6374, %v6685
    %v6841 = vsub.f32 %v6377, %v6687
    %v6842 = vsub.f32 %v6382, %v6689
    %v6843 = vsub.f32 %v6385, %v6691
    %v6844 = vsub.f32 %v6390, %v6693
    %v6845 = vsub.f32 %v6393, %v6695
    %v6846 = vsub.f32 %v6398, %v6697
    %v6847 = vsub.f32 %v6401, %v6699
    %v6848 = vsub.f32 %v6406, %v6701
    %v6849 = vsub.f32 %v6409, %v6703
    %v6850 = vsub.f32 %v6414, %v6705
    %v6851 = vsub.f32 %v6417, %v6707
    %v6852 = vsub.f32 %v6422, %v6709
    %v6853 = vsub.f32 %v6425, %v6711
    %v6854 = vsub.f32 %v6430, %v6713
    %v6855 = vsub.f32 %v6433, %v6715
    %v6856 = vsub.f32 %v6438, %v6717
    %v6857 = vsub.f32 %v6441, %v6719
    %v6858 = vsub.f32 %v6446, %v6721
    %v6859 = vsub.f32 %v6449, %v6723
    %v6860 = vsub.f32 %v6454, %v6725
    %v6861 = vsub.f32 %v6457, %v6727
    %v6862 = vsub.f32 %v6462, %v6729
    %v6863 = vsub.f32 %v6465, %v6731
    %v6864 = vsub.f32 %v6470, %v6733
    %v6865 = vsub.f32 %v6473, %v6735
    %v6866 = vsub.f32 %v6478, %v6737
    %v6867 = vsub.f32 %v6481, %v6739
    %v6868 = vmul.f32 %v6740, 1.442695
    %v6869 = vpow.pop %v6868
    %v6870 = vmul.f32 %v6741, 1.442695
    %v6871 = vpow.pop %v6870
    %v6872 = vmul.f32 %v6742, 1.442695
    %v6873 = vpow.pop %v6872
    %v6874 = vmul.f32 %v6743, 1.442695
    %v6875 = vpow.pop %v6874
    %v6876 = vmul.f32 %v6744, 1.442695
    %v6877 = vpow.pop %v6876
    %v6878 = vmul.f32 %v6745, 1.442695
    %v6879 = vpow.pop %v6878
    %v6880 = vmul.f32 %v6746, 1.442695
    %v6881 = vpow.pop %v6880
    %v6882 = vmul.f32 %v6747, 1.442695
    %v6883 = vpow.pop %v6882
    %v6884 = vmul.f32 %v6748, 1.442695
    %v6885 = vpow.pop %v6884
    %v6886 = vmul.f32 %v6749, 1.442695
    %v6887 = vpow.pop %v6886
    %v6888 = vmul.f32 %v6750, 1.442695
    %v6889 = vpow.pop %v6888
    %v6890 = vmul.f32 %v6751, 1.442695
    %v6891 = vpow.pop %v6890
    %v6892 = vmul.f32 %v6752, 1.442695
    %v6893 = vpow.pop %v6892
    %v6894 = vmul.f32 %v6753, 1.442695
    %v6895 = vpow.pop %v6894
    %v6896 = vmul.f32 %v6754, 1.442695
    %v6897 = vpow.pop %v6896
    %v6898 = vmul.f32 %v6755, 1.442695
    %v6899 = vpow.pop %v6898
    %v6900 = vmul.f32 %v6756, 1.442695
    %v6901 = vpow.pop %v6900
    %v6902 = vmul.f32 %v6757, 1.442695
    %v6903 = vpow.pop %v6902
    %v6904 = vmul.f32 %v6758, 1.442695
    %v6905 = vpow.pop %v6904
    %v6906 = vmul.f32 %v6759, 1.442695
    %v6907 = vpow.pop %v6906
    %v6908 = vmul.f32 %v6760, 1.442695
    %v6909 = vpow.pop %v6908
    %v6910 = vmul.f32 %v6761, 1.442695
    %v6911 = vpow.pop %v6910
    %v6912 = vmul.f32 %v6762, 1.442695
    %v6913 = vpow.pop %v6912
    %v6914 = vmul.f32 %v6763, 1.442695
    %v6915 = vpow.pop %v6914
    %v6916 = vmul.f32 %v6764, 1.442695
    %v6917 = vpow.pop %v6916
    %v6918 = vmul.f32 %v6765, 1.442695
    %v6919 = vpow.pop %v6918
    %v6920 = vmul.f32 %v6766, 1.442695
    %v6921 = vpow.pop %v6920
    %v6922 = vmul.f32 %v6767, 1.442695
    %v6923 = vpow.pop %v6922
    %v6924 = vmul.f32 %v6768, 1.442695
    %v6925 = vpow.pop %v6924
    %v6926 = vmul.f32 %v6769, 1.442695
    %v6927 = vpow.pop %v6926
    %v6928 = vmul.f32 %v6770, 1.442695
    %v6929 = vpow.pop %v6928
    %v6930 = vmul.f32 %v6771, 1.442695
    %v6931 = vpow.pop %v6930
    %v6932 = vmul.f32 %v6772, 1.442695
    %v6933 = vpow.pop %v6932
    %v6934 = vmul.f32 %v6773, 1.442695
    %v6935 = vpow.pop %v6934
    %v6936 = vmul.f32 %v6774, 1.442695
    %v6937 = vpow.pop %v6936
    %v6938 = vmul.f32 %v6775, 1.442695
    %v6939 = vpow.pop %v6938
    %v6940 = vmul.f32 %v6776, 1.442695
    %v6941 = vpow.pop %v6940
    %v6942 = vmul.f32 %v6777, 1.442695
    %v6943 = vpow.pop %v6942
    %v6944 = vmul.f32 %v6778, 1.442695
    %v6945 = vpow.pop %v6944
    %v6946 = vmul.f32 %v6779, 1.442695
    %v6947 = vpow.pop %v6946
    %v6948 = vmul.f32 %v6780, 1.442695
    %v6949 = vpow.pop %v6948
    %v6950 = vmul.f32 %v6781, 1.442695
    %v6951 = vpow.pop %v6950
    %v6952 = vmul.f32 %v6782, 1.442695
    %v6953 = vpow.pop %v6952
    %v6954 = vmul.f32 %v6783, 1.442695
    %v6955 = vpow.pop %v6954
    %v6956 = vmul.f32 %v6784, 1.442695
    %v6957 = vpow.pop %v6956
    %v6958 = vmul.f32 %v6785, 1.442695
    %v6959 = vpow.pop %v6958
    %v6960 = vmul.f32 %v6786, 1.442695
    %v6961 = vpow.pop %v6960
    %v6962 = vmul.f32 %v6787, 1.442695
    %v6963 = vpow.pop %v6962
    %v6964 = vmul.f32 %v6788, 1.442695
    %v6965 = vpow.pop %v6964
    %v6966 = vmul.f32 %v6789, 1.442695
    %v6967 = vpow.pop %v6966
    %v6968 = vmul.f32 %v6790, 1.442695
    %v6969 = vpow.pop %v6968
    %v6970 = vmul.f32 %v6791, 1.442695
    %v6971 = vpow.pop %v6970
    %v6972 = vmul.f32 %v6792, 1.442695
    %v6973 = vpow.pop %v6972
    %v6974 = vmul.f32 %v6793, 1.442695
    %v6975 = vpow.pop %v6974
    %v6976 = vmul.f32 %v6794, 1.442695
    %v6977 = vpow.pop %v6976
    %v6978 = vmul.f32 %v6795, 1.442695
    %v6979 = vpow.pop %v6978
    %v6980 = vmul.f32 %v6796, 1.442695
    %v6981 = vpow.pop %v6980
    %v6982 = vmul.f32 %v6797, 1.442695
    %v6983 = vpow.pop %v6982
    %v6984 = vmul.f32 %v6798, 1.442695
    %v6985 = vpow.pop %v6984
    %v6986 = vmul.f32 %v6799, 1.442695
    %v6987 = vpow.pop %v6986
    %v6988 = vmul.f32 %v6800, 1.442695
    %v6989 = vpow.pop %v6988
    %v6990 = vmul.f32 %v6801, 1.442695
    %v6991 = vpow.pop %v6990
    %v6992 = vmul.f32 %v6802, 1.442695
    %v6993 = vpow.pop %v6992
    %v6994 = vmul.f32 %v6803, 1.442695
    %v6995 = vpow.pop %v6994
    %v6996 = vmul.f32 %v6804, 1.442695
    %v6997 = vpow.pop %v6996
    %v6998 = vmul.f32 %v6805, 1.442695
    %v6999 = vpow.pop %v6998
    %v7000 = vmul.f32 %v6806, 1.442695
    %v7001 = vpow.pop %v7000
    %v7002 = vmul.f32 %v6807, 1.442695
    %v7003 = vpow.pop %v7002
    %v7004 = vmul.f32 %v6808, 1.442695
    %v7005 = vpow.pop %v7004
    %v7006 = vmul.f32 %v6809, 1.442695
    %v7007 = vpow.pop %v7006
    %v7008 = vmul.f32 %v6810, 1.442695
    %v7009 = vpow.pop %v7008
    %v7010 = vmul.f32 %v6811, 1.442695
    %v7011 = vpow.pop %v7010
    %v7012 = vmul.f32 %v6812, 1.442695
    %v7013 = vpow.pop %v7012
    %v7014 = vmul.f32 %v6813, 1.442695
    %v7015 = vpow.pop %v7014
    %v7016 = vmul.f32 %v6814, 1.442695
    %v7017 = vpow.pop %v7016
    %v7018 = vmul.f32 %v6815, 1.442695
    %v7019 = vpow.pop %v7018
    %v7020 = vmul.f32 %v6816, 1.442695
    %v7021 = vpow.pop %v7020
    %v7022 = vmul.f32 %v6817, 1.442695
    %v7023 = vpow.pop %v7022
    %v7024 = vmul.f32 %v6818, 1.442695
    %v7025 = vpow.pop %v7024
    %v7026 = vmul.f32 %v6819, 1.442695
    %v7027 = vpow.pop %v7026
    %v7028 = vmul.f32 %v6820, 1.442695
    %v7029 = vpow.pop %v7028
    %v7030 = vmul.f32 %v6821, 1.442695
    %v7031 = vpow.pop %v7030
    %v7032 = vmul.f32 %v6822, 1.442695
    %v7033 = vpow.pop %v7032
    %v7034 = vmul.f32 %v6823, 1.442695
    %v7035 = vpow.pop %v7034
    %v7036 = vmul.f32 %v6824, 1.442695
    %v7037 = vpow.pop %v7036
    %v7038 = vmul.f32 %v6825, 1.442695
    %v7039 = vpow.pop %v7038
    %v7040 = vmul.f32 %v6826, 1.442695
    %v7041 = vpow.pop %v7040
    %v7042 = vmul.f32 %v6827, 1.442695
    %v7043 = vpow.pop %v7042
    %v7044 = vmul.f32 %v6828, 1.442695
    %v7045 = vpow.pop %v7044
    %v7046 = vmul.f32 %v6829, 1.442695
    %v7047 = vpow.pop %v7046
    %v7048 = vmul.f32 %v6830, 1.442695
    %v7049 = vpow.pop %v7048
    %v7050 = vmul.f32 %v6831, 1.442695
    %v7051 = vpow.pop %v7050
    %v7052 = vmul.f32 %v6832, 1.442695
    %v7053 = vpow.pop %v7052
    %v7054 = vmul.f32 %v6833, 1.442695
    %v7055 = vpow.pop %v7054
    %v7056 = vmul.f32 %v6834, 1.442695
    %v7057 = vpow.pop %v7056
    %v7058 = vmul.f32 %v6835, 1.442695
    %v7059 = vpow.pop %v7058
    %v7060 = vmul.f32 %v6836, 1.442695
    %v7061 = vpow.pop %v7060
    %v7062 = vmul.f32 %v6837, 1.442695
    %v7063 = vpow.pop %v7062
    %v7064 = vmul.f32 %v6838, 1.442695
    %v7065 = vpow.pop %v7064
    %v7066 = vmul.f32 %v6839, 1.442695
    %v7067 = vpow.pop %v7066
    %v7068 = vmul.f32 %v6840, 1.442695
    %v7069 = vpow.pop %v7068
    %v7070 = vmul.f32 %v6841, 1.442695
    %v7071 = vpow.pop %v7070
    %v7072 = vmul.f32 %v6842, 1.442695
    %v7073 = vpow.pop %v7072
    %v7074 = vmul.f32 %v6843, 1.442695
    %v7075 = vpow.pop %v7074
    %v7076 = vmul.f32 %v6844, 1.442695
    %v7077 = vpow.pop %v7076
    %v7078 = vmul.f32 %v6845, 1.442695
    %v7079 = vpow.pop %v7078
    %v7080 = vmul.f32 %v6846, 1.442695
    %v7081 = vpow.pop %v7080
    %v7082 = vmul.f32 %v6847, 1.442695
    %v7083 = vpow.pop %v7082
    %v7084 = vmul.f32 %v6848, 1.442695
    %v7085 = vpow.pop %v7084
    %v7086 = vmul.f32 %v6849, 1.442695
    %v7087 = vpow.pop %v7086
    %v7088 = vmul.f32 %v6850, 1.442695
    %v7089 = vpow.pop %v7088
    %v7090 = vmul.f32 %v6851, 1.442695
    %v7091 = vpow.pop %v7090
    %v7092 = vmul.f32 %v6852, 1.442695
    %v7093 = vpow.pop %v7092
    %v7094 = vmul.f32 %v6853, 1.442695
    %v7095 = vpow.pop %v7094
    %v7096 = vmul.f32 %v6854, 1.442695
    %v7097 = vpow.pop %v7096
    %v7098 = vmul.f32 %v6855, 1.442695
    %v7099 = vpow.pop %v7098
    %v7100 = vmul.f32 %v6856, 1.442695
    %v7101 = vpow.pop %v7100
    %v7102 = vmul.f32 %v6857, 1.442695
    %v7103 = vpow.pop %v7102
    %v7104 = vmul.f32 %v6858, 1.442695
    %v7105 = vpow.pop %v7104
    %v7106 = vmul.f32 %v6859, 1.442695
    %v7107 = vpow.pop %v7106
    %v7108 = vmul.f32 %v6860, 1.442695
    %v7109 = vpow.pop %v7108
    %v7110 = vmul.f32 %v6861, 1.442695
    %v7111 = vpow.pop %v7110
    %v7112 = vmul.f32 %v6862, 1.442695
    %v7113 = vpow.pop %v7112
    %v7114 = vmul.f32 %v6863, 1.442695
    %v7115 = vpow.pop %v7114
    %v7116 = vmul.f32 %v6864, 1.442695
    %v7117 = vpow.pop %v7116
    %v7118 = vmul.f32 %v6865, 1.442695
    %v7119 = vpow.pop %v7118
    %v7120 = vmul.f32 %v6866, 1.442695
    %v7121 = vpow.pop %v7120
    %v7122 = vmul.f32 %v6867, 1.442695
    %v7123 = vpow.pop %v7122
    %7124 = vadd.xlane.f32.xlu0 %v6869
    %v7125 = vpop.xlane.xlu0 %7124
    %7126 = vadd.xlane.f32.xlu0 %v6871
    %v7127 = vpop.xlane.xlu0 %7126
    %7128 = vadd.xlane.f32.xlu0 %v6873
    %v7129 = vpop.xlane.xlu0 %7128
    %7130 = vadd.xlane.f32.xlu0 %v6875
    %v7131 = vpop.xlane.xlu0 %7130
    %7132 = vadd.xlane.f32.xlu0 %v6877
    %v7133 = vpop.xlane.xlu0 %7132
    %7134 = vadd.xlane.f32.xlu0 %v6879
    %v7135 = vpop.xlane.xlu0 %7134
    %7136 = vadd.xlane.f32.xlu0 %v6881
    %v7137 = vpop.xlane.xlu0 %7136
    %7138 = vadd.xlane.f32.xlu0 %v6883
    %v7139 = vpop.xlane.xlu0 %7138
    %7140 = vadd.xlane.f32.xlu0 %v6885
    %v7141 = vpop.xlane.xlu0 %7140
    %7142 = vadd.xlane.f32.xlu0 %v6887
    %v7143 = vpop.xlane.xlu0 %7142
    %7144 = vadd.xlane.f32.xlu0 %v6889
    %v7145 = vpop.xlane.xlu0 %7144
    %7146 = vadd.xlane.f32.xlu0 %v6891
    %v7147 = vpop.xlane.xlu0 %7146
    %7148 = vadd.xlane.f32.xlu0 %v6893
    %v7149 = vpop.xlane.xlu0 %7148
    %7150 = vadd.xlane.f32.xlu0 %v6895
    %v7151 = vpop.xlane.xlu0 %7150
    %7152 = vadd.xlane.f32.xlu0 %v6897
    %v7153 = vpop.xlane.xlu0 %7152
    %7154 = vadd.xlane.f32.xlu0 %v6899
    %v7155 = vpop.xlane.xlu0 %7154
    %7156 = vadd.xlane.f32.xlu0 %v6901
    %v7157 = vpop.xlane.xlu0 %7156
    %7158 = vadd.xlane.f32.xlu0 %v6903
    %v7159 = vpop.xlane.xlu0 %7158
    %7160 = vadd.xlane.f32.xlu0 %v6905
    %v7161 = vpop.xlane.xlu0 %7160
    %7162 = vadd.xlane.f32.xlu0 %v6907
    %v7163 = vpop.xlane.xlu0 %7162
    %7164 = vadd.xlane.f32.xlu0 %v6909
    %v7165 = vpop.xlane.xlu0 %7164
    %7166 = vadd.xlane.f32.xlu0 %v6911
    %v7167 = vpop.xlane.xlu0 %7166
    %7168 = vadd.xlane.f32.xlu0 %v6913
    %v7169 = vpop.xlane.xlu0 %7168
    %7170 = vadd.xlane.f32.xlu0 %v6915
    %v7171 = vpop.xlane.xlu0 %7170
    %7172 = vadd.xlane.f32.xlu0 %v6917
    %v7173 = vpop.xlane.xlu0 %7172
    %7174 = vadd.xlane.f32.xlu0 %v6919
    %v7175 = vpop.xlane.xlu0 %7174
    %7176 = vadd.xlane.f32.xlu0 %v6921
    %v7177 = vpop.xlane.xlu0 %7176
    %7178 = vadd.xlane.f32.xlu0 %v6923
    %v7179 = vpop.xlane.xlu0 %7178
    %7180 = vadd.xlane.f32.xlu0 %v6925
    %v7181 = vpop.xlane.xlu0 %7180
    %7182 = vadd.xlane.f32.xlu0 %v6927
    %v7183 = vpop.xlane.xlu0 %7182
    %7184 = vadd.xlane.f32.xlu0 %v6929
    %v7185 = vpop.xlane.xlu0 %7184
    %7186 = vadd.xlane.f32.xlu0 %v6931
    %v7187 = vpop.xlane.xlu0 %7186
    %7188 = vadd.xlane.f32.xlu0 %v6933
    %v7189 = vpop.xlane.xlu0 %7188
    %7190 = vadd.xlane.f32.xlu0 %v6935
    %v7191 = vpop.xlane.xlu0 %7190
    %7192 = vadd.xlane.f32.xlu0 %v6937
    %v7193 = vpop.xlane.xlu0 %7192
    %7194 = vadd.xlane.f32.xlu0 %v6939
    %v7195 = vpop.xlane.xlu0 %7194
    %7196 = vadd.xlane.f32.xlu0 %v6941
    %v7197 = vpop.xlane.xlu0 %7196
    %7198 = vadd.xlane.f32.xlu0 %v6943
    %v7199 = vpop.xlane.xlu0 %7198
    %7200 = vadd.xlane.f32.xlu0 %v6945
    %v7201 = vpop.xlane.xlu0 %7200
    %7202 = vadd.xlane.f32.xlu0 %v6947
    %v7203 = vpop.xlane.xlu0 %7202
    %7204 = vadd.xlane.f32.xlu0 %v6949
    %v7205 = vpop.xlane.xlu0 %7204
    %7206 = vadd.xlane.f32.xlu0 %v6951
    %v7207 = vpop.xlane.xlu0 %7206
    %7208 = vadd.xlane.f32.xlu0 %v6953
    %v7209 = vpop.xlane.xlu0 %7208
    %7210 = vadd.xlane.f32.xlu0 %v6955
    %v7211 = vpop.xlane.xlu0 %7210
    %7212 = vadd.xlane.f32.xlu0 %v6957
    %v7213 = vpop.xlane.xlu0 %7212
    %7214 = vadd.xlane.f32.xlu0 %v6959
    %v7215 = vpop.xlane.xlu0 %7214
    %7216 = vadd.xlane.f32.xlu0 %v6961
    %v7217 = vpop.xlane.xlu0 %7216
    %7218 = vadd.xlane.f32.xlu0 %v6963
    %v7219 = vpop.xlane.xlu0 %7218
    %7220 = vadd.xlane.f32.xlu0 %v6965
    %v7221 = vpop.xlane.xlu0 %7220
    %7222 = vadd.xlane.f32.xlu0 %v6967
    %v7223 = vpop.xlane.xlu0 %7222
    %7224 = vadd.xlane.f32.xlu0 %v6969
    %v7225 = vpop.xlane.xlu0 %7224
    %7226 = vadd.xlane.f32.xlu0 %v6971
    %v7227 = vpop.xlane.xlu0 %7226
    %7228 = vadd.xlane.f32.xlu0 %v6973
    %v7229 = vpop.xlane.xlu0 %7228
    %7230 = vadd.xlane.f32.xlu0 %v6975
    %v7231 = vpop.xlane.xlu0 %7230
    %7232 = vadd.xlane.f32.xlu0 %v6977
    %v7233 = vpop.xlane.xlu0 %7232
    %7234 = vadd.xlane.f32.xlu0 %v6979
    %v7235 = vpop.xlane.xlu0 %7234
    %7236 = vadd.xlane.f32.xlu0 %v6981
    %v7237 = vpop.xlane.xlu0 %7236
    %7238 = vadd.xlane.f32.xlu0 %v6983
    %v7239 = vpop.xlane.xlu0 %7238
    %7240 = vadd.xlane.f32.xlu0 %v6985
    %v7241 = vpop.xlane.xlu0 %7240
    %7242 = vadd.xlane.f32.xlu0 %v6987
    %v7243 = vpop.xlane.xlu0 %7242
    %7244 = vadd.xlane.f32.xlu0 %v6989
    %v7245 = vpop.xlane.xlu0 %7244
    %7246 = vadd.xlane.f32.xlu0 %v6991
    %v7247 = vpop.xlane.xlu0 %7246
    %7248 = vadd.xlane.f32.xlu0 %v6993
    %v7249 = vpop.xlane.xlu0 %7248
    %7250 = vadd.xlane.f32.xlu0 %v6995
    %v7251 = vpop.xlane.xlu0 %7250
    %7252 = vadd.xlane.f32.xlu0 %v6997
    %v7253 = vpop.xlane.xlu0 %7252
    %7254 = vadd.xlane.f32.xlu0 %v6999
    %v7255 = vpop.xlane.xlu0 %7254
    %7256 = vadd.xlane.f32.xlu0 %v7001
    %v7257 = vpop.xlane.xlu0 %7256
    %7258 = vadd.xlane.f32.xlu0 %v7003
    %v7259 = vpop.xlane.xlu0 %7258
    %7260 = vadd.xlane.f32.xlu0 %v7005
    %v7261 = vpop.xlane.xlu0 %7260
    %7262 = vadd.xlane.f32.xlu0 %v7007
    %v7263 = vpop.xlane.xlu0 %7262
    %7264 = vadd.xlane.f32.xlu0 %v7009
    %v7265 = vpop.xlane.xlu0 %7264
    %7266 = vadd.xlane.f32.xlu0 %v7011
    %v7267 = vpop.xlane.xlu0 %7266
    %7268 = vadd.xlane.f32.xlu0 %v7013
    %v7269 = vpop.xlane.xlu0 %7268
    %7270 = vadd.xlane.f32.xlu0 %v7015
    %v7271 = vpop.xlane.xlu0 %7270
    %7272 = vadd.xlane.f32.xlu0 %v7017
    %v7273 = vpop.xlane.xlu0 %7272
    %7274 = vadd.xlane.f32.xlu0 %v7019
    %v7275 = vpop.xlane.xlu0 %7274
    %7276 = vadd.xlane.f32.xlu0 %v7021
    %v7277 = vpop.xlane.xlu0 %7276
    %7278 = vadd.xlane.f32.xlu0 %v7023
    %v7279 = vpop.xlane.xlu0 %7278
    %7280 = vadd.xlane.f32.xlu0 %v7025
    %v7281 = vpop.xlane.xlu0 %7280
    %7282 = vadd.xlane.f32.xlu0 %v7027
    %v7283 = vpop.xlane.xlu0 %7282
    %7284 = vadd.xlane.f32.xlu0 %v7029
    %v7285 = vpop.xlane.xlu0 %7284
    %7286 = vadd.xlane.f32.xlu0 %v7031
    %v7287 = vpop.xlane.xlu0 %7286
    %7288 = vadd.xlane.f32.xlu0 %v7033
    %v7289 = vpop.xlane.xlu0 %7288
    %7290 = vadd.xlane.f32.xlu0 %v7035
    %v7291 = vpop.xlane.xlu0 %7290
    %7292 = vadd.xlane.f32.xlu0 %v7037
    %v7293 = vpop.xlane.xlu0 %7292
    %7294 = vadd.xlane.f32.xlu0 %v7039
    %v7295 = vpop.xlane.xlu0 %7294
    %7296 = vadd.xlane.f32.xlu0 %v7041
    %v7297 = vpop.xlane.xlu0 %7296
    %7298 = vadd.xlane.f32.xlu0 %v7043
    %v7299 = vpop.xlane.xlu0 %7298
    %7300 = vadd.xlane.f32.xlu0 %v7045
    %v7301 = vpop.xlane.xlu0 %7300
    %7302 = vadd.xlane.f32.xlu0 %v7047
    %v7303 = vpop.xlane.xlu0 %7302
    %7304 = vadd.xlane.f32.xlu0 %v7049
    %v7305 = vpop.xlane.xlu0 %7304
    %7306 = vadd.xlane.f32.xlu0 %v7051
    %v7307 = vpop.xlane.xlu0 %7306
    %7308 = vadd.xlane.f32.xlu0 %v7053
    %v7309 = vpop.xlane.xlu0 %7308
    %7310 = vadd.xlane.f32.xlu0 %v7055
    %v7311 = vpop.xlane.xlu0 %7310
    %7312 = vadd.xlane.f32.xlu0 %v7057
    %v7313 = vpop.xlane.xlu0 %7312
    %7314 = vadd.xlane.f32.xlu0 %v7059
    %v7315 = vpop.xlane.xlu0 %7314
    %7316 = vadd.xlane.f32.xlu0 %v7061
    %v7317 = vpop.xlane.xlu0 %7316
    %7318 = vadd.xlane.f32.xlu0 %v7063
    %v7319 = vpop.xlane.xlu0 %7318
    %7320 = vadd.xlane.f32.xlu0 %v7065
    %v7321 = vpop.xlane.xlu0 %7320
    %7322 = vadd.xlane.f32.xlu0 %v7067
    %v7323 = vpop.xlane.xlu0 %7322
    %7324 = vadd.xlane.f32.xlu0 %v7069
    %v7325 = vpop.xlane.xlu0 %7324
    %7326 = vadd.xlane.f32.xlu0 %v7071
    %v7327 = vpop.xlane.xlu0 %7326
    %7328 = vadd.xlane.f32.xlu0 %v7073
    %v7329 = vpop.xlane.xlu0 %7328
    %7330 = vadd.xlane.f32.xlu0 %v7075
    %v7331 = vpop.xlane.xlu0 %7330
    %7332 = vadd.xlane.f32.xlu0 %v7077
    %v7333 = vpop.xlane.xlu0 %7332
    %7334 = vadd.xlane.f32.xlu0 %v7079
    %v7335 = vpop.xlane.xlu0 %7334
    %7336 = vadd.xlane.f32.xlu0 %v7081
    %v7337 = vpop.xlane.xlu0 %7336
    %7338 = vadd.xlane.f32.xlu0 %v7083
    %v7339 = vpop.xlane.xlu0 %7338
    %7340 = vadd.xlane.f32.xlu0 %v7085
    %v7341 = vpop.xlane.xlu0 %7340
    %7342 = vadd.xlane.f32.xlu0 %v7087
    %v7343 = vpop.xlane.xlu0 %7342
    %7344 = vadd.xlane.f32.xlu0 %v7089
    %v7345 = vpop.xlane.xlu0 %7344
    %7346 = vadd.xlane.f32.xlu0 %v7091
    %v7347 = vpop.xlane.xlu0 %7346
    %7348 = vadd.xlane.f32.xlu0 %v7093
    %v7349 = vpop.xlane.xlu0 %7348
    %7350 = vadd.xlane.f32.xlu0 %v7095
    %v7351 = vpop.xlane.xlu0 %7350
    %7352 = vadd.xlane.f32.xlu0 %v7097
    %v7353 = vpop.xlane.xlu0 %7352
    %7354 = vadd.xlane.f32.xlu0 %v7099
    %v7355 = vpop.xlane.xlu0 %7354
    %7356 = vadd.xlane.f32.xlu0 %v7101
    %v7357 = vpop.xlane.xlu0 %7356
    %7358 = vadd.xlane.f32.xlu0 %v7103
    %v7359 = vpop.xlane.xlu0 %7358
    %7360 = vadd.xlane.f32.xlu0 %v7105
    %v7361 = vpop.xlane.xlu0 %7360
    %7362 = vadd.xlane.f32.xlu0 %v7107
    %v7363 = vpop.xlane.xlu0 %7362
    %7364 = vadd.xlane.f32.xlu0 %v7109
    %v7365 = vpop.xlane.xlu0 %7364
    %7366 = vadd.xlane.f32.xlu0 %v7111
    %v7367 = vpop.xlane.xlu0 %7366
    %7368 = vadd.xlane.f32.xlu0 %v7113
    %v7369 = vpop.xlane.xlu0 %7368
    %7370 = vadd.xlane.f32.xlu0 %v7115
    %v7371 = vpop.xlane.xlu0 %7370
    %7372 = vadd.xlane.f32.xlu0 %v7117
    %v7373 = vpop.xlane.xlu0 %7372
    %7374 = vadd.xlane.f32.xlu0 %v7119
    %v7375 = vpop.xlane.xlu0 %7374
    %7376 = vadd.xlane.f32.xlu0 %v7121
    %v7377 = vpop.xlane.xlu0 %7376
    %7378 = vadd.xlane.f32.xlu0 %v7123
    %v7379 = vpop.xlane.xlu0 %7378
    %v7380 = vrcp.pop %v7125
    %v7381 = vrcp.pop %v7127
    %v7382 = vrcp.pop %v7129
    %v7383 = vrcp.pop %v7131
    %v7384 = vrcp.pop %v7133
    %v7385 = vrcp.pop %v7135
    %v7386 = vrcp.pop %v7137
    %v7387 = vrcp.pop %v7139
    %v7388 = vrcp.pop %v7141
    %v7389 = vrcp.pop %v7143
    %v7390 = vrcp.pop %v7145
    %v7391 = vrcp.pop %v7147
    %v7392 = vrcp.pop %v7149
    %v7393 = vrcp.pop %v7151
    %v7394 = vrcp.pop %v7153
    %v7395 = vrcp.pop %v7155
    %v7396 = vrcp.pop %v7157
    %v7397 = vrcp.pop %v7159
    %v7398 = vrcp.pop %v7161
    %v7399 = vrcp.pop %v7163
    %v7400 = vrcp.pop %v7165
    %v7401 = vrcp.pop %v7167
    %v7402 = vrcp.pop %v7169
    %v7403 = vrcp.pop %v7171
    %v7404 = vrcp.pop %v7173
    %v7405 = vrcp.pop %v7175
    %v7406 = vrcp.pop %v7177
    %v7407 = vrcp.pop %v7179
    %v7408 = vrcp.pop %v7181
    %v7409 = vrcp.pop %v7183
    %v7410 = vrcp.pop %v7185
    %v7411 = vrcp.pop %v7187
    %v7412 = vrcp.pop %v7189
    %v7413 = vrcp.pop %v7191
    %v7414 = vrcp.pop %v7193
    %v7415 = vrcp.pop %v7195
    %v7416 = vrcp.pop %v7197
    %v7417 = vrcp.pop %v7199
    %v7418 = vrcp.pop %v7201
    %v7419 = vrcp.pop %v7203
    %v7420 = vrcp.pop %v7205
    %v7421 = vrcp.pop %v7207
    %v7422 = vrcp.pop %v7209
    %v7423 = vrcp.pop %v7211
    %v7424 = vrcp.pop %v7213
    %v7425 = vrcp.pop %v7215
    %v7426 = vrcp.pop %v7217
    %v7427 = vrcp.pop %v7219
    %v7428 = vrcp.pop %v7221
    %v7429 = vrcp.pop %v7223
    %v7430 = vrcp.pop %v7225
    %v7431 = vrcp.pop %v7227
    %v7432 = vrcp.pop %v7229
    %v7433 = vrcp.pop %v7231
    %v7434 = vrcp.pop %v7233
    %v7435 = vrcp.pop %v7235
    %v7436 = vrcp.pop %v7237
    %v7437 = vrcp.pop %v7239
    %v7438 = vrcp.pop %v7241
    %v7439 = vrcp.pop %v7243
    %v7440 = vrcp.pop %v7245
    %v7441 = vrcp.pop %v7247
    %v7442 = vrcp.pop %v7249
    %v7443 = vrcp.pop %v7251
    %v7444 = vrcp.pop %v7253
    %v7445 = vrcp.pop %v7255
    %v7446 = vrcp.pop %v7257
    %v7447 = vrcp.pop %v7259
    %v7448 = vrcp.pop %v7261
    %v7449 = vrcp.pop %v7263
    %v7450 = vrcp.pop %v7265
    %v7451 = vrcp.pop %v7267
    %v7452 = vrcp.pop %v7269
    %v7453 = vrcp.pop %v7271
    %v7454 = vrcp.pop %v7273
    %v7455 = vrcp.pop %v7275
    %v7456 = vrcp.pop %v7277
    %v7457 = vrcp.pop %v7279
    %v7458 = vrcp.pop %v7281
    %v7459 = vrcp.pop %v7283
    %v7460 = vrcp.pop %v7285
    %v7461 = vrcp.pop %v7287
    %v7462 = vrcp.pop %v7289
    %v7463 = vrcp.pop %v7291
    %v7464 = vrcp.pop %v7293
    %v7465 = vrcp.pop %v7295
    %v7466 = vrcp.pop %v7297
    %v7467 = vrcp.pop %v7299
    %v7468 = vrcp.pop %v7301
    %v7469 = vrcp.pop %v7303
    %v7470 = vrcp.pop %v7305
    %v7471 = vrcp.pop %v7307
    %v7472 = vrcp.pop %v7309
    %v7473 = vrcp.pop %v7311
    %v7474 = vrcp.pop %v7313
    %v7475 = vrcp.pop %v7315
    %v7476 = vrcp.pop %v7317
    %v7477 = vrcp.pop %v7319
    %v7478 = vrcp.pop %v7321
    %v7479 = vrcp.pop %v7323
    %v7480 = vrcp.pop %v7325
    %v7481 = vrcp.pop %v7327
    %v7482 = vrcp.pop %v7329
    %v7483 = vrcp.pop %v7331
    %v7484 = vrcp.pop %v7333
    %v7485 = vrcp.pop %v7335
    %v7486 = vrcp.pop %v7337
    %v7487 = vrcp.pop %v7339
    %v7488 = vrcp.pop %v7341
    %v7489 = vrcp.pop %v7343
    %v7490 = vrcp.pop %v7345
    %v7491 = vrcp.pop %v7347
    %v7492 = vrcp.pop %v7349
    %v7493 = vrcp.pop %v7351
    %v7494 = vrcp.pop %v7353
    %v7495 = vrcp.pop %v7355
    %v7496 = vrcp.pop %v7357
    %v7497 = vrcp.pop %v7359
    %v7498 = vrcp.pop %v7361
    %v7499 = vrcp.pop %v7363
    %v7500 = vrcp.pop %v7365
    %v7501 = vrcp.pop %v7367
    %v7502 = vrcp.pop %v7369
    %v7503 = vrcp.pop %v7371
    %v7504 = vrcp.pop %v7373
    %v7505 = vrcp.pop %v7375
    %v7506 = vrcp.pop %v7377
    %v7507 = vrcp.pop %v7379
    %v7508 = vmul.f32 %v6869, %v7380
    %v7509 = vmul.f32 %v6871, %v7381
    %v7510 = vmul.f32 %v6873, %v7382
    %v7511 = vmul.f32 %v6875, %v7383
    %v7512 = vmul.f32 %v6877, %v7384
    %v7513 = vmul.f32 %v6879, %v7385
    %v7514 = vmul.f32 %v6881, %v7386
    %v7515 = vmul.f32 %v6883, %v7387
    %v7516 = vmul.f32 %v6885, %v7388
    %v7517 = vmul.f32 %v6887, %v7389
    %v7518 = vmul.f32 %v6889, %v7390
    %v7519 = vmul.f32 %v6891, %v7391
    %v7520 = vmul.f32 %v6893, %v7392
    %v7521 = vmul.f32 %v6895, %v7393
    %v7522 = vmul.f32 %v6897, %v7394
    %v7523 = vmul.f32 %v6899, %v7395
    %v7524 = vmul.f32 %v6901, %v7396
    %v7525 = vmul.f32 %v6903, %v7397
    %v7526 = vmul.f32 %v6905, %v7398
    %v7527 = vmul.f32 %v6907, %v7399
    %v7528 = vmul.f32 %v6909, %v7400
    %v7529 = vmul.f32 %v6911, %v7401
    %v7530 = vmul.f32 %v6913, %v7402
    %v7531 = vmul.f32 %v6915, %v7403
    %v7532 = vmul.f32 %v6917, %v7404
    %v7533 = vmul.f32 %v6919, %v7405
    %v7534 = vmul.f32 %v6921, %v7406
    %v7535 = vmul.f32 %v6923, %v7407
    %v7536 = vmul.f32 %v6925, %v7408
    %v7537 = vmul.f32 %v6927, %v7409
    %v7538 = vmul.f32 %v6929, %v7410
    %v7539 = vmul.f32 %v6931, %v7411
    %v7540 = vmul.f32 %v6933, %v7412
    %v7541 = vmul.f32 %v6935, %v7413
    %v7542 = vmul.f32 %v6937, %v7414
    %v7543 = vmul.f32 %v6939, %v7415
    %v7544 = vmul.f32 %v6941, %v7416
    %v7545 = vmul.f32 %v6943, %v7417
    %v7546 = vmul.f32 %v6945, %v7418
    %v7547 = vmul.f32 %v6947, %v7419
    %v7548 = vmul.f32 %v6949, %v7420
    %v7549 = vmul.f32 %v6951, %v7421
    %v7550 = vmul.f32 %v6953, %v7422
    %v7551 = vmul.f32 %v6955, %v7423
    %v7552 = vmul.f32 %v6957, %v7424
    %v7553 = vmul.f32 %v6959, %v7425
    %v7554 = vmul.f32 %v6961, %v7426
    %v7555 = vmul.f32 %v6963, %v7427
    %v7556 = vmul.f32 %v6965, %v7428
    %v7557 = vmul.f32 %v6967, %v7429
    %v7558 = vmul.f32 %v6969, %v7430
    %v7559 = vmul.f32 %v6971, %v7431
    %v7560 = vmul.f32 %v6973, %v7432
    %v7561 = vmul.f32 %v6975, %v7433
    %v7562 = vmul.f32 %v6977, %v7434
    %v7563 = vmul.f32 %v6979, %v7435
    %v7564 = vmul.f32 %v6981, %v7436
    %v7565 = vmul.f32 %v6983, %v7437
    %v7566 = vmul.f32 %v6985, %v7438
    %v7567 = vmul.f32 %v6987, %v7439
    %v7568 = vmul.f32 %v6989, %v7440
    %v7569 = vmul.f32 %v6991, %v7441
    %v7570 = vmul.f32 %v6993, %v7442
    %v7571 = vmul.f32 %v6995, %v7443
    %v7572 = vmul.f32 %v6997, %v7444
    %v7573 = vmul.f32 %v6999, %v7445
    %v7574 = vmul.f32 %v7001, %v7446
    %v7575 = vmul.f32 %v7003, %v7447
    %v7576 = vmul.f32 %v7005, %v7448
    %v7577 = vmul.f32 %v7007, %v7449
    %v7578 = vmul.f32 %v7009, %v7450
    %v7579 = vmul.f32 %v7011, %v7451
    %v7580 = vmul.f32 %v7013, %v7452
    %v7581 = vmul.f32 %v7015, %v7453
    %v7582 = vmul.f32 %v7017, %v7454
    %v7583 = vmul.f32 %v7019, %v7455
    %v7584 = vmul.f32 %v7021, %v7456
    %v7585 = vmul.f32 %v7023, %v7457
    %v7586 = vmul.f32 %v7025, %v7458
    %v7587 = vmul.f32 %v7027, %v7459
    %v7588 = vmul.f32 %v7029, %v7460
    %v7589 = vmul.f32 %v7031, %v7461
    %v7590 = vmul.f32 %v7033, %v7462
    %v7591 = vmul.f32 %v7035, %v7463
    %v7592 = vmul.f32 %v7037, %v7464
    %v7593 = vmul.f32 %v7039, %v7465
    %v7594 = vmul.f32 %v7041, %v7466
    %v7595 = vmul.f32 %v7043, %v7467
    %v7596 = vmul.f32 %v7045, %v7468
    %v7597 = vmul.f32 %v7047, %v7469
    %v7598 = vmul.f32 %v7049, %v7470
    %v7599 = vmul.f32 %v7051, %v7471
    %v7600 = vmul.f32 %v7053, %v7472
    %v7601 = vmul.f32 %v7055, %v7473
    %v7602 = vmul.f32 %v7057, %v7474
    %v7603 = vmul.f32 %v7059, %v7475
    %v7604 = vmul.f32 %v7061, %v7476
    %v7605 = vmul.f32 %v7063, %v7477
    %v7606 = vmul.f32 %v7065, %v7478
    %v7607 = vmul.f32 %v7067, %v7479
    %v7608 = vmul.f32 %v7069, %v7480
    %v7609 = vmul.f32 %v7071, %v7481
    %v7610 = vmul.f32 %v7073, %v7482
    %v7611 = vmul.f32 %v7075, %v7483
    %v7612 = vmul.f32 %v7077, %v7484
    %v7613 = vmul.f32 %v7079, %v7485
    %v7614 = vmul.f32 %v7081, %v7486
    %v7615 = vmul.f32 %v7083, %v7487
    %v7616 = vmul.f32 %v7085, %v7488
    %v7617 = vmul.f32 %v7087, %v7489
    %v7618 = vmul.f32 %v7089, %v7490
    %v7619 = vmul.f32 %v7091, %v7491
    %v7620 = vmul.f32 %v7093, %v7492
    %v7621 = vmul.f32 %v7095, %v7493
    %v7622 = vmul.f32 %v7097, %v7494
    %v7623 = vmul.f32 %v7099, %v7495
    %v7624 = vmul.f32 %v7101, %v7496
    %v7625 = vmul.f32 %v7103, %v7497
    %v7626 = vmul.f32 %v7105, %v7498
    %v7627 = vmul.f32 %v7107, %v7499
    %v7628 = vmul.f32 %v7109, %v7500
    %v7629 = vmul.f32 %v7111, %v7501
    %v7630 = vmul.f32 %v7113, %v7502
    %v7631 = vmul.f32 %v7115, %v7503
    %v7632 = vmul.f32 %v7117, %v7504
    %v7633 = vmul.f32 %v7119, %v7505
    %v7634 = vmul.f32 %v7121, %v7506
    %v7635 = vmul.f32 %v7123, %v7507
    %v7636 = vld [vmem:[%s9] sm:$0xf]
    %v7637 = vld [vmem:[%s9 + $0x4] sm:$0xf]
    %v7638 = vld [vmem:[%s9 + $0x8] sm:$0xf]
    %v7639 = vld [vmem:[%s9 + $0xc] sm:$0xf]
    %v7640 = vld [vmem:[%s9 + $0x10] sm:$0xf]
    %v7641 = vld [vmem:[%s9 + $0x14] sm:$0xf]
    %v7642 = vld [vmem:[%s9 + $0x18] sm:$0xf]
    %v7643 = vld [vmem:[%s9 + $0x1c] sm:$0xf]
    %v7644 = vld [vmem:[%s9 + $0x20] sm:$0xf]
    %v7645 = vld [vmem:[%s9 + $0x24] sm:$0xf]
    %v7646 = vld [vmem:[%s9 + $0x28] sm:$0xf]
    %v7647 = vld [vmem:[%s9 + $0x2c] sm:$0xf]
    %v7648 = vld [vmem:[%s9 + $0x30] sm:$0xf]
    %v7649 = vld [vmem:[%s9 + $0x34] sm:$0xf]
    %v7650 = vld [vmem:[%s9 + $0x38] sm:$0xf]
    %v7651 = vld [vmem:[%s9 + $0x3c] sm:$0xf]
    %v7652 = vld [vmem:[%s10] sm:$0x1]
    %v7653 = vpack.c.bf16 %v7509, %v7508
    %v7654 = vpack.c.bf16 %v7511, %v7510
    %v7655 = vpack.c.bf16 %v7513, %v7512
    %v7656 = vpack.c.bf16 %v7515, %v7514
    %v7657 = vpack.c.bf16 %v7517, %v7516
    %v7658 = vpack.c.bf16 %v7519, %v7518
    %v7659 = vpack.c.bf16 %v7521, %v7520
    %v7660 = vpack.c.bf16 %v7523, %v7522
    %v7661 = vpack.c.bf16 %v7525, %v7524
    %v7662 = vpack.c.bf16 %v7527, %v7526
    %v7663 = vpack.c.bf16 %v7529, %v7528
    %v7664 = vpack.c.bf16 %v7531, %v7530
    %v7665 = vpack.c.bf16 %v7533, %v7532
    %v7666 = vpack.c.bf16 %v7535, %v7534
    %v7667 = vpack.c.bf16 %v7537, %v7536
    %v7668 = vpack.c.bf16 %v7539, %v7538
    %v7669 = vpack.c.bf16 %v7541, %v7540
    %v7670 = vpack.c.bf16 %v7543, %v7542
    %v7671 = vpack.c.bf16 %v7545, %v7544
    %v7672 = vpack.c.bf16 %v7547, %v7546
    %v7673 = vpack.c.bf16 %v7549, %v7548
    %v7674 = vpack.c.bf16 %v7551, %v7550
    %v7675 = vpack.c.bf16 %v7553, %v7552
    %v7676 = vpack.c.bf16 %v7555, %v7554
    %v7677 = vpack.c.bf16 %v7557, %v7556
    %v7678 = vpack.c.bf16 %v7559, %v7558
    %v7679 = vpack.c.bf16 %v7561, %v7560
    %v7680 = vpack.c.bf16 %v7563, %v7562
    %v7681 = vpack.c.bf16 %v7565, %v7564
    %v7682 = vpack.c.bf16 %v7567, %v7566
    %v7683 = vpack.c.bf16 %v7569, %v7568
    %v7684 = vpack.c.bf16 %v7571, %v7570
    %v7685 = vpack.c.bf16 %v7573, %v7572
    %v7686 = vpack.c.bf16 %v7575, %v7574
    %v7687 = vpack.c.bf16 %v7577, %v7576
    %v7688 = vpack.c.bf16 %v7579, %v7578
    %v7689 = vpack.c.bf16 %v7581, %v7580
    %v7690 = vpack.c.bf16 %v7583, %v7582
    %v7691 = vpack.c.bf16 %v7585, %v7584
    %v7692 = vpack.c.bf16 %v7587, %v7586
    %v7693 = vpack.c.bf16 %v7589, %v7588
    %v7694 = vpack.c.bf16 %v7591, %v7590
    %v7695 = vpack.c.bf16 %v7593, %v7592
    %v7696 = vpack.c.bf16 %v7595, %v7594
    %v7697 = vpack.c.bf16 %v7597, %v7596
    %v7698 = vpack.c.bf16 %v7599, %v7598
    %v7699 = vpack.c.bf16 %v7601, %v7600
    %v7700 = vpack.c.bf16 %v7603, %v7602
    %v7701 = vpack.c.bf16 %v7605, %v7604
    %v7702 = vpack.c.bf16 %v7607, %v7606
    %v7703 = vpack.c.bf16 %v7609, %v7608
    %v7704 = vpack.c.bf16 %v7611, %v7610
    %v7705 = vpack.c.bf16 %v7613, %v7612
    %v7706 = vpack.c.bf16 %v7615, %v7614
    %v7707 = vpack.c.bf16 %v7617, %v7616
    %v7708 = vpack.c.bf16 %v7619, %v7618
    %v7709 = vpack.c.bf16 %v7621, %v7620
    %v7710 = vpack.c.bf16 %v7623, %v7622
    %v7711 = vpack.c.bf16 %v7625, %v7624
    %v7712 = vpack.c.bf16 %v7627, %v7626
    %v7713 = vpack.c.bf16 %v7629, %v7628
    %v7714 = vpack.c.bf16 %v7631, %v7630
    %v7715 = vpack.c.bf16 %v7633, %v7632
    %v7716 = vpack.c.bf16 %v7635, %v7634
    %v7718 = vlaneseq
    %v7719 = vshrl.u32 %v7718, 7
    %v7720 = vsub.s32 0, %v7719
    %v7721 = vrot.slane %v7652, %v7720
    %v7739 = vunpack.c.l.b16 %v7636
    %v7740 = vunpack.c.l.b16 %v7637
    %v7741 = vunpack.c.l.b16 %v7638
    %v7742 = vunpack.c.l.b16 %v7639
    %v7743 = vunpack.c.l.b16 %v7640
    %v7744 = vunpack.c.l.b16 %v7641
    %v7745 = vunpack.c.l.b16 %v7642
    %v7746 = vunpack.c.l.b16 %v7643
    %v7747 = vunpack.c.l.b16 %v7644
    %v7748 = vunpack.c.l.b16 %v7645
    %v7749 = vunpack.c.l.b16 %v7646
    %v7750 = vunpack.c.l.b16 %v7647
    %v7751 = vunpack.c.l.b16 %v7648
    %v7752 = vunpack.c.l.b16 %v7649
    %v7753 = vunpack.c.l.b16 %v7650
    %v7754 = vunpack.c.l.b16 %v7651
    %v7755 = vpack.c.b16 %v7740, %v7739
    %v7756 = vpack.c.b16 %v7742, %v7741
    %v7757 = vpack.c.b16 %v7744, %v7743
    %v7758 = vpack.c.b16 %v7746, %v7745
    %v7759 = vpack.c.b16 %v7748, %v7747
    %v7760 = vpack.c.b16 %v7750, %v7749
    %v7761 = vpack.c.b16 %v7752, %v7751
    %v7762 = vpack.c.b16 %v7754, %v7753
    %7771 = vmatprep.subr.bf16.mxu0 0
    %7772 = vmatpush1.bf16.msra.mxu0 %v7755
    %7773 = vmatprep.subr.bf16.mxu0 0
    %7774 = vmatpush1.bf16.msra.mxu0 %v7756
    %7775 = vmatprep.subr.bf16.mxu0 0
    %7776 = vmatpush1.bf16.msra.mxu0 %v7757
    %7777 = vmatprep.subr.bf16.mxu0 0
    %7778 = vmatpush1.bf16.msra.mxu0 %v7758
    %7779 = vmatprep.subr.bf16.mxu0 0
    %7780 = vmatpush1.bf16.msra.mxu0 %v7759
    %7781 = vmatprep.subr.bf16.mxu0 0
    %7782 = vmatpush1.bf16.msra.mxu0 %v7760
    %7783 = vmatprep.subr.bf16.mxu0 0
    %7784 = vmatpush1.bf16.msra.mxu0 %v7761
    %7785 = vmatprep.subr.bf16.mxu0 0
    %7786 = vmatpush1.bf16.msra.mxu0 %v7762
    %7787 = vmatprep.subr.bf16.mxu0 0
    %7788 = vmatpush1.bf16.msra.mxu0 0
    %7789 = vmatprep.subr.bf16.mxu0 0
    %7790 = vmatpush1.bf16.msra.mxu0 0
    %7791 = vmatprep.subr.bf16.mxu0 0
    %7792 = vmatpush1.bf16.msra.mxu0 0
    %7793 = vmatprep.subr.bf16.mxu0 0
    %7794 = vmatpush1.bf16.msra.mxu0 0
    %7795 = vmatprep.subr.bf16.mxu0 0
    %7796 = vmatpush1.bf16.msra.mxu0 0
    %7797 = vmatprep.subr.bf16.mxu0 0
    %7798 = vmatpush1.bf16.msra.mxu0 0
    %7799 = vmatprep.subr.bf16.mxu0 0
    %7800 = vmatpush1.bf16.msra.mxu0 0
    %7801 = vmatprep.subr.bf16.mxu0 0
    %7802 = vmatpush1.bf16.msra.mxu0 0
    %7803 = vmatprep.mubr.bf16.mxu0 0
    %7804 = vmatmul.mubr.bf16.gmra.mrb[0].mxu0 %v7653
    %v7805 = vpop.f32.mrb[0].mxu0
    %v7806 = vadd.f32 %v7721, %v7805
    %v7807 = vpop.f32.mrb[0].mxu0
    %v7808 = vpop.f32.mrb[0].mxu0
    %v7809 = vadd.f32 %v7721, %v7808
    %v7810 = vpop.f32.mrb[0].mxu0
    %7811 = vmatprep.mubr.bf16.mxu0 0
    %7812 = vmatmul.mubr.bf16.gmra.mrb[0].mxu0 %v7654
    %v7813 = vpop.f32.mrb[0].mxu0
    %v7814 = vadd.f32 %v7721, %v7813
    %v7815 = vpop.f32.mrb[0].mxu0
    %v7816 = vpop.f32.mrb[0].mxu0
    %v7817 = vadd.f32 %v7721, %v7816
    %v7818 = vpop.f32.mrb[0].mxu0
    %7819 = vmatprep.mubr.bf16.mxu0 0
    %7820 = vmatmul.mubr.bf16.gmra.mrb[0].mxu0 %v7655
    %v7821 = vpop.f32.mrb[0].mxu0
    %v7822 = vadd.f32 %v7721, %v7821
    %v7823 = vpop.f32.mrb[0].mxu0
    %v7824 = vpop.f32.mrb[0].mxu0
    %v7825 = vadd.f32 %v7721, %v7824
    %v7826 = vpop.f32.mrb[0].mxu0
    %7827 = vmatprep.mubr.bf16.mxu0 0
    %7828 = vmatmul.mubr.bf16.gmra.mrb[0].mxu0 %v7656
    %v7829 = vpop.f32.mrb[0].mxu0
    %v7830 = vadd.f32 %v7721, %v7829
    %v7831 = vpop.f32.mrb[0].mxu0
    %v7832 = vpop.f32.mrb[0].mxu0
    %v7833 = vadd.f32 %v7721, %v7832
    %v7834 = vpop.f32.mrb[0].mxu0
    %7835 = vmatprep.mubr.bf16.mxu0 0
    %7836 = vmatmul.mubr.bf16.gmra.mrb[0].mxu0 %v7657
    %v7837 = vpop.f32.mrb[0].mxu0
    %v7838 = vadd.f32 %v7721, %v7837
    %v7839 = vpop.f32.mrb[0].mxu0
    %v7840 = vpop.f32.mrb[0].mxu0
    %v7841 = vadd.f32 %v7721, %v7840
    %v7842 = vpop.f32.mrb[0].mxu0
    %7843 = vmatprep.mubr.bf16.mxu0 0
    %7844 = vmatmul.mubr.bf16.gmra.mrb[0].mxu0 %v7658
    %v7845 = vpop.f32.mrb[0].mxu0
    %v7846 = vadd.f32 %v7721, %v7845
    %v7847 = vpop.f32.mrb[0].mxu0
    %v7848 = vpop.f32.mrb[0].mxu0
    %v7849 = vadd.f32 %v7721, %v7848
    %v7850 = vpop.f32.mrb[0].mxu0
    %7851 = vmatprep.mubr.bf16.mxu0 0
    %7852 = vmatmul.mubr.bf16.gmra.mrb[0].mxu0 %v7659
    %v7853 = vpop.f32.mrb[0].mxu0
    %v7854 = vadd.f32 %v7721, %v7853
    %v7855 = vpop.f32.mrb[0].mxu0
    %v7856 = vpop.f32.mrb[0].mxu0
    %v7857 = vadd.f32 %v7721, %v7856
    %v7858 = vpop.f32.mrb[0].mxu0
    %7859 = vmatprep.mubr.bf16.mxu0 0
    %7860 = vmatmul.mubr.bf16.gmra.mrb[0].mxu0 %v7660
    %v7861 = vpop.f32.mrb[0].mxu0
    %v7862 = vadd.f32 %v7721, %v7861
    %v7863 = vpop.f32.mrb[0].mxu0
    %v7864 = vpop.f32.mrb[0].mxu0
    %v7865 = vadd.f32 %v7721, %v7864
    %v7866 = vpop.f32.mrb[0].mxu0
    %7867 = vmatprep.mubr.bf16.mxu0 0
    %7868 = vmatmul.mubr.bf16.gmra.mrb[0].mxu0 %v7661
    %v7869 = vpop.f32.mrb[0].mxu0
    %v7870 = vadd.f32 %v7721, %v7869
    %v7871 = vpop.f32.mrb[0].mxu0
    %v7872 = vpop.f32.mrb[0].mxu0
    %v7873 = vadd.f32 %v7721, %v7872
    %v7874 = vpop.f32.mrb[0].mxu0
    %7875 = vmatprep.mubr.bf16.mxu0 0
    %7876 = vmatmul.mubr.bf16.gmra.mrb[0].mxu0 %v7662
    %v7877 = vpop.f32.mrb[0].mxu0
    %v7878 = vadd.f32 %v7721, %v7877
    %v7879 = vpop.f32.mrb[0].mxu0
    %v7880 = vpop.f32.mrb[0].mxu0
    %v7881 = vadd.f32 %v7721, %v7880
    %v7882 = vpop.f32.mrb[0].mxu0
    %7883 = vmatprep.mubr.bf16.mxu0 0
    %7884 = vmatmul.mubr.bf16.gmra.mrb[0].mxu0 %v7663
    %v7885 = vpop.f32.mrb[0].mxu0
    %v7886 = vadd.f32 %v7721, %v7885
    %v7887 = vpop.f32.mrb[0].mxu0
    %v7888 = vpop.f32.mrb[0].mxu0
    %v7889 = vadd.f32 %v7721, %v7888
    %v7890 = vpop.f32.mrb[0].mxu0
    %7891 = vmatprep.mubr.bf16.mxu0 0
    %7892 = vmatmul.mubr.bf16.gmra.mrb[0].mxu0 %v7664
    %v7893 = vpop.f32.mrb[0].mxu0
    %v7894 = vadd.f32 %v7721, %v7893
    %v7895 = vpop.f32.mrb[0].mxu0
    %v7896 = vpop.f32.mrb[0].mxu0
    %v7897 = vadd.f32 %v7721, %v7896
    %v7898 = vpop.f32.mrb[0].mxu0
    %7899 = vmatprep.mubr.bf16.mxu0 0
    %7900 = vmatmul.mubr.bf16.gmra.mrb[0].mxu0 %v7665
    %v7901 = vpop.f32.mrb[0].mxu0
    %v7902 = vadd.f32 %v7721, %v7901
    %v7903 = vpop.f32.mrb[0].mxu0
    %v7904 = vpop.f32.mrb[0].mxu0
    %v7905 = vadd.f32 %v7721, %v7904
    %v7906 = vpop.f32.mrb[0].mxu0
    %7907 = vmatprep.mubr.bf16.mxu0 0
    %7908 = vmatmul.mubr.bf16.gmra.mrb[0].mxu0 %v7666
    %v7909 = vpop.f32.mrb[0].mxu0
    %v7910 = vadd.f32 %v7721, %v7909
    %v7911 = vpop.f32.mrb[0].mxu0
    %v7912 = vpop.f32.mrb[0].mxu0
    %v7913 = vadd.f32 %v7721, %v7912
    %v7914 = vpop.f32.mrb[0].mxu0
    %7915 = vmatprep.mubr.bf16.mxu0 0
    %7916 = vmatmul.mubr.bf16.gmra.mrb[0].mxu0 %v7667
    %v7917 = vpop.f32.mrb[0].mxu0
    %v7918 = vadd.f32 %v7721, %v7917
    %v7919 = vpop.f32.mrb[0].mxu0
    %v7920 = vpop.f32.mrb[0].mxu0
    %v7921 = vadd.f32 %v7721, %v7920
    %v7922 = vpop.f32.mrb[0].mxu0
    %7923 = vmatprep.mubr.bf16.mxu0 0
    %7924 = vmatmul.mubr.bf16.gmra.mrb[0].mxu0 %v7668
    %v7925 = vpop.f32.mrb[0].mxu0
    %v7926 = vadd.f32 %v7721, %v7925
    %v7927 = vpop.f32.mrb[0].mxu0
    %v7928 = vpop.f32.mrb[0].mxu0
    %v7929 = vadd.f32 %v7721, %v7928
    %v7930 = vpop.f32.mrb[0].mxu0
    %7931 = vmatprep.mubr.bf16.mxu0 0
    %7932 = vmatmul.mubr.bf16.gmra.mrb[0].mxu0 %v7669
    %v7933 = vpop.f32.mrb[0].mxu0
    %v7934 = vadd.f32 %v7721, %v7933
    %v7935 = vpop.f32.mrb[0].mxu0
    %v7936 = vpop.f32.mrb[0].mxu0
    %v7937 = vadd.f32 %v7721, %v7936
    %v7938 = vpop.f32.mrb[0].mxu0
    %7939 = vmatprep.mubr.bf16.mxu0 0
    %7940 = vmatmul.mubr.bf16.gmra.mrb[0].mxu0 %v7670
    %v7941 = vpop.f32.mrb[0].mxu0
    %v7942 = vadd.f32 %v7721, %v7941
    %v7943 = vpop.f32.mrb[0].mxu0
    %v7944 = vpop.f32.mrb[0].mxu0
    %v7945 = vadd.f32 %v7721, %v7944
    %v7946 = vpop.f32.mrb[0].mxu0
    %7947 = vmatprep.mubr.bf16.mxu0 0
    %7948 = vmatmul.mubr.bf16.gmra.mrb[0].mxu0 %v7671
    %v7949 = vpop.f32.mrb[0].mxu0
    %v7950 = vadd.f32 %v7721, %v7949
    %v7951 = vpop.f32.mrb[0].mxu0
    %v7952 = vpop.f32.mrb[0].mxu0
    %v7953 = vadd.f32 %v7721, %v7952
    %v7954 = vpop.f32.mrb[0].mxu0
    %7955 = vmatprep.mubr.bf16.mxu0 0
    %7956 = vmatmul.mubr.bf16.gmra.mrb[0].mxu0 %v7672
    %v7957 = vpop.f32.mrb[0].mxu0
    %v7958 = vadd.f32 %v7721, %v7957
    %v7959 = vpop.f32.mrb[0].mxu0
    %v7960 = vpop.f32.mrb[0].mxu0
    %v7961 = vadd.f32 %v7721, %v7960
    %v7962 = vpop.f32.mrb[0].mxu0
    %7963 = vmatprep.mubr.bf16.mxu0 0
    %7964 = vmatmul.mubr.bf16.gmra.mrb[0].mxu0 %v7673
    %v7965 = vpop.f32.mrb[0].mxu0
    %v7966 = vadd.f32 %v7721, %v7965
    %v7967 = vpop.f32.mrb[0].mxu0
    %v7968 = vpop.f32.mrb[0].mxu0
    %v7969 = vadd.f32 %v7721, %v7968
    %v7970 = vpop.f32.mrb[0].mxu0
    %7971 = vmatprep.mubr.bf16.mxu0 0
    %7972 = vmatmul.mubr.bf16.gmra.mrb[0].mxu0 %v7674
    %v7973 = vpop.f32.mrb[0].mxu0
    %v7974 = vadd.f32 %v7721, %v7973
    %v7975 = vpop.f32.mrb[0].mxu0
    %v7976 = vpop.f32.mrb[0].mxu0
    %v7977 = vadd.f32 %v7721, %v7976
    %v7978 = vpop.f32.mrb[0].mxu0
    %7979 = vmatprep.mubr.bf16.mxu0 0
    %7980 = vmatmul.mubr.bf16.gmra.mrb[0].mxu0 %v7675
    %v7981 = vpop.f32.mrb[0].mxu0
    %v7982 = vadd.f32 %v7721, %v7981
    %v7983 = vpop.f32.mrb[0].mxu0
    %v7984 = vpop.f32.mrb[0].mxu0
    %v7985 = vadd.f32 %v7721, %v7984
    %v7986 = vpop.f32.mrb[0].mxu0
    %7987 = vmatprep.mubr.bf16.mxu0 0
    %7988 = vmatmul.mubr.bf16.gmra.mrb[0].mxu0 %v7676
    %v7989 = vpop.f32.mrb[0].mxu0
    %v7990 = vadd.f32 %v7721, %v7989
    %v7991 = vpop.f32.mrb[0].mxu0
    %v7992 = vpop.f32.mrb[0].mxu0
    %v7993 = vadd.f32 %v7721, %v7992
    %v7994 = vpop.f32.mrb[0].mxu0
    %7995 = vmatprep.mubr.bf16.mxu0 0
    %7996 = vmatmul.mubr.bf16.gmra.mrb[0].mxu0 %v7677
    %v7997 = vpop.f32.mrb[0].mxu0
    %v7998 = vadd.f32 %v7721, %v7997
    %v7999 = vpop.f32.mrb[0].mxu0
    %v8000 = vpop.f32.mrb[0].mxu0
    %v8001 = vadd.f32 %v7721, %v8000
    %v8002 = vpop.f32.mrb[0].mxu0
    %8003 = vmatprep.mubr.bf16.mxu0 0
    %8004 = vmatmul.mubr.bf16.gmra.mrb[0].mxu0 %v7678
    %v8005 = vpop.f32.mrb[0].mxu0
    %v8006 = vadd.f32 %v7721, %v8005
    %v8007 = vpop.f32.mrb[0].mxu0
    %v8008 = vpop.f32.mrb[0].mxu0
    %v8009 = vadd.f32 %v7721, %v8008
    %v8010 = vpop.f32.mrb[0].mxu0
    %8011 = vmatprep.mubr.bf16.mxu0 0
    %8012 = vmatmul.mubr.bf16.gmra.mrb[0].mxu0 %v7679
    %v8013 = vpop.f32.mrb[0].mxu0
    %v8014 = vadd.f32 %v7721, %v8013
    %v8015 = vpop.f32.mrb[0].mxu0
    %v8016 = vpop.f32.mrb[0].mxu0
    %v8017 = vadd.f32 %v7721, %v8016
    %v8018 = vpop.f32.mrb[0].mxu0
    %8019 = vmatprep.mubr.bf16.mxu0 0
    %8020 = vmatmul.mubr.bf16.gmra.mrb[0].mxu0 %v7680
    %v8021 = vpop.f32.mrb[0].mxu0
    %v8022 = vadd.f32 %v7721, %v8021
    %v8023 = vpop.f32.mrb[0].mxu0
    %v8024 = vpop.f32.mrb[0].mxu0
    %v8025 = vadd.f32 %v7721, %v8024
    %v8026 = vpop.f32.mrb[0].mxu0
    %8027 = vmatprep.mubr.bf16.mxu0 0
    %8028 = vmatmul.mubr.bf16.gmra.mrb[0].mxu0 %v7681
    %v8029 = vpop.f32.mrb[0].mxu0
    %v8030 = vadd.f32 %v7721, %v8029
    %v8031 = vpop.f32.mrb[0].mxu0
    %v8032 = vpop.f32.mrb[0].mxu0
    %v8033 = vadd.f32 %v7721, %v8032
    %v8034 = vpop.f32.mrb[0].mxu0
    %8035 = vmatprep.mubr.bf16.mxu0 0
    %8036 = vmatmul.mubr.bf16.gmra.mrb[0].mxu0 %v7682
    %v8037 = vpop.f32.mrb[0].mxu0
    %v8038 = vadd.f32 %v7721, %v8037
    %v8039 = vpop.f32.mrb[0].mxu0
    %v8040 = vpop.f32.mrb[0].mxu0
    %v8041 = vadd.f32 %v7721, %v8040
    %v8042 = vpop.f32.mrb[0].mxu0
    %8043 = vmatprep.mubr.bf16.mxu0 0
    %8044 = vmatmul.mubr.bf16.gmra.mrb[0].mxu0 %v7683
    %v8045 = vpop.f32.mrb[0].mxu0
    %v8046 = vadd.f32 %v7721, %v8045
    %v8047 = vpop.f32.mrb[0].mxu0
    %v8048 = vpop.f32.mrb[0].mxu0
    %v8049 = vadd.f32 %v7721, %v8048
    %v8050 = vpop.f32.mrb[0].mxu0
    %8051 = vmatprep.mubr.bf16.mxu0 0
    %8052 = vmatmul.mubr.bf16.gmra.mrb[0].mxu0 %v7684
    %v8053 = vpop.f32.mrb[0].mxu0
    %v8054 = vadd.f32 %v7721, %v8053
    %v8055 = vpop.f32.mrb[0].mxu0
    %v8056 = vpop.f32.mrb[0].mxu0
    %v8057 = vadd.f32 %v7721, %v8056
    %v8058 = vpop.f32.mrb[0].mxu0
    %8059 = vmatprep.mubr.bf16.mxu0 0
    %8060 = vmatmul.mubr.bf16.gmra.mrb[0].mxu0 %v7685
    %v8061 = vpop.f32.mrb[0].mxu0
    %v8062 = vadd.f32 %v7721, %v8061
    %v8063 = vpop.f32.mrb[0].mxu0
    %v8064 = vpop.f32.mrb[0].mxu0
    %v8065 = vadd.f32 %v7721, %v8064
    %v8066 = vpop.f32.mrb[0].mxu0
    %8067 = vmatprep.mubr.bf16.mxu0 0
    %8068 = vmatmul.mubr.bf16.gmra.mrb[0].mxu0 %v7686
    %v8069 = vpop.f32.mrb[0].mxu0
    %v8070 = vadd.f32 %v7721, %v8069
    %v8071 = vpop.f32.mrb[0].mxu0
    %v8072 = vpop.f32.mrb[0].mxu0
    %v8073 = vadd.f32 %v7721, %v8072
    %v8074 = vpop.f32.mrb[0].mxu0
    %8075 = vmatprep.mubr.bf16.mxu0 0
    %8076 = vmatmul.mubr.bf16.gmra.mrb[0].mxu0 %v7687
    %v8077 = vpop.f32.mrb[0].mxu0
    %v8078 = vadd.f32 %v7721, %v8077
    %v8079 = vpop.f32.mrb[0].mxu0
    %v8080 = vpop.f32.mrb[0].mxu0
    %v8081 = vadd.f32 %v7721, %v8080
    %v8082 = vpop.f32.mrb[0].mxu0
    %8083 = vmatprep.mubr.bf16.mxu0 0
    %8084 = vmatmul.mubr.bf16.gmra.mrb[0].mxu0 %v7688
    %v8085 = vpop.f32.mrb[0].mxu0
    %v8086 = vadd.f32 %v7721, %v8085
    %v8087 = vpop.f32.mrb[0].mxu0
    %v8088 = vpop.f32.mrb[0].mxu0
    %v8089 = vadd.f32 %v7721, %v8088
    %v8090 = vpop.f32.mrb[0].mxu0
    %8091 = vmatprep.mubr.bf16.mxu0 0
    %8092 = vmatmul.mubr.bf16.gmra.mrb[0].mxu0 %v7689
    %v8093 = vpop.f32.mrb[0].mxu0
    %v8094 = vadd.f32 %v7721, %v8093
    %v8095 = vpop.f32.mrb[0].mxu0
    %v8096 = vpop.f32.mrb[0].mxu0
    %v8097 = vadd.f32 %v7721, %v8096
    %v8098 = vpop.f32.mrb[0].mxu0
    %8099 = vmatprep.mubr.bf16.mxu0 0
    %8100 = vmatmul.mubr.bf16.gmra.mrb[0].mxu0 %v7690
    %v8101 = vpop.f32.mrb[0].mxu0
    %v8102 = vadd.f32 %v7721, %v8101
    %v8103 = vpop.f32.mrb[0].mxu0
    %v8104 = vpop.f32.mrb[0].mxu0
    %v8105 = vadd.f32 %v7721, %v8104
    %v8106 = vpop.f32.mrb[0].mxu0
    %8107 = vmatprep.mubr.bf16.mxu0 0
    %8108 = vmatmul.mubr.bf16.gmra.mrb[0].mxu0 %v7691
    %v8109 = vpop.f32.mrb[0].mxu0
    %v8110 = vadd.f32 %v7721, %v8109
    %v8111 = vpop.f32.mrb[0].mxu0
    %v8112 = vpop.f32.mrb[0].mxu0
    %v8113 = vadd.f32 %v7721, %v8112
    %v8114 = vpop.f32.mrb[0].mxu0
    %8115 = vmatprep.mubr.bf16.mxu0 0
    %8116 = vmatmul.mubr.bf16.gmra.mrb[0].mxu0 %v7692
    %v8117 = vpop.f32.mrb[0].mxu0
    %v8118 = vadd.f32 %v7721, %v8117
    %v8119 = vpop.f32.mrb[0].mxu0
    %v8120 = vpop.f32.mrb[0].mxu0
    %v8121 = vadd.f32 %v7721, %v8120
    %v8122 = vpop.f32.mrb[0].mxu0
    %8123 = vmatprep.mubr.bf16.mxu0 0
    %8124 = vmatmul.mubr.bf16.gmra.mrb[0].mxu0 %v7693
    %v8125 = vpop.f32.mrb[0].mxu0
    %v8126 = vadd.f32 %v7721, %v8125
    %v8127 = vpop.f32.mrb[0].mxu0
    %v8128 = vpop.f32.mrb[0].mxu0
    %v8129 = vadd.f32 %v7721, %v8128
    %v8130 = vpop.f32.mrb[0].mxu0
    %8131 = vmatprep.mubr.bf16.mxu0 0
    %8132 = vmatmul.mubr.bf16.gmra.mrb[0].mxu0 %v7694
    %v8133 = vpop.f32.mrb[0].mxu0
    %v8134 = vadd.f32 %v7721, %v8133
    %v8135 = vpop.f32.mrb[0].mxu0
    %v8136 = vpop.f32.mrb[0].mxu0
    %v8137 = vadd.f32 %v7721, %v8136
    %v8138 = vpop.f32.mrb[0].mxu0
    %8139 = vmatprep.mubr.bf16.mxu0 0
    %8140 = vmatmul.mubr.bf16.gmra.mrb[0].mxu0 %v7695
    %v8141 = vpop.f32.mrb[0].mxu0
    %v8142 = vadd.f32 %v7721, %v8141
    %v8143 = vpop.f32.mrb[0].mxu0
    %v8144 = vpop.f32.mrb[0].mxu0
    %v8145 = vadd.f32 %v7721, %v8144
    %v8146 = vpop.f32.mrb[0].mxu0
    %8147 = vmatprep.mubr.bf16.mxu0 0
    %8148 = vmatmul.mubr.bf16.gmra.mrb[0].mxu0 %v7696
    %v8149 = vpop.f32.mrb[0].mxu0
    %v8150 = vadd.f32 %v7721, %v8149
    %v8151 = vpop.f32.mrb[0].mxu0
    %v8152 = vpop.f32.mrb[0].mxu0
    %v8153 = vadd.f32 %v7721, %v8152
    %v8154 = vpop.f32.mrb[0].mxu0
    %8155 = vmatprep.mubr.bf16.mxu0 0
    %8156 = vmatmul.mubr.bf16.gmra.mrb[0].mxu0 %v7697
    %v8157 = vpop.f32.mrb[0].mxu0
    %v8158 = vadd.f32 %v7721, %v8157
    %v8159 = vpop.f32.mrb[0].mxu0
    %v8160 = vpop.f32.mrb[0].mxu0
    %v8161 = vadd.f32 %v7721, %v8160
    %v8162 = vpop.f32.mrb[0].mxu0
    %8163 = vmatprep.mubr.bf16.mxu0 0
    %8164 = vmatmul.mubr.bf16.gmra.mrb[0].mxu0 %v7698
    %v8165 = vpop.f32.mrb[0].mxu0
    %v8166 = vadd.f32 %v7721, %v8165
    %v8167 = vpop.f32.mrb[0].mxu0
    %v8168 = vpop.f32.mrb[0].mxu0
    %v8169 = vadd.f32 %v7721, %v8168
    %v8170 = vpop.f32.mrb[0].mxu0
    %8171 = vmatprep.mubr.bf16.mxu0 0
    %8172 = vmatmul.mubr.bf16.gmra.mrb[0].mxu0 %v7699
    %v8173 = vpop.f32.mrb[0].mxu0
    %v8174 = vadd.f32 %v7721, %v8173
    %v8175 = vpop.f32.mrb[0].mxu0
    %v8176 = vpop.f32.mrb[0].mxu0
    %v8177 = vadd.f32 %v7721, %v8176
    %v8178 = vpop.f32.mrb[0].mxu0
    %8179 = vmatprep.mubr.bf16.mxu0 0
    %8180 = vmatmul.mubr.bf16.gmra.mrb[0].mxu0 %v7700
    %v8181 = vpop.f32.mrb[0].mxu0
    %v8182 = vadd.f32 %v7721, %v8181
    %v8183 = vpop.f32.mrb[0].mxu0
    %v8184 = vpop.f32.mrb[0].mxu0
    %v8185 = vadd.f32 %v7721, %v8184
    %v8186 = vpop.f32.mrb[0].mxu0
    %8187 = vmatprep.mubr.bf16.mxu0 0
    %8188 = vmatmul.mubr.bf16.gmra.mrb[0].mxu0 %v7701
    %v8189 = vpop.f32.mrb[0].mxu0
    %v8190 = vadd.f32 %v7721, %v8189
    %v8191 = vpop.f32.mrb[0].mxu0
    %v8192 = vpop.f32.mrb[0].mxu0
    %v8193 = vadd.f32 %v7721, %v8192
    %v8194 = vpop.f32.mrb[0].mxu0
    %8195 = vmatprep.mubr.bf16.mxu0 0
    %8196 = vmatmul.mubr.bf16.gmra.mrb[0].mxu0 %v7702
    %v8197 = vpop.f32.mrb[0].mxu0
    %v8198 = vadd.f32 %v7721, %v8197
    %v8199 = vpop.f32.mrb[0].mxu0
    %v8200 = vpop.f32.mrb[0].mxu0
    %v8201 = vadd.f32 %v7721, %v8200
    %v8202 = vpop.f32.mrb[0].mxu0
    %8203 = vmatprep.mubr.bf16.mxu0 0
    %8204 = vmatmul.mubr.bf16.gmra.mrb[0].mxu0 %v7703
    %v8205 = vpop.f32.mrb[0].mxu0
    %v8206 = vadd.f32 %v7721, %v8205
    %v8207 = vpop.f32.mrb[0].mxu0
    %v8208 = vpop.f32.mrb[0].mxu0
    %v8209 = vadd.f32 %v7721, %v8208
    %v8210 = vpop.f32.mrb[0].mxu0
    %8211 = vmatprep.mubr.bf16.mxu0 0
    %8212 = vmatmul.mubr.bf16.gmra.mrb[0].mxu0 %v7704
    %v8213 = vpop.f32.mrb[0].mxu0
    %v8214 = vadd.f32 %v7721, %v8213
    %v8215 = vpop.f32.mrb[0].mxu0
    %v8216 = vpop.f32.mrb[0].mxu0
    %v8217 = vadd.f32 %v7721, %v8216
    %v8218 = vpop.f32.mrb[0].mxu0
    %8219 = vmatprep.mubr.bf16.mxu0 0
    %8220 = vmatmul.mubr.bf16.gmra.mrb[0].mxu0 %v7705
    %v8221 = vpop.f32.mrb[0].mxu0
    %v8222 = vadd.f32 %v7721, %v8221
    %v8223 = vpop.f32.mrb[0].mxu0
    %v8224 = vpop.f32.mrb[0].mxu0
    %v8225 = vadd.f32 %v7721, %v8224
    %v8226 = vpop.f32.mrb[0].mxu0
    %8227 = vmatprep.mubr.bf16.mxu0 0
    %8228 = vmatmul.mubr.bf16.gmra.mrb[0].mxu0 %v7706
    %v8229 = vpop.f32.mrb[0].mxu0
    %v8230 = vadd.f32 %v7721, %v8229
    %v8231 = vpop.f32.mrb[0].mxu0
    %v8232 = vpop.f32.mrb[0].mxu0
    %v8233 = vadd.f32 %v7721, %v8232
    %v8234 = vpop.f32.mrb[0].mxu0
    %8235 = vmatprep.mubr.bf16.mxu0 0
    %8236 = vmatmul.mubr.bf16.gmra.mrb[0].mxu0 %v7707
    %v8237 = vpop.f32.mrb[0].mxu0
    %v8238 = vadd.f32 %v7721, %v8237
    %v8239 = vpop.f32.mrb[0].mxu0
    %v8240 = vpop.f32.mrb[0].mxu0
    %v8241 = vadd.f32 %v7721, %v8240
    %v8242 = vpop.f32.mrb[0].mxu0
    %8243 = vmatprep.mubr.bf16.mxu0 0
    %8244 = vmatmul.mubr.bf16.gmra.mrb[0].mxu0 %v7708
    %v8245 = vpop.f32.mrb[0].mxu0
    %v8246 = vadd.f32 %v7721, %v8245
    %v8247 = vpop.f32.mrb[0].mxu0
    %v8248 = vpop.f32.mrb[0].mxu0
    %v8249 = vadd.f32 %v7721, %v8248
    %v8250 = vpop.f32.mrb[0].mxu0
    %8251 = vmatprep.mubr.bf16.mxu0 0
    %8252 = vmatmul.mubr.bf16.gmra.mrb[0].mxu0 %v7709
    %v8253 = vpop.f32.mrb[0].mxu0
    %v8254 = vadd.f32 %v7721, %v8253
    %v8255 = vpop.f32.mrb[0].mxu0
    %v8256 = vpop.f32.mrb[0].mxu0
    %v8257 = vadd.f32 %v7721, %v8256
    %v8258 = vpop.f32.mrb[0].mxu0
    %8259 = vmatprep.mubr.bf16.mxu0 0
    %8260 = vmatmul.mubr.bf16.gmra.mrb[0].mxu0 %v7710
    %v8261 = vpop.f32.mrb[0].mxu0
    %v8262 = vadd.f32 %v7721, %v8261
    %v8263 = vpop.f32.mrb[0].mxu0
    %v8264 = vpop.f32.mrb[0].mxu0
    %v8265 = vadd.f32 %v7721, %v8264
    %v8266 = vpop.f32.mrb[0].mxu0
    %8267 = vmatprep.mubr.bf16.mxu0 0
    %8268 = vmatmul.mubr.bf16.gmra.mrb[0].mxu0 %v7711
    %v8269 = vpop.f32.mrb[0].mxu0
    %v8270 = vadd.f32 %v7721, %v8269
    %v8271 = vpop.f32.mrb[0].mxu0
    %v8272 = vpop.f32.mrb[0].mxu0
    %v8273 = vadd.f32 %v7721, %v8272
    %v8274 = vpop.f32.mrb[0].mxu0
    %8275 = vmatprep.mubr.bf16.mxu0 0
    %8276 = vmatmul.mubr.bf16.gmra.mrb[0].mxu0 %v7712
    %v8277 = vpop.f32.mrb[0].mxu0
    %v8278 = vadd.f32 %v7721, %v8277
    %v8279 = vpop.f32.mrb[0].mxu0
    %v8280 = vpop.f32.mrb[0].mxu0
    %v8281 = vadd.f32 %v7721, %v8280
    %v8282 = vpop.f32.mrb[0].mxu0
    %8283 = vmatprep.mubr.bf16.mxu0 0
    %8284 = vmatmul.mubr.bf16.gmra.mrb[0].mxu0 %v7713
    %v8285 = vpop.f32.mrb[0].mxu0
    %v8286 = vadd.f32 %v7721, %v8285
    %v8287 = vpop.f32.mrb[0].mxu0
    %v8288 = vpop.f32.mrb[0].mxu0
    %v8289 = vadd.f32 %v7721, %v8288
    %v8290 = vpop.f32.mrb[0].mxu0
    %8291 = vmatprep.mubr.bf16.mxu0 0
    %8292 = vmatmul.mubr.bf16.gmra.mrb[0].mxu0 %v7714
    %v8293 = vpop.f32.mrb[0].mxu0
    %v8294 = vadd.f32 %v7721, %v8293
    %v8295 = vpop.f32.mrb[0].mxu0
    %v8296 = vpop.f32.mrb[0].mxu0
    %v8297 = vadd.f32 %v7721, %v8296
    %v8298 = vpop.f32.mrb[0].mxu0
    %8299 = vmatprep.mubr.bf16.mxu0 0
    %8300 = vmatmul.mubr.bf16.gmra.mrb[0].mxu0 %v7715
    %v8301 = vpop.f32.mrb[0].mxu0
    %v8302 = vadd.f32 %v7721, %v8301
    %v8303 = vpop.f32.mrb[0].mxu0
    %v8304 = vpop.f32.mrb[0].mxu0
    %v8305 = vadd.f32 %v7721, %v8304
    %v8306 = vpop.f32.mrb[0].mxu0
    %8307 = vmatprep.mubr.bf16.mxu0 0
    %8308 = vmatmul.mubr.bf16.gmra.mrb[0].mxu0 %v7716
    %v8309 = vpop.f32.mrb[0].mxu0
    %v8310 = vadd.f32 %v7721, %v8309
    %v8311 = vpop.f32.mrb[0].mxu0
    %v8312 = vpop.f32.mrb[0].mxu0
    %v8313 = vadd.f32 %v7721, %v8312
    %v8314 = vpop.f32.mrb[0].mxu0
    %8315 = vdwg.mxu0
    %8316 = vmax.xlane.f32.xlu0 %v7806
    %v8317 = vpop.xlane.xlu0 %8316
    %8318 = vmax.xlane.f32.xlu0 %v7809
    %v8319 = vpop.xlane.xlu0 %8318
    %8320 = vmax.xlane.f32.xlu0 %v7814
    %v8321 = vpop.xlane.xlu0 %8320
    %8322 = vmax.xlane.f32.xlu0 %v7817
    %v8323 = vpop.xlane.xlu0 %8322
    %8324 = vmax.xlane.f32.xlu0 %v7822
    %v8325 = vpop.xlane.xlu0 %8324
    %8326 = vmax.xlane.f32.xlu0 %v7825
    %v8327 = vpop.xlane.xlu0 %8326
    %8328 = vmax.xlane.f32.xlu0 %v7830
    %v8329 = vpop.xlane.xlu0 %8328
    %8330 = vmax.xlane.f32.xlu0 %v7833
    %v8331 = vpop.xlane.xlu0 %8330
    %8332 = vmax.xlane.f32.xlu0 %v7838
    %v8333 = vpop.xlane.xlu0 %8332
    %8334 = vmax.xlane.f32.xlu0 %v7841
    %v8335 = vpop.xlane.xlu0 %8334
    %8336 = vmax.xlane.f32.xlu0 %v7846
    %v8337 = vpop.xlane.xlu0 %8336
    %8338 = vmax.xlane.f32.xlu0 %v7849
    %v8339 = vpop.xlane.xlu0 %8338
    %8340 = vmax.xlane.f32.xlu0 %v7854
    %v8341 = vpop.xlane.xlu0 %8340
    %8342 = vmax.xlane.f32.xlu0 %v7857
    %v8343 = vpop.xlane.xlu0 %8342
    %8344 = vmax.xlane.f32.xlu0 %v7862
    %v8345 = vpop.xlane.xlu0 %8344
    %8346 = vmax.xlane.f32.xlu0 %v7865
    %v8347 = vpop.xlane.xlu0 %8346
    %8348 = vmax.xlane.f32.xlu0 %v7870
    %v8349 = vpop.xlane.xlu0 %8348
    %8350 = vmax.xlane.f32.xlu0 %v7873
    %v8351 = vpop.xlane.xlu0 %8350
    %8352 = vmax.xlane.f32.xlu0 %v7878
    %v8353 = vpop.xlane.xlu0 %8352
    %8354 = vmax.xlane.f32.xlu0 %v7881
    %v8355 = vpop.xlane.xlu0 %8354
    %8356 = vmax.xlane.f32.xlu0 %v7886
    %v8357 = vpop.xlane.xlu0 %8356
    %8358 = vmax.xlane.f32.xlu0 %v7889
    %v8359 = vpop.xlane.xlu0 %8358
    %8360 = vmax.xlane.f32.xlu0 %v7894
    %v8361 = vpop.xlane.xlu0 %8360
    %8362 = vmax.xlane.f32.xlu0 %v7897
    %v8363 = vpop.xlane.xlu0 %8362
    %8364 = vmax.xlane.f32.xlu0 %v7902
    %v8365 = vpop.xlane.xlu0 %8364
    %8366 = vmax.xlane.f32.xlu0 %v7905
    %v8367 = vpop.xlane.xlu0 %8366
    %8368 = vmax.xlane.f32.xlu0 %v7910
    %v8369 = vpop.xlane.xlu0 %8368
    %8370 = vmax.xlane.f32.xlu0 %v7913
    %v8371 = vpop.xlane.xlu0 %8370
    %8372 = vmax.xlane.f32.xlu0 %v7918
    %v8373 = vpop.xlane.xlu0 %8372
    %8374 = vmax.xlane.f32.xlu0 %v7921
    %v8375 = vpop.xlane.xlu0 %8374
    %8376 = vmax.xlane.f32.xlu0 %v7926
    %v8377 = vpop.xlane.xlu0 %8376
    %8378 = vmax.xlane.f32.xlu0 %v7929
    %v8379 = vpop.xlane.xlu0 %8378
    %8380 = vmax.xlane.f32.xlu0 %v7934
    %v8381 = vpop.xlane.xlu0 %8380
    %8382 = vmax.xlane.f32.xlu0 %v7937
    %v8383 = vpop.xlane.xlu0 %8382
    %8384 = vmax.xlane.f32.xlu0 %v7942
    %v8385 = vpop.xlane.xlu0 %8384
    %8386 = vmax.xlane.f32.xlu0 %v7945
    %v8387 = vpop.xlane.xlu0 %8386
    %8388 = vmax.xlane.f32.xlu0 %v7950
    %v8389 = vpop.xlane.xlu0 %8388
    %8390 = vmax.xlane.f32.xlu0 %v7953
    %v8391 = vpop.xlane.xlu0 %8390
    %8392 = vmax.xlane.f32.xlu0 %v7958
    %v8393 = vpop.xlane.xlu0 %8392
    %8394 = vmax.xlane.f32.xlu0 %v7961
    %v8395 = vpop.xlane.xlu0 %8394
    %8396 = vmax.xlane.f32.xlu0 %v7966
    %v8397 = vpop.xlane.xlu0 %8396
    %8398 = vmax.xlane.f32.xlu0 %v7969
    %v8399 = vpop.xlane.xlu0 %8398
    %8400 = vmax.xlane.f32.xlu0 %v7974
    %v8401 = vpop.xlane.xlu0 %8400
    %8402 = vmax.xlane.f32.xlu0 %v7977
    %v8403 = vpop.xlane.xlu0 %8402
    %8404 = vmax.xlane.f32.xlu0 %v7982
    %v8405 = vpop.xlane.xlu0 %8404
    %8406 = vmax.xlane.f32.xlu0 %v7985
    %v8407 = vpop.xlane.xlu0 %8406
    %8408 = vmax.xlane.f32.xlu0 %v7990
    %v8409 = vpop.xlane.xlu0 %8408
    %8410 = vmax.xlane.f32.xlu0 %v7993
    %v8411 = vpop.xlane.xlu0 %8410
    %8412 = vmax.xlane.f32.xlu0 %v7998
    %v8413 = vpop.xlane.xlu0 %8412
    %8414 = vmax.xlane.f32.xlu0 %v8001
    %v8415 = vpop.xlane.xlu0 %8414
    %8416 = vmax.xlane.f32.xlu0 %v8006
    %v8417 = vpop.xlane.xlu0 %8416
    %8418 = vmax.xlane.f32.xlu0 %v8009
    %v8419 = vpop.xlane.xlu0 %8418
    %8420 = vmax.xlane.f32.xlu0 %v8014
    %v8421 = vpop.xlane.xlu0 %8420
    %8422 = vmax.xlane.f32.xlu0 %v8017
    %v8423 = vpop.xlane.xlu0 %8422
    %8424 = vmax.xlane.f32.xlu0 %v8022
    %v8425 = vpop.xlane.xlu0 %8424
    %8426 = vmax.xlane.f32.xlu0 %v8025
    %v8427 = vpop.xlane.xlu0 %8426
    %8428 = vmax.xlane.f32.xlu0 %v8030
    %v8429 = vpop.xlane.xlu0 %8428
    %8430 = vmax.xlane.f32.xlu0 %v8033
    %v8431 = vpop.xlane.xlu0 %8430
    %8432 = vmax.xlane.f32.xlu0 %v8038
    %v8433 = vpop.xlane.xlu0 %8432
    %8434 = vmax.xlane.f32.xlu0 %v8041
    %v8435 = vpop.xlane.xlu0 %8434
    %8436 = vmax.xlane.f32.xlu0 %v8046
    %v8437 = vpop.xlane.xlu0 %8436
    %8438 = vmax.xlane.f32.xlu0 %v8049
    %v8439 = vpop.xlane.xlu0 %8438
    %8440 = vmax.xlane.f32.xlu0 %v8054
    %v8441 = vpop.xlane.xlu0 %8440
    %8442 = vmax.xlane.f32.xlu0 %v8057
    %v8443 = vpop.xlane.xlu0 %8442
    %8444 = vmax.xlane.f32.xlu0 %v8062
    %v8445 = vpop.xlane.xlu0 %8444
    %8446 = vmax.xlane.f32.xlu0 %v8065
    %v8447 = vpop.xlane.xlu0 %8446
    %8448 = vmax.xlane.f32.xlu0 %v8070
    %v8449 = vpop.xlane.xlu0 %8448
    %8450 = vmax.xlane.f32.xlu0 %v8073
    %v8451 = vpop.xlane.xlu0 %8450
    %8452 = vmax.xlane.f32.xlu0 %v8078
    %v8453 = vpop.xlane.xlu0 %8452
    %8454 = vmax.xlane.f32.xlu0 %v8081
    %v8455 = vpop.xlane.xlu0 %8454
    %8456 = vmax.xlane.f32.xlu0 %v8086
    %v8457 = vpop.xlane.xlu0 %8456
    %8458 = vmax.xlane.f32.xlu0 %v8089
    %v8459 = vpop.xlane.xlu0 %8458
    %8460 = vmax.xlane.f32.xlu0 %v8094
    %v8461 = vpop.xlane.xlu0 %8460
    %8462 = vmax.xlane.f32.xlu0 %v8097
    %v8463 = vpop.xlane.xlu0 %8462
    %8464 = vmax.xlane.f32.xlu0 %v8102
    %v8465 = vpop.xlane.xlu0 %8464
    %8466 = vmax.xlane.f32.xlu0 %v8105
    %v8467 = vpop.xlane.xlu0 %8466
    %8468 = vmax.xlane.f32.xlu0 %v8110
    %v8469 = vpop.xlane.xlu0 %8468
    %8470 = vmax.xlane.f32.xlu0 %v8113
    %v8471 = vpop.xlane.xlu0 %8470
    %8472 = vmax.xlane.f32.xlu0 %v8118
    %v8473 = vpop.xlane.xlu0 %8472
    %8474 = vmax.xlane.f32.xlu0 %v8121
    %v8475 = vpop.xlane.xlu0 %8474
    %8476 = vmax.xlane.f32.xlu0 %v8126
    %v8477 = vpop.xlane.xlu0 %8476
    %8478 = vmax.xlane.f32.xlu0 %v8129
    %v8479 = vpop.xlane.xlu0 %8478
    %8480 = vmax.xlane.f32.xlu0 %v8134
    %v8481 = vpop.xlane.xlu0 %8480
    %8482 = vmax.xlane.f32.xlu0 %v8137
    %v8483 = vpop.xlane.xlu0 %8482
    %8484 = vmax.xlane.f32.xlu0 %v8142
    %v8485 = vpop.xlane.xlu0 %8484
    %8486 = vmax.xlane.f32.xlu0 %v8145
    %v8487 = vpop.xlane.xlu0 %8486
    %8488 = vmax.xlane.f32.xlu0 %v8150
    %v8489 = vpop.xlane.xlu0 %8488
    %8490 = vmax.xlane.f32.xlu0 %v8153
    %v8491 = vpop.xlane.xlu0 %8490
    %8492 = vmax.xlane.f32.xlu0 %v8158
    %v8493 = vpop.xlane.xlu0 %8492
    %8494 = vmax.xlane.f32.xlu0 %v8161
    %v8495 = vpop.xlane.xlu0 %8494
    %8496 = vmax.xlane.f32.xlu0 %v8166
    %v8497 = vpop.xlane.xlu0 %8496
    %8498 = vmax.xlane.f32.xlu0 %v8169
    %v8499 = vpop.xlane.xlu0 %8498
    %8500 = vmax.xlane.f32.xlu0 %v8174
    %v8501 = vpop.xlane.xlu0 %8500
    %8502 = vmax.xlane.f32.xlu0 %v8177
    %v8503 = vpop.xlane.xlu0 %8502
    %8504 = vmax.xlane.f32.xlu0 %v8182
    %v8505 = vpop.xlane.xlu0 %8504
    %8506 = vmax.xlane.f32.xlu0 %v8185
    %v8507 = vpop.xlane.xlu0 %8506
    %8508 = vmax.xlane.f32.xlu0 %v8190
    %v8509 = vpop.xlane.xlu0 %8508
    %8510 = vmax.xlane.f32.xlu0 %v8193
    %v8511 = vpop.xlane.xlu0 %8510
    %8512 = vmax.xlane.f32.xlu0 %v8198
    %v8513 = vpop.xlane.xlu0 %8512
    %8514 = vmax.xlane.f32.xlu0 %v8201
    %v8515 = vpop.xlane.xlu0 %8514
    %8516 = vmax.xlane.f32.xlu0 %v8206
    %v8517 = vpop.xlane.xlu0 %8516
    %8518 = vmax.xlane.f32.xlu0 %v8209
    %v8519 = vpop.xlane.xlu0 %8518
    %8520 = vmax.xlane.f32.xlu0 %v8214
    %v8521 = vpop.xlane.xlu0 %8520
    %8522 = vmax.xlane.f32.xlu0 %v8217
    %v8523 = vpop.xlane.xlu0 %8522
    %8524 = vmax.xlane.f32.xlu0 %v8222
    %v8525 = vpop.xlane.xlu0 %8524
    %8526 = vmax.xlane.f32.xlu0 %v8225
    %v8527 = vpop.xlane.xlu0 %8526
    %8528 = vmax.xlane.f32.xlu0 %v8230
    %v8529 = vpop.xlane.xlu0 %8528
    %8530 = vmax.xlane.f32.xlu0 %v8233
    %v8531 = vpop.xlane.xlu0 %8530
    %8532 = vmax.xlane.f32.xlu0 %v8238
    %v8533 = vpop.xlane.xlu0 %8532
    %8534 = vmax.xlane.f32.xlu0 %v8241
    %v8535 = vpop.xlane.xlu0 %8534
    %8536 = vmax.xlane.f32.xlu0 %v8246
    %v8537 = vpop.xlane.xlu0 %8536
    %8538 = vmax.xlane.f32.xlu0 %v8249
    %v8539 = vpop.xlane.xlu0 %8538
    %8540 = vmax.xlane.f32.xlu0 %v8254
    %v8541 = vpop.xlane.xlu0 %8540
    %8542 = vmax.xlane.f32.xlu0 %v8257
    %v8543 = vpop.xlane.xlu0 %8542
    %8544 = vmax.xlane.f32.xlu0 %v8262
    %v8545 = vpop.xlane.xlu0 %8544
    %8546 = vmax.xlane.f32.xlu0 %v8265
    %v8547 = vpop.xlane.xlu0 %8546
    %8548 = vmax.xlane.f32.xlu0 %v8270
    %v8549 = vpop.xlane.xlu0 %8548
    %8550 = vmax.xlane.f32.xlu0 %v8273
    %v8551 = vpop.xlane.xlu0 %8550
    %8552 = vmax.xlane.f32.xlu0 %v8278
    %v8553 = vpop.xlane.xlu0 %8552
    %8554 = vmax.xlane.f32.xlu0 %v8281
    %v8555 = vpop.xlane.xlu0 %8554
    %8556 = vmax.xlane.f32.xlu0 %v8286
    %v8557 = vpop.xlane.xlu0 %8556
    %8558 = vmax.xlane.f32.xlu0 %v8289
    %v8559 = vpop.xlane.xlu0 %8558
    %8560 = vmax.xlane.f32.xlu0 %v8294
    %v8561 = vpop.xlane.xlu0 %8560
    %8562 = vmax.xlane.f32.xlu0 %v8297
    %v8563 = vpop.xlane.xlu0 %8562
    %8564 = vmax.xlane.f32.xlu0 %v8302
    %v8565 = vpop.xlane.xlu0 %8564
    %8566 = vmax.xlane.f32.xlu0 %v8305
    %v8567 = vpop.xlane.xlu0 %8566
    %8568 = vmax.xlane.f32.xlu0 %v8310
    %v8569 = vpop.xlane.xlu0 %8568
    %8570 = vmax.xlane.f32.xlu0 %v8313
    %v8571 = vpop.xlane.xlu0 %8570
    %v8572 = vsub.f32 %v7806, %v8317
    %v8573 = vsub.f32 %v7809, %v8319
    %v8574 = vsub.f32 %v7814, %v8321
    %v8575 = vsub.f32 %v7817, %v8323
    %v8576 = vsub.f32 %v7822, %v8325
    %v8577 = vsub.f32 %v7825, %v8327
    %v8578 = vsub.f32 %v7830, %v8329
    %v8579 = vsub.f32 %v7833, %v8331
    %v8580 = vsub.f32 %v7838, %v8333
    %v8581 = vsub.f32 %v7841, %v8335
    %v8582 = vsub.f32 %v7846, %v8337
    %v8583 = vsub.f32 %v7849, %v8339
    %v8584 = vsub.f32 %v7854, %v8341
    %v8585 = vsub.f32 %v7857, %v8343
    %v8586 = vsub.f32 %v7862, %v8345
    %v8587 = vsub.f32 %v7865, %v8347
    %v8588 = vsub.f32 %v7870, %v8349
    %v8589 = vsub.f32 %v7873, %v8351
    %v8590 = vsub.f32 %v7878, %v8353
    %v8591 = vsub.f32 %v7881, %v8355
    %v8592 = vsub.f32 %v7886, %v8357
    %v8593 = vsub.f32 %v7889, %v8359
    %v8594 = vsub.f32 %v7894, %v8361
    %v8595 = vsub.f32 %v7897, %v8363
    %v8596 = vsub.f32 %v7902, %v8365
    %v8597 = vsub.f32 %v7905, %v8367
    %v8598 = vsub.f32 %v7910, %v8369
    %v8599 = vsub.f32 %v7913, %v8371
    %v8600 = vsub.f32 %v7918, %v8373
    %v8601 = vsub.f32 %v7921, %v8375
    %v8602 = vsub.f32 %v7926, %v8377
    %v8603 = vsub.f32 %v7929, %v8379
    %v8604 = vsub.f32 %v7934, %v8381
    %v8605 = vsub.f32 %v7937, %v8383
    %v8606 = vsub.f32 %v7942, %v8385
    %v8607 = vsub.f32 %v7945, %v8387
    %v8608 = vsub.f32 %v7950, %v8389
    %v8609 = vsub.f32 %v7953, %v8391
    %v8610 = vsub.f32 %v7958, %v8393
    %v8611 = vsub.f32 %v7961, %v8395
    %v8612 = vsub.f32 %v7966, %v8397
    %v8613 = vsub.f32 %v7969, %v8399
    %v8614 = vsub.f32 %v7974, %v8401
    %v8615 = vsub.f32 %v7977, %v8403
    %v8616 = vsub.f32 %v7982, %v8405
    %v8617 = vsub.f32 %v7985, %v8407
    %v8618 = vsub.f32 %v7990, %v8409
    %v8619 = vsub.f32 %v7993, %v8411
    %v8620 = vsub.f32 %v7998, %v8413
    %v8621 = vsub.f32 %v8001, %v8415
    %v8622 = vsub.f32 %v8006, %v8417
    %v8623 = vsub.f32 %v8009, %v8419
    %v8624 = vsub.f32 %v8014, %v8421
    %v8625 = vsub.f32 %v8017, %v8423
    %v8626 = vsub.f32 %v8022, %v8425
    %v8627 = vsub.f32 %v8025, %v8427
    %v8628 = vsub.f32 %v8030, %v8429
    %v8629 = vsub.f32 %v8033, %v8431
    %v8630 = vsub.f32 %v8038, %v8433
    %v8631 = vsub.f32 %v8041, %v8435
    %v8632 = vsub.f32 %v8046, %v8437
    %v8633 = vsub.f32 %v8049, %v8439
    %v8634 = vsub.f32 %v8054, %v8441
    %v8635 = vsub.f32 %v8057, %v8443
    %v8636 = vsub.f32 %v8062, %v8445
    %v8637 = vsub.f32 %v8065, %v8447
    %v8638 = vsub.f32 %v8070, %v8449
    %v8639 = vsub.f32 %v8073, %v8451
    %v8640 = vsub.f32 %v8078, %v8453
    %v8641 = vsub.f32 %v8081, %v8455
    %v8642 = vsub.f32 %v8086, %v8457
    %v8643 = vsub.f32 %v8089, %v8459
    %v8644 = vsub.f32 %v8094, %v8461
    %v8645 = vsub.f32 %v8097, %v8463
    %v8646 = vsub.f32 %v8102, %v8465
    %v8647 = vsub.f32 %v8105, %v8467
    %v8648 = vsub.f32 %v8110, %v8469
    %v8649 = vsub.f32 %v8113, %v8471
    %v8650 = vsub.f32 %v8118, %v8473
    %v8651 = vsub.f32 %v8121, %v8475
    %v8652 = vsub.f32 %v8126, %v8477
    %v8653 = vsub.f32 %v8129, %v8479
    %v8654 = vsub.f32 %v8134, %v8481
    %v8655 = vsub.f32 %v8137, %v8483
    %v8656 = vsub.f32 %v8142, %v8485
    %v8657 = vsub.f32 %v8145, %v8487
    %v8658 = vsub.f32 %v8150, %v8489
    %v8659 = vsub.f32 %v8153, %v8491
    %v8660 = vsub.f32 %v8158, %v8493
    %v8661 = vsub.f32 %v8161, %v8495
    %v8662 = vsub.f32 %v8166, %v8497
    %v8663 = vsub.f32 %v8169, %v8499
    %v8664 = vsub.f32 %v8174, %v8501
    %v8665 = vsub.f32 %v8177, %v8503
    %v8666 = vsub.f32 %v8182, %v8505
    %v8667 = vsub.f32 %v8185, %v8507
    %v8668 = vsub.f32 %v8190, %v8509
    %v8669 = vsub.f32 %v8193, %v8511
    %v8670 = vsub.f32 %v8198, %v8513
    %v8671 = vsub.f32 %v8201, %v8515
    %v8672 = vsub.f32 %v8206, %v8517
    %v8673 = vsub.f32 %v8209, %v8519
    %v8674 = vsub.f32 %v8214, %v8521
    %v8675 = vsub.f32 %v8217, %v8523
    %v8676 = vsub.f32 %v8222, %v8525
    %v8677 = vsub.f32 %v8225, %v8527
    %v8678 = vsub.f32 %v8230, %v8529
    %v8679 = vsub.f32 %v8233, %v8531
    %v8680 = vsub.f32 %v8238, %v8533
    %v8681 = vsub.f32 %v8241, %v8535
    %v8682 = vsub.f32 %v8246, %v8537
    %v8683 = vsub.f32 %v8249, %v8539
    %v8684 = vsub.f32 %v8254, %v8541
    %v8685 = vsub.f32 %v8257, %v8543
    %v8686 = vsub.f32 %v8262, %v8545
    %v8687 = vsub.f32 %v8265, %v8547
    %v8688 = vsub.f32 %v8270, %v8549
    %v8689 = vsub.f32 %v8273, %v8551
    %v8690 = vsub.f32 %v8278, %v8553
    %v8691 = vsub.f32 %v8281, %v8555
    %v8692 = vsub.f32 %v8286, %v8557
    %v8693 = vsub.f32 %v8289, %v8559
    %v8694 = vsub.f32 %v8294, %v8561
    %v8695 = vsub.f32 %v8297, %v8563
    %v8696 = vsub.f32 %v8302, %v8565
    %v8697 = vsub.f32 %v8305, %v8567
    %v8698 = vsub.f32 %v8310, %v8569
    %v8699 = vsub.f32 %v8313, %v8571
    %v8700 = vmul.f32 %v8572, 1.442695
    %v8701 = vpow.pop %v8700
    %v8702 = vmul.f32 %v8573, 1.442695
    %v8703 = vpow.pop %v8702
    %v8704 = vmul.f32 %v8574, 1.442695
    %v8705 = vpow.pop %v8704
    %v8706 = vmul.f32 %v8575, 1.442695
    %v8707 = vpow.pop %v8706
    %v8708 = vmul.f32 %v8576, 1.442695
    %v8709 = vpow.pop %v8708
    %v8710 = vmul.f32 %v8577, 1.442695
    %v8711 = vpow.pop %v8710
    %v8712 = vmul.f32 %v8578, 1.442695
    %v8713 = vpow.pop %v8712
    %v8714 = vmul.f32 %v8579, 1.442695
    %v8715 = vpow.pop %v8714
    %v8716 = vmul.f32 %v8580, 1.442695
    %v8717 = vpow.pop %v8716
    %v8718 = vmul.f32 %v8581, 1.442695
    %v8719 = vpow.pop %v8718
    %v8720 = vmul.f32 %v8582, 1.442695
    %v8721 = vpow.pop %v8720
    %v8722 = vmul.f32 %v8583, 1.442695
    %v8723 = vpow.pop %v8722
    %v8724 = vmul.f32 %v8584, 1.442695
    %v8725 = vpow.pop %v8724
    %v8726 = vmul.f32 %v8585, 1.442695
    %v8727 = vpow.pop %v8726
    %v8728 = vmul.f32 %v8586, 1.442695
    %v8729 = vpow.pop %v8728
    %v8730 = vmul.f32 %v8587, 1.442695
    %v8731 = vpow.pop %v8730
    %v8732 = vmul.f32 %v8588, 1.442695
    %v8733 = vpow.pop %v8732
    %v8734 = vmul.f32 %v8589, 1.442695
    %v8735 = vpow.pop %v8734
    %v8736 = vmul.f32 %v8590, 1.442695
    %v8737 = vpow.pop %v8736
    %v8738 = vmul.f32 %v8591, 1.442695
    %v8739 = vpow.pop %v8738
    %v8740 = vmul.f32 %v8592, 1.442695
    %v8741 = vpow.pop %v8740
    %v8742 = vmul.f32 %v8593, 1.442695
    %v8743 = vpow.pop %v8742
    %v8744 = vmul.f32 %v8594, 1.442695
    %v8745 = vpow.pop %v8744
    %v8746 = vmul.f32 %v8595, 1.442695
    %v8747 = vpow.pop %v8746
    %v8748 = vmul.f32 %v8596, 1.442695
    %v8749 = vpow.pop %v8748
    %v8750 = vmul.f32 %v8597, 1.442695
    %v8751 = vpow.pop %v8750
    %v8752 = vmul.f32 %v8598, 1.442695
    %v8753 = vpow.pop %v8752
    %v8754 = vmul.f32 %v8599, 1.442695
    %v8755 = vpow.pop %v8754
    %v8756 = vmul.f32 %v8600, 1.442695
    %v8757 = vpow.pop %v8756
    %v8758 = vmul.f32 %v8601, 1.442695
    %v8759 = vpow.pop %v8758
    %v8760 = vmul.f32 %v8602, 1.442695
    %v8761 = vpow.pop %v8760
    %v8762 = vmul.f32 %v8603, 1.442695
    %v8763 = vpow.pop %v8762
    %v8764 = vmul.f32 %v8604, 1.442695
    %v8765 = vpow.pop %v8764
    %v8766 = vmul.f32 %v8605, 1.442695
    %v8767 = vpow.pop %v8766
    %v8768 = vmul.f32 %v8606, 1.442695
    %v8769 = vpow.pop %v8768
    %v8770 = vmul.f32 %v8607, 1.442695
    %v8771 = vpow.pop %v8770
    %v8772 = vmul.f32 %v8608, 1.442695
    %v8773 = vpow.pop %v8772
    %v8774 = vmul.f32 %v8609, 1.442695
    %v8775 = vpow.pop %v8774
    %v8776 = vmul.f32 %v8610, 1.442695
    %v8777 = vpow.pop %v8776
    %v8778 = vmul.f32 %v8611, 1.442695
    %v8779 = vpow.pop %v8778
    %v8780 = vmul.f32 %v8612, 1.442695
    %v8781 = vpow.pop %v8780
    %v8782 = vmul.f32 %v8613, 1.442695
    %v8783 = vpow.pop %v8782
    %v8784 = vmul.f32 %v8614, 1.442695
    %v8785 = vpow.pop %v8784
    %v8786 = vmul.f32 %v8615, 1.442695
    %v8787 = vpow.pop %v8786
    %v8788 = vmul.f32 %v8616, 1.442695
    %v8789 = vpow.pop %v8788
    %v8790 = vmul.f32 %v8617, 1.442695
    %v8791 = vpow.pop %v8790
    %v8792 = vmul.f32 %v8618, 1.442695
    %v8793 = vpow.pop %v8792
    %v8794 = vmul.f32 %v8619, 1.442695
    %v8795 = vpow.pop %v8794
    %v8796 = vmul.f32 %v8620, 1.442695
    %v8797 = vpow.pop %v8796
    %v8798 = vmul.f32 %v8621, 1.442695
    %v8799 = vpow.pop %v8798
    %v8800 = vmul.f32 %v8622, 1.442695
    %v8801 = vpow.pop %v8800
    %v8802 = vmul.f32 %v8623, 1.442695
    %v8803 = vpow.pop %v8802
    %v8804 = vmul.f32 %v8624, 1.442695
    %v8805 = vpow.pop %v8804
    %v8806 = vmul.f32 %v8625, 1.442695
    %v8807 = vpow.pop %v8806
    %v8808 = vmul.f32 %v8626, 1.442695
    %v8809 = vpow.pop %v8808
    %v8810 = vmul.f32 %v8627, 1.442695
    %v8811 = vpow.pop %v8810
    %v8812 = vmul.f32 %v8628, 1.442695
    %v8813 = vpow.pop %v8812
    %v8814 = vmul.f32 %v8629, 1.442695
    %v8815 = vpow.pop %v8814
    %v8816 = vmul.f32 %v8630, 1.442695
    %v8817 = vpow.pop %v8816
    %v8818 = vmul.f32 %v8631, 1.442695
    %v8819 = vpow.pop %v8818
    %v8820 = vmul.f32 %v8632, 1.442695
    %v8821 = vpow.pop %v8820
    %v8822 = vmul.f32 %v8633, 1.442695
    %v8823 = vpow.pop %v8822
    %v8824 = vmul.f32 %v8634, 1.442695
    %v8825 = vpow.pop %v8824
    %v8826 = vmul.f32 %v8635, 1.442695
    %v8827 = vpow.pop %v8826
    %v8828 = vmul.f32 %v8636, 1.442695
    %v8829 = vpow.pop %v8828
    %v8830 = vmul.f32 %v8637, 1.442695
    %v8831 = vpow.pop %v8830
    %v8832 = vmul.f32 %v8638, 1.442695
    %v8833 = vpow.pop %v8832
    %v8834 = vmul.f32 %v8639, 1.442695
    %v8835 = vpow.pop %v8834
    %v8836 = vmul.f32 %v8640, 1.442695
    %v8837 = vpow.pop %v8836
    %v8838 = vmul.f32 %v8641, 1.442695
    %v8839 = vpow.pop %v8838
    %v8840 = vmul.f32 %v8642, 1.442695
    %v8841 = vpow.pop %v8840
    %v8842 = vmul.f32 %v8643, 1.442695
    %v8843 = vpow.pop %v8842
    %v8844 = vmul.f32 %v8644, 1.442695
    %v8845 = vpow.pop %v8844
    %v8846 = vmul.f32 %v8645, 1.442695
    %v8847 = vpow.pop %v8846
    %v8848 = vmul.f32 %v8646, 1.442695
    %v8849 = vpow.pop %v8848
    %v8850 = vmul.f32 %v8647, 1.442695
    %v8851 = vpow.pop %v8850
    %v8852 = vmul.f32 %v8648, 1.442695
    %v8853 = vpow.pop %v8852
    %v8854 = vmul.f32 %v8649, 1.442695
    %v8855 = vpow.pop %v8854
    %v8856 = vmul.f32 %v8650, 1.442695
    %v8857 = vpow.pop %v8856
    %v8858 = vmul.f32 %v8651, 1.442695
    %v8859 = vpow.pop %v8858
    %v8860 = vmul.f32 %v8652, 1.442695
    %v8861 = vpow.pop %v8860
    %v8862 = vmul.f32 %v8653, 1.442695
    %v8863 = vpow.pop %v8862
    %v8864 = vmul.f32 %v8654, 1.442695
    %v8865 = vpow.pop %v8864
    %v8866 = vmul.f32 %v8655, 1.442695
    %v8867 = vpow.pop %v8866
    %v8868 = vmul.f32 %v8656, 1.442695
    %v8869 = vpow.pop %v8868
    %v8870 = vmul.f32 %v8657, 1.442695
    %v8871 = vpow.pop %v8870
    %v8872 = vmul.f32 %v8658, 1.442695
    %v8873 = vpow.pop %v8872
    %v8874 = vmul.f32 %v8659, 1.442695
    %v8875 = vpow.pop %v8874
    %v8876 = vmul.f32 %v8660, 1.442695
    %v8877 = vpow.pop %v8876
    %v8878 = vmul.f32 %v8661, 1.442695
    %v8879 = vpow.pop %v8878
    %v8880 = vmul.f32 %v8662, 1.442695
    %v8881 = vpow.pop %v8880
    %v8882 = vmul.f32 %v8663, 1.442695
    %v8883 = vpow.pop %v8882
    %v8884 = vmul.f32 %v8664, 1.442695
    %v8885 = vpow.pop %v8884
    %v8886 = vmul.f32 %v8665, 1.442695
    %v8887 = vpow.pop %v8886
    %v8888 = vmul.f32 %v8666, 1.442695
    %v8889 = vpow.pop %v8888
    %v8890 = vmul.f32 %v8667, 1.442695
    %v8891 = vpow.pop %v8890
    %v8892 = vmul.f32 %v8668, 1.442695
    %v8893 = vpow.pop %v8892
    %v8894 = vmul.f32 %v8669, 1.442695
    %v8895 = vpow.pop %v8894
    %v8896 = vmul.f32 %v8670, 1.442695
    %v8897 = vpow.pop %v8896
    %v8898 = vmul.f32 %v8671, 1.442695
    %v8899 = vpow.pop %v8898
    %v8900 = vmul.f32 %v8672, 1.442695
    %v8901 = vpow.pop %v8900
    %v8902 = vmul.f32 %v8673, 1.442695
    %v8903 = vpow.pop %v8902
    %v8904 = vmul.f32 %v8674, 1.442695
    %v8905 = vpow.pop %v8904
    %v8906 = vmul.f32 %v8675, 1.442695
    %v8907 = vpow.pop %v8906
    %v8908 = vmul.f32 %v8676, 1.442695
    %v8909 = vpow.pop %v8908
    %v8910 = vmul.f32 %v8677, 1.442695
    %v8911 = vpow.pop %v8910
    %v8912 = vmul.f32 %v8678, 1.442695
    %v8913 = vpow.pop %v8912
    %v8914 = vmul.f32 %v8679, 1.442695
    %v8915 = vpow.pop %v8914
    %v8916 = vmul.f32 %v8680, 1.442695
    %v8917 = vpow.pop %v8916
    %v8918 = vmul.f32 %v8681, 1.442695
    %v8919 = vpow.pop %v8918
    %v8920 = vmul.f32 %v8682, 1.442695
    %v8921 = vpow.pop %v8920
    %v8922 = vmul.f32 %v8683, 1.442695
    %v8923 = vpow.pop %v8922
    %v8924 = vmul.f32 %v8684, 1.442695
    %v8925 = vpow.pop %v8924
    %v8926 = vmul.f32 %v8685, 1.442695
    %v8927 = vpow.pop %v8926
    %v8928 = vmul.f32 %v8686, 1.442695
    %v8929 = vpow.pop %v8928
    %v8930 = vmul.f32 %v8687, 1.442695
    %v8931 = vpow.pop %v8930
    %v8932 = vmul.f32 %v8688, 1.442695
    %v8933 = vpow.pop %v8932
    %v8934 = vmul.f32 %v8689, 1.442695
    %v8935 = vpow.pop %v8934
    %v8936 = vmul.f32 %v8690, 1.442695
    %v8937 = vpow.pop %v8936
    %v8938 = vmul.f32 %v8691, 1.442695
    %v8939 = vpow.pop %v8938
    %v8940 = vmul.f32 %v8692, 1.442695
    %v8941 = vpow.pop %v8940
    %v8942 = vmul.f32 %v8693, 1.442695
    %v8943 = vpow.pop %v8942
    %v8944 = vmul.f32 %v8694, 1.442695
    %v8945 = vpow.pop %v8944
    %v8946 = vmul.f32 %v8695, 1.442695
    %v8947 = vpow.pop %v8946
    %v8948 = vmul.f32 %v8696, 1.442695
    %v8949 = vpow.pop %v8948
    %v8950 = vmul.f32 %v8697, 1.442695
    %v8951 = vpow.pop %v8950
    %v8952 = vmul.f32 %v8698, 1.442695
    %v8953 = vpow.pop %v8952
    %v8954 = vmul.f32 %v8699, 1.442695
    %v8955 = vpow.pop %v8954
    %8956 = vadd.xlane.f32.xlu0 %v8701
    %v8957 = vpop.xlane.xlu0 %8956
    %8958 = vadd.xlane.f32.xlu0 %v8703
    %v8959 = vpop.xlane.xlu0 %8958
    %8960 = vadd.xlane.f32.xlu0 %v8705
    %v8961 = vpop.xlane.xlu0 %8960
    %8962 = vadd.xlane.f32.xlu0 %v8707
    %v8963 = vpop.xlane.xlu0 %8962
    %8964 = vadd.xlane.f32.xlu0 %v8709
    %v8965 = vpop.xlane.xlu0 %8964
    %8966 = vadd.xlane.f32.xlu0 %v8711
    %v8967 = vpop.xlane.xlu0 %8966
    %8968 = vadd.xlane.f32.xlu0 %v8713
    %v8969 = vpop.xlane.xlu0 %8968
    %8970 = vadd.xlane.f32.xlu0 %v8715
    %v8971 = vpop.xlane.xlu0 %8970
    %8972 = vadd.xlane.f32.xlu0 %v8717
    %v8973 = vpop.xlane.xlu0 %8972
    %8974 = vadd.xlane.f32.xlu0 %v8719
    %v8975 = vpop.xlane.xlu0 %8974
    %8976 = vadd.xlane.f32.xlu0 %v8721
    %v8977 = vpop.xlane.xlu0 %8976
    %8978 = vadd.xlane.f32.xlu0 %v8723
    %v8979 = vpop.xlane.xlu0 %8978
    %8980 = vadd.xlane.f32.xlu0 %v8725
    %v8981 = vpop.xlane.xlu0 %8980
    %8982 = vadd.xlane.f32.xlu0 %v8727
    %v8983 = vpop.xlane.xlu0 %8982
    %8984 = vadd.xlane.f32.xlu0 %v8729
    %v8985 = vpop.xlane.xlu0 %8984
    %8986 = vadd.xlane.f32.xlu0 %v8731
    %v8987 = vpop.xlane.xlu0 %8986
    %8988 = vadd.xlane.f32.xlu0 %v8733
    %v8989 = vpop.xlane.xlu0 %8988
    %8990 = vadd.xlane.f32.xlu0 %v8735
    %v8991 = vpop.xlane.xlu0 %8990
    %8992 = vadd.xlane.f32.xlu0 %v8737
    %v8993 = vpop.xlane.xlu0 %8992
    %8994 = vadd.xlane.f32.xlu0 %v8739
    %v8995 = vpop.xlane.xlu0 %8994
    %8996 = vadd.xlane.f32.xlu0 %v8741
    %v8997 = vpop.xlane.xlu0 %8996
    %8998 = vadd.xlane.f32.xlu0 %v8743
    %v8999 = vpop.xlane.xlu0 %8998
    %9000 = vadd.xlane.f32.xlu0 %v8745
    %v9001 = vpop.xlane.xlu0 %9000
    %9002 = vadd.xlane.f32.xlu0 %v8747
    %v9003 = vpop.xlane.xlu0 %9002
    %9004 = vadd.xlane.f32.xlu0 %v8749
    %v9005 = vpop.xlane.xlu0 %9004
    %9006 = vadd.xlane.f32.xlu0 %v8751
    %v9007 = vpop.xlane.xlu0 %9006
    %9008 = vadd.xlane.f32.xlu0 %v8753
    %v9009 = vpop.xlane.xlu0 %9008
    %9010 = vadd.xlane.f32.xlu0 %v8755
    %v9011 = vpop.xlane.xlu0 %9010
    %9012 = vadd.xlane.f32.xlu0 %v8757
    %v9013 = vpop.xlane.xlu0 %9012
    %9014 = vadd.xlane.f32.xlu0 %v8759
    %v9015 = vpop.xlane.xlu0 %9014
    %9016 = vadd.xlane.f32.xlu0 %v8761
    %v9017 = vpop.xlane.xlu0 %9016
    %9018 = vadd.xlane.f32.xlu0 %v8763
    %v9019 = vpop.xlane.xlu0 %9018
    %9020 = vadd.xlane.f32.xlu0 %v8765
    %v9021 = vpop.xlane.xlu0 %9020
    %9022 = vadd.xlane.f32.xlu0 %v8767
    %v9023 = vpop.xlane.xlu0 %9022
    %9024 = vadd.xlane.f32.xlu0 %v8769
    %v9025 = vpop.xlane.xlu0 %9024
    %9026 = vadd.xlane.f32.xlu0 %v8771
    %v9027 = vpop.xlane.xlu0 %9026
    %9028 = vadd.xlane.f32.xlu0 %v8773
    %v9029 = vpop.xlane.xlu0 %9028
    %9030 = vadd.xlane.f32.xlu0 %v8775
    %v9031 = vpop.xlane.xlu0 %9030
    %9032 = vadd.xlane.f32.xlu0 %v8777
    %v9033 = vpop.xlane.xlu0 %9032
    %9034 = vadd.xlane.f32.xlu0 %v8779
    %v9035 = vpop.xlane.xlu0 %9034
    %9036 = vadd.xlane.f32.xlu0 %v8781
    %v9037 = vpop.xlane.xlu0 %9036
    %9038 = vadd.xlane.f32.xlu0 %v8783
    %v9039 = vpop.xlane.xlu0 %9038
    %9040 = vadd.xlane.f32.xlu0 %v8785
    %v9041 = vpop.xlane.xlu0 %9040
    %9042 = vadd.xlane.f32.xlu0 %v8787
    %v9043 = vpop.xlane.xlu0 %9042
    %9044 = vadd.xlane.f32.xlu0 %v8789
    %v9045 = vpop.xlane.xlu0 %9044
    %9046 = vadd.xlane.f32.xlu0 %v8791
    %v9047 = vpop.xlane.xlu0 %9046
    %9048 = vadd.xlane.f32.xlu0 %v8793
    %v9049 = vpop.xlane.xlu0 %9048
    %9050 = vadd.xlane.f32.xlu0 %v8795
    %v9051 = vpop.xlane.xlu0 %9050
    %9052 = vadd.xlane.f32.xlu0 %v8797
    %v9053 = vpop.xlane.xlu0 %9052
    %9054 = vadd.xlane.f32.xlu0 %v8799
    %v9055 = vpop.xlane.xlu0 %9054
    %9056 = vadd.xlane.f32.xlu0 %v8801
    %v9057 = vpop.xlane.xlu0 %9056
    %9058 = vadd.xlane.f32.xlu0 %v8803
    %v9059 = vpop.xlane.xlu0 %9058
    %9060 = vadd.xlane.f32.xlu0 %v8805
    %v9061 = vpop.xlane.xlu0 %9060
    %9062 = vadd.xlane.f32.xlu0 %v8807
    %v9063 = vpop.xlane.xlu0 %9062
    %9064 = vadd.xlane.f32.xlu0 %v8809
    %v9065 = vpop.xlane.xlu0 %9064
    %9066 = vadd.xlane.f32.xlu0 %v8811
    %v9067 = vpop.xlane.xlu0 %9066
    %9068 = vadd.xlane.f32.xlu0 %v8813
    %v9069 = vpop.xlane.xlu0 %9068
    %9070 = vadd.xlane.f32.xlu0 %v8815
    %v9071 = vpop.xlane.xlu0 %9070
    %9072 = vadd.xlane.f32.xlu0 %v8817
    %v9073 = vpop.xlane.xlu0 %9072
    %9074 = vadd.xlane.f32.xlu0 %v8819
    %v9075 = vpop.xlane.xlu0 %9074
    %9076 = vadd.xlane.f32.xlu0 %v8821
    %v9077 = vpop.xlane.xlu0 %9076
    %9078 = vadd.xlane.f32.xlu0 %v8823
    %v9079 = vpop.xlane.xlu0 %9078
    %9080 = vadd.xlane.f32.xlu0 %v8825
    %v9081 = vpop.xlane.xlu0 %9080
    %9082 = vadd.xlane.f32.xlu0 %v8827
    %v9083 = vpop.xlane.xlu0 %9082
    %9084 = vadd.xlane.f32.xlu0 %v8829
    %v9085 = vpop.xlane.xlu0 %9084
    %9086 = vadd.xlane.f32.xlu0 %v8831
    %v9087 = vpop.xlane.xlu0 %9086
    %9088 = vadd.xlane.f32.xlu0 %v8833
    %v9089 = vpop.xlane.xlu0 %9088
    %9090 = vadd.xlane.f32.xlu0 %v8835
    %v9091 = vpop.xlane.xlu0 %9090
    %9092 = vadd.xlane.f32.xlu0 %v8837
    %v9093 = vpop.xlane.xlu0 %9092
    %9094 = vadd.xlane.f32.xlu0 %v8839
    %v9095 = vpop.xlane.xlu0 %9094
    %9096 = vadd.xlane.f32.xlu0 %v8841
    %v9097 = vpop.xlane.xlu0 %9096
    %9098 = vadd.xlane.f32.xlu0 %v8843
    %v9099 = vpop.xlane.xlu0 %9098
    %9100 = vadd.xlane.f32.xlu0 %v8845
    %v9101 = vpop.xlane.xlu0 %9100
    %9102 = vadd.xlane.f32.xlu0 %v8847
    %v9103 = vpop.xlane.xlu0 %9102
    %9104 = vadd.xlane.f32.xlu0 %v8849
    %v9105 = vpop.xlane.xlu0 %9104
    %9106 = vadd.xlane.f32.xlu0 %v8851
    %v9107 = vpop.xlane.xlu0 %9106
    %9108 = vadd.xlane.f32.xlu0 %v8853
    %v9109 = vpop.xlane.xlu0 %9108
    %9110 = vadd.xlane.f32.xlu0 %v8855
    %v9111 = vpop.xlane.xlu0 %9110
    %9112 = vadd.xlane.f32.xlu0 %v8857
    %v9113 = vpop.xlane.xlu0 %9112
    %9114 = vadd.xlane.f32.xlu0 %v8859
    %v9115 = vpop.xlane.xlu0 %9114
    %9116 = vadd.xlane.f32.xlu0 %v8861
    %v9117 = vpop.xlane.xlu0 %9116
    %9118 = vadd.xlane.f32.xlu0 %v8863
    %v9119 = vpop.xlane.xlu0 %9118
    %9120 = vadd.xlane.f32.xlu0 %v8865
    %v9121 = vpop.xlane.xlu0 %9120
    %9122 = vadd.xlane.f32.xlu0 %v8867
    %v9123 = vpop.xlane.xlu0 %9122
    %9124 = vadd.xlane.f32.xlu0 %v8869
    %v9125 = vpop.xlane.xlu0 %9124
    %9126 = vadd.xlane.f32.xlu0 %v8871
    %v9127 = vpop.xlane.xlu0 %9126
    %9128 = vadd.xlane.f32.xlu0 %v8873
    %v9129 = vpop.xlane.xlu0 %9128
    %9130 = vadd.xlane.f32.xlu0 %v8875
    %v9131 = vpop.xlane.xlu0 %9130
    %9132 = vadd.xlane.f32.xlu0 %v8877
    %v9133 = vpop.xlane.xlu0 %9132
    %9134 = vadd.xlane.f32.xlu0 %v8879
    %v9135 = vpop.xlane.xlu0 %9134
    %9136 = vadd.xlane.f32.xlu0 %v8881
    %v9137 = vpop.xlane.xlu0 %9136
    %9138 = vadd.xlane.f32.xlu0 %v8883
    %v9139 = vpop.xlane.xlu0 %9138
    %9140 = vadd.xlane.f32.xlu0 %v8885
    %v9141 = vpop.xlane.xlu0 %9140
    %9142 = vadd.xlane.f32.xlu0 %v8887
    %v9143 = vpop.xlane.xlu0 %9142
    %9144 = vadd.xlane.f32.xlu0 %v8889
    %v9145 = vpop.xlane.xlu0 %9144
    %9146 = vadd.xlane.f32.xlu0 %v8891
    %v9147 = vpop.xlane.xlu0 %9146
    %9148 = vadd.xlane.f32.xlu0 %v8893
    %v9149 = vpop.xlane.xlu0 %9148
    %9150 = vadd.xlane.f32.xlu0 %v8895
    %v9151 = vpop.xlane.xlu0 %9150
    %9152 = vadd.xlane.f32.xlu0 %v8897
    %v9153 = vpop.xlane.xlu0 %9152
    %9154 = vadd.xlane.f32.xlu0 %v8899
    %v9155 = vpop.xlane.xlu0 %9154
    %9156 = vadd.xlane.f32.xlu0 %v8901
    %v9157 = vpop.xlane.xlu0 %9156
    %9158 = vadd.xlane.f32.xlu0 %v8903
    %v9159 = vpop.xlane.xlu0 %9158
    %9160 = vadd.xlane.f32.xlu0 %v8905
    %v9161 = vpop.xlane.xlu0 %9160
    %9162 = vadd.xlane.f32.xlu0 %v8907
    %v9163 = vpop.xlane.xlu0 %9162
    %9164 = vadd.xlane.f32.xlu0 %v8909
    %v9165 = vpop.xlane.xlu0 %9164
    %9166 = vadd.xlane.f32.xlu0 %v8911
    %v9167 = vpop.xlane.xlu0 %9166
    %9168 = vadd.xlane.f32.xlu0 %v8913
    %v9169 = vpop.xlane.xlu0 %9168
    %9170 = vadd.xlane.f32.xlu0 %v8915
    %v9171 = vpop.xlane.xlu0 %9170
    %9172 = vadd.xlane.f32.xlu0 %v8917
    %v9173 = vpop.xlane.xlu0 %9172
    %9174 = vadd.xlane.f32.xlu0 %v8919
    %v9175 = vpop.xlane.xlu0 %9174
    %9176 = vadd.xlane.f32.xlu0 %v8921
    %v9177 = vpop.xlane.xlu0 %9176
    %9178 = vadd.xlane.f32.xlu0 %v8923
    %v9179 = vpop.xlane.xlu0 %9178
    %9180 = vadd.xlane.f32.xlu0 %v8925
    %v9181 = vpop.xlane.xlu0 %9180
    %9182 = vadd.xlane.f32.xlu0 %v8927
    %v9183 = vpop.xlane.xlu0 %9182
    %9184 = vadd.xlane.f32.xlu0 %v8929
    %v9185 = vpop.xlane.xlu0 %9184
    %9186 = vadd.xlane.f32.xlu0 %v8931
    %v9187 = vpop.xlane.xlu0 %9186
    %9188 = vadd.xlane.f32.xlu0 %v8933
    %v9189 = vpop.xlane.xlu0 %9188
    %9190 = vadd.xlane.f32.xlu0 %v8935
    %v9191 = vpop.xlane.xlu0 %9190
    %9192 = vadd.xlane.f32.xlu0 %v8937
    %v9193 = vpop.xlane.xlu0 %9192
    %9194 = vadd.xlane.f32.xlu0 %v8939
    %v9195 = vpop.xlane.xlu0 %9194
    %9196 = vadd.xlane.f32.xlu0 %v8941
    %v9197 = vpop.xlane.xlu0 %9196
    %9198 = vadd.xlane.f32.xlu0 %v8943
    %v9199 = vpop.xlane.xlu0 %9198
    %9200 = vadd.xlane.f32.xlu0 %v8945
    %v9201 = vpop.xlane.xlu0 %9200
    %9202 = vadd.xlane.f32.xlu0 %v8947
    %v9203 = vpop.xlane.xlu0 %9202
    %9204 = vadd.xlane.f32.xlu0 %v8949
    %v9205 = vpop.xlane.xlu0 %9204
    %9206 = vadd.xlane.f32.xlu0 %v8951
    %v9207 = vpop.xlane.xlu0 %9206
    %9208 = vadd.xlane.f32.xlu0 %v8953
    %v9209 = vpop.xlane.xlu0 %9208
    %9210 = vadd.xlane.f32.xlu0 %v8955
    %v9211 = vpop.xlane.xlu0 %9210
    %v9212 = vrcp.pop %v8957
    %v9213 = vrcp.pop %v8959
    %v9214 = vrcp.pop %v8961
    %v9215 = vrcp.pop %v8963
    %v9216 = vrcp.pop %v8965
    %v9217 = vrcp.pop %v8967
    %v9218 = vrcp.pop %v8969
    %v9219 = vrcp.pop %v8971
    %v9220 = vrcp.pop %v8973
    %v9221 = vrcp.pop %v8975
    %v9222 = vrcp.pop %v8977
    %v9223 = vrcp.pop %v8979
    %v9224 = vrcp.pop %v8981
    %v9225 = vrcp.pop %v8983
    %v9226 = vrcp.pop %v8985
    %v9227 = vrcp.pop %v8987
    %v9228 = vrcp.pop %v8989
    %v9229 = vrcp.pop %v8991
    %v9230 = vrcp.pop %v8993
    %v9231 = vrcp.pop %v8995
    %v9232 = vrcp.pop %v8997
    %v9233 = vrcp.pop %v8999
    %v9234 = vrcp.pop %v9001
    %v9235 = vrcp.pop %v9003
    %v9236 = vrcp.pop %v9005
    %v9237 = vrcp.pop %v9007
    %v9238 = vrcp.pop %v9009
    %v9239 = vrcp.pop %v9011
    %v9240 = vrcp.pop %v9013
    %v9241 = vrcp.pop %v9015
    %v9242 = vrcp.pop %v9017
    %v9243 = vrcp.pop %v9019
    %v9244 = vrcp.pop %v9021
    %v9245 = vrcp.pop %v9023
    %v9246 = vrcp.pop %v9025
    %v9247 = vrcp.pop %v9027
    %v9248 = vrcp.pop %v9029
    %v9249 = vrcp.pop %v9031
    %v9250 = vrcp.pop %v9033
    %v9251 = vrcp.pop %v9035
    %v9252 = vrcp.pop %v9037
    %v9253 = vrcp.pop %v9039
    %v9254 = vrcp.pop %v9041
    %v9255 = vrcp.pop %v9043
    %v9256 = vrcp.pop %v9045
    %v9257 = vrcp.pop %v9047
    %v9258 = vrcp.pop %v9049
    %v9259 = vrcp.pop %v9051
    %v9260 = vrcp.pop %v9053
    %v9261 = vrcp.pop %v9055
    %v9262 = vrcp.pop %v9057
    %v9263 = vrcp.pop %v9059
    %v9264 = vrcp.pop %v9061
    %v9265 = vrcp.pop %v9063
    %v9266 = vrcp.pop %v9065
    %v9267 = vrcp.pop %v9067
    %v9268 = vrcp.pop %v9069
    %v9269 = vrcp.pop %v9071
    %v9270 = vrcp.pop %v9073
    %v9271 = vrcp.pop %v9075
    %v9272 = vrcp.pop %v9077
    %v9273 = vrcp.pop %v9079
    %v9274 = vrcp.pop %v9081
    %v9275 = vrcp.pop %v9083
    %v9276 = vrcp.pop %v9085
    %v9277 = vrcp.pop %v9087
    %v9278 = vrcp.pop %v9089
    %v9279 = vrcp.pop %v9091
    %v9280 = vrcp.pop %v9093
    %v9281 = vrcp.pop %v9095
    %v9282 = vrcp.pop %v9097
    %v9283 = vrcp.pop %v9099
    %v9284 = vrcp.pop %v9101
    %v9285 = vrcp.pop %v9103
    %v9286 = vrcp.pop %v9105
    %v9287 = vrcp.pop %v9107
    %v9288 = vrcp.pop %v9109
    %v9289 = vrcp.pop %v9111
    %v9290 = vrcp.pop %v9113
    %v9291 = vrcp.pop %v9115
    %v9292 = vrcp.pop %v9117
    %v9293 = vrcp.pop %v9119
    %v9294 = vrcp.pop %v9121
    %v9295 = vrcp.pop %v9123
    %v9296 = vrcp.pop %v9125
    %v9297 = vrcp.pop %v9127
    %v9298 = vrcp.pop %v9129
    %v9299 = vrcp.pop %v9131
    %v9300 = vrcp.pop %v9133
    %v9301 = vrcp.pop %v9135
    %v9302 = vrcp.pop %v9137
    %v9303 = vrcp.pop %v9139
    %v9304 = vrcp.pop %v9141
    %v9305 = vrcp.pop %v9143
    %v9306 = vrcp.pop %v9145
    %v9307 = vrcp.pop %v9147
    %v9308 = vrcp.pop %v9149
    %v9309 = vrcp.pop %v9151
    %v9310 = vrcp.pop %v9153
    %v9311 = vrcp.pop %v9155
    %v9312 = vrcp.pop %v9157
    %v9313 = vrcp.pop %v9159
    %v9314 = vrcp.pop %v9161
    %v9315 = vrcp.pop %v9163
    %v9316 = vrcp.pop %v9165
    %v9317 = vrcp.pop %v9167
    %v9318 = vrcp.pop %v9169
    %v9319 = vrcp.pop %v9171
    %v9320 = vrcp.pop %v9173
    %v9321 = vrcp.pop %v9175
    %v9322 = vrcp.pop %v9177
    %v9323 = vrcp.pop %v9179
    %v9324 = vrcp.pop %v9181
    %v9325 = vrcp.pop %v9183
    %v9326 = vrcp.pop %v9185
    %v9327 = vrcp.pop %v9187
    %v9328 = vrcp.pop %v9189
    %v9329 = vrcp.pop %v9191
    %v9330 = vrcp.pop %v9193
    %v9331 = vrcp.pop %v9195
    %v9332 = vrcp.pop %v9197
    %v9333 = vrcp.pop %v9199
    %v9334 = vrcp.pop %v9201
    %v9335 = vrcp.pop %v9203
    %v9336 = vrcp.pop %v9205
    %v9337 = vrcp.pop %v9207
    %v9338 = vrcp.pop %v9209
    %v9339 = vrcp.pop %v9211
    %v9340 = vmul.f32 %v8701, %v9212
    %v9341 = vmul.f32 %v8703, %v9213
    %v9342 = vmul.f32 %v8705, %v9214
    %v9343 = vmul.f32 %v8707, %v9215
    %v9344 = vmul.f32 %v8709, %v9216
    %v9345 = vmul.f32 %v8711, %v9217
    %v9346 = vmul.f32 %v8713, %v9218
    %v9347 = vmul.f32 %v8715, %v9219
    %v9348 = vmul.f32 %v8717, %v9220
    %v9349 = vmul.f32 %v8719, %v9221
    %v9350 = vmul.f32 %v8721, %v9222
    %v9351 = vmul.f32 %v8723, %v9223
    %v9352 = vmul.f32 %v8725, %v9224
    %v9353 = vmul.f32 %v8727, %v9225
    %v9354 = vmul.f32 %v8729, %v9226
    %v9355 = vmul.f32 %v8731, %v9227
    %v9356 = vmul.f32 %v8733, %v9228
    %v9357 = vmul.f32 %v8735, %v9229
    %v9358 = vmul.f32 %v8737, %v9230
    %v9359 = vmul.f32 %v8739, %v9231
    %v9360 = vmul.f32 %v8741, %v9232
    %v9361 = vmul.f32 %v8743, %v9233
    %v9362 = vmul.f32 %v8745, %v9234
    %v9363 = vmul.f32 %v8747, %v9235
    %v9364 = vmul.f32 %v8749, %v9236
    %v9365 = vmul.f32 %v8751, %v9237
    %v9366 = vmul.f32 %v8753, %v9238
    %v9367 = vmul.f32 %v8755, %v9239
    %v9368 = vmul.f32 %v8757, %v9240
    %v9369 = vmul.f32 %v8759, %v9241
    %v9370 = vmul.f32 %v8761, %v9242
    %v9371 = vmul.f32 %v8763, %v9243
    %v9372 = vmul.f32 %v8765, %v9244
    %v9373 = vmul.f32 %v8767, %v9245
    %v9374 = vmul.f32 %v8769, %v9246
    %v9375 = vmul.f32 %v8771, %v9247
    %v9376 = vmul.f32 %v8773, %v9248
    %v9377 = vmul.f32 %v8775, %v9249
    %v9378 = vmul.f32 %v8777, %v9250
    %v9379 = vmul.f32 %v8779, %v9251
    %v9380 = vmul.f32 %v8781, %v9252
    %v9381 = vmul.f32 %v8783, %v9253
    %v9382 = vmul.f32 %v8785, %v9254
    %v9383 = vmul.f32 %v8787, %v9255
    %v9384 = vmul.f32 %v8789, %v9256
    %v9385 = vmul.f32 %v8791, %v9257
    %v9386 = vmul.f32 %v8793, %v9258
    %v9387 = vmul.f32 %v8795, %v9259
    %v9388 = vmul.f32 %v8797, %v9260
    %v9389 = vmul.f32 %v8799, %v9261
    %v9390 = vmul.f32 %v8801, %v9262
    %v9391 = vmul.f32 %v8803, %v9263
    %v9392 = vmul.f32 %v8805, %v9264
    %v9393 = vmul.f32 %v8807, %v9265
    %v9394 = vmul.f32 %v8809, %v9266
    %v9395 = vmul.f32 %v8811, %v9267
    %v9396 = vmul.f32 %v8813, %v9268
    %v9397 = vmul.f32 %v8815, %v9269
    %v9398 = vmul.f32 %v8817, %v9270
    %v9399 = vmul.f32 %v8819, %v9271
    %v9400 = vmul.f32 %v8821, %v9272
    %v9401 = vmul.f32 %v8823, %v9273
    %v9402 = vmul.f32 %v8825, %v9274
    %v9403 = vmul.f32 %v8827, %v9275
    %v9404 = vmul.f32 %v8829, %v9276
    %v9405 = vmul.f32 %v8831, %v9277
    %v9406 = vmul.f32 %v8833, %v9278
    %v9407 = vmul.f32 %v8835, %v9279
    %v9408 = vmul.f32 %v8837, %v9280
    %v9409 = vmul.f32 %v8839, %v9281
    %v9410 = vmul.f32 %v8841, %v9282
    %v9411 = vmul.f32 %v8843, %v9283
    %v9412 = vmul.f32 %v8845, %v9284
    %v9413 = vmul.f32 %v8847, %v9285
    %v9414 = vmul.f32 %v8849, %v9286
    %v9415 = vmul.f32 %v8851, %v9287
    %v9416 = vmul.f32 %v8853, %v9288
    %v9417 = vmul.f32 %v8855, %v9289
    %v9418 = vmul.f32 %v8857, %v9290
    %v9419 = vmul.f32 %v8859, %v9291
    %v9420 = vmul.f32 %v8861, %v9292
    %v9421 = vmul.f32 %v8863, %v9293
    %v9422 = vmul.f32 %v8865, %v9294
    %v9423 = vmul.f32 %v8867, %v9295
    %v9424 = vmul.f32 %v8869, %v9296
    %v9425 = vmul.f32 %v8871, %v9297
    %v9426 = vmul.f32 %v8873, %v9298
    %v9427 = vmul.f32 %v8875, %v9299
    %v9428 = vmul.f32 %v8877, %v9300
    %v9429 = vmul.f32 %v8879, %v9301
    %v9430 = vmul.f32 %v8881, %v9302
    %v9431 = vmul.f32 %v8883, %v9303
    %v9432 = vmul.f32 %v8885, %v9304
    %v9433 = vmul.f32 %v8887, %v9305
    %v9434 = vmul.f32 %v8889, %v9306
    %v9435 = vmul.f32 %v8891, %v9307
    %v9436 = vmul.f32 %v8893, %v9308
    %v9437 = vmul.f32 %v8895, %v9309
    %v9438 = vmul.f32 %v8897, %v9310
    %v9439 = vmul.f32 %v8899, %v9311
    %v9440 = vmul.f32 %v8901, %v9312
    %v9441 = vmul.f32 %v8903, %v9313
    %v9442 = vmul.f32 %v8905, %v9314
    %v9443 = vmul.f32 %v8907, %v9315
    %v9444 = vmul.f32 %v8909, %v9316
    %v9445 = vmul.f32 %v8911, %v9317
    %v9446 = vmul.f32 %v8913, %v9318
    %v9447 = vmul.f32 %v8915, %v9319
    %v9448 = vmul.f32 %v8917, %v9320
    %v9449 = vmul.f32 %v8919, %v9321
    %v9450 = vmul.f32 %v8921, %v9322
    %v9451 = vmul.f32 %v8923, %v9323
    %v9452 = vmul.f32 %v8925, %v9324
    %v9453 = vmul.f32 %v8927, %v9325
    %v9454 = vmul.f32 %v8929, %v9326
    %v9455 = vmul.f32 %v8931, %v9327
    %v9456 = vmul.f32 %v8933, %v9328
    %v9457 = vmul.f32 %v8935, %v9329
    %v9458 = vmul.f32 %v8937, %v9330
    %v9459 = vmul.f32 %v8939, %v9331
    %v9460 = vmul.f32 %v8941, %v9332
    %v9461 = vmul.f32 %v8943, %v9333
    %v9462 = vmul.f32 %v8945, %v9334
    %v9463 = vmul.f32 %v8947, %v9335
    %v9464 = vmul.f32 %v8949, %v9336
    %v9465 = vmul.f32 %v8951, %v9337
    %v9466 = vmul.f32 %v8953, %v9338
    %v9467 = vmul.f32 %v8955, %v9339
    %v9468 = vld [vmem:[%s11] sm:$0xf]
    %v9469 = vld [vmem:[%s11 + $0x4] sm:$0xf]
    %v9470 = vld [vmem:[%s11 + $0x8] sm:$0xf]
    %v9471 = vld [vmem:[%s11 + $0xc] sm:$0xf]
    %v9472 = vld [vmem:[%s11 + $0x10] sm:$0xf]
    %v9473 = vld [vmem:[%s11 + $0x14] sm:$0xf]
    %v9474 = vld [vmem:[%s11 + $0x18] sm:$0xf]
    %v9475 = vld [vmem:[%s11 + $0x1c] sm:$0xf]
    %v9476 = vld [vmem:[%s11 + $0x20] sm:$0xf]
    %v9477 = vld [vmem:[%s11 + $0x24] sm:$0xf]
    %v9478 = vld [vmem:[%s11 + $0x28] sm:$0xf]
    %v9479 = vld [vmem:[%s11 + $0x2c] sm:$0xf]
    %v9480 = vld [vmem:[%s11 + $0x30] sm:$0xf]
    %v9481 = vld [vmem:[%s11 + $0x34] sm:$0xf]
    %v9482 = vld [vmem:[%s11 + $0x38] sm:$0xf]
    %v9483 = vld [vmem:[%s11 + $0x3c] sm:$0xf]
    %v9484 = vld [vmem:[%s12] sm:$0x1]
    %v9485 = vpack.c.bf16 %v9341, %v9340
    %v9486 = vpack.c.bf16 %v9343, %v9342
    %v9487 = vpack.c.bf16 %v9345, %v9344
    %v9488 = vpack.c.bf16 %v9347, %v9346
    %v9489 = vpack.c.bf16 %v9349, %v9348
    %v9490 = vpack.c.bf16 %v9351, %v9350
    %v9491 = vpack.c.bf16 %v9353, %v9352
    %v9492 = vpack.c.bf16 %v9355, %v9354
    %v9493 = vpack.c.bf16 %v9357, %v9356
    %v9494 = vpack.c.bf16 %v9359, %v9358
    %v9495 = vpack.c.bf16 %v9361, %v9360
    %v9496 = vpack.c.bf16 %v9363, %v9362
    %v9497 = vpack.c.bf16 %v9365, %v9364
    %v9498 = vpack.c.bf16 %v9367, %v9366
    %v9499 = vpack.c.bf16 %v9369, %v9368
    %v9500 = vpack.c.bf16 %v9371, %v9370
    %v9501 = vpack.c.bf16 %v9373, %v9372
    %v9502 = vpack.c.bf16 %v9375, %v9374
    %v9503 = vpack.c.bf16 %v9377, %v9376
    %v9504 = vpack.c.bf16 %v9379, %v9378
    %v9505 = vpack.c.bf16 %v9381, %v9380
    %v9506 = vpack.c.bf16 %v9383, %v9382
    %v9507 = vpack.c.bf16 %v9385, %v9384
    %v9508 = vpack.c.bf16 %v9387, %v9386
    %v9509 = vpack.c.bf16 %v9389, %v9388
    %v9510 = vpack.c.bf16 %v9391, %v9390
    %v9511 = vpack.c.bf16 %v9393, %v9392
    %v9512 = vpack.c.bf16 %v9395, %v9394
    %v9513 = vpack.c.bf16 %v9397, %v9396
    %v9514 = vpack.c.bf16 %v9399, %v9398
    %v9515 = vpack.c.bf16 %v9401, %v9400
    %v9516 = vpack.c.bf16 %v9403, %v9402
    %v9517 = vpack.c.bf16 %v9405, %v9404
    %v9518 = vpack.c.bf16 %v9407, %v9406
    %v9519 = vpack.c.bf16 %v9409, %v9408
    %v9520 = vpack.c.bf16 %v9411, %v9410
    %v9521 = vpack.c.bf16 %v9413, %v9412
    %v9522 = vpack.c.bf16 %v9415, %v9414
    %v9523 = vpack.c.bf16 %v9417, %v9416
    %v9524 = vpack.c.bf16 %v9419, %v9418
    %v9525 = vpack.c.bf16 %v9421, %v9420
    %v9526 = vpack.c.bf16 %v9423, %v9422
    %v9527 = vpack.c.bf16 %v9425, %v9424
    %v9528 = vpack.c.bf16 %v9427, %v9426
    %v9529 = vpack.c.bf16 %v9429, %v9428
    %v9530 = vpack.c.bf16 %v9431, %v9430
    %v9531 = vpack.c.bf16 %v9433, %v9432
    %v9532 = vpack.c.bf16 %v9435, %v9434
    %v9533 = vpack.c.bf16 %v9437, %v9436
    %v9534 = vpack.c.bf16 %v9439, %v9438
    %v9535 = vpack.c.bf16 %v9441, %v9440
    %v9536 = vpack.c.bf16 %v9443, %v9442
    %v9537 = vpack.c.bf16 %v9445, %v9444
    %v9538 = vpack.c.bf16 %v9447, %v9446
    %v9539 = vpack.c.bf16 %v9449, %v9448
    %v9540 = vpack.c.bf16 %v9451, %v9450
    %v9541 = vpack.c.bf16 %v9453, %v9452
    %v9542 = vpack.c.bf16 %v9455, %v9454
    %v9543 = vpack.c.bf16 %v9457, %v9456
    %v9544 = vpack.c.bf16 %v9459, %v9458
    %v9545 = vpack.c.bf16 %v9461, %v9460
    %v9546 = vpack.c.bf16 %v9463, %v9462
    %v9547 = vpack.c.bf16 %v9465, %v9464
    %v9548 = vpack.c.bf16 %v9467, %v9466
    %v9550 = vlaneseq
    %v9551 = vshrl.u32 %v9550, 7
    %v9552 = vsub.s32 0, %v9551
    %v9553 = vrot.slane %v9484, %v9552
    %v9571 = vunpack.c.l.b16 %v9468
    %v9572 = vunpack.c.l.b16 %v9469
    %v9573 = vunpack.c.l.b16 %v9470
    %v9574 = vunpack.c.l.b16 %v9471
    %v9575 = vunpack.c.l.b16 %v9472
    %v9576 = vunpack.c.l.b16 %v9473
    %v9577 = vunpack.c.l.b16 %v9474
    %v9578 = vunpack.c.l.b16 %v9475
    %v9579 = vunpack.c.l.b16 %v9476
    %v9580 = vunpack.c.l.b16 %v9477
    %v9581 = vunpack.c.l.b16 %v9478
    %v9582 = vunpack.c.l.b16 %v9479
    %v9583 = vunpack.c.l.b16 %v9480
    %v9584 = vunpack.c.l.b16 %v9481
    %v9585 = vunpack.c.l.b16 %v9482
    %v9586 = vunpack.c.l.b16 %v9483
    %v9587 = vpack.c.b16 %v9572, %v9571
    %v9588 = vpack.c.b16 %v9574, %v9573
    %v9589 = vpack.c.b16 %v9576, %v9575
    %v9590 = vpack.c.b16 %v9578, %v9577
    %v9591 = vpack.c.b16 %v9580, %v9579
    %v9592 = vpack.c.b16 %v9582, %v9581
    %v9593 = vpack.c.b16 %v9584, %v9583
    %v9594 = vpack.c.b16 %v9586, %v9585
    %9603 = vmatprep.subr.bf16.mxu0 0
    %9604 = vmatpush1.bf16.msra.mxu0 %v9587
    %9605 = vmatprep.subr.bf16.mxu0 0
    %9606 = vmatpush1.bf16.msra.mxu0 %v9588
    %9607 = vmatprep.subr.bf16.mxu0 0
    %9608 = vmatpush1.bf16.msra.mxu0 %v9589
    %9609 = vmatprep.subr.bf16.mxu0 0
    %9610 = vmatpush1.bf16.msra.mxu0 %v9590
    %9611 = vmatprep.subr.bf16.mxu0 0
    %9612 = vmatpush1.bf16.msra.mxu0 %v9591
    %9613 = vmatprep.subr.bf16.mxu0 0
    %9614 = vmatpush1.bf16.msra.mxu0 %v9592
    %9615 = vmatprep.subr.bf16.mxu0 0
    %9616 = vmatpush1.bf16.msra.mxu0 %v9593
    %9617 = vmatprep.subr.bf16.mxu0 0
    %9618 = vmatpush1.bf16.msra.mxu0 %v9594
    %9619 = vmatprep.subr.bf16.mxu0 0
    %9620 = vmatpush1.bf16.msra.mxu0 0
    %9621 = vmatprep.subr.bf16.mxu0 0
    %9622 = vmatpush1.bf16.msra.mxu0 0
    %9623 = vmatprep.subr.bf16.mxu0 0
    %9624 = vmatpush1.bf16.msra.mxu0 0
    %9625 = vmatprep.subr.bf16.mxu0 0
    %9626 = vmatpush1.bf16.msra.mxu0 0
    %9627 = vmatprep.subr.bf16.mxu0 0
    %9628 = vmatpush1.bf16.msra.mxu0 0
    %9629 = vmatprep.subr.bf16.mxu0 0
    %9630 = vmatpush1.bf16.msra.mxu0 0
    %9631 = vmatprep.subr.bf16.mxu0 0
    %9632 = vmatpush1.bf16.msra.mxu0 0
    %9633 = vmatprep.subr.bf16.mxu0 0
    %9634 = vmatpush1.bf16.msra.mxu0 0
    %9635 = vmatprep.mubr.bf16.mxu0 0
    %9636 = vmatmul.mubr.bf16.gmra.mrb[0].mxu0 %v9485
    %v9637 = vpop.f32.mrb[0].mxu0
    %v9638 = vadd.f32 %v9553, %v9637
    %v9639 = vpop.f32.mrb[0].mxu0
    %v9640 = vpop.f32.mrb[0].mxu0
    %v9641 = vadd.f32 %v9553, %v9640
    %v9642 = vpop.f32.mrb[0].mxu0
    %9643 = vmatprep.mubr.bf16.mxu0 0
    %9644 = vmatmul.mubr.bf16.gmra.mrb[0].mxu0 %v9486
    %v9645 = vpop.f32.mrb[0].mxu0
    %v9646 = vadd.f32 %v9553, %v9645
    %v9647 = vpop.f32.mrb[0].mxu0
    %v9648 = vpop.f32.mrb[0].mxu0
    %v9649 = vadd.f32 %v9553, %v9648
    %v9650 = vpop.f32.mrb[0].mxu0
    %9651 = vmatprep.mubr.bf16.mxu0 0
    %9652 = vmatmul.mubr.bf16.gmra.mrb[0].mxu0 %v9487
    %v9653 = vpop.f32.mrb[0].mxu0
    %v9654 = vadd.f32 %v9553, %v9653
    %v9655 = vpop.f32.mrb[0].mxu0
    %v9656 = vpop.f32.mrb[0].mxu0
    %v9657 = vadd.f32 %v9553, %v9656
    %v9658 = vpop.f32.mrb[0].mxu0
    %9659 = vmatprep.mubr.bf16.mxu0 0
    %9660 = vmatmul.mubr.bf16.gmra.mrb[0].mxu0 %v9488
    %v9661 = vpop.f32.mrb[0].mxu0
    %v9662 = vadd.f32 %v9553, %v9661
    %v9663 = vpop.f32.mrb[0].mxu0
    %v9664 = vpop.f32.mrb[0].mxu0
    %v9665 = vadd.f32 %v9553, %v9664
    %v9666 = vpop.f32.mrb[0].mxu0
    %9667 = vmatprep.mubr.bf16.mxu0 0
    %9668 = vmatmul.mubr.bf16.gmra.mrb[0].mxu0 %v9489
    %v9669 = vpop.f32.mrb[0].mxu0
    %v9670 = vadd.f32 %v9553, %v9669
    %v9671 = vpop.f32.mrb[0].mxu0
    %v9672 = vpop.f32.mrb[0].mxu0
    %v9673 = vadd.f32 %v9553, %v9672
    %v9674 = vpop.f32.mrb[0].mxu0
    %9675 = vmatprep.mubr.bf16.mxu0 0
    %9676 = vmatmul.mubr.bf16.gmra.mrb[0].mxu0 %v9490
    %v9677 = vpop.f32.mrb[0].mxu0
    %v9678 = vadd.f32 %v9553, %v9677
    %v9679 = vpop.f32.mrb[0].mxu0
    %v9680 = vpop.f32.mrb[0].mxu0
    %v9681 = vadd.f32 %v9553, %v9680
    %v9682 = vpop.f32.mrb[0].mxu0
    %9683 = vmatprep.mubr.bf16.mxu0 0
    %9684 = vmatmul.mubr.bf16.gmra.mrb[0].mxu0 %v9491
    %v9685 = vpop.f32.mrb[0].mxu0
    %v9686 = vadd.f32 %v9553, %v9685
    %v9687 = vpop.f32.mrb[0].mxu0
    %v9688 = vpop.f32.mrb[0].mxu0
    %v9689 = vadd.f32 %v9553, %v9688
    %v9690 = vpop.f32.mrb[0].mxu0
    %9691 = vmatprep.mubr.bf16.mxu0 0
    %9692 = vmatmul.mubr.bf16.gmra.mrb[0].mxu0 %v9492
    %v9693 = vpop.f32.mrb[0].mxu0
    %v9694 = vadd.f32 %v9553, %v9693
    %v9695 = vpop.f32.mrb[0].mxu0
    %v9696 = vpop.f32.mrb[0].mxu0
    %v9697 = vadd.f32 %v9553, %v9696
    %v9698 = vpop.f32.mrb[0].mxu0
    %9699 = vmatprep.mubr.bf16.mxu0 0
    %9700 = vmatmul.mubr.bf16.gmra.mrb[0].mxu0 %v9493
    %v9701 = vpop.f32.mrb[0].mxu0
    %v9702 = vadd.f32 %v9553, %v9701
    %v9703 = vpop.f32.mrb[0].mxu0
    %v9704 = vpop.f32.mrb[0].mxu0
    %v9705 = vadd.f32 %v9553, %v9704
    %v9706 = vpop.f32.mrb[0].mxu0
    %9707 = vmatprep.mubr.bf16.mxu0 0
    %9708 = vmatmul.mubr.bf16.gmra.mrb[0].mxu0 %v9494
    %v9709 = vpop.f32.mrb[0].mxu0
    %v9710 = vadd.f32 %v9553, %v9709
    %v9711 = vpop.f32.mrb[0].mxu0
    %v9712 = vpop.f32.mrb[0].mxu0
    %v9713 = vadd.f32 %v9553, %v9712
    %v9714 = vpop.f32.mrb[0].mxu0
    %9715 = vmatprep.mubr.bf16.mxu0 0
    %9716 = vmatmul.mubr.bf16.gmra.mrb[0].mxu0 %v9495
    %v9717 = vpop.f32.mrb[0].mxu0
    %v9718 = vadd.f32 %v9553, %v9717
    %v9719 = vpop.f32.mrb[0].mxu0
    %v9720 = vpop.f32.mrb[0].mxu0
    %v9721 = vadd.f32 %v9553, %v9720
    %v9722 = vpop.f32.mrb[0].mxu0
    %9723 = vmatprep.mubr.bf16.mxu0 0
    %9724 = vmatmul.mubr.bf16.gmra.mrb[0].mxu0 %v9496
    %v9725 = vpop.f32.mrb[0].mxu0
    %v9726 = vadd.f32 %v9553, %v9725
    %v9727 = vpop.f32.mrb[0].mxu0
    %v9728 = vpop.f32.mrb[0].mxu0
    %v9729 = vadd.f32 %v9553, %v9728
    %v9730 = vpop.f32.mrb[0].mxu0
    %9731 = vmatprep.mubr.bf16.mxu0 0
    %9732 = vmatmul.mubr.bf16.gmra.mrb[0].mxu0 %v9497
    %v9733 = vpop.f32.mrb[0].mxu0
    %v9734 = vadd.f32 %v9553, %v9733
    %v9735 = vpop.f32.mrb[0].mxu0
    %v9736 = vpop.f32.mrb[0].mxu0
    %v9737 = vadd.f32 %v9553, %v9736
    %v9738 = vpop.f32.mrb[0].mxu0
    %9739 = vmatprep.mubr.bf16.mxu0 0
    %9740 = vmatmul.mubr.bf16.gmra.mrb[0].mxu0 %v9498
    %v9741 = vpop.f32.mrb[0].mxu0
    %v9742 = vadd.f32 %v9553, %v9741
    %v9743 = vpop.f32.mrb[0].mxu0
    %v9744 = vpop.f32.mrb[0].mxu0
    %v9745 = vadd.f32 %v9553, %v9744
    %v9746 = vpop.f32.mrb[0].mxu0
    %9747 = vmatprep.mubr.bf16.mxu0 0
    %9748 = vmatmul.mubr.bf16.gmra.mrb[0].mxu0 %v9499
    %v9749 = vpop.f32.mrb[0].mxu0
    %v9750 = vadd.f32 %v9553, %v9749
    %v9751 = vpop.f32.mrb[0].mxu0
    %v9752 = vpop.f32.mrb[0].mxu0
    %v9753 = vadd.f32 %v9553, %v9752
    %v9754 = vpop.f32.mrb[0].mxu0
    %9755 = vmatprep.mubr.bf16.mxu0 0
    %9756 = vmatmul.mubr.bf16.gmra.mrb[0].mxu0 %v9500
    %v9757 = vpop.f32.mrb[0].mxu0
    %v9758 = vadd.f32 %v9553, %v9757
    %v9759 = vpop.f32.mrb[0].mxu0
    %v9760 = vpop.f32.mrb[0].mxu0
    %v9761 = vadd.f32 %v9553, %v9760
    %v9762 = vpop.f32.mrb[0].mxu0
    %9763 = vmatprep.mubr.bf16.mxu0 0
    %9764 = vmatmul.mubr.bf16.gmra.mrb[0].mxu0 %v9501
    %v9765 = vpop.f32.mrb[0].mxu0
    %v9766 = vadd.f32 %v9553, %v9765
    %v9767 = vpop.f32.mrb[0].mxu0
    %v9768 = vpop.f32.mrb[0].mxu0
    %v9769 = vadd.f32 %v9553, %v9768
    %v9770 = vpop.f32.mrb[0].mxu0
    %9771 = vmatprep.mubr.bf16.mxu0 0
    %9772 = vmatmul.mubr.bf16.gmra.mrb[0].mxu0 %v9502
    %v9773 = vpop.f32.mrb[0].mxu0
    %v9774 = vadd.f32 %v9553, %v9773
    %v9775 = vpop.f32.mrb[0].mxu0
    %v9776 = vpop.f32.mrb[0].mxu0
    %v9777 = vadd.f32 %v9553, %v9776
    %v9778 = vpop.f32.mrb[0].mxu0
    %9779 = vmatprep.mubr.bf16.mxu0 0
    %9780 = vmatmul.mubr.bf16.gmra.mrb[0].mxu0 %v9503
    %v9781 = vpop.f32.mrb[0].mxu0
    %v9782 = vadd.f32 %v9553, %v9781
    %v9783 = vpop.f32.mrb[0].mxu0
    %v9784 = vpop.f32.mrb[0].mxu0
    %v9785 = vadd.f32 %v9553, %v9784
    %v9786 = vpop.f32.mrb[0].mxu0
    %9787 = vmatprep.mubr.bf16.mxu0 0
    %9788 = vmatmul.mubr.bf16.gmra.mrb[0].mxu0 %v9504
    %v9789 = vpop.f32.mrb[0].mxu0
    %v9790 = vadd.f32 %v9553, %v9789
    %v9791 = vpop.f32.mrb[0].mxu0
    %v9792 = vpop.f32.mrb[0].mxu0
    %v9793 = vadd.f32 %v9553, %v9792
    %v9794 = vpop.f32.mrb[0].mxu0
    %9795 = vmatprep.mubr.bf16.mxu0 0
    %9796 = vmatmul.mubr.bf16.gmra.mrb[0].mxu0 %v9505
    %v9797 = vpop.f32.mrb[0].mxu0
    %v9798 = vadd.f32 %v9553, %v9797
    %v9799 = vpop.f32.mrb[0].mxu0
    %v9800 = vpop.f32.mrb[0].mxu0
    %v9801 = vadd.f32 %v9553, %v9800
    %v9802 = vpop.f32.mrb[0].mxu0
    %9803 = vmatprep.mubr.bf16.mxu0 0
    %9804 = vmatmul.mubr.bf16.gmra.mrb[0].mxu0 %v9506
    %v9805 = vpop.f32.mrb[0].mxu0
    %v9806 = vadd.f32 %v9553, %v9805
    %v9807 = vpop.f32.mrb[0].mxu0
    %v9808 = vpop.f32.mrb[0].mxu0
    %v9809 = vadd.f32 %v9553, %v9808
    %v9810 = vpop.f32.mrb[0].mxu0
    %9811 = vmatprep.mubr.bf16.mxu0 0
    %9812 = vmatmul.mubr.bf16.gmra.mrb[0].mxu0 %v9507
    %v9813 = vpop.f32.mrb[0].mxu0
    %v9814 = vadd.f32 %v9553, %v9813
    %v9815 = vpop.f32.mrb[0].mxu0
    %v9816 = vpop.f32.mrb[0].mxu0
    %v9817 = vadd.f32 %v9553, %v9816
    %v9818 = vpop.f32.mrb[0].mxu0
    %9819 = vmatprep.mubr.bf16.mxu0 0
    %9820 = vmatmul.mubr.bf16.gmra.mrb[0].mxu0 %v9508
    %v9821 = vpop.f32.mrb[0].mxu0
    %v9822 = vadd.f32 %v9553, %v9821
    %v9823 = vpop.f32.mrb[0].mxu0
    %v9824 = vpop.f32.mrb[0].mxu0
    %v9825 = vadd.f32 %v9553, %v9824
    %v9826 = vpop.f32.mrb[0].mxu0
    %9827 = vmatprep.mubr.bf16.mxu0 0
    %9828 = vmatmul.mubr.bf16.gmra.mrb[0].mxu0 %v9509
    %v9829 = vpop.f32.mrb[0].mxu0
    %v9830 = vadd.f32 %v9553, %v9829
    %v9831 = vpop.f32.mrb[0].mxu0
    %v9832 = vpop.f32.mrb[0].mxu0
    %v9833 = vadd.f32 %v9553, %v9832
    %v9834 = vpop.f32.mrb[0].mxu0
    %9835 = vmatprep.mubr.bf16.mxu0 0
    %9836 = vmatmul.mubr.bf16.gmra.mrb[0].mxu0 %v9510
    %v9837 = vpop.f32.mrb[0].mxu0
    %v9838 = vadd.f32 %v9553, %v9837
    %v9839 = vpop.f32.mrb[0].mxu0
    %v9840 = vpop.f32.mrb[0].mxu0
    %v9841 = vadd.f32 %v9553, %v9840
    %v9842 = vpop.f32.mrb[0].mxu0
    %9843 = vmatprep.mubr.bf16.mxu0 0
    %9844 = vmatmul.mubr.bf16.gmra.mrb[0].mxu0 %v9511
    %v9845 = vpop.f32.mrb[0].mxu0
    %v9846 = vadd.f32 %v9553, %v9845
    %v9847 = vpop.f32.mrb[0].mxu0
    %v9848 = vpop.f32.mrb[0].mxu0
    %v9849 = vadd.f32 %v9553, %v9848
    %v9850 = vpop.f32.mrb[0].mxu0
    %9851 = vmatprep.mubr.bf16.mxu0 0
    %9852 = vmatmul.mubr.bf16.gmra.mrb[0].mxu0 %v9512
    %v9853 = vpop.f32.mrb[0].mxu0
    %v9854 = vadd.f32 %v9553, %v9853
    %v9855 = vpop.f32.mrb[0].mxu0
    %v9856 = vpop.f32.mrb[0].mxu0
    %v9857 = vadd.f32 %v9553, %v9856
    %v9858 = vpop.f32.mrb[0].mxu0
    %9859 = vmatprep.mubr.bf16.mxu0 0
    %9860 = vmatmul.mubr.bf16.gmra.mrb[0].mxu0 %v9513
    %v9861 = vpop.f32.mrb[0].mxu0
    %v9862 = vadd.f32 %v9553, %v9861
    %v9863 = vpop.f32.mrb[0].mxu0
    %v9864 = vpop.f32.mrb[0].mxu0
    %v9865 = vadd.f32 %v9553, %v9864
    %v9866 = vpop.f32.mrb[0].mxu0
    %9867 = vmatprep.mubr.bf16.mxu0 0
    %9868 = vmatmul.mubr.bf16.gmra.mrb[0].mxu0 %v9514
    %v9869 = vpop.f32.mrb[0].mxu0
    %v9870 = vadd.f32 %v9553, %v9869
    %v9871 = vpop.f32.mrb[0].mxu0
    %v9872 = vpop.f32.mrb[0].mxu0
    %v9873 = vadd.f32 %v9553, %v9872
    %v9874 = vpop.f32.mrb[0].mxu0
    %9875 = vmatprep.mubr.bf16.mxu0 0
    %9876 = vmatmul.mubr.bf16.gmra.mrb[0].mxu0 %v9515
    %v9877 = vpop.f32.mrb[0].mxu0
    %v9878 = vadd.f32 %v9553, %v9877
    %v9879 = vpop.f32.mrb[0].mxu0
    %v9880 = vpop.f32.mrb[0].mxu0
    %v9881 = vadd.f32 %v9553, %v9880
    %v9882 = vpop.f32.mrb[0].mxu0
    %9883 = vmatprep.mubr.bf16.mxu0 0
    %9884 = vmatmul.mubr.bf16.gmra.mrb[0].mxu0 %v9516
    %v9885 = vpop.f32.mrb[0].mxu0
    %v9886 = vadd.f32 %v9553, %v9885
    %v9887 = vpop.f32.mrb[0].mxu0
    %v9888 = vpop.f32.mrb[0].mxu0
    %v9889 = vadd.f32 %v9553, %v9888
    %v9890 = vpop.f32.mrb[0].mxu0
    %9891 = vmatprep.mubr.bf16.mxu0 0
    %9892 = vmatmul.mubr.bf16.gmra.mrb[0].mxu0 %v9517
    %v9893 = vpop.f32.mrb[0].mxu0
    %v9894 = vadd.f32 %v9553, %v9893
    %v9895 = vpop.f32.mrb[0].mxu0
    %v9896 = vpop.f32.mrb[0].mxu0
    %v9897 = vadd.f32 %v9553, %v9896
    %v9898 = vpop.f32.mrb[0].mxu0
    %9899 = vmatprep.mubr.bf16.mxu0 0
    %9900 = vmatmul.mubr.bf16.gmra.mrb[0].mxu0 %v9518
    %v9901 = vpop.f32.mrb[0].mxu0
    %v9902 = vadd.f32 %v9553, %v9901
    %v9903 = vpop.f32.mrb[0].mxu0
    %v9904 = vpop.f32.mrb[0].mxu0
    %v9905 = vadd.f32 %v9553, %v9904
    %v9906 = vpop.f32.mrb[0].mxu0
    %9907 = vmatprep.mubr.bf16.mxu0 0
    %9908 = vmatmul.mubr.bf16.gmra.mrb[0].mxu0 %v9519
    %v9909 = vpop.f32.mrb[0].mxu0
    %v9910 = vadd.f32 %v9553, %v9909
    %v9911 = vpop.f32.mrb[0].mxu0
    %v9912 = vpop.f32.mrb[0].mxu0
    %v9913 = vadd.f32 %v9553, %v9912
    %v9914 = vpop.f32.mrb[0].mxu0
    %9915 = vmatprep.mubr.bf16.mxu0 0
    %9916 = vmatmul.mubr.bf16.gmra.mrb[0].mxu0 %v9520
    %v9917 = vpop.f32.mrb[0].mxu0
    %v9918 = vadd.f32 %v9553, %v9917
    %v9919 = vpop.f32.mrb[0].mxu0
    %v9920 = vpop.f32.mrb[0].mxu0
    %v9921 = vadd.f32 %v9553, %v9920
    %v9922 = vpop.f32.mrb[0].mxu0
    %9923 = vmatprep.mubr.bf16.mxu0 0
    %9924 = vmatmul.mubr.bf16.gmra.mrb[0].mxu0 %v9521
    %v9925 = vpop.f32.mrb[0].mxu0
    %v9926 = vadd.f32 %v9553, %v9925
    %v9927 = vpop.f32.mrb[0].mxu0
    %v9928 = vpop.f32.mrb[0].mxu0
    %v9929 = vadd.f32 %v9553, %v9928
    %v9930 = vpop.f32.mrb[0].mxu0
    %9931 = vmatprep.mubr.bf16.mxu0 0
    %9932 = vmatmul.mubr.bf16.gmra.mrb[0].mxu0 %v9522
    %v9933 = vpop.f32.mrb[0].mxu0
    %v9934 = vadd.f32 %v9553, %v9933
    %v9935 = vpop.f32.mrb[0].mxu0
    %v9936 = vpop.f32.mrb[0].mxu0
    %v9937 = vadd.f32 %v9553, %v9936
    %v9938 = vpop.f32.mrb[0].mxu0
    %9939 = vmatprep.mubr.bf16.mxu0 0
    %9940 = vmatmul.mubr.bf16.gmra.mrb[0].mxu0 %v9523
    %v9941 = vpop.f32.mrb[0].mxu0
    %v9942 = vadd.f32 %v9553, %v9941
    %v9943 = vpop.f32.mrb[0].mxu0
    %v9944 = vpop.f32.mrb[0].mxu0
    %v9945 = vadd.f32 %v9553, %v9944
    %v9946 = vpop.f32.mrb[0].mxu0
    %9947 = vmatprep.mubr.bf16.mxu0 0
    %9948 = vmatmul.mubr.bf16.gmra.mrb[0].mxu0 %v9524
    %v9949 = vpop.f32.mrb[0].mxu0
    %v9950 = vadd.f32 %v9553, %v9949
    %v9951 = vpop.f32.mrb[0].mxu0
    %v9952 = vpop.f32.mrb[0].mxu0
    %v9953 = vadd.f32 %v9553, %v9952
    %v9954 = vpop.f32.mrb[0].mxu0
    %9955 = vmatprep.mubr.bf16.mxu0 0
    %9956 = vmatmul.mubr.bf16.gmra.mrb[0].mxu0 %v9525
    %v9957 = vpop.f32.mrb[0].mxu0
    %v9958 = vadd.f32 %v9553, %v9957
    %v9959 = vpop.f32.mrb[0].mxu0
    %v9960 = vpop.f32.mrb[0].mxu0
    %v9961 = vadd.f32 %v9553, %v9960
    %v9962 = vpop.f32.mrb[0].mxu0
    %9963 = vmatprep.mubr.bf16.mxu0 0
    %9964 = vmatmul.mubr.bf16.gmra.mrb[0].mxu0 %v9526
    %v9965 = vpop.f32.mrb[0].mxu0
    %v9966 = vadd.f32 %v9553, %v9965
    %v9967 = vpop.f32.mrb[0].mxu0
    %v9968 = vpop.f32.mrb[0].mxu0
    %v9969 = vadd.f32 %v9553, %v9968
    %v9970 = vpop.f32.mrb[0].mxu0
    %9971 = vmatprep.mubr.bf16.mxu0 0
    %9972 = vmatmul.mubr.bf16.gmra.mrb[0].mxu0 %v9527
    %v9973 = vpop.f32.mrb[0].mxu0
    %v9974 = vadd.f32 %v9553, %v9973
    %v9975 = vpop.f32.mrb[0].mxu0
    %v9976 = vpop.f32.mrb[0].mxu0
    %v9977 = vadd.f32 %v9553, %v9976
    %v9978 = vpop.f32.mrb[0].mxu0
    %9979 = vmatprep.mubr.bf16.mxu0 0
    %9980 = vmatmul.mubr.bf16.gmra.mrb[0].mxu0 %v9528
    %v9981 = vpop.f32.mrb[0].mxu0
    %v9982 = vadd.f32 %v9553, %v9981
    %v9983 = vpop.f32.mrb[0].mxu0
    %v9984 = vpop.f32.mrb[0].mxu0
    %v9985 = vadd.f32 %v9553, %v9984
    %v9986 = vpop.f32.mrb[0].mxu0
    %9987 = vmatprep.mubr.bf16.mxu0 0
    %9988 = vmatmul.mubr.bf16.gmra.mrb[0].mxu0 %v9529
    %v9989 = vpop.f32.mrb[0].mxu0
    %v9990 = vadd.f32 %v9553, %v9989
    %v9991 = vpop.f32.mrb[0].mxu0
    %v9992 = vpop.f32.mrb[0].mxu0
    %v9993 = vadd.f32 %v9553, %v9992
    %v9994 = vpop.f32.mrb[0].mxu0
    %9995 = vmatprep.mubr.bf16.mxu0 0
    %9996 = vmatmul.mubr.bf16.gmra.mrb[0].mxu0 %v9530
    %v9997 = vpop.f32.mrb[0].mxu0
    %v9998 = vadd.f32 %v9553, %v9997
    %v9999 = vpop.f32.mrb[0].mxu0
    %v10000 = vpop.f32.mrb[0].mxu0
    %v10001 = vadd.f32 %v9553, %v10000
    %v10002 = vpop.f32.mrb[0].mxu0
    %10003 = vmatprep.mubr.bf16.mxu0 0
    %10004 = vmatmul.mubr.bf16.gmra.mrb[0].mxu0 %v9531
    %v10005 = vpop.f32.mrb[0].mxu0
    %v10006 = vadd.f32 %v9553, %v10005
    %v10007 = vpop.f32.mrb[0].mxu0
    %v10008 = vpop.f32.mrb[0].mxu0
    %v10009 = vadd.f32 %v9553, %v10008
    %v10010 = vpop.f32.mrb[0].mxu0
    %10011 = vmatprep.mubr.bf16.mxu0 0
    %10012 = vmatmul.mubr.bf16.gmra.mrb[0].mxu0 %v9532
    %v10013 = vpop.f32.mrb[0].mxu0
    %v10014 = vadd.f32 %v9553, %v10013
    %v10015 = vpop.f32.mrb[0].mxu0
    %v10016 = vpop.f32.mrb[0].mxu0
    %v10017 = vadd.f32 %v9553, %v10016
    %v10018 = vpop.f32.mrb[0].mxu0
    %10019 = vmatprep.mubr.bf16.mxu0 0
    %10020 = vmatmul.mubr.bf16.gmra.mrb[0].mxu0 %v9533
    %v10021 = vpop.f32.mrb[0].mxu0
    %v10022 = vadd.f32 %v9553, %v10021
    %v10023 = vpop.f32.mrb[0].mxu0
    %v10024 = vpop.f32.mrb[0].mxu0
    %v10025 = vadd.f32 %v9553, %v10024
    %v10026 = vpop.f32.mrb[0].mxu0
    %10027 = vmatprep.mubr.bf16.mxu0 0
    %10028 = vmatmul.mubr.bf16.gmra.mrb[0].mxu0 %v9534
    %v10029 = vpop.f32.mrb[0].mxu0
    %v10030 = vadd.f32 %v9553, %v10029
    %v10031 = vpop.f32.mrb[0].mxu0
    %v10032 = vpop.f32.mrb[0].mxu0
    %v10033 = vadd.f32 %v9553, %v10032
    %v10034 = vpop.f32.mrb[0].mxu0
    %10035 = vmatprep.mubr.bf16.mxu0 0
    %10036 = vmatmul.mubr.bf16.gmra.mrb[0].mxu0 %v9535
    %v10037 = vpop.f32.mrb[0].mxu0
    %v10038 = vadd.f32 %v9553, %v10037
    %v10039 = vpop.f32.mrb[0].mxu0
    %v10040 = vpop.f32.mrb[0].mxu0
    %v10041 = vadd.f32 %v9553, %v10040
    %v10042 = vpop.f32.mrb[0].mxu0
    %10043 = vmatprep.mubr.bf16.mxu0 0
    %10044 = vmatmul.mubr.bf16.gmra.mrb[0].mxu0 %v9536
    %v10045 = vpop.f32.mrb[0].mxu0
    %v10046 = vadd.f32 %v9553, %v10045
    %v10047 = vpop.f32.mrb[0].mxu0
    %v10048 = vpop.f32.mrb[0].mxu0
    %v10049 = vadd.f32 %v9553, %v10048
    %v10050 = vpop.f32.mrb[0].mxu0
    %10051 = vmatprep.mubr.bf16.mxu0 0
    %10052 = vmatmul.mubr.bf16.gmra.mrb[0].mxu0 %v9537
    %v10053 = vpop.f32.mrb[0].mxu0
    %v10054 = vadd.f32 %v9553, %v10053
    %v10055 = vpop.f32.mrb[0].mxu0
    %v10056 = vpop.f32.mrb[0].mxu0
    %v10057 = vadd.f32 %v9553, %v10056
    %v10058 = vpop.f32.mrb[0].mxu0
    %10059 = vmatprep.mubr.bf16.mxu0 0
    %10060 = vmatmul.mubr.bf16.gmra.mrb[0].mxu0 %v9538
    %v10061 = vpop.f32.mrb[0].mxu0
    %v10062 = vadd.f32 %v9553, %v10061
    %v10063 = vpop.f32.mrb[0].mxu0
    %v10064 = vpop.f32.mrb[0].mxu0
    %v10065 = vadd.f32 %v9553, %v10064
    %v10066 = vpop.f32.mrb[0].mxu0
    %10067 = vmatprep.mubr.bf16.mxu0 0
    %10068 = vmatmul.mubr.bf16.gmra.mrb[0].mxu0 %v9539
    %v10069 = vpop.f32.mrb[0].mxu0
    %v10070 = vadd.f32 %v9553, %v10069
    %v10071 = vpop.f32.mrb[0].mxu0
    %v10072 = vpop.f32.mrb[0].mxu0
    %v10073 = vadd.f32 %v9553, %v10072
    %v10074 = vpop.f32.mrb[0].mxu0
    %10075 = vmatprep.mubr.bf16.mxu0 0
    %10076 = vmatmul.mubr.bf16.gmra.mrb[0].mxu0 %v9540
    %v10077 = vpop.f32.mrb[0].mxu0
    %v10078 = vadd.f32 %v9553, %v10077
    %v10079 = vpop.f32.mrb[0].mxu0
    %v10080 = vpop.f32.mrb[0].mxu0
    %v10081 = vadd.f32 %v9553, %v10080
    %v10082 = vpop.f32.mrb[0].mxu0
    %10083 = vmatprep.mubr.bf16.mxu0 0
    %10084 = vmatmul.mubr.bf16.gmra.mrb[0].mxu0 %v9541
    %v10085 = vpop.f32.mrb[0].mxu0
    %v10086 = vadd.f32 %v9553, %v10085
    %v10087 = vpop.f32.mrb[0].mxu0
    %v10088 = vpop.f32.mrb[0].mxu0
    %v10089 = vadd.f32 %v9553, %v10088
    %v10090 = vpop.f32.mrb[0].mxu0
    %10091 = vmatprep.mubr.bf16.mxu0 0
    %10092 = vmatmul.mubr.bf16.gmra.mrb[0].mxu0 %v9542
    %v10093 = vpop.f32.mrb[0].mxu0
    %v10094 = vadd.f32 %v9553, %v10093
    %v10095 = vpop.f32.mrb[0].mxu0
    %v10096 = vpop.f32.mrb[0].mxu0
    %v10097 = vadd.f32 %v9553, %v10096
    %v10098 = vpop.f32.mrb[0].mxu0
    %10099 = vmatprep.mubr.bf16.mxu0 0
    %10100 = vmatmul.mubr.bf16.gmra.mrb[0].mxu0 %v9543
    %v10101 = vpop.f32.mrb[0].mxu0
    %v10102 = vadd.f32 %v9553, %v10101
    %v10103 = vpop.f32.mrb[0].mxu0
    %v10104 = vpop.f32.mrb[0].mxu0
    %v10105 = vadd.f32 %v9553, %v10104
    %v10106 = vpop.f32.mrb[0].mxu0
    %10107 = vmatprep.mubr.bf16.mxu0 0
    %10108 = vmatmul.mubr.bf16.gmra.mrb[0].mxu0 %v9544
    %v10109 = vpop.f32.mrb[0].mxu0
    %v10110 = vadd.f32 %v9553, %v10109
    %v10111 = vpop.f32.mrb[0].mxu0
    %v10112 = vpop.f32.mrb[0].mxu0
    %v10113 = vadd.f32 %v9553, %v10112
    %v10114 = vpop.f32.mrb[0].mxu0
    %10115 = vmatprep.mubr.bf16.mxu0 0
    %10116 = vmatmul.mubr.bf16.gmra.mrb[0].mxu0 %v9545
    %v10117 = vpop.f32.mrb[0].mxu0
    %v10118 = vadd.f32 %v9553, %v10117
    %v10119 = vpop.f32.mrb[0].mxu0
    %v10120 = vpop.f32.mrb[0].mxu0
    %v10121 = vadd.f32 %v9553, %v10120
    %v10122 = vpop.f32.mrb[0].mxu0
    %10123 = vmatprep.mubr.bf16.mxu0 0
    %10124 = vmatmul.mubr.bf16.gmra.mrb[0].mxu0 %v9546
    %v10125 = vpop.f32.mrb[0].mxu0
    %v10126 = vadd.f32 %v9553, %v10125
    %v10127 = vpop.f32.mrb[0].mxu0
    %v10128 = vpop.f32.mrb[0].mxu0
    %v10129 = vadd.f32 %v9553, %v10128
    %v10130 = vpop.f32.mrb[0].mxu0
    %10131 = vmatprep.mubr.bf16.mxu0 0
    %10132 = vmatmul.mubr.bf16.gmra.mrb[0].mxu0 %v9547
    %v10133 = vpop.f32.mrb[0].mxu0
    %v10134 = vadd.f32 %v9553, %v10133
    %v10135 = vpop.f32.mrb[0].mxu0
    %v10136 = vpop.f32.mrb[0].mxu0
    %v10137 = vadd.f32 %v9553, %v10136
    %v10138 = vpop.f32.mrb[0].mxu0
    %10139 = vmatprep.mubr.bf16.mxu0 0
    %10140 = vmatmul.mubr.bf16.gmra.mrb[0].mxu0 %v9548
    %v10141 = vpop.f32.mrb[0].mxu0
    %v10142 = vadd.f32 %v9553, %v10141
    %v10143 = vpop.f32.mrb[0].mxu0
    %v10144 = vpop.f32.mrb[0].mxu0
    %v10145 = vadd.f32 %v9553, %v10144
    %v10146 = vpop.f32.mrb[0].mxu0
    %10147 = vdwg.mxu0
    %10148 = vst [vmem:[#allocation2] sm:$0xff] %v9638
    %10149 = vst [vmem:[#allocation2 + $0x8] sm:$0xff] %v9641
    %10150 = vst [vmem:[#allocation2 + $0x10] sm:$0xff] %v9646
    %10151 = vst [vmem:[#allocation2 + $0x18] sm:$0xff] %v9649
    %10152 = vst [vmem:[#allocation2 + $0x20] sm:$0xff] %v9654
    %10153 = vst [vmem:[#allocation2 + $0x28] sm:$0xff] %v9657
    %10154 = vst [vmem:[#allocation2 + $0x30] sm:$0xff] %v9662
    %10155 = vst [vmem:[#allocation2 + $0x38] sm:$0xff] %v9665
    %10156 = vst [vmem:[#allocation2 + $0x40] sm:$0xff] %v9670
    %10157 = vst [vmem:[#allocation2 + $0x48] sm:$0xff] %v9673
    %10158 = vst [vmem:[#allocation2 + $0x50] sm:$0xff] %v9678
    %10159 = vst [vmem:[#allocation2 + $0x58] sm:$0xff] %v9681
    %10160 = vst [vmem:[#allocation2 + $0x60] sm:$0xff] %v9686
    %10161 = vst [vmem:[#allocation2 + $0x68] sm:$0xff] %v9689
    %10162 = vst [vmem:[#allocation2 + $0x70] sm:$0xff] %v9694
    %10163 = vst [vmem:[#allocation2 + $0x78] sm:$0xff] %v9697
    %10164 = vst [vmem:[#allocation2 + $0x80] sm:$0xff] %v9702
    %10165 = vst [vmem:[#allocation2 + $0x88] sm:$0xff] %v9705
    %10166 = vst [vmem:[#allocation2 + $0x90] sm:$0xff] %v9710
    %10167 = vst [vmem:[#allocation2 + $0x98] sm:$0xff] %v9713
    %10168 = vst [vmem:[#allocation2 + $0xa0] sm:$0xff] %v9718
    %10169 = vst [vmem:[#allocation2 + $0xa8] sm:$0xff] %v9721
    %10170 = vst [vmem:[#allocation2 + $0xb0] sm:$0xff] %v9726
    %10171 = vst [vmem:[#allocation2 + $0xb8] sm:$0xff] %v9729
    %10172 = vst [vmem:[#allocation2 + $0xc0] sm:$0xff] %v9734
    %10173 = vst [vmem:[#allocation2 + $0xc8] sm:$0xff] %v9737
    %10174 = vst [vmem:[#allocation2 + $0xd0] sm:$0xff] %v9742
    %10175 = vst [vmem:[#allocation2 + $0xd8] sm:$0xff] %v9745
    %10176 = vst [vmem:[#allocation2 + $0xe0] sm:$0xff] %v9750
    %10177 = vst [vmem:[#allocation2 + $0xe8] sm:$0xff] %v9753
    %10178 = vst [vmem:[#allocation2 + $0xf0] sm:$0xff] %v9758
    %10179 = vst [vmem:[#allocation2 + $0xf8] sm:$0xff] %v9761
    %10180 = vst [vmem:[#allocation2 + $0x100] sm:$0xff] %v9766
    %10181 = vst [vmem:[#allocation2 + $0x108] sm:$0xff] %v9769
    %10182 = vst [vmem:[#allocation2 + $0x110] sm:$0xff] %v9774
    %10183 = vst [vmem:[#allocation2 + $0x118] sm:$0xff] %v9777
    %10184 = vst [vmem:[#allocation2 + $0x120] sm:$0xff] %v9782
    %10185 = vst [vmem:[#allocation2 + $0x128] sm:$0xff] %v9785
    %10186 = vst [vmem:[#allocation2 + $0x130] sm:$0xff] %v9790
    %10187 = vst [vmem:[#allocation2 + $0x138] sm:$0xff] %v9793
    %10188 = vst [vmem:[#allocation2 + $0x140] sm:$0xff] %v9798
    %10189 = vst [vmem:[#allocation2 + $0x148] sm:$0xff] %v9801
    %10190 = vst [vmem:[#allocation2 + $0x150] sm:$0xff] %v9806
    %10191 = vst [vmem:[#allocation2 + $0x158] sm:$0xff] %v9809
    %10192 = vst [vmem:[#allocation2 + $0x160] sm:$0xff] %v9814
    %10193 = vst [vmem:[#allocation2 + $0x168] sm:$0xff] %v9817
    %10194 = vst [vmem:[#allocation2 + $0x170] sm:$0xff] %v9822
    %10195 = vst [vmem:[#allocation2 + $0x178] sm:$0xff] %v9825
    %10196 = vst [vmem:[#allocation2 + $0x180] sm:$0xff] %v9830
    %10197 = vst [vmem:[#allocation2 + $0x188] sm:$0xff] %v9833
    %10198 = vst [vmem:[#allocation2 + $0x190] sm:$0xff] %v9838
    %10199 = vst [vmem:[#allocation2 + $0x198] sm:$0xff] %v9841
    %10200 = vst [vmem:[#allocation2 + $0x1a0] sm:$0xff] %v9846
    %10201 = vst [vmem:[#allocation2 + $0x1a8] sm:$0xff] %v9849
    %10202 = vst [vmem:[#allocation2 + $0x1b0] sm:$0xff] %v9854
    %10203 = vst [vmem:[#allocation2 + $0x1b8] sm:$0xff] %v9857
    %10204 = vst [vmem:[#allocation2 + $0x1c0] sm:$0xff] %v9862
    %10205 = vst [vmem:[#allocation2 + $0x1c8] sm:$0xff] %v9865
    %10206 = vst [vmem:[#allocation2 + $0x1d0] sm:$0xff] %v9870
    %10207 = vst [vmem:[#allocation2 + $0x1d8] sm:$0xff] %v9873
    %10208 = vst [vmem:[#allocation2 + $0x1e0] sm:$0xff] %v9878
    %10209 = vst [vmem:[#allocation2 + $0x1e8] sm:$0xff] %v9881
    %10210 = vst [vmem:[#allocation2 + $0x1f0] sm:$0xff] %v9886
    %10211 = vst [vmem:[#allocation2 + $0x1f8] sm:$0xff] %v9889
    %10212 = vst [vmem:[#allocation2 + $0x200] sm:$0xff] %v9894
    %10213 = vst [vmem:[#allocation2 + $0x208] sm:$0xff] %v9897
    %10214 = vst [vmem:[#allocation2 + $0x210] sm:$0xff] %v9902
    %10215 = vst [vmem:[#allocation2 + $0x218] sm:$0xff] %v9905
    %10216 = vst [vmem:[#allocation2 + $0x220] sm:$0xff] %v9910
    %10217 = vst [vmem:[#allocation2 + $0x228] sm:$0xff] %v9913
    %10218 = vst [vmem:[#allocation2 + $0x230] sm:$0xff] %v9918
    %10219 = vst [vmem:[#allocation2 + $0x238] sm:$0xff] %v9921
    %10220 = vst [vmem:[#allocation2 + $0x240] sm:$0xff] %v9926
    %10221 = vst [vmem:[#allocation2 + $0x248] sm:$0xff] %v9929
    %10222 = vst [vmem:[#allocation2 + $0x250] sm:$0xff] %v9934
    %10223 = vst [vmem:[#allocation2 + $0x258] sm:$0xff] %v9937
    %10224 = vst [vmem:[#allocation2 + $0x260] sm:$0xff] %v9942
    %10225 = vst [vmem:[#allocation2 + $0x268] sm:$0xff] %v9945
    %10226 = vst [vmem:[#allocation2 + $0x270] sm:$0xff] %v9950
    %10227 = vst [vmem:[#allocation2 + $0x278] sm:$0xff] %v9953
    %10228 = vst [vmem:[#allocation2 + $0x280] sm:$0xff] %v9958
    %10229 = vst [vmem:[#allocation2 + $0x288] sm:$0xff] %v9961
    %10230 = vst [vmem:[#allocation2 + $0x290] sm:$0xff] %v9966
    %10231 = vst [vmem:[#allocation2 + $0x298] sm:$0xff] %v9969
    %10232 = vst [vmem:[#allocation2 + $0x2a0] sm:$0xff] %v9974
    %10233 = vst [vmem:[#allocation2 + $0x2a8] sm:$0xff] %v9977
    %10234 = vst [vmem:[#allocation2 + $0x2b0] sm:$0xff] %v9982
    %10235 = vst [vmem:[#allocation2 + $0x2b8] sm:$0xff] %v9985
    %10236 = vst [vmem:[#allocation2 + $0x2c0] sm:$0xff] %v9990
    %10237 = vst [vmem:[#allocation2 + $0x2c8] sm:$0xff] %v9993
    %10238 = vst [vmem:[#allocation2 + $0x2d0] sm:$0xff] %v9998
    %10239 = vst [vmem:[#allocation2 + $0x2d8] sm:$0xff] %v10001
    %10240 = vst [vmem:[#allocation2 + $0x2e0] sm:$0xff] %v10006
    %10241 = vst [vmem:[#allocation2 + $0x2e8] sm:$0xff] %v10009
    %10242 = vst [vmem:[#allocation2 + $0x2f0] sm:$0xff] %v10014
    %10243 = vst [vmem:[#allocation2 + $0x2f8] sm:$0xff] %v10017
    %10244 = vst [vmem:[#allocation2 + $0x300] sm:$0xff] %v10022
    %10245 = vst [vmem:[#allocation2 + $0x308] sm:$0xff] %v10025
    %10246 = vst [vmem:[#allocation2 + $0x310] sm:$0xff] %v10030
    %10247 = vst [vmem:[#allocation2 + $0x318] sm:$0xff] %v10033
    %10248 = vst [vmem:[#allocation2 + $0x320] sm:$0xff] %v10038
    %10249 = vst [vmem:[#allocation2 + $0x328] sm:$0xff] %v10041
    %10250 = vst [vmem:[#allocation2 + $0x330] sm:$0xff] %v10046
    %10251 = vst [vmem:[#allocation2 + $0x338] sm:$0xff] %v10049
    %10252 = vst [vmem:[#allocation2 + $0x340] sm:$0xff] %v10054
    %10253 = vst [vmem:[#allocation2 + $0x348] sm:$0xff] %v10057
    %10254 = vst [vmem:[#allocation2 + $0x350] sm:$0xff] %v10062
    %10255 = vst [vmem:[#allocation2 + $0x358] sm:$0xff] %v10065
    %10256 = vst [vmem:[#allocation2 + $0x360] sm:$0xff] %v10070
    %10257 = vst [vmem:[#allocation2 + $0x368] sm:$0xff] %v10073
    %10258 = vst [vmem:[#allocation2 + $0x370] sm:$0xff] %v10078
    %10259 = vst [vmem:[#allocation2 + $0x378] sm:$0xff] %v10081
    %10260 = vst [vmem:[#allocation2 + $0x380] sm:$0xff] %v10086
    %10261 = vst [vmem:[#allocation2 + $0x388] sm:$0xff] %v10089
    %10262 = vst [vmem:[#allocation2 + $0x390] sm:$0xff] %v10094
    %10263 = vst [vmem:[#allocation2 + $0x398] sm:$0xff] %v10097
    %10264 = vst [vmem:[#allocation2 + $0x3a0] sm:$0xff] %v10102
    %10265 = vst [vmem:[#allocation2 + $0x3a8] sm:$0xff] %v10105
    %10266 = vst [vmem:[#allocation2 + $0x3b0] sm:$0xff] %v10110
    %10267 = vst [vmem:[#allocation2 + $0x3b8] sm:$0xff] %v10113
    %10268 = vst [vmem:[#allocation2 + $0x3c0] sm:$0xff] %v10118
    %10269 = vst [vmem:[#allocation2 + $0x3c8] sm:$0xff] %v10121
    %10270 = vst [vmem:[#allocation2 + $0x3d0] sm:$0xff] %v10126
    %10271 = vst [vmem:[#allocation2 + $0x3d8] sm:$0xff] %v10129
    %10272 = vst [vmem:[#allocation2 + $0x3e0] sm:$0xff] %v10134
    %10273 = vst [vmem:[#allocation2 + $0x3e8] sm:$0xff] %v10137
    %10274 = vst [vmem:[#allocation2 + $0x3f0] sm:$0xff] %v10142
    %10275 = vst [vmem:[#allocation2 + $0x3f8] sm:$0xff] %v10145
    // Predicated region
    $region54: #{tpu_custom_call.1} parent=1 // pred_check
      _
    $region55: #{tpu_custom_call.1} parent=1 // pred_check_branch
      %10277 = sbr.rel (0) target = $region57
    $region56: #{tpu_custom_call.1} parent=1 // pred_region
      %s10279 = ssub.s32 16384, 16384
      %10280 = vsyncadd [#allocation3], %s10279
      %s10281 = sshll.u32 [#allocation2], 4
      %s10282 = int_to_ptr.vmem [resolvable:$true] %s10281
      %10287 = dma.vmem_to_hbm [thread:$0]  %s10282, 16384, %s13, [#allocation3], 128, 128, 8
    $region57: #{tpu_custom_call.1} parent=1 // pred_fallthru
      _
    // Predicated region
    $region58: #{tpu_custom_call.1} parent=1 // pred_check
      _
    $region59: #{tpu_custom_call.1} parent=1 // pred_check_branch
      %10289 = sbr.rel (0) target = $region61
    $region60: #{tpu_custom_call.1} parent=1 // pred_region
      %10290 = dma.done [#allocation3], 16384
    $region61: #{tpu_custom_call.1} parent=1 // pred_fallthru
      _
    %10291 = vsyncpa [#allocation3], 1

</llo_original>
